<compile_context>
chip_gen: v5e
topology: v5e:2x2
jax: 0.10.0
libtpu: 0.0.40
codegen_flags: <defaults>
</compile_context>

<pallas_src>
import math

import numpy as np
import jax
import jax.numpy as jnp
from jax.experimental import pallas as pl
from jax.experimental.pallas import tpu as pltpu  # noqa: F401  (TPU backend assumed)

# ----- model hyper-parameters (small, consistent with the module) -----------------
VOCAB = 16
SEQ_LEN = 8            # w
NUM_SEQS = 4           # h (MSA depth)
EMBED_DIM = 32         # dim
NUM_HEADS = 4
DIM_HEAD = 64          # Attention's default (MSASelfAttentionBlock's dim_head arg is unused)
NUM_LAYERS = 2
NUM_CLASSES = 2
BATCH = 2
INNER = NUM_HEADS * DIM_HEAD            # 256
ROWS = BATCH * NUM_SEQS * SEQ_LEN       # 64 folded rows, (b, h, w) row-major
HEAD_BLK = 4 * DIM_HEAD                 # 256-lane per-head block [q_h | k_h | v_h | g_h]
PROJ_W_COLS = 2 * INNER + NUM_HEADS * HEAD_BLK   # 512 (row V|G) + 1024 (col, per-head) = 1536
OUT_PAD = 128                           # lane-dense padded fc output width
EPS = 1e-5                              # torch LayerNorm default eps
NEG_INF = -1e30
VEC_W = 256                             # small-vector slab width (bg needs 256)
FC_BIAS_ROW = NUM_LAYERS * 2 * 6        # 24
VEC_ROWS = FC_BIAS_ROW + 1              # 25

LOG2_SEQ = SEQ_LEN.bit_length() - 1                 # 3
LOG2_HW = (NUM_SEQS * SEQ_LEN).bit_length() - 1     # 5
assert (1 << LOG2_SEQ) == SEQ_LEN and (1 << LOG2_HW) == NUM_SEQS * SEQ_LEN


def _layernorm(x, g, b):
    mu = jnp.mean(x, axis=-1, keepdims=True)
    var = jnp.mean((x - mu) ** 2, axis=-1, keepdims=True)
    return (x - mu) * jax.lax.rsqrt(var + EPS) * g + b


def paratope_kernel(seq_ref, emb_ref, projw_ref, outw_ref, vecs_ref, fcw_ref, out_ref):
    f32 = jnp.float32

    # --- group structure generated in-kernel (VPU iota + shift/and; no constant DMAs) ---
    ri = jax.lax.broadcasted_iota(jnp.int32, (ROWS, ROWS), 0)
    rj = jax.lax.broadcasted_iota(jnp.int32, (ROWS, ROWS), 1)
    # tied (row) attention groups: same (b, h)  -> 1/0 matrix used as a group-sum matmul
    row_group_sum = jnp.where((ri >> LOG2_SEQ) == (rj >> LOG2_SEQ), 1.0, 0.0).astype(f32)
    # column attention groups: same (b, w)      -> softmax mask (no row permutation needed)
    col_mask = ((ri >> LOG2_HW) == (rj >> LOG2_HW)) & \
               ((ri & (SEQ_LEN - 1)) == (rj & (SEQ_LEN - 1)))

    # --- embedding lookup = one-hot @ table (row 0 of table zeroed => padding_idx=0) ---
    tok = seq_ref[...]                                                      # (ROWS, 1) int32
    vocab_iota = jax.lax.broadcasted_iota(jnp.int32, (ROWS, VOCAB), 1)
    onehot = (vocab_iota == tok).astype(f32)
    x = jnp.dot(onehot, emb_ref[...], preferred_element_type=f32)           # (ROWS, D)

    vecs = vecs_ref[...]                                                    # (25, 256)

    def vec(layer, branch, idx, width):
        r = (layer * 2 + branch) * 6 + idx
        return vecs[r:r + 1, :width]                                        # (1, width)

    for layer in range(NUM_LAYERS):
        prow0 = layer * EMBED_DIM

        # ======================= row (tied) attention =======================
        ln1g, ln1b = vec(layer, 0, 0, EMBED_DIM), vec(layer, 0, 1, EMBED_DIM)
        bo = vec(layer, 0, 2, EMBED_DIM)
        ln2g, ln2b = vec(layer, 0, 3, EMBED_DIM), vec(layer, 0, 4, EMBED_DIM)
        bg = vec(layer, 0, 5, INNER)

        xn = _layernorm(x, ln1g, ln1b)                                      # AxialAttention.norm
        proj = jnp.dot(xn, projw_ref[prow0:prow0 + EMBED_DIM, 0:2 * INNER],
                       preferred_element_type=f32)                          # (ROWS, 512) = [V | G]
        v = proj[:, :INNER]
        gates = jax.nn.sigmoid(proj[:, INNER:] + bg)
        # tied quirk: softmax over the size-1 reduced axis == 1  =>  each head's output
        # is the plain sum of v over its (b, h) group; one group-sum matmul does all heads.
        heads = jnp.dot(row_group_sum, v, preferred_element_type=f32)
        wo = outw_ref[(layer * 2) * INNER:(layer * 2 + 1) * INNER, :]       # (INNER, D)
        att = jnp.dot(heads * gates, wo, preferred_element_type=f32) + bo   # to_out
        att = xn + att                                                      # residual vs normed x
        x = x + _layernorm(att, ln2g, ln2b)                                 # Attention.norm + block residual

        # ======================= column attention =======================
        ln1g, ln1b = vec(layer, 1, 0, EMBED_DIM), vec(layer, 1, 1, EMBED_DIM)
        bo = vec(layer, 1, 2, EMBED_DIM)
        ln2g, ln2b = vec(layer, 1, 3, EMBED_DIM), vec(layer, 1, 4, EMBED_DIM)
        bg = vec(layer, 1, 5, INNER)

        xn = _layernorm(x, ln1g, ln1b)
        wobase = (layer * 2 + 1) * INNER
        acc = jnp.zeros((ROWS, EMBED_DIM), f32)
        for h in range(NUM_HEADS):
            c0 = 2 * INNER + h * HEAD_BLK                                   # 128-lane aligned
            ph = jnp.dot(xn, projw_ref[prow0:prow0 + EMBED_DIM, c0:c0 + HEAD_BLK],
                         preferred_element_type=f32)                        # (ROWS, 256) = [q|k|v|g]
            q_h = ph[:, 0:DIM_HEAD]                                         # 1/sqrt(d) folded into Wq
            k_h = ph[:, DIM_HEAD:2 * DIM_HEAD]
            v_h = ph[:, 2 * DIM_HEAD:3 * DIM_HEAD]
            g_h = jax.nn.sigmoid(ph[:, 3 * DIM_HEAD:4 * DIM_HEAD]
                                 + bg[:, h * DIM_HEAD:(h + 1) * DIM_HEAD])
            s = jax.lax.dot_general(q_h, k_h, (((1,), (1,)), ((), ())),
                                    preferred_element_type=f32)             # (ROWS, ROWS)
            s = jnp.where(col_mask, s, NEG_INF)                             # restrict to (b, w) group
            s = s - jnp.max(s, axis=-1, keepdims=True)
            e = jnp.exp(s)
            p = e * pl.reciprocal(jnp.sum(e, axis=-1, keepdims=True), approx=True)
            head = jnp.dot(p, v_h, preferred_element_type=f32)              # (ROWS, DIM_HEAD)
            wo_h = outw_ref[wobase + h * DIM_HEAD:wobase + (h + 1) * DIM_HEAD, :]
            acc = acc + jnp.dot(head * g_h, wo_h, preferred_element_type=f32)
        att = xn + (acc + bo)
        x = x + _layernorm(att, ln2g, ln2b)

    # --- output[:, 0, :, :] via static 8-aligned sublane slices, then lane-padded fc ---
    sel_x = jnp.concatenate(
        [x[b * NUM_SEQS * SEQ_LEN: b * NUM_SEQS * SEQ_LEN + SEQ_LEN] for b in range(BATCH)],
        axis=0)                                                             # (B*SEQ_LEN, D)
    fcb = vecs[FC_BIAS_ROW:FC_BIAS_ROW + 1, :OUT_PAD]
    out_ref[...] = jnp.dot(sel_x, fcw_ref[...], preferred_element_type=f32) + fcb


# ----------------------------- wrapper ----------------------------------------------
def paratope_forward(params, sequences):
    b, h, w = sequences.shape
    assert (b, h, w) == (BATCH, NUM_SEQS, SEQ_LEN)
    seq_flat = sequences.reshape(ROWS, 1).astype(jnp.int32)
    out = pl.pallas_call(
        paratope_kernel,
        out_shape=jax.ShapeDtypeStruct((BATCH * SEQ_LEN, OUT_PAD), jnp.float32),
        # NOTE(v7x): gridless call uses one TensorCore; add a parallel batch grid axis
        # only if BATCH/NUM_SEQS ever grows enough to shard across both TCs.
    )(seq_flat, params["embedding"], params["proj_w"], params["out_w"],
      params["vecs"], params["fc_w_pad"])
    return out[:, :NUM_CLASSES].reshape(b, w, NUM_CLASSES)


# ----------------------------- deterministic init + packing -------------------------
def init_params(key):
    keys = iter(jax.random.split(key, 64))

    def lin_w(fan_in, fan_out):
        bound = 1.0 / math.sqrt(fan_in)
        return np.asarray(jax.random.uniform(next(keys), (fan_in, fan_out),
                                             jnp.float32, -bound, bound))

    def lin_b(fan_in, fan_out):
        bound = 1.0 / math.sqrt(fan_in)
        return np.asarray(jax.random.uniform(next(keys), (1, fan_out),
                                             jnp.float32, -bound, bound))

    emb = jax.random.normal(next(keys), (VOCAB, EMBED_DIM), jnp.float32)
    emb = emb.at[0].set(0.0)                              # padding_idx = 0

    proj_w = np.zeros((NUM_LAYERS * EMBED_DIM, PROJ_W_COLS), np.float32)
    out_w = np.zeros((NUM_LAYERS * 2 * INNER, EMBED_DIM), np.float32)
    vecs = np.zeros((VEC_ROWS, VEC_W), np.float32)
    scale = DIM_HEAD ** (-0.5)

    for layer in range(NUM_LAYERS):
        r0 = layer * EMBED_DIM
        for branch in range(2):                           # 0 = row (tied), 1 = col
            wq = lin_w(EMBED_DIM, INNER)                  # to_q (provably inert in the tied branch)
            wk = lin_w(EMBED_DIM, INNER)                  # to_kv first half
            wv = lin_w(EMBED_DIM, INNER)                  # to_kv second half
            wg = np.zeros((EMBED_DIM, INNER), np.float32) # gating.weight = 0
            wo = lin_w(INNER, EMBED_DIM)                  # to_out.weight (as (in, out))
            bo = lin_b(INNER, EMBED_DIM)                  # to_out.bias
            bg = np.ones((1, INNER), np.float32)          # gating.bias = 1
            if branch == 0:
                proj_w[r0:r0 + EMBED_DIM, 0:2 * INNER] = np.concatenate([wv, wg], axis=1)
            else:
                blocks = []
                for hh in range(NUM_HEADS):               # per-head interleave, q pre-scaled
                    sl = slice(hh * DIM_HEAD, (hh + 1) * DIM_HEAD)
                    blocks += [wq[:, sl] * scale, wk[:, sl], wv[:, sl], wg[:, sl]]
                proj_w[r0:r0 + EMBED_DIM, 2 * INNER:] = np.concatenate(blocks, axis=1)
            out_w[(layer * 2 + branch) * INNER:(layer * 2 + branch + 1) * INNER, :] = wo
            base = (layer * 2 + branch) * 6
            vecs[base + 0, :EMBED_DIM] = 1.0              # ln1.weight
            vecs[base + 1, :EMBED_DIM] = 0.0              # ln1.bias
            vecs[base + 2, :EMBED_DIM] = bo[0]            # to_out.bias
            vecs[base + 3, :EMBED_DIM] = 1.0              # ln2.weight
            vecs[base + 4, :EMBED_DIM] = 0.0              # ln2.bias
            vecs[base + 5, :INNER] = bg[0]                # gating.bias

    fc_w = lin_w(EMBED_DIM, NUM_CLASSES)
    fc_b = lin_b(EMBED_DIM, NUM_CLASSES)
    fc_w_pad = np.zeros((EMBED_DIM, OUT_PAD), np.float32)
    fc_w_pad[:, :NUM_CLASSES] = fc_w
    vecs[FC_BIAS_ROW, :NUM_CLASSES] = fc_b[0]

    return {
        "embedding": emb,
        "proj_w": jnp.asarray(proj_w),
        "out_w": jnp.asarray(out_w),
        "vecs": jnp.asarray(vecs),
        "fc_w_pad": jnp.asarray(fc_w_pad),
    }


if __name__ == "__main__":
    key = jax.random.PRNGKey(0)
    kp, ks = jax.random.split(key)
    params = init_params(kp)
    sequences = jax.random.randint(ks, (BATCH, NUM_SEQS, SEQ_LEN), 1, VOCAB, dtype=jnp.int32)

    logits = paratope_forward(params, sequences)
    jax.block_until_ready(logits)
    assert logits.shape == (BATCH, SEQ_LEN, NUM_CLASSES) and logits.dtype == jnp.float32
    assert bool(jnp.all(jnp.isfinite(logits)))
    print("KERNEL_OK")
</pallas_src>

<mosaic_0001>
module attributes {stable_mosaic.version = 11 : i64} {
  func.func @paratope_kernel(%arg0: memref<64x1xi32, #tpu.memory_space<vmem>>, %arg1: memref<16x32xf32, #tpu.memory_space<vmem>>, %arg2: memref<64x1536xf32, #tpu.memory_space<vmem>>, %arg3: memref<1024x32xf32, #tpu.memory_space<vmem>>, %arg4: memref<25x256xf32, #tpu.memory_space<vmem>>, %arg5: memref<32x128xf32, #tpu.memory_space<vmem>>, %arg6: memref<16x128xf32, #tpu.memory_space<vmem>>) attributes {dimension_semantics = [], scalar_prefetch = 0 : i64, scratch_operands = 0 : i64, tpu.core_type = #tpu.core_type<tc>} {
    %0 = tpu.iota {dimensions = array<i32: 0>} : vector<64x64xi32>
    %1 = tpu.iota {dimensions = array<i32: 1>} : vector<64x64xi32>
    %c3_i32 = arith.constant 3 : i32
    %2 = vector.broadcast %c3_i32 : i32 to vector<64x64xi32>
    %3 = arith.shrsi %0, %2 : vector<64x64xi32>
    %c3_i32_0 = arith.constant 3 : i32
    %4 = vector.broadcast %c3_i32_0 : i32 to vector<64x64xi32>
    %5 = arith.shrsi %1, %4 : vector<64x64xi32>
    %6 = arith.cmpi eq, %3, %5 : vector<64x64xi32>
    %cst = arith.constant 1.000000e+00 : f32
    %cst_1 = arith.constant 0.000000e+00 : f32
    %7 = vector.broadcast %cst : f32 to vector<64x64xf32>
    %8 = vector.broadcast %cst_1 : f32 to vector<64x64xf32>
    %9 = arith.select %6, %7, %8 : vector<64x64xi1>, vector<64x64xf32>
    %c5_i32 = arith.constant 5 : i32
    %10 = vector.broadcast %c5_i32 : i32 to vector<64x64xi32>
    %11 = arith.shrsi %0, %10 : vector<64x64xi32>
    %c5_i32_2 = arith.constant 5 : i32
    %12 = vector.broadcast %c5_i32_2 : i32 to vector<64x64xi32>
    %13 = arith.shrsi %1, %12 : vector<64x64xi32>
    %14 = arith.cmpi eq, %11, %13 : vector<64x64xi32>
    %c7_i32 = arith.constant 7 : i32
    %15 = vector.broadcast %c7_i32 : i32 to vector<64x64xi32>
    %16 = arith.andi %0, %15 : vector<64x64xi32>
    %c7_i32_3 = arith.constant 7 : i32
    %17 = vector.broadcast %c7_i32_3 : i32 to vector<64x64xi32>
    %18 = arith.andi %1, %17 : vector<64x64xi32>
    %19 = arith.cmpi eq, %16, %18 : vector<64x64xi32>
    %20 = arith.andi %14, %19 : vector<64x64xi1>
    %c0 = arith.constant 0 : index
    %c0_4 = arith.constant 0 : index
    %21 = vector.load %arg0[%c0, %c0_4] : memref<64x1xi32, #tpu.memory_space<vmem>>, vector<64x1xi32>
    %22 = tpu.iota {dimensions = array<i32: 1>} : vector<64x16xi32>
    %23 = vector.broadcast %21 : vector<64x1xi32> to vector<64x16xi32>
    %24 = arith.cmpi eq, %22, %23 : vector<64x16xi32>
    %25 = arith.extui %24 : vector<64x16xi1> to vector<64x16xi32>
    %26 = arith.sitofp %25 : vector<64x16xi32> to vector<64x16xf32>
    %c0_5 = arith.constant 0 : index
    %c0_6 = arith.constant 0 : index
    %27 = vector.load %arg1[%c0_5, %c0_6] : memref<16x32xf32, #tpu.memory_space<vmem>>, vector<16x32xf32>
    %cst_7 = arith.constant dense<0.000000e+00> : vector<64x32xf32>
    %28 = tpu.matmul %26, %27, %cst_7 {dimension_numbers = #tpu.dot_dimension_numbers<[1], [0], [0], [1], [0, 0, 1, 1], [], []>} : vector<64x16xf32>, vector<16x32xf32>, vector<64x32xf32> -> vector<64x32xf32>
    %c0_8 = arith.constant 0 : index
    %c0_9 = arith.constant 0 : index
    %29 = vector.load %arg4[%c0_8, %c0_9] : memref<25x256xf32, #tpu.memory_space<vmem>>, vector<25x256xf32>
    %30 = vector.extract_strided_slice %29 {offsets = [0, 0], sizes = [1, 32], strides = [1, 1]} : vector<25x256xf32> to vector<1x32xf32>
    %31 = vector.extract_strided_slice %29 {offsets = [1, 0], sizes = [1, 32], strides = [1, 1]} : vector<25x256xf32> to vector<1x32xf32>
    %32 = vector.extract_strided_slice %29 {offsets = [2, 0], sizes = [1, 32], strides = [1, 1]} : vector<25x256xf32> to vector<1x32xf32>
    %33 = vector.extract_strided_slice %29 {offsets = [3, 0], sizes = [1, 32], strides = [1, 1]} : vector<25x256xf32> to vector<1x32xf32>
    %34 = vector.extract_strided_slice %29 {offsets = [4, 0], sizes = [1, 32], strides = [1, 1]} : vector<25x256xf32> to vector<1x32xf32>
    %35 = vector.extract_strided_slice %29 {offsets = [5, 0], sizes = [1, 256], strides = [1, 1]} : vector<25x256xf32> to vector<1x256xf32>
    %cst_10 = arith.constant dense<0.000000e+00> : vector<64xf32>
    %36 = vector.multi_reduction <add>, %28, %cst_10 [1] : vector<64x32xf32> to vector<64xf32>
    %37 = vector.shape_cast %36 : vector<64xf32> to vector<64x1xf32>
    %cst_11 = arith.constant 3.200000e+01 : f32
    %38 = vector.broadcast %cst_11 : f32 to vector<64x1xf32>
    %39 = arith.divf %37, %38 : vector<64x1xf32>
    %40 = vector.broadcast %39 : vector<64x1xf32> to vector<64x32xf32>
    %41 = arith.subf %28, %40 : vector<64x32xf32>
    %42 = arith.mulf %41, %41 : vector<64x32xf32>
    %cst_12 = arith.constant dense<0.000000e+00> : vector<64xf32>
    %43 = vector.multi_reduction <add>, %42, %cst_12 [1] : vector<64x32xf32> to vector<64xf32>
    %44 = vector.shape_cast %43 : vector<64xf32> to vector<64x1xf32>
    %cst_13 = arith.constant 3.200000e+01 : f32
    %45 = vector.broadcast %cst_13 : f32 to vector<64x1xf32>
    %46 = arith.divf %44, %45 : vector<64x1xf32>
    %47 = vector.broadcast %39 : vector<64x1xf32> to vector<64x32xf32>
    %48 = arith.subf %28, %47 : vector<64x32xf32>
    %cst_14 = arith.constant 9.99999974E-6 : f32
    %49 = vector.broadcast %cst_14 : f32 to vector<64x1xf32>
    %50 = arith.addf %46, %49 : vector<64x1xf32>
    %51 = math.rsqrt %50 : vector<64x1xf32>
    %52 = vector.broadcast %51 : vector<64x1xf32> to vector<64x32xf32>
    %53 = arith.mulf %48, %52 : vector<64x32xf32>
    %54 = vector.broadcast %30 : vector<1x32xf32> to vector<64x32xf32>
    %55 = arith.mulf %53, %54 : vector<64x32xf32>
    %56 = vector.broadcast %31 : vector<1x32xf32> to vector<64x32xf32>
    %57 = arith.addf %55, %56 : vector<64x32xf32>
    %c0_15 = arith.constant 0 : index
    %c0_16 = arith.constant 0 : index
    %58 = vector.load %arg2[%c0_15, %c0_16] : memref<64x1536xf32, #tpu.memory_space<vmem>>, vector<32x512xf32>
    %cst_17 = arith.constant dense<0.000000e+00> : vector<64x512xf32>
    %59 = tpu.matmul %57, %58, %cst_17 {dimension_numbers = #tpu.dot_dimension_numbers<[1], [0], [0], [1], [0, 0, 1, 1], [], []>} : vector<64x32xf32>, vector<32x512xf32>, vector<64x512xf32> -> vector<64x512xf32>
    %60 = vector.extract_strided_slice %59 {offsets = [0, 0], sizes = [64, 256], strides = [1, 1]} : vector<64x512xf32> to vector<64x256xf32>
    %61 = vector.extract_strided_slice %59 {offsets = [0, 256], sizes = [64, 256], strides = [1, 1]} : vector<64x512xf32> to vector<64x256xf32>
    %62 = vector.broadcast %35 : vector<1x256xf32> to vector<64x256xf32>
    %63 = arith.addf %61, %62 : vector<64x256xf32>
    %64 = arith.negf %63 : vector<64x256xf32>
    %65 = math.exp %64 : vector<64x256xf32>
    %cst_18 = arith.constant 1.000000e+00 : f32
    %66 = vector.broadcast %cst_18 : f32 to vector<64x256xf32>
    %67 = arith.addf %66, %65 : vector<64x256xf32>
    %68 = arith.divf %66, %67 : vector<64x256xf32>
    %cst_19 = arith.constant dense<0.000000e+00> : vector<64x256xf32>
    %69 = tpu.matmul %9, %60, %cst_19 {dimension_numbers = #tpu.dot_dimension_numbers<[1], [0], [0], [1], [0, 0, 1, 1], [], []>} : vector<64x64xf32>, vector<64x256xf32>, vector<64x256xf32> -> vector<64x256xf32>
    %c0_20 = arith.constant 0 : index
    %c0_21 = arith.constant 0 : index
    %70 = vector.load %arg3[%c0_20, %c0_21] : memref<1024x32xf32, #tpu.memory_space<vmem>>, vector<256x32xf32>
    %71 = arith.mulf %69, %68 : vector<64x256xf32>
    %cst_22 = arith.constant dense<0.000000e+00> : vector<64x32xf32>
    %72 = tpu.matmul %71, %70, %cst_22 {dimension_numbers = #tpu.dot_dimension_numbers<[1], [0], [0], [1], [0, 0, 1, 1], [], []>} : vector<64x256xf32>, vector<256x32xf32>, vector<64x32xf32> -> vector<64x32xf32>
    %73 = vector.broadcast %32 : vector<1x32xf32> to vector<64x32xf32>
    %74 = arith.addf %72, %73 : vector<64x32xf32>
    %75 = arith.addf %57, %74 : vector<64x32xf32>
    %cst_23 = arith.constant dense<0.000000e+00> : vector<64xf32>
    %76 = vector.multi_reduction <add>, %75, %cst_23 [1] : vector<64x32xf32> to vector<64xf32>
    %77 = vector.shape_cast %76 : vector<64xf32> to vector<64x1xf32>
    %cst_24 = arith.constant 3.200000e+01 : f32
    %78 = vector.broadcast %cst_24 : f32 to vector<64x1xf32>
    %79 = arith.divf %77, %78 : vector<64x1xf32>
    %80 = vector.broadcast %79 : vector<64x1xf32> to vector<64x32xf32>
    %81 = arith.subf %75, %80 : vector<64x32xf32>
    %82 = arith.mulf %81, %81 : vector<64x32xf32>
    %cst_25 = arith.constant dense<0.000000e+00> : vector<64xf32>
    %83 = vector.multi_reduction <add>, %82, %cst_25 [1] : vector<64x32xf32> to vector<64xf32>
    %84 = vector.shape_cast %83 : vector<64xf32> to vector<64x1xf32>
    %cst_26 = arith.constant 3.200000e+01 : f32
    %85 = vector.broadcast %cst_26 : f32 to vector<64x1xf32>
    %86 = arith.divf %84, %85 : vector<64x1xf32>
    %87 = vector.broadcast %79 : vector<64x1xf32> to vector<64x32xf32>
    %88 = arith.subf %75, %87 : vector<64x32xf32>
    %cst_27 = arith.constant 9.99999974E-6 : f32
    %89 = vector.broadcast %cst_27 : f32 to vector<64x1xf32>
    %90 = arith.addf %86, %89 : vector<64x1xf32>
    %91 = math.rsqrt %90 : vector<64x1xf32>
    %92 = vector.broadcast %91 : vector<64x1xf32> to vector<64x32xf32>
    %93 = arith.mulf %88, %92 : vector<64x32xf32>
    %94 = vector.broadcast %33 : vector<1x32xf32> to vector<64x32xf32>
    %95 = arith.mulf %93, %94 : vector<64x32xf32>
    %96 = vector.broadcast %34 : vector<1x32xf32> to vector<64x32xf32>
    %97 = arith.addf %95, %96 : vector<64x32xf32>
    %98 = arith.addf %28, %97 : vector<64x32xf32>
    %99 = vector.extract_strided_slice %29 {offsets = [6, 0], sizes = [1, 32], strides = [1, 1]} : vector<25x256xf32> to vector<1x32xf32>
    %100 = vector.extract_strided_slice %29 {offsets = [7, 0], sizes = [1, 32], strides = [1, 1]} : vector<25x256xf32> to vector<1x32xf32>
    %101 = vector.extract_strided_slice %29 {offsets = [8, 0], sizes = [1, 32], strides = [1, 1]} : vector<25x256xf32> to vector<1x32xf32>
    %102 = vector.extract_strided_slice %29 {offsets = [9, 0], sizes = [1, 32], strides = [1, 1]} : vector<25x256xf32> to vector<1x32xf32>
    %103 = vector.extract_strided_slice %29 {offsets = [10, 0], sizes = [1, 32], strides = [1, 1]} : vector<25x256xf32> to vector<1x32xf32>
    %104 = vector.extract_strided_slice %29 {offsets = [11, 0], sizes = [1, 256], strides = [1, 1]} : vector<25x256xf32> to vector<1x256xf32>
    %cst_28 = arith.constant dense<0.000000e+00> : vector<64xf32>
    %105 = vector.multi_reduction <add>, %98, %cst_28 [1] : vector<64x32xf32> to vector<64xf32>
    %106 = vector.shape_cast %105 : vector<64xf32> to vector<64x1xf32>
    %cst_29 = arith.constant 3.200000e+01 : f32
    %107 = vector.broadcast %cst_29 : f32 to vector<64x1xf32>
    %108 = arith.divf %106, %107 : vector<64x1xf32>
    %109 = vector.broadcast %108 : vector<64x1xf32> to vector<64x32xf32>
    %110 = arith.subf %98, %109 : vector<64x32xf32>
    %111 = arith.mulf %110, %110 : vector<64x32xf32>
    %cst_30 = arith.constant dense<0.000000e+00> : vector<64xf32>
    %112 = vector.multi_reduction <add>, %111, %cst_30 [1] : vector<64x32xf32> to vector<64xf32>
    %113 = vector.shape_cast %112 : vector<64xf32> to vector<64x1xf32>
    %cst_31 = arith.constant 3.200000e+01 : f32
    %114 = vector.broadcast %cst_31 : f32 to vector<64x1xf32>
    %115 = arith.divf %113, %114 : vector<64x1xf32>
    %116 = vector.broadcast %108 : vector<64x1xf32> to vector<64x32xf32>
    %117 = arith.subf %98, %116 : vector<64x32xf32>
    %cst_32 = arith.constant 9.99999974E-6 : f32
    %118 = vector.broadcast %cst_32 : f32 to vector<64x1xf32>
    %119 = arith.addf %115, %118 : vector<64x1xf32>
    %120 = math.rsqrt %119 : vector<64x1xf32>
    %121 = vector.broadcast %120 : vector<64x1xf32> to vector<64x32xf32>
    %122 = arith.mulf %117, %121 : vector<64x32xf32>
    %123 = vector.broadcast %99 : vector<1x32xf32> to vector<64x32xf32>
    %124 = arith.mulf %122, %123 : vector<64x32xf32>
    %125 = vector.broadcast %100 : vector<1x32xf32> to vector<64x32xf32>
    %126 = arith.addf %124, %125 : vector<64x32xf32>
    %cst_33 = arith.constant 0.000000e+00 : f32
    %127 = vector.broadcast %cst_33 : f32 to vector<64x32xf32>
    %c0_34 = arith.constant 0 : index
    %c512 = arith.constant 512 : index
    %128 = vector.load %arg2[%c0_34, %c512] : memref<64x1536xf32, #tpu.memory_space<vmem>>, vector<32x256xf32>
    %cst_35 = arith.constant dense<0.000000e+00> : vector<64x256xf32>
    %129 = tpu.matmul %126, %128, %cst_35 {dimension_numbers = #tpu.dot_dimension_numbers<[1], [0], [0], [1], [0, 0, 1, 1], [], []>} : vector<64x32xf32>, vector<32x256xf32>, vector<64x256xf32> -> vector<64x256xf32>
    %130 = vector.extract_strided_slice %129 {offsets = [0, 0], sizes = [64, 64], strides = [1, 1]} : vector<64x256xf32> to vector<64x64xf32>
    %131 = vector.extract_strided_slice %129 {offsets = [0, 64], sizes = [64, 64], strides = [1, 1]} : vector<64x256xf32> to vector<64x64xf32>
    %132 = vector.extract_strided_slice %129 {offsets = [0, 128], sizes = [64, 64], strides = [1, 1]} : vector<64x256xf32> to vector<64x64xf32>
    %133 = vector.extract_strided_slice %129 {offsets = [0, 192], sizes = [64, 64], strides = [1, 1]} : vector<64x256xf32> to vector<64x64xf32>
    %134 = vector.extract_strided_slice %104 {offsets = [0, 0], sizes = [1, 64], strides = [1, 1]} : vector<1x256xf32> to vector<1x64xf32>
    %135 = vector.broadcast %134 : vector<1x64xf32> to vector<64x64xf32>
    %136 = arith.addf %133, %135 : vector<64x64xf32>
    %137 = arith.negf %136 : vector<64x64xf32>
    %138 = math.exp %137 : vector<64x64xf32>
    %cst_36 = arith.constant 1.000000e+00 : f32
    %139 = vector.broadcast %cst_36 : f32 to vector<64x64xf32>
    %140 = arith.addf %139, %138 : vector<64x64xf32>
    %141 = arith.divf %139, %140 : vector<64x64xf32>
    %cst_37 = arith.constant dense<0.000000e+00> : vector<64x64xf32>
    %142 = tpu.matmul %130, %131, %cst_37 {dimension_numbers = #tpu.dot_dimension_numbers<[1], [1], [0], [0], [0, 0, 1, 0], [], []>} : vector<64x64xf32>, vector<64x64xf32>, vector<64x64xf32> -> vector<64x64xf32>
    %cst_38 = arith.constant -1.000000e+30 : f32
    %143 = vector.broadcast %cst_38 : f32 to vector<64x64xf32>
    %144 = arith.select %20, %142, %143 : vector<64x64xi1>, vector<64x64xf32>
    %cst_39 = arith.constant dense<0xFF800000> : vector<64xf32>
    %145 = vector.multi_reduction <maximumf>, %144, %cst_39 [1] : vector<64x64xf32> to vector<64xf32>
    %146 = vector.shape_cast %145 : vector<64xf32> to vector<64x1xf32>
    %147 = vector.broadcast %146 : vector<64x1xf32> to vector<64x64xf32>
    %148 = arith.subf %144, %147 : vector<64x64xf32>
    %149 = math.exp %148 : vector<64x64xf32>
    %cst_40 = arith.constant dense<0.000000e+00> : vector<64xf32>
    %150 = vector.multi_reduction <add>, %149, %cst_40 [1] : vector<64x64xf32> to vector<64xf32>
    %151 = vector.shape_cast %150 : vector<64xf32> to vector<64x1xf32>
    %152 = tpu.reciprocal %151 {approx = true} : vector<64x1xf32> -> vector<64x1xf32>
    %153 = vector.broadcast %152 : vector<64x1xf32> to vector<64x64xf32>
    %154 = arith.mulf %149, %153 : vector<64x64xf32>
    %cst_41 = arith.constant dense<0.000000e+00> : vector<64x64xf32>
    %155 = tpu.matmul %154, %132, %cst_41 {dimension_numbers = #tpu.dot_dimension_numbers<[1], [0], [0], [1], [0, 0, 1, 1], [], []>} : vector<64x64xf32>, vector<64x64xf32>, vector<64x64xf32> -> vector<64x64xf32>
    %c256 = arith.constant 256 : index
    %c0_42 = arith.constant 0 : index
    %156 = vector.load %arg3[%c256, %c0_42] : memref<1024x32xf32, #tpu.memory_space<vmem>>, vector<64x32xf32>
    %157 = arith.mulf %155, %141 : vector<64x64xf32>
    %cst_43 = arith.constant dense<0.000000e+00> : vector<64x32xf32>
    %158 = tpu.matmul %157, %156, %cst_43 {dimension_numbers = #tpu.dot_dimension_numbers<[1], [0], [0], [1], [0, 0, 1, 1], [], []>} : vector<64x64xf32>, vector<64x32xf32>, vector<64x32xf32> -> vector<64x32xf32>
    %159 = arith.addf %127, %158 : vector<64x32xf32>
    %c0_44 = arith.constant 0 : index
    %c768 = arith.constant 768 : index
    %160 = vector.load %arg2[%c0_44, %c768] : memref<64x1536xf32, #tpu.memory_space<vmem>>, vector<32x256xf32>
    %cst_45 = arith.constant dense<0.000000e+00> : vector<64x256xf32>
    %161 = tpu.matmul %126, %160, %cst_45 {dimension_numbers = #tpu.dot_dimension_numbers<[1], [0], [0], [1], [0, 0, 1, 1], [], []>} : vector<64x32xf32>, vector<32x256xf32>, vector<64x256xf32> -> vector<64x256xf32>
    %162 = vector.extract_strided_slice %161 {offsets = [0, 0], sizes = [64, 64], strides = [1, 1]} : vector<64x256xf32> to vector<64x64xf32>
    %163 = vector.extract_strided_slice %161 {offsets = [0, 64], sizes = [64, 64], strides = [1, 1]} : vector<64x256xf32> to vector<64x64xf32>
    %164 = vector.extract_strided_slice %161 {offsets = [0, 128], sizes = [64, 64], strides = [1, 1]} : vector<64x256xf32> to vector<64x64xf32>
    %165 = vector.extract_strided_slice %161 {offsets = [0, 192], sizes = [64, 64], strides = [1, 1]} : vector<64x256xf32> to vector<64x64xf32>
    %166 = vector.extract_strided_slice %104 {offsets = [0, 64], sizes = [1, 64], strides = [1, 1]} : vector<1x256xf32> to vector<1x64xf32>
    %167 = vector.broadcast %166 : vector<1x64xf32> to vector<64x64xf32>
    %168 = arith.addf %165, %167 : vector<64x64xf32>
    %169 = arith.negf %168 : vector<64x64xf32>
    %170 = math.exp %169 : vector<64x64xf32>
    %cst_46 = arith.constant 1.000000e+00 : f32
    %171 = vector.broadcast %cst_46 : f32 to vector<64x64xf32>
    %172 = arith.addf %171, %170 : vector<64x64xf32>
    %173 = arith.divf %171, %172 : vector<64x64xf32>
    %cst_47 = arith.constant dense<0.000000e+00> : vector<64x64xf32>
    %174 = tpu.matmul %162, %163, %cst_47 {dimension_numbers = #tpu.dot_dimension_numbers<[1], [1], [0], [0], [0, 0, 1, 0], [], []>} : vector<64x64xf32>, vector<64x64xf32>, vector<64x64xf32> -> vector<64x64xf32>
    %cst_48 = arith.constant -1.000000e+30 : f32
    %175 = vector.broadcast %cst_48 : f32 to vector<64x64xf32>
    %176 = arith.select %20, %174, %175 : vector<64x64xi1>, vector<64x64xf32>
    %cst_49 = arith.constant dense<0xFF800000> : vector<64xf32>
    %177 = vector.multi_reduction <maximumf>, %176, %cst_49 [1] : vector<64x64xf32> to vector<64xf32>
    %178 = vector.shape_cast %177 : vector<64xf32> to vector<64x1xf32>
    %179 = vector.broadcast %178 : vector<64x1xf32> to vector<64x64xf32>
    %180 = arith.subf %176, %179 : vector<64x64xf32>
    %181 = math.exp %180 : vector<64x64xf32>
    %cst_50 = arith.constant dense<0.000000e+00> : vector<64xf32>
    %182 = vector.multi_reduction <add>, %181, %cst_50 [1] : vector<64x64xf32> to vector<64xf32>
    %183 = vector.shape_cast %182 : vector<64xf32> to vector<64x1xf32>
    %184 = tpu.reciprocal %183 {approx = true} : vector<64x1xf32> -> vector<64x1xf32>
    %185 = vector.broadcast %184 : vector<64x1xf32> to vector<64x64xf32>
    %186 = arith.mulf %181, %185 : vector<64x64xf32>
    %cst_51 = arith.constant dense<0.000000e+00> : vector<64x64xf32>
    %187 = tpu.matmul %186, %164, %cst_51 {dimension_numbers = #tpu.dot_dimension_numbers<[1], [0], [0], [1], [0, 0, 1, 1], [], []>} : vector<64x64xf32>, vector<64x64xf32>, vector<64x64xf32> -> vector<64x64xf32>
    %c320 = arith.constant 320 : index
    %c0_52 = arith.constant 0 : index
    %188 = vector.load %arg3[%c320, %c0_52] : memref<1024x32xf32, #tpu.memory_space<vmem>>, vector<64x32xf32>
    %189 = arith.mulf %187, %173 : vector<64x64xf32>
    %cst_53 = arith.constant dense<0.000000e+00> : vector<64x32xf32>
    %190 = tpu.matmul %189, %188, %cst_53 {dimension_numbers = #tpu.dot_dimension_numbers<[1], [0], [0], [1], [0, 0, 1, 1], [], []>} : vector<64x64xf32>, vector<64x32xf32>, vector<64x32xf32> -> vector<64x32xf32>
    %191 = arith.addf %159, %190 : vector<64x32xf32>
    %c0_54 = arith.constant 0 : index
    %c1024 = arith.constant 1024 : index
    %192 = vector.load %arg2[%c0_54, %c1024] : memref<64x1536xf32, #tpu.memory_space<vmem>>, vector<32x256xf32>
    %cst_55 = arith.constant dense<0.000000e+00> : vector<64x256xf32>
    %193 = tpu.matmul %126, %192, %cst_55 {dimension_numbers = #tpu.dot_dimension_numbers<[1], [0], [0], [1], [0, 0, 1, 1], [], []>} : vector<64x32xf32>, vector<32x256xf32>, vector<64x256xf32> -> vector<64x256xf32>
    %194 = vector.extract_strided_slice %193 {offsets = [0, 0], sizes = [64, 64], strides = [1, 1]} : vector<64x256xf32> to vector<64x64xf32>
    %195 = vector.extract_strided_slice %193 {offsets = [0, 64], sizes = [64, 64], strides = [1, 1]} : vector<64x256xf32> to vector<64x64xf32>
    %196 = vector.extract_strided_slice %193 {offsets = [0, 128], sizes = [64, 64], strides = [1, 1]} : vector<64x256xf32> to vector<64x64xf32>
    %197 = vector.extract_strided_slice %193 {offsets = [0, 192], sizes = [64, 64], strides = [1, 1]} : vector<64x256xf32> to vector<64x64xf32>
    %198 = vector.extract_strided_slice %104 {offsets = [0, 128], sizes = [1, 64], strides = [1, 1]} : vector<1x256xf32> to vector<1x64xf32>
    %199 = vector.broadcast %198 : vector<1x64xf32> to vector<64x64xf32>
    %200 = arith.addf %197, %199 : vector<64x64xf32>
    %201 = arith.negf %200 : vector<64x64xf32>
    %202 = math.exp %201 : vector<64x64xf32>
    %cst_56 = arith.constant 1.000000e+00 : f32
    %203 = vector.broadcast %cst_56 : f32 to vector<64x64xf32>
    %204 = arith.addf %203, %202 : vector<64x64xf32>
    %205 = arith.divf %203, %204 : vector<64x64xf32>
    %cst_57 = arith.constant dense<0.000000e+00> : vector<64x64xf32>
    %206 = tpu.matmul %194, %195, %cst_57 {dimension_numbers = #tpu.dot_dimension_numbers<[1], [1], [0], [0], [0, 0, 1, 0], [], []>} : vector<64x64xf32>, vector<64x64xf32>, vector<64x64xf32> -> vector<64x64xf32>
    %cst_58 = arith.constant -1.000000e+30 : f32
    %207 = vector.broadcast %cst_58 : f32 to vector<64x64xf32>
    %208 = arith.select %20, %206, %207 : vector<64x64xi1>, vector<64x64xf32>
    %cst_59 = arith.constant dense<0xFF800000> : vector<64xf32>
    %209 = vector.multi_reduction <maximumf>, %208, %cst_59 [1] : vector<64x64xf32> to vector<64xf32>
    %210 = vector.shape_cast %209 : vector<64xf32> to vector<64x1xf32>
    %211 = vector.broadcast %210 : vector<64x1xf32> to vector<64x64xf32>
    %212 = arith.subf %208, %211 : vector<64x64xf32>
    %213 = math.exp %212 : vector<64x64xf32>
    %cst_60 = arith.constant dense<0.000000e+00> : vector<64xf32>
    %214 = vector.multi_reduction <add>, %213, %cst_60 [1] : vector<64x64xf32> to vector<64xf32>
    %215 = vector.shape_cast %214 : vector<64xf32> to vector<64x1xf32>
    %216 = tpu.reciprocal %215 {approx = true} : vector<64x1xf32> -> vector<64x1xf32>
    %217 = vector.broadcast %216 : vector<64x1xf32> to vector<64x64xf32>
    %218 = arith.mulf %213, %217 : vector<64x64xf32>
    %cst_61 = arith.constant dense<0.000000e+00> : vector<64x64xf32>
    %219 = tpu.matmul %218, %196, %cst_61 {dimension_numbers = #tpu.dot_dimension_numbers<[1], [0], [0], [1], [0, 0, 1, 1], [], []>} : vector<64x64xf32>, vector<64x64xf32>, vector<64x64xf32> -> vector<64x64xf32>
    %c384 = arith.constant 384 : index
    %c0_62 = arith.constant 0 : index
    %220 = vector.load %arg3[%c384, %c0_62] : memref<1024x32xf32, #tpu.memory_space<vmem>>, vector<64x32xf32>
    %221 = arith.mulf %219, %205 : vector<64x64xf32>
    %cst_63 = arith.constant dense<0.000000e+00> : vector<64x32xf32>
    %222 = tpu.matmul %221, %220, %cst_63 {dimension_numbers = #tpu.dot_dimension_numbers<[1], [0], [0], [1], [0, 0, 1, 1], [], []>} : vector<64x64xf32>, vector<64x32xf32>, vector<64x32xf32> -> vector<64x32xf32>
    %223 = arith.addf %191, %222 : vector<64x32xf32>
    %c0_64 = arith.constant 0 : index
    %c1280 = arith.constant 1280 : index
    %224 = vector.load %arg2[%c0_64, %c1280] : memref<64x1536xf32, #tpu.memory_space<vmem>>, vector<32x256xf32>
    %cst_65 = arith.constant dense<0.000000e+00> : vector<64x256xf32>
    %225 = tpu.matmul %126, %224, %cst_65 {dimension_numbers = #tpu.dot_dimension_numbers<[1], [0], [0], [1], [0, 0, 1, 1], [], []>} : vector<64x32xf32>, vector<32x256xf32>, vector<64x256xf32> -> vector<64x256xf32>
    %226 = vector.extract_strided_slice %225 {offsets = [0, 0], sizes = [64, 64], strides = [1, 1]} : vector<64x256xf32> to vector<64x64xf32>
    %227 = vector.extract_strided_slice %225 {offsets = [0, 64], sizes = [64, 64], strides = [1, 1]} : vector<64x256xf32> to vector<64x64xf32>
    %228 = vector.extract_strided_slice %225 {offsets = [0, 128], sizes = [64, 64], strides = [1, 1]} : vector<64x256xf32> to vector<64x64xf32>
    %229 = vector.extract_strided_slice %225 {offsets = [0, 192], sizes = [64, 64], strides = [1, 1]} : vector<64x256xf32> to vector<64x64xf32>
    %230 = vector.extract_strided_slice %104 {offsets = [0, 192], sizes = [1, 64], strides = [1, 1]} : vector<1x256xf32> to vector<1x64xf32>
    %231 = vector.broadcast %230 : vector<1x64xf32> to vector<64x64xf32>
    %232 = arith.addf %229, %231 : vector<64x64xf32>
    %233 = arith.negf %232 : vector<64x64xf32>
    %234 = math.exp %233 : vector<64x64xf32>
    %cst_66 = arith.constant 1.000000e+00 : f32
    %235 = vector.broadcast %cst_66 : f32 to vector<64x64xf32>
    %236 = arith.addf %235, %234 : vector<64x64xf32>
    %237 = arith.divf %235, %236 : vector<64x64xf32>
    %cst_67 = arith.constant dense<0.000000e+00> : vector<64x64xf32>
    %238 = tpu.matmul %226, %227, %cst_67 {dimension_numbers = #tpu.dot_dimension_numbers<[1], [1], [0], [0], [0, 0, 1, 0], [], []>} : vector<64x64xf32>, vector<64x64xf32>, vector<64x64xf32> -> vector<64x64xf32>
    %cst_68 = arith.constant -1.000000e+30 : f32
    %239 = vector.broadcast %cst_68 : f32 to vector<64x64xf32>
    %240 = arith.select %20, %238, %239 : vector<64x64xi1>, vector<64x64xf32>
    %cst_69 = arith.constant dense<0xFF800000> : vector<64xf32>
    %241 = vector.multi_reduction <maximumf>, %240, %cst_69 [1] : vector<64x64xf32> to vector<64xf32>
    %242 = vector.shape_cast %241 : vector<64xf32> to vector<64x1xf32>
    %243 = vector.broadcast %242 : vector<64x1xf32> to vector<64x64xf32>
    %244 = arith.subf %240, %243 : vector<64x64xf32>
    %245 = math.exp %244 : vector<64x64xf32>
    %cst_70 = arith.constant dense<0.000000e+00> : vector<64xf32>
    %246 = vector.multi_reduction <add>, %245, %cst_70 [1] : vector<64x64xf32> to vector<64xf32>
    %247 = vector.shape_cast %246 : vector<64xf32> to vector<64x1xf32>
    %248 = tpu.reciprocal %247 {approx = true} : vector<64x1xf32> -> vector<64x1xf32>
    %249 = vector.broadcast %248 : vector<64x1xf32> to vector<64x64xf32>
    %250 = arith.mulf %245, %249 : vector<64x64xf32>
    %cst_71 = arith.constant dense<0.000000e+00> : vector<64x64xf32>
    %251 = tpu.matmul %250, %228, %cst_71 {dimension_numbers = #tpu.dot_dimension_numbers<[1], [0], [0], [1], [0, 0, 1, 1], [], []>} : vector<64x64xf32>, vector<64x64xf32>, vector<64x64xf32> -> vector<64x64xf32>
    %c448 = arith.constant 448 : index
    %c0_72 = arith.constant 0 : index
    %252 = vector.load %arg3[%c448, %c0_72] : memref<1024x32xf32, #tpu.memory_space<vmem>>, vector<64x32xf32>
    %253 = arith.mulf %251, %237 : vector<64x64xf32>
    %cst_73 = arith.constant dense<0.000000e+00> : vector<64x32xf32>
    %254 = tpu.matmul %253, %252, %cst_73 {dimension_numbers = #tpu.dot_dimension_numbers<[1], [0], [0], [1], [0, 0, 1, 1], [], []>} : vector<64x64xf32>, vector<64x32xf32>, vector<64x32xf32> -> vector<64x32xf32>
    %255 = arith.addf %223, %254 : vector<64x32xf32>
    %256 = vector.broadcast %101 : vector<1x32xf32> to vector<64x32xf32>
    %257 = arith.addf %255, %256 : vector<64x32xf32>
    %258 = arith.addf %126, %257 : vector<64x32xf32>
    %cst_74 = arith.constant dense<0.000000e+00> : vector<64xf32>
    %259 = vector.multi_reduction <add>, %258, %cst_74 [1] : vector<64x32xf32> to vector<64xf32>
    %260 = vector.shape_cast %259 : vector<64xf32> to vector<64x1xf32>
    %cst_75 = arith.constant 3.200000e+01 : f32
    %261 = vector.broadcast %cst_75 : f32 to vector<64x1xf32>
    %262 = arith.divf %260, %261 : vector<64x1xf32>
    %263 = vector.broadcast %262 : vector<64x1xf32> to vector<64x32xf32>
    %264 = arith.subf %258, %263 : vector<64x32xf32>
    %265 = arith.mulf %264, %264 : vector<64x32xf32>
    %cst_76 = arith.constant dense<0.000000e+00> : vector<64xf32>
    %266 = vector.multi_reduction <add>, %265, %cst_76 [1] : vector<64x32xf32> to vector<64xf32>
    %267 = vector.shape_cast %266 : vector<64xf32> to vector<64x1xf32>
    %cst_77 = arith.constant 3.200000e+01 : f32
    %268 = vector.broadcast %cst_77 : f32 to vector<64x1xf32>
    %269 = arith.divf %267, %268 : vector<64x1xf32>
    %270 = vector.broadcast %262 : vector<64x1xf32> to vector<64x32xf32>
    %271 = arith.subf %258, %270 : vector<64x32xf32>
    %cst_78 = arith.constant 9.99999974E-6 : f32
    %272 = vector.broadcast %cst_78 : f32 to vector<64x1xf32>
    %273 = arith.addf %269, %272 : vector<64x1xf32>
    %274 = math.rsqrt %273 : vector<64x1xf32>
    %275 = vector.broadcast %274 : vector<64x1xf32> to vector<64x32xf32>
    %276 = arith.mulf %271, %275 : vector<64x32xf32>
    %277 = vector.broadcast %102 : vector<1x32xf32> to vector<64x32xf32>
    %278 = arith.mulf %276, %277 : vector<64x32xf32>
    %279 = vector.broadcast %103 : vector<1x32xf32> to vector<64x32xf32>
    %280 = arith.addf %278, %279 : vector<64x32xf32>
    %281 = arith.addf %98, %280 : vector<64x32xf32>
    %282 = vector.extract_strided_slice %29 {offsets = [12, 0], sizes = [1, 32], strides = [1, 1]} : vector<25x256xf32> to vector<1x32xf32>
    %283 = vector.extract_strided_slice %29 {offsets = [13, 0], sizes = [1, 32], strides = [1, 1]} : vector<25x256xf32> to vector<1x32xf32>
    %284 = vector.extract_strided_slice %29 {offsets = [14, 0], sizes = [1, 32], strides = [1, 1]} : vector<25x256xf32> to vector<1x32xf32>
    %285 = vector.extract_strided_slice %29 {offsets = [15, 0], sizes = [1, 32], strides = [1, 1]} : vector<25x256xf32> to vector<1x32xf32>
    %286 = vector.extract_strided_slice %29 {offsets = [16, 0], sizes = [1, 32], strides = [1, 1]} : vector<25x256xf32> to vector<1x32xf32>
    %287 = vector.extract_strided_slice %29 {offsets = [17, 0], sizes = [1, 256], strides = [1, 1]} : vector<25x256xf32> to vector<1x256xf32>
    %cst_79 = arith.constant dense<0.000000e+00> : vector<64xf32>
    %288 = vector.multi_reduction <add>, %281, %cst_79 [1] : vector<64x32xf32> to vector<64xf32>
    %289 = vector.shape_cast %288 : vector<64xf32> to vector<64x1xf32>
    %cst_80 = arith.constant 3.200000e+01 : f32
    %290 = vector.broadcast %cst_80 : f32 to vector<64x1xf32>
    %291 = arith.divf %289, %290 : vector<64x1xf32>
    %292 = vector.broadcast %291 : vector<64x1xf32> to vector<64x32xf32>
    %293 = arith.subf %281, %292 : vector<64x32xf32>
    %294 = arith.mulf %293, %293 : vector<64x32xf32>
    %cst_81 = arith.constant dense<0.000000e+00> : vector<64xf32>
    %295 = vector.multi_reduction <add>, %294, %cst_81 [1] : vector<64x32xf32> to vector<64xf32>
    %296 = vector.shape_cast %295 : vector<64xf32> to vector<64x1xf32>
    %cst_82 = arith.constant 3.200000e+01 : f32
    %297 = vector.broadcast %cst_82 : f32 to vector<64x1xf32>
    %298 = arith.divf %296, %297 : vector<64x1xf32>
    %299 = vector.broadcast %291 : vector<64x1xf32> to vector<64x32xf32>
    %300 = arith.subf %281, %299 : vector<64x32xf32>
    %cst_83 = arith.constant 9.99999974E-6 : f32
    %301 = vector.broadcast %cst_83 : f32 to vector<64x1xf32>
    %302 = arith.addf %298, %301 : vector<64x1xf32>
    %303 = math.rsqrt %302 : vector<64x1xf32>
    %304 = vector.broadcast %303 : vector<64x1xf32> to vector<64x32xf32>
    %305 = arith.mulf %300, %304 : vector<64x32xf32>
    %306 = vector.broadcast %282 : vector<1x32xf32> to vector<64x32xf32>
    %307 = arith.mulf %305, %306 : vector<64x32xf32>
    %308 = vector.broadcast %283 : vector<1x32xf32> to vector<64x32xf32>
    %309 = arith.addf %307, %308 : vector<64x32xf32>
    %c32 = arith.constant 32 : index
    %c0_84 = arith.constant 0 : index
    %310 = vector.load %arg2[%c32, %c0_84] : memref<64x1536xf32, #tpu.memory_space<vmem>>, vector<32x512xf32>
    %cst_85 = arith.constant dense<0.000000e+00> : vector<64x512xf32>
    %311 = tpu.matmul %309, %310, %cst_85 {dimension_numbers = #tpu.dot_dimension_numbers<[1], [0], [0], [1], [0, 0, 1, 1], [], []>} : vector<64x32xf32>, vector<32x512xf32>, vector<64x512xf32> -> vector<64x512xf32>
    %312 = vector.extract_strided_slice %311 {offsets = [0, 0], sizes = [64, 256], strides = [1, 1]} : vector<64x512xf32> to vector<64x256xf32>
    %313 = vector.extract_strided_slice %311 {offsets = [0, 256], sizes = [64, 256], strides = [1, 1]} : vector<64x512xf32> to vector<64x256xf32>
    %314 = vector.broadcast %287 : vector<1x256xf32> to vector<64x256xf32>
    %315 = arith.addf %313, %314 : vector<64x256xf32>
    %316 = arith.negf %315 : vector<64x256xf32>
    %317 = math.exp %316 : vector<64x256xf32>
    %cst_86 = arith.constant 1.000000e+00 : f32
    %318 = vector.broadcast %cst_86 : f32 to vector<64x256xf32>
    %319 = arith.addf %318, %317 : vector<64x256xf32>
    %320 = arith.divf %318, %319 : vector<64x256xf32>
    %cst_87 = arith.constant dense<0.000000e+00> : vector<64x256xf32>
    %321 = tpu.matmul %9, %312, %cst_87 {dimension_numbers = #tpu.dot_dimension_numbers<[1], [0], [0], [1], [0, 0, 1, 1], [], []>} : vector<64x64xf32>, vector<64x256xf32>, vector<64x256xf32> -> vector<64x256xf32>
    %c512_88 = arith.constant 512 : index
    %c0_89 = arith.constant 0 : index
    %322 = vector.load %arg3[%c512_88, %c0_89] : memref<1024x32xf32, #tpu.memory_space<vmem>>, vector<256x32xf32>
    %323 = arith.mulf %321, %320 : vector<64x256xf32>
    %cst_90 = arith.constant dense<0.000000e+00> : vector<64x32xf32>
    %324 = tpu.matmul %323, %322, %cst_90 {dimension_numbers = #tpu.dot_dimension_numbers<[1], [0], [0], [1], [0, 0, 1, 1], [], []>} : vector<64x256xf32>, vector<256x32xf32>, vector<64x32xf32> -> vector<64x32xf32>
    %325 = vector.broadcast %284 : vector<1x32xf32> to vector<64x32xf32>
    %326 = arith.addf %324, %325 : vector<64x32xf32>
    %327 = arith.addf %309, %326 : vector<64x32xf32>
    %cst_91 = arith.constant dense<0.000000e+00> : vector<64xf32>
    %328 = vector.multi_reduction <add>, %327, %cst_91 [1] : vector<64x32xf32> to vector<64xf32>
    %329 = vector.shape_cast %328 : vector<64xf32> to vector<64x1xf32>
    %cst_92 = arith.constant 3.200000e+01 : f32
    %330 = vector.broadcast %cst_92 : f32 to vector<64x1xf32>
    %331 = arith.divf %329, %330 : vector<64x1xf32>
    %332 = vector.broadcast %331 : vector<64x1xf32> to vector<64x32xf32>
    %333 = arith.subf %327, %332 : vector<64x32xf32>
    %334 = arith.mulf %333, %333 : vector<64x32xf32>
    %cst_93 = arith.constant dense<0.000000e+00> : vector<64xf32>
    %335 = vector.multi_reduction <add>, %334, %cst_93 [1] : vector<64x32xf32> to vector<64xf32>
    %336 = vector.shape_cast %335 : vector<64xf32> to vector<64x1xf32>
    %cst_94 = arith.constant 3.200000e+01 : f32
    %337 = vector.broadcast %cst_94 : f32 to vector<64x1xf32>
    %338 = arith.divf %336, %337 : vector<64x1xf32>
    %339 = vector.broadcast %331 : vector<64x1xf32> to vector<64x32xf32>
    %340 = arith.subf %327, %339 : vector<64x32xf32>
    %cst_95 = arith.constant 9.99999974E-6 : f32
    %341 = vector.broadcast %cst_95 : f32 to vector<64x1xf32>
    %342 = arith.addf %338, %341 : vector<64x1xf32>
    %343 = math.rsqrt %342 : vector<64x1xf32>
    %344 = vector.broadcast %343 : vector<64x1xf32> to vector<64x32xf32>
    %345 = arith.mulf %340, %344 : vector<64x32xf32>
    %346 = vector.broadcast %285 : vector<1x32xf32> to vector<64x32xf32>
    %347 = arith.mulf %345, %346 : vector<64x32xf32>
    %348 = vector.broadcast %286 : vector<1x32xf32> to vector<64x32xf32>
    %349 = arith.addf %347, %348 : vector<64x32xf32>
    %350 = arith.addf %281, %349 : vector<64x32xf32>
    %351 = vector.extract_strided_slice %29 {offsets = [18, 0], sizes = [1, 32], strides = [1, 1]} : vector<25x256xf32> to vector<1x32xf32>
    %352 = vector.extract_strided_slice %29 {offsets = [19, 0], sizes = [1, 32], strides = [1, 1]} : vector<25x256xf32> to vector<1x32xf32>
    %353 = vector.extract_strided_slice %29 {offsets = [20, 0], sizes = [1, 32], strides = [1, 1]} : vector<25x256xf32> to vector<1x32xf32>
    %354 = vector.extract_strided_slice %29 {offsets = [21, 0], sizes = [1, 32], strides = [1, 1]} : vector<25x256xf32> to vector<1x32xf32>
    %355 = vector.extract_strided_slice %29 {offsets = [22, 0], sizes = [1, 32], strides = [1, 1]} : vector<25x256xf32> to vector<1x32xf32>
    %356 = vector.extract_strided_slice %29 {offsets = [23, 0], sizes = [1, 256], strides = [1, 1]} : vector<25x256xf32> to vector<1x256xf32>
    %cst_96 = arith.constant dense<0.000000e+00> : vector<64xf32>
    %357 = vector.multi_reduction <add>, %350, %cst_96 [1] : vector<64x32xf32> to vector<64xf32>
    %358 = vector.shape_cast %357 : vector<64xf32> to vector<64x1xf32>
    %cst_97 = arith.constant 3.200000e+01 : f32
    %359 = vector.broadcast %cst_97 : f32 to vector<64x1xf32>
    %360 = arith.divf %358, %359 : vector<64x1xf32>
    %361 = vector.broadcast %360 : vector<64x1xf32> to vector<64x32xf32>
    %362 = arith.subf %350, %361 : vector<64x32xf32>
    %363 = arith.mulf %362, %362 : vector<64x32xf32>
    %cst_98 = arith.constant dense<0.000000e+00> : vector<64xf32>
    %364 = vector.multi_reduction <add>, %363, %cst_98 [1] : vector<64x32xf32> to vector<64xf32>
    %365 = vector.shape_cast %364 : vector<64xf32> to vector<64x1xf32>
    %cst_99 = arith.constant 3.200000e+01 : f32
    %366 = vector.broadcast %cst_99 : f32 to vector<64x1xf32>
    %367 = arith.divf %365, %366 : vector<64x1xf32>
    %368 = vector.broadcast %360 : vector<64x1xf32> to vector<64x32xf32>
    %369 = arith.subf %350, %368 : vector<64x32xf32>
    %cst_100 = arith.constant 9.99999974E-6 : f32
    %370 = vector.broadcast %cst_100 : f32 to vector<64x1xf32>
    %371 = arith.addf %367, %370 : vector<64x1xf32>
    %372 = math.rsqrt %371 : vector<64x1xf32>
    %373 = vector.broadcast %372 : vector<64x1xf32> to vector<64x32xf32>
    %374 = arith.mulf %369, %373 : vector<64x32xf32>
    %375 = vector.broadcast %351 : vector<1x32xf32> to vector<64x32xf32>
    %376 = arith.mulf %374, %375 : vector<64x32xf32>
    %377 = vector.broadcast %352 : vector<1x32xf32> to vector<64x32xf32>
    %378 = arith.addf %376, %377 : vector<64x32xf32>
    %cst_101 = arith.constant 0.000000e+00 : f32
    %379 = vector.broadcast %cst_101 : f32 to vector<64x32xf32>
    %c32_102 = arith.constant 32 : index
    %c512_103 = arith.constant 512 : index
    %380 = vector.load %arg2[%c32_102, %c512_103] : memref<64x1536xf32, #tpu.memory_space<vmem>>, vector<32x256xf32>
    %cst_104 = arith.constant dense<0.000000e+00> : vector<64x256xf32>
    %381 = tpu.matmul %378, %380, %cst_104 {dimension_numbers = #tpu.dot_dimension_numbers<[1], [0], [0], [1], [0, 0, 1, 1], [], []>} : vector<64x32xf32>, vector<32x256xf32>, vector<64x256xf32> -> vector<64x256xf32>
    %382 = vector.extract_strided_slice %381 {offsets = [0, 0], sizes = [64, 64], strides = [1, 1]} : vector<64x256xf32> to vector<64x64xf32>
    %383 = vector.extract_strided_slice %381 {offsets = [0, 64], sizes = [64, 64], strides = [1, 1]} : vector<64x256xf32> to vector<64x64xf32>
    %384 = vector.extract_strided_slice %381 {offsets = [0, 128], sizes = [64, 64], strides = [1, 1]} : vector<64x256xf32> to vector<64x64xf32>
    %385 = vector.extract_strided_slice %381 {offsets = [0, 192], sizes = [64, 64], strides = [1, 1]} : vector<64x256xf32> to vector<64x64xf32>
    %386 = vector.extract_strided_slice %356 {offsets = [0, 0], sizes = [1, 64], strides = [1, 1]} : vector<1x256xf32> to vector<1x64xf32>
    %387 = vector.broadcast %386 : vector<1x64xf32> to vector<64x64xf32>
    %388 = arith.addf %385, %387 : vector<64x64xf32>
    %389 = arith.negf %388 : vector<64x64xf32>
    %390 = math.exp %389 : vector<64x64xf32>
    %cst_105 = arith.constant 1.000000e+00 : f32
    %391 = vector.broadcast %cst_105 : f32 to vector<64x64xf32>
    %392 = arith.addf %391, %390 : vector<64x64xf32>
    %393 = arith.divf %391, %392 : vector<64x64xf32>
    %cst_106 = arith.constant dense<0.000000e+00> : vector<64x64xf32>
    %394 = tpu.matmul %382, %383, %cst_106 {dimension_numbers = #tpu.dot_dimension_numbers<[1], [1], [0], [0], [0, 0, 1, 0], [], []>} : vector<64x64xf32>, vector<64x64xf32>, vector<64x64xf32> -> vector<64x64xf32>
    %cst_107 = arith.constant -1.000000e+30 : f32
    %395 = vector.broadcast %cst_107 : f32 to vector<64x64xf32>
    %396 = arith.select %20, %394, %395 : vector<64x64xi1>, vector<64x64xf32>
    %cst_108 = arith.constant dense<0xFF800000> : vector<64xf32>
    %397 = vector.multi_reduction <maximumf>, %396, %cst_108 [1] : vector<64x64xf32> to vector<64xf32>
    %398 = vector.shape_cast %397 : vector<64xf32> to vector<64x1xf32>
    %399 = vector.broadcast %398 : vector<64x1xf32> to vector<64x64xf32>
    %400 = arith.subf %396, %399 : vector<64x64xf32>
    %401 = math.exp %400 : vector<64x64xf32>
    %cst_109 = arith.constant dense<0.000000e+00> : vector<64xf32>
    %402 = vector.multi_reduction <add>, %401, %cst_109 [1] : vector<64x64xf32> to vector<64xf32>
    %403 = vector.shape_cast %402 : vector<64xf32> to vector<64x1xf32>
    %404 = tpu.reciprocal %403 {approx = true} : vector<64x1xf32> -> vector<64x1xf32>
    %405 = vector.broadcast %404 : vector<64x1xf32> to vector<64x64xf32>
    %406 = arith.mulf %401, %405 : vector<64x64xf32>
    %cst_110 = arith.constant dense<0.000000e+00> : vector<64x64xf32>
    %407 = tpu.matmul %406, %384, %cst_110 {dimension_numbers = #tpu.dot_dimension_numbers<[1], [0], [0], [1], [0, 0, 1, 1], [], []>} : vector<64x64xf32>, vector<64x64xf32>, vector<64x64xf32> -> vector<64x64xf32>
    %c768_111 = arith.constant 768 : index
    %c0_112 = arith.constant 0 : index
    %408 = vector.load %arg3[%c768_111, %c0_112] : memref<1024x32xf32, #tpu.memory_space<vmem>>, vector<64x32xf32>
    %409 = arith.mulf %407, %393 : vector<64x64xf32>
    %cst_113 = arith.constant dense<0.000000e+00> : vector<64x32xf32>
    %410 = tpu.matmul %409, %408, %cst_113 {dimension_numbers = #tpu.dot_dimension_numbers<[1], [0], [0], [1], [0, 0, 1, 1], [], []>} : vector<64x64xf32>, vector<64x32xf32>, vector<64x32xf32> -> vector<64x32xf32>
    %411 = arith.addf %379, %410 : vector<64x32xf32>
    %c32_114 = arith.constant 32 : index
    %c768_115 = arith.constant 768 : index
    %412 = vector.load %arg2[%c32_114, %c768_115] : memref<64x1536xf32, #tpu.memory_space<vmem>>, vector<32x256xf32>
    %cst_116 = arith.constant dense<0.000000e+00> : vector<64x256xf32>
    %413 = tpu.matmul %378, %412, %cst_116 {dimension_numbers = #tpu.dot_dimension_numbers<[1], [0], [0], [1], [0, 0, 1, 1], [], []>} : vector<64x32xf32>, vector<32x256xf32>, vector<64x256xf32> -> vector<64x256xf32>
    %414 = vector.extract_strided_slice %413 {offsets = [0, 0], sizes = [64, 64], strides = [1, 1]} : vector<64x256xf32> to vector<64x64xf32>
    %415 = vector.extract_strided_slice %413 {offsets = [0, 64], sizes = [64, 64], strides = [1, 1]} : vector<64x256xf32> to vector<64x64xf32>
    %416 = vector.extract_strided_slice %413 {offsets = [0, 128], sizes = [64, 64], strides = [1, 1]} : vector<64x256xf32> to vector<64x64xf32>
    %417 = vector.extract_strided_slice %413 {offsets = [0, 192], sizes = [64, 64], strides = [1, 1]} : vector<64x256xf32> to vector<64x64xf32>
    %418 = vector.extract_strided_slice %356 {offsets = [0, 64], sizes = [1, 64], strides = [1, 1]} : vector<1x256xf32> to vector<1x64xf32>
    %419 = vector.broadcast %418 : vector<1x64xf32> to vector<64x64xf32>
    %420 = arith.addf %417, %419 : vector<64x64xf32>
    %421 = arith.negf %420 : vector<64x64xf32>
    %422 = math.exp %421 : vector<64x64xf32>
    %cst_117 = arith.constant 1.000000e+00 : f32
    %423 = vector.broadcast %cst_117 : f32 to vector<64x64xf32>
    %424 = arith.addf %423, %422 : vector<64x64xf32>
    %425 = arith.divf %423, %424 : vector<64x64xf32>
    %cst_118 = arith.constant dense<0.000000e+00> : vector<64x64xf32>
    %426 = tpu.matmul %414, %415, %cst_118 {dimension_numbers = #tpu.dot_dimension_numbers<[1], [1], [0], [0], [0, 0, 1, 0], [], []>} : vector<64x64xf32>, vector<64x64xf32>, vector<64x64xf32> -> vector<64x64xf32>
    %cst_119 = arith.constant -1.000000e+30 : f32
    %427 = vector.broadcast %cst_119 : f32 to vector<64x64xf32>
    %428 = arith.select %20, %426, %427 : vector<64x64xi1>, vector<64x64xf32>
    %cst_120 = arith.constant dense<0xFF800000> : vector<64xf32>
    %429 = vector.multi_reduction <maximumf>, %428, %cst_120 [1] : vector<64x64xf32> to vector<64xf32>
    %430 = vector.shape_cast %429 : vector<64xf32> to vector<64x1xf32>
    %431 = vector.broadcast %430 : vector<64x1xf32> to vector<64x64xf32>
    %432 = arith.subf %428, %431 : vector<64x64xf32>
    %433 = math.exp %432 : vector<64x64xf32>
    %cst_121 = arith.constant dense<0.000000e+00> : vector<64xf32>
    %434 = vector.multi_reduction <add>, %433, %cst_121 [1] : vector<64x64xf32> to vector<64xf32>
    %435 = vector.shape_cast %434 : vector<64xf32> to vector<64x1xf32>
    %436 = tpu.reciprocal %435 {approx = true} : vector<64x1xf32> -> vector<64x1xf32>
    %437 = vector.broadcast %436 : vector<64x1xf32> to vector<64x64xf32>
    %438 = arith.mulf %433, %437 : vector<64x64xf32>
    %cst_122 = arith.constant dense<0.000000e+00> : vector<64x64xf32>
    %439 = tpu.matmul %438, %416, %cst_122 {dimension_numbers = #tpu.dot_dimension_numbers<[1], [0], [0], [1], [0, 0, 1, 1], [], []>} : vector<64x64xf32>, vector<64x64xf32>, vector<64x64xf32> -> vector<64x64xf32>
    %c832 = arith.constant 832 : index
    %c0_123 = arith.constant 0 : index
    %440 = vector.load %arg3[%c832, %c0_123] : memref<1024x32xf32, #tpu.memory_space<vmem>>, vector<64x32xf32>
    %441 = arith.mulf %439, %425 : vector<64x64xf32>
    %cst_124 = arith.constant dense<0.000000e+00> : vector<64x32xf32>
    %442 = tpu.matmul %441, %440, %cst_124 {dimension_numbers = #tpu.dot_dimension_numbers<[1], [0], [0], [1], [0, 0, 1, 1], [], []>} : vector<64x64xf32>, vector<64x32xf32>, vector<64x32xf32> -> vector<64x32xf32>
    %443 = arith.addf %411, %442 : vector<64x32xf32>
    %c32_125 = arith.constant 32 : index
    %c1024_126 = arith.constant 1024 : index
    %444 = vector.load %arg2[%c32_125, %c1024_126] : memref<64x1536xf32, #tpu.memory_space<vmem>>, vector<32x256xf32>
    %cst_127 = arith.constant dense<0.000000e+00> : vector<64x256xf32>
    %445 = tpu.matmul %378, %444, %cst_127 {dimension_numbers = #tpu.dot_dimension_numbers<[1], [0], [0], [1], [0, 0, 1, 1], [], []>} : vector<64x32xf32>, vector<32x256xf32>, vector<64x256xf32> -> vector<64x256xf32>
    %446 = vector.extract_strided_slice %445 {offsets = [0, 0], sizes = [64, 64], strides = [1, 1]} : vector<64x256xf32> to vector<64x64xf32>
    %447 = vector.extract_strided_slice %445 {offsets = [0, 64], sizes = [64, 64], strides = [1, 1]} : vector<64x256xf32> to vector<64x64xf32>
    %448 = vector.extract_strided_slice %445 {offsets = [0, 128], sizes = [64, 64], strides = [1, 1]} : vector<64x256xf32> to vector<64x64xf32>
    %449 = vector.extract_strided_slice %445 {offsets = [0, 192], sizes = [64, 64], strides = [1, 1]} : vector<64x256xf32> to vector<64x64xf32>
    %450 = vector.extract_strided_slice %356 {offsets = [0, 128], sizes = [1, 64], strides = [1, 1]} : vector<1x256xf32> to vector<1x64xf32>
    %451 = vector.broadcast %450 : vector<1x64xf32> to vector<64x64xf32>
    %452 = arith.addf %449, %451 : vector<64x64xf32>
    %453 = arith.negf %452 : vector<64x64xf32>
    %454 = math.exp %453 : vector<64x64xf32>
    %cst_128 = arith.constant 1.000000e+00 : f32
    %455 = vector.broadcast %cst_128 : f32 to vector<64x64xf32>
    %456 = arith.addf %455, %454 : vector<64x64xf32>
    %457 = arith.divf %455, %456 : vector<64x64xf32>
    %cst_129 = arith.constant dense<0.000000e+00> : vector<64x64xf32>
    %458 = tpu.matmul %446, %447, %cst_129 {dimension_numbers = #tpu.dot_dimension_numbers<[1], [1], [0], [0], [0, 0, 1, 0], [], []>} : vector<64x64xf32>, vector<64x64xf32>, vector<64x64xf32> -> vector<64x64xf32>
    %cst_130 = arith.constant -1.000000e+30 : f32
    %459 = vector.broadcast %cst_130 : f32 to vector<64x64xf32>
    %460 = arith.select %20, %458, %459 : vector<64x64xi1>, vector<64x64xf32>
    %cst_131 = arith.constant dense<0xFF800000> : vector<64xf32>
    %461 = vector.multi_reduction <maximumf>, %460, %cst_131 [1] : vector<64x64xf32> to vector<64xf32>
    %462 = vector.shape_cast %461 : vector<64xf32> to vector<64x1xf32>
    %463 = vector.broadcast %462 : vector<64x1xf32> to vector<64x64xf32>
    %464 = arith.subf %460, %463 : vector<64x64xf32>
    %465 = math.exp %464 : vector<64x64xf32>
    %cst_132 = arith.constant dense<0.000000e+00> : vector<64xf32>
    %466 = vector.multi_reduction <add>, %465, %cst_132 [1] : vector<64x64xf32> to vector<64xf32>
    %467 = vector.shape_cast %466 : vector<64xf32> to vector<64x1xf32>
    %468 = tpu.reciprocal %467 {approx = true} : vector<64x1xf32> -> vector<64x1xf32>
    %469 = vector.broadcast %468 : vector<64x1xf32> to vector<64x64xf32>
    %470 = arith.mulf %465, %469 : vector<64x64xf32>
    %cst_133 = arith.constant dense<0.000000e+00> : vector<64x64xf32>
    %471 = tpu.matmul %470, %448, %cst_133 {dimension_numbers = #tpu.dot_dimension_numbers<[1], [0], [0], [1], [0, 0, 1, 1], [], []>} : vector<64x64xf32>, vector<64x64xf32>, vector<64x64xf32> -> vector<64x64xf32>
    %c896 = arith.constant 896 : index
    %c0_134 = arith.constant 0 : index
    %472 = vector.load %arg3[%c896, %c0_134] : memref<1024x32xf32, #tpu.memory_space<vmem>>, vector<64x32xf32>
    %473 = arith.mulf %471, %457 : vector<64x64xf32>
    %cst_135 = arith.constant dense<0.000000e+00> : vector<64x32xf32>
    %474 = tpu.matmul %473, %472, %cst_135 {dimension_numbers = #tpu.dot_dimension_numbers<[1], [0], [0], [1], [0, 0, 1, 1], [], []>} : vector<64x64xf32>, vector<64x32xf32>, vector<64x32xf32> -> vector<64x32xf32>
    %475 = arith.addf %443, %474 : vector<64x32xf32>
    %c32_136 = arith.constant 32 : index
    %c1280_137 = arith.constant 1280 : index
    %476 = vector.load %arg2[%c32_136, %c1280_137] : memref<64x1536xf32, #tpu.memory_space<vmem>>, vector<32x256xf32>
    %cst_138 = arith.constant dense<0.000000e+00> : vector<64x256xf32>
    %477 = tpu.matmul %378, %476, %cst_138 {dimension_numbers = #tpu.dot_dimension_numbers<[1], [0], [0], [1], [0, 0, 1, 1], [], []>} : vector<64x32xf32>, vector<32x256xf32>, vector<64x256xf32> -> vector<64x256xf32>
    %478 = vector.extract_strided_slice %477 {offsets = [0, 0], sizes = [64, 64], strides = [1, 1]} : vector<64x256xf32> to vector<64x64xf32>
    %479 = vector.extract_strided_slice %477 {offsets = [0, 64], sizes = [64, 64], strides = [1, 1]} : vector<64x256xf32> to vector<64x64xf32>
    %480 = vector.extract_strided_slice %477 {offsets = [0, 128], sizes = [64, 64], strides = [1, 1]} : vector<64x256xf32> to vector<64x64xf32>
    %481 = vector.extract_strided_slice %477 {offsets = [0, 192], sizes = [64, 64], strides = [1, 1]} : vector<64x256xf32> to vector<64x64xf32>
    %482 = vector.extract_strided_slice %356 {offsets = [0, 192], sizes = [1, 64], strides = [1, 1]} : vector<1x256xf32> to vector<1x64xf32>
    %483 = vector.broadcast %482 : vector<1x64xf32> to vector<64x64xf32>
    %484 = arith.addf %481, %483 : vector<64x64xf32>
    %485 = arith.negf %484 : vector<64x64xf32>
    %486 = math.exp %485 : vector<64x64xf32>
    %cst_139 = arith.constant 1.000000e+00 : f32
    %487 = vector.broadcast %cst_139 : f32 to vector<64x64xf32>
    %488 = arith.addf %487, %486 : vector<64x64xf32>
    %489 = arith.divf %487, %488 : vector<64x64xf32>
    %cst_140 = arith.constant dense<0.000000e+00> : vector<64x64xf32>
    %490 = tpu.matmul %478, %479, %cst_140 {dimension_numbers = #tpu.dot_dimension_numbers<[1], [1], [0], [0], [0, 0, 1, 0], [], []>} : vector<64x64xf32>, vector<64x64xf32>, vector<64x64xf32> -> vector<64x64xf32>
    %cst_141 = arith.constant -1.000000e+30 : f32
    %491 = vector.broadcast %cst_141 : f32 to vector<64x64xf32>
    %492 = arith.select %20, %490, %491 : vector<64x64xi1>, vector<64x64xf32>
    %cst_142 = arith.constant dense<0xFF800000> : vector<64xf32>
    %493 = vector.multi_reduction <maximumf>, %492, %cst_142 [1] : vector<64x64xf32> to vector<64xf32>
    %494 = vector.shape_cast %493 : vector<64xf32> to vector<64x1xf32>
    %495 = vector.broadcast %494 : vector<64x1xf32> to vector<64x64xf32>
    %496 = arith.subf %492, %495 : vector<64x64xf32>
    %497 = math.exp %496 : vector<64x64xf32>
    %cst_143 = arith.constant dense<0.000000e+00> : vector<64xf32>
    %498 = vector.multi_reduction <add>, %497, %cst_143 [1] : vector<64x64xf32> to vector<64xf32>
    %499 = vector.shape_cast %498 : vector<64xf32> to vector<64x1xf32>
    %500 = tpu.reciprocal %499 {approx = true} : vector<64x1xf32> -> vector<64x1xf32>
    %501 = vector.broadcast %500 : vector<64x1xf32> to vector<64x64xf32>
    %502 = arith.mulf %497, %501 : vector<64x64xf32>
    %cst_144 = arith.constant dense<0.000000e+00> : vector<64x64xf32>
    %503 = tpu.matmul %502, %480, %cst_144 {dimension_numbers = #tpu.dot_dimension_numbers<[1], [0], [0], [1], [0, 0, 1, 1], [], []>} : vector<64x64xf32>, vector<64x64xf32>, vector<64x64xf32> -> vector<64x64xf32>
    %c960 = arith.constant 960 : index
    %c0_145 = arith.constant 0 : index
    %504 = vector.load %arg3[%c960, %c0_145] : memref<1024x32xf32, #tpu.memory_space<vmem>>, vector<64x32xf32>
    %505 = arith.mulf %503, %489 : vector<64x64xf32>
    %cst_146 = arith.constant dense<0.000000e+00> : vector<64x32xf32>
    %506 = tpu.matmul %505, %504, %cst_146 {dimension_numbers = #tpu.dot_dimension_numbers<[1], [0], [0], [1], [0, 0, 1, 1], [], []>} : vector<64x64xf32>, vector<64x32xf32>, vector<64x32xf32> -> vector<64x32xf32>
    %507 = arith.addf %475, %506 : vector<64x32xf32>
    %508 = vector.broadcast %353 : vector<1x32xf32> to vector<64x32xf32>
    %509 = arith.addf %507, %508 : vector<64x32xf32>
    %510 = arith.addf %378, %509 : vector<64x32xf32>
    %cst_147 = arith.constant dense<0.000000e+00> : vector<64xf32>
    %511 = vector.multi_reduction <add>, %510, %cst_147 [1] : vector<64x32xf32> to vector<64xf32>
    %512 = vector.shape_cast %511 : vector<64xf32> to vector<64x1xf32>
    %cst_148 = arith.constant 3.200000e+01 : f32
    %513 = vector.broadcast %cst_148 : f32 to vector<64x1xf32>
    %514 = arith.divf %512, %513 : vector<64x1xf32>
    %515 = vector.broadcast %514 : vector<64x1xf32> to vector<64x32xf32>
    %516 = arith.subf %510, %515 : vector<64x32xf32>
    %517 = arith.mulf %516, %516 : vector<64x32xf32>
    %cst_149 = arith.constant dense<0.000000e+00> : vector<64xf32>
    %518 = vector.multi_reduction <add>, %517, %cst_149 [1] : vector<64x32xf32> to vector<64xf32>
    %519 = vector.shape_cast %518 : vector<64xf32> to vector<64x1xf32>
    %cst_150 = arith.constant 3.200000e+01 : f32
    %520 = vector.broadcast %cst_150 : f32 to vector<64x1xf32>
    %521 = arith.divf %519, %520 : vector<64x1xf32>
    %522 = vector.broadcast %514 : vector<64x1xf32> to vector<64x32xf32>
    %523 = arith.subf %510, %522 : vector<64x32xf32>
    %cst_151 = arith.constant 9.99999974E-6 : f32
    %524 = vector.broadcast %cst_151 : f32 to vector<64x1xf32>
    %525 = arith.addf %521, %524 : vector<64x1xf32>
    %526 = math.rsqrt %525 : vector<64x1xf32>
    %527 = vector.broadcast %526 : vector<64x1xf32> to vector<64x32xf32>
    %528 = arith.mulf %523, %527 : vector<64x32xf32>
    %529 = vector.broadcast %354 : vector<1x32xf32> to vector<64x32xf32>
    %530 = arith.mulf %528, %529 : vector<64x32xf32>
    %531 = vector.broadcast %355 : vector<1x32xf32> to vector<64x32xf32>
    %532 = arith.addf %530, %531 : vector<64x32xf32>
    %533 = arith.addf %350, %532 : vector<64x32xf32>
    %534 = vector.extract_strided_slice %533 {offsets = [0, 0], sizes = [8, 32], strides = [1, 1]} : vector<64x32xf32> to vector<8x32xf32>
    %535 = vector.extract_strided_slice %533 {offsets = [32, 0], sizes = [8, 32], strides = [1, 1]} : vector<64x32xf32> to vector<8x32xf32>
    %536 = tpu.concatenate %534, %535 in 0 : vector<8x32xf32>, vector<8x32xf32> -> vector<16x32xf32>
    %537 = vector.extract_strided_slice %29 {offsets = [24, 0], sizes = [1, 128], strides = [1, 1]} : vector<25x256xf32> to vector<1x128xf32>
    %c0_152 = arith.constant 0 : index
    %c0_153 = arith.constant 0 : index
    %538 = vector.load %arg5[%c0_152, %c0_153] : memref<32x128xf32, #tpu.memory_space<vmem>>, vector<32x128xf32>
    %cst_154 = arith.constant dense<0.000000e+00> : vector<16x128xf32>
    %539 = tpu.matmul %536, %538, %cst_154 {dimension_numbers = #tpu.dot_dimension_numbers<[1], [0], [0], [1], [0, 0, 1, 1], [], []>} : vector<16x32xf32>, vector<32x128xf32>, vector<16x128xf32> -> vector<16x128xf32>
    %540 = vector.broadcast %537 : vector<1x128xf32> to vector<16x128xf32>
    %541 = arith.addf %539, %540 : vector<16x128xf32>
    %c0_155 = arith.constant 0 : index
    %c0_156 = arith.constant 0 : index
    %542 = vector.load %arg6[%c0_155, %c0_156] : memref<16x128xf32, #tpu.memory_space<vmem>>, vector<16x128xf32>
    tpu.vector_store %arg6[%c0_155, %c0_156], %541 {strides = array<i32>} : memref<16x128xf32, #tpu.memory_space<vmem>>, vector<16x128xf32>,
    return
  }
}

</mosaic_0001>

<llo_original>
// kernel: tpu_custom_call.1
$region0: #{tpu_custom_call.1}
  #allocation0 [shape = 'u32[]', space=smem, size = 0x4, offset = 0x4, fixed_abs, tag = 'smem constant byte address 0x4 - core index']
  #allocation1 [shape = 'u32[72,128]{1,0:T(1,128)}', space=vmem, size = 0x9000, scoped, tag = 'internal scratch']
  %s0 = inlined_call_operand.vmem [shape: s32[64,1], index: 0, kind: input, shape index: {}]
  %s1 = inlined_call_operand.vmem [shape: f32[16,32], index: 1, kind: input, shape index: {}]
  %s2 = inlined_call_operand.vmem [shape: f32[64,1536], index: 2, kind: input, shape index: {}]
  %s3 = inlined_call_operand.vmem [shape: f32[1024,32], index: 3, kind: input, shape index: {}]
  %s4 = inlined_call_operand.vmem [shape: f32[25,256], index: 4, kind: input, shape index: {}]
  %s5 = inlined_call_operand.vmem [shape: f32[32,128], index: 5, kind: input, shape index: {}]
  %s6 = inlined_call_operand.hbm [shape: f32[16,128], index: 6, kind: output, shape index: {}]
  %s7 = sld [smem:[#allocation0]]
  $region34: #{tpu_custom_call.1} parent=0
    _
  %s9 = ssub.s32 1, %s7
  %s10 = scalar_select 0, %s9, %s7
  $region1: #{tpu_custom_call.1} parent=0
    #allocation2 [shape = 'u8[8192]{0}', space=vmem, size = 0x2000, scoped, tag = 'output window, operand 0, single buffered']
    #allocation3 [shape = 's32[1]{0}', space=sflag, size = 0x4, scoped, tag = 'scoped memory for tpu_custom_call.1']
    %11 = vsyncpa [#allocation3], 0
    // Predicated region
    $region2: #{tpu_custom_call.1} parent=1 // pred_check
      _
    $region3: #{tpu_custom_call.1} parent=1 // pred_check_branch
      %13 = sbr.rel (0) target = $region5
    $region4: #{tpu_custom_call.1} parent=1 // pred_region
      _
    $region5: #{tpu_custom_call.1} parent=1 // pred_fallthru
      _
    // Predicated region
    $region6: #{tpu_custom_call.1} parent=1 // pred_check
      _
    $region7: #{tpu_custom_call.1} parent=1 // pred_check_branch
      %15 = sbr.rel (0) target = $region9
    $region8: #{tpu_custom_call.1} parent=1 // pred_region
      _
    $region9: #{tpu_custom_call.1} parent=1 // pred_fallthru
      _
    // Predicated region
    $region10: #{tpu_custom_call.1} parent=1 // pred_check
      _
    $region11: #{tpu_custom_call.1} parent=1 // pred_check_branch
      %17 = sbr.rel (0) target = $region13
    $region12: #{tpu_custom_call.1} parent=1 // pred_region
      _
    $region13: #{tpu_custom_call.1} parent=1 // pred_fallthru
      _
    // Predicated region
    $region14: #{tpu_custom_call.1} parent=1 // pred_check
      _
    $region15: #{tpu_custom_call.1} parent=1 // pred_check_branch
      %19 = sbr.rel (0) target = $region17
    $region16: #{tpu_custom_call.1} parent=1 // pred_region
      _
    $region17: #{tpu_custom_call.1} parent=1 // pred_fallthru
      _
    // Predicated region
    $region18: #{tpu_custom_call.1} parent=1 // pred_check
      _
    $region19: #{tpu_custom_call.1} parent=1 // pred_check_branch
      %21 = sbr.rel (0) target = $region21
    $region20: #{tpu_custom_call.1} parent=1 // pred_region
      _
    $region21: #{tpu_custom_call.1} parent=1 // pred_fallthru
      _
    // Predicated region
    $region22: #{tpu_custom_call.1} parent=1 // pred_check
      _
    $region23: #{tpu_custom_call.1} parent=1 // pred_check_branch
      %23 = sbr.rel (0) target = $region25
    $region24: #{tpu_custom_call.1} parent=1 // pred_region
      _
    $region25: #{tpu_custom_call.1} parent=1 // pred_fallthru
      _
    %v24 = vlaneseq
    %v25 = vshrl.u32 %v24, 7
    %v26 = vadd.s32 %v25, 8
    %v27 = vadd.s32 %v25, 16
    %v28 = vadd.s32 %v25, 24
    %v29 = vadd.s32 %v25, 32
    %v30 = vadd.s32 %v25, 40
    %v31 = vadd.s32 %v25, 48
    %v32 = vadd.s32 %v25, 56
    %v33 = vlaneseq
    %v34 = vand.u32 %v33, 127
    %v35 = vshra.s32 %v25, 3
    %v36 = vshra.s32 %v26, 3
    %v37 = vshra.s32 %v27, 3
    %v38 = vshra.s32 %v28, 3
    %v39 = vshra.s32 %v29, 3
    %v40 = vshra.s32 %v30, 3
    %v41 = vshra.s32 %v31, 3
    %v42 = vshra.s32 %v32, 3
    %v43 = vshra.s32 %v34, 3
    %vm44 = vcmp.eq.s32.totalorder %v35, %v43
    %vm45 = vcmp.eq.s32.totalorder %v36, %v43
    %vm46 = vcmp.eq.s32.totalorder %v37, %v43
    %vm47 = vcmp.eq.s32.totalorder %v38, %v43
    %vm48 = vcmp.eq.s32.totalorder %v39, %v43
    %vm49 = vcmp.eq.s32.totalorder %v40, %v43
    %vm50 = vcmp.eq.s32.totalorder %v41, %v43
    %vm51 = vcmp.eq.s32.totalorder %v42, %v43
    %v52 = vsel %vm44, 1.0, 0.0
    %v53 = vsel %vm45, 1.0, 0.0
    %v54 = vsel %vm46, 1.0, 0.0
    %v55 = vsel %vm47, 1.0, 0.0
    %v56 = vsel %vm48, 1.0, 0.0
    %v57 = vsel %vm49, 1.0, 0.0
    %v58 = vsel %vm50, 1.0, 0.0
    %v59 = vsel %vm51, 1.0, 0.0
    %v60 = vshra.s32 %v25, 5
    %v61 = vshra.s32 %v26, 5
    %v62 = vshra.s32 %v27, 5
    %v63 = vshra.s32 %v28, 5
    %v64 = vshra.s32 %v29, 5
    %v65 = vshra.s32 %v30, 5
    %v66 = vshra.s32 %v31, 5
    %v67 = vshra.s32 %v32, 5
    %v68 = vshra.s32 %v34, 5
    %vm69 = vcmp.eq.s32.totalorder %v60, %v68
    %vm70 = vcmp.eq.s32.totalorder %v61, %v68
    %vm71 = vcmp.eq.s32.totalorder %v62, %v68
    %vm72 = vcmp.eq.s32.totalorder %v63, %v68
    %vm73 = vcmp.eq.s32.totalorder %v64, %v68
    %vm74 = vcmp.eq.s32.totalorder %v65, %v68
    %vm75 = vcmp.eq.s32.totalorder %v66, %v68
    %vm76 = vcmp.eq.s32.totalorder %v67, %v68
    %v77 = vand.u32 %v25, 7
    %v78 = vand.u32 %v26, 7
    %v79 = vand.u32 %v27, 7
    %v80 = vand.u32 %v28, 7
    %v81 = vand.u32 %v29, 7
    %v82 = vand.u32 %v30, 7
    %v83 = vand.u32 %v31, 7
    %v84 = vand.u32 %v32, 7
    %v85 = vand.u32 %v34, 7
    %vm86 = vcmp.eq.s32.totalorder %v77, %v85
    %vm87 = vcmp.eq.s32.totalorder %v78, %v85
    %vm88 = vcmp.eq.s32.totalorder %v79, %v85
    %vm89 = vcmp.eq.s32.totalorder %v80, %v85
    %vm90 = vcmp.eq.s32.totalorder %v81, %v85
    %vm91 = vcmp.eq.s32.totalorder %v82, %v85
    %vm92 = vcmp.eq.s32.totalorder %v83, %v85
    %vm93 = vcmp.eq.s32.totalorder %v84, %v85
    %vm94 = vmand %vm69, %vm86
    %vm95 = vmand %vm70, %vm87
    %vm96 = vmand %vm71, %vm88
    %vm97 = vmand %vm72, %vm89
    %vm98 = vmand %vm73, %vm90
    %vm99 = vmand %vm74, %vm91
    %vm100 = vmand %vm75, %vm92
    %vm101 = vmand %vm76, %vm93
    %v102 = vld [vmem:[%s0] sm:$0xff]
    %v103 = vld [vmem:[%s0 + $0x8] sm:$0xff]
    %v104 = vld [vmem:[%s0 + $0x10] sm:$0xff]
    %v105 = vld [vmem:[%s0 + $0x18] sm:$0xff]
    %v106 = vld [vmem:[%s0 + $0x20] sm:$0xff]
    %v107 = vld [vmem:[%s0 + $0x28] sm:$0xff]
    %v108 = vld [vmem:[%s0 + $0x30] sm:$0xff]
    %v109 = vld [vmem:[%s0 + $0x38] sm:$0xff]
    %110 = vset.pattern.permute.xlu0 0
    %111 = vperm.xlu0 %110, %v102
    %v112 = vpop.permute.xlu0 %111
    %113 = vset.pattern.permute.xlu0 0
    %114 = vperm.xlu0 %113, %v103
    %v115 = vpop.permute.xlu0 %114
    %116 = vset.pattern.permute.xlu0 0
    %117 = vperm.xlu0 %116, %v104
    %v118 = vpop.permute.xlu0 %117
    %119 = vset.pattern.permute.xlu0 0
    %120 = vperm.xlu0 %119, %v105
    %v121 = vpop.permute.xlu0 %120
    %122 = vset.pattern.permute.xlu0 0
    %123 = vperm.xlu0 %122, %v106
    %v124 = vpop.permute.xlu0 %123
    %125 = vset.pattern.permute.xlu0 0
    %126 = vperm.xlu0 %125, %v107
    %v127 = vpop.permute.xlu0 %126
    %128 = vset.pattern.permute.xlu0 0
    %129 = vperm.xlu0 %128, %v108
    %v130 = vpop.permute.xlu0 %129
    %131 = vset.pattern.permute.xlu0 0
    %132 = vperm.xlu0 %131, %v109
    %v133 = vpop.permute.xlu0 %132
    %vm134 = vcmp.eq.s32.totalorder %v34, %v112
    %vm135 = vcmp.eq.s32.totalorder %v34, %v115
    %vm136 = vcmp.eq.s32.totalorder %v34, %v118
    %vm137 = vcmp.eq.s32.totalorder %v34, %v121
    %vm138 = vcmp.eq.s32.totalorder %v34, %v124
    %vm139 = vcmp.eq.s32.totalorder %v34, %v127
    %vm140 = vcmp.eq.s32.totalorder %v34, %v130
    %vm141 = vcmp.eq.s32.totalorder %v34, %v133
    %v142 = vsel %vm134, 1, 0
    %v143 = vsel %vm135, 1, 0
    %v144 = vsel %vm136, 1, 0
    %v145 = vsel %vm137, 1, 0
    %v146 = vsel %vm138, 1, 0
    %v147 = vsel %vm139, 1, 0
    %v148 = vsel %vm140, 1, 0
    %v149 = vsel %vm141, 1, 0
    %v150 = vcvt.s32.f32 %v142
    %v151 = vcvt.s32.f32 %v143
    %v152 = vcvt.s32.f32 %v144
    %v153 = vcvt.s32.f32 %v145
    %v154 = vcvt.s32.f32 %v146
    %v155 = vcvt.s32.f32 %v147
    %v156 = vcvt.s32.f32 %v148
    %v157 = vcvt.s32.f32 %v149
    %v158 = vld [vmem:[%s1] sm:$0xff]
    %v159 = vld [vmem:[%s1 + $0x8] sm:$0xff]
    %vm160 = vcmask 130048
    %v162 = vsel %vm160, %v150, 0
    %v165 = vsel %vm160, %v151, 0
    %v168 = vsel %vm160, %v152, 0
    %v171 = vsel %vm160, %v153, 0
    %v174 = vsel %vm160, %v154, 0
    %v177 = vsel %vm160, %v155, 0
    %v180 = vsel %vm160, %v156, 0
    %v183 = vsel %vm160, %v157, 0
    %185 = vmatpush.msra.mxu0 0.0
    %186 = vmatpush.msra.mxu0 0.0
    %187 = vmatpush.msra.mxu0 0.0
    %188 = vmatpush.msra.mxu0 0.0
    %189 = vmatpush.msra.mxu0 0.0
    %190 = vmatpush.msra.mxu0 0.0
    %191 = vmatpush.msra.mxu0 0.0
    %192 = vmatpush.msra.mxu0 0.0
    %193 = vmatpush.msra.mxu0 0.0
    %194 = vmatpush.msra.mxu0 0.0
    %195 = vmatpush.msra.mxu0 0.0
    %196 = vmatpush.msra.mxu0 0.0
    %197 = vmatpush.msra.mxu0 0.0
    %198 = vmatpush.msra.mxu0 0.0
    %199 = vmatpush.msra.mxu0 %v159
    %200 = vmatpush.msra.mxu0 %v158
    %201 = vmatmul.f32.gmra.mxu0 %v162
    %v202 = vpop.f32.mrf.mxu0
    %v203 = vadd.f32 0.0, %v202
    %204 = vmatmul.f32.gmra.mxu0 %v165
    %v205 = vpop.f32.mrf.mxu0
    %v206 = vadd.f32 0.0, %v205
    %207 = vmatmul.f32.gmra.mxu0 %v168
    %v208 = vpop.f32.mrf.mxu0
    %v209 = vadd.f32 0.0, %v208
    %210 = vmatmul.f32.gmra.mxu0 %v171
    %v211 = vpop.f32.mrf.mxu0
    %v212 = vadd.f32 0.0, %v211
    %213 = vmatmul.f32.gmra.mxu0 %v174
    %v214 = vpop.f32.mrf.mxu0
    %v215 = vadd.f32 0.0, %v214
    %216 = vmatmul.f32.gmra.mxu0 %v177
    %v217 = vpop.f32.mrf.mxu0
    %v218 = vadd.f32 0.0, %v217
    %219 = vmatmul.f32.gmra.mxu0 %v180
    %v220 = vpop.f32.mrf.mxu0
    %v221 = vadd.f32 0.0, %v220
    %222 = vmatmul.f32.gmra.mxu0 %v183
    %v223 = vpop.f32.mrf.mxu0
    %v224 = vadd.f32 0.0, %v223
    %225 = vdwg.mxu0
    %v226 = vld [vmem:[%s4] sm:$0xff]
    %v227 = vld [vmem:[%s4 + $0x8] sm:$0xff]
    %v228 = vld [vmem:[%s4 + $0x10] sm:$0xff]
    %v229 = vld [vmem:[%s4 + $0x18] sm:$0xff]
    %v230 = vld [vmem:[%s4 + $0x20] sm:$0xff]
    %v231 = vld [vmem:[%s4 + $0x28] sm:$0xff]
    %v232 = vld [vmem:[%s4 + $0x30] sm:$0x1]
    %vm233 = vcmask 261120
    %v234 = vsel %vm233, %v203, 0.0
    %235 = vadd.xlane.f32.xlu0 %v234
    %v236 = vpop.xlane.xlu0 %235
    %v237 = vsel %vm233, %v206, 0.0
    %238 = vadd.xlane.f32.xlu0 %v237
    %v239 = vpop.xlane.xlu0 %238
    %v240 = vsel %vm233, %v209, 0.0
    %241 = vadd.xlane.f32.xlu0 %v240
    %v242 = vpop.xlane.xlu0 %241
    %v243 = vsel %vm233, %v212, 0.0
    %244 = vadd.xlane.f32.xlu0 %v243
    %v245 = vpop.xlane.xlu0 %244
    %v246 = vsel %vm233, %v215, 0.0
    %247 = vadd.xlane.f32.xlu0 %v246
    %v248 = vpop.xlane.xlu0 %247
    %v249 = vsel %vm233, %v218, 0.0
    %250 = vadd.xlane.f32.xlu0 %v249
    %v251 = vpop.xlane.xlu0 %250
    %v252 = vsel %vm233, %v221, 0.0
    %253 = vadd.xlane.f32.xlu0 %v252
    %v254 = vpop.xlane.xlu0 %253
    %v255 = vsel %vm233, %v224, 0.0
    %256 = vadd.xlane.f32.xlu0 %v255
    %v257 = vpop.xlane.xlu0 %256
    %v258 = vrcp.pop 32.0
    %v259 = vmul.f32 32.0, %v258
    %v260 = vsub.f32 1.0, %v259
    %v261 = vmul.f32 %v258, %v260
    %v262 = vadd.f32 %v258, %v261
    %vm263 = vweird.f32 %v258
    %v264 = vsel %vm263, %v258, %v262
    %v265 = vmul.f32 %v236, %v264
    %v266 = vmul.f32 %v239, %v264
    %v267 = vmul.f32 %v242, %v264
    %v268 = vmul.f32 %v245, %v264
    %v269 = vmul.f32 %v248, %v264
    %v270 = vmul.f32 %v251, %v264
    %v271 = vmul.f32 %v254, %v264
    %v272 = vmul.f32 %v257, %v264
    %v273 = vsub.f32 %v203, %v265
    %v274 = vsub.f32 %v206, %v266
    %v275 = vsub.f32 %v209, %v267
    %v276 = vsub.f32 %v212, %v268
    %v277 = vsub.f32 %v215, %v269
    %v278 = vsub.f32 %v218, %v270
    %v279 = vsub.f32 %v221, %v271
    %v280 = vsub.f32 %v224, %v272
    %v281 = vmul.f32 %v273, %v273
    %v282 = vmul.f32 %v274, %v274
    %v283 = vmul.f32 %v275, %v275
    %v284 = vmul.f32 %v276, %v276
    %v285 = vmul.f32 %v277, %v277
    %v286 = vmul.f32 %v278, %v278
    %v287 = vmul.f32 %v279, %v279
    %v288 = vmul.f32 %v280, %v280
    %v289 = vsel %vm233, %v281, 0.0
    %290 = vadd.xlane.f32.xlu0 %v289
    %v291 = vpop.xlane.xlu0 %290
    %v292 = vsel %vm233, %v282, 0.0
    %293 = vadd.xlane.f32.xlu0 %v292
    %v294 = vpop.xlane.xlu0 %293
    %v295 = vsel %vm233, %v283, 0.0
    %296 = vadd.xlane.f32.xlu0 %v295
    %v297 = vpop.xlane.xlu0 %296
    %v298 = vsel %vm233, %v284, 0.0
    %299 = vadd.xlane.f32.xlu0 %v298
    %v300 = vpop.xlane.xlu0 %299
    %v301 = vsel %vm233, %v285, 0.0
    %302 = vadd.xlane.f32.xlu0 %v301
    %v303 = vpop.xlane.xlu0 %302
    %v304 = vsel %vm233, %v286, 0.0
    %305 = vadd.xlane.f32.xlu0 %v304
    %v306 = vpop.xlane.xlu0 %305
    %v307 = vsel %vm233, %v287, 0.0
    %308 = vadd.xlane.f32.xlu0 %v307
    %v309 = vpop.xlane.xlu0 %308
    %v310 = vsel %vm233, %v288, 0.0
    %311 = vadd.xlane.f32.xlu0 %v310
    %v312 = vpop.xlane.xlu0 %311
    %v313 = vmul.f32 %v291, %v264
    %v314 = vmul.f32 %v294, %v264
    %v315 = vmul.f32 %v297, %v264
    %v316 = vmul.f32 %v300, %v264
    %v317 = vmul.f32 %v303, %v264
    %v318 = vmul.f32 %v306, %v264
    %v319 = vmul.f32 %v309, %v264
    %v320 = vmul.f32 %v312, %v264
    %v321 = vadd.f32 %v313, 1e-05
    %v322 = vadd.f32 %v314, 1e-05
    %v323 = vadd.f32 %v315, 1e-05
    %v324 = vadd.f32 %v316, 1e-05
    %v325 = vadd.f32 %v317, 1e-05
    %v326 = vadd.f32 %v318, 1e-05
    %v327 = vadd.f32 %v319, 1e-05
    %v328 = vadd.f32 %v320, 1e-05
    %v329 = vrsqrt.pop %v321
    %v330 = vmul.f32 %v329, %v321
    %v331 = vmul.f32 %v330, %v329
    %v332 = vmul.f32 0.5, %v331
    %v333 = vsub.f32 1.5, %v332
    %v334 = vmul.f32 %v329, %v333
    %vm335 = vweird.f32 %v321
    %vm336 = vweird.f32 %v329
    %vm337 = vmor %vm335, %vm336
    %v338 = vsel %vm337, %v329, %v334
    %v339 = vrsqrt.pop %v322
    %v340 = vmul.f32 %v339, %v322
    %v341 = vmul.f32 %v340, %v339
    %v342 = vmul.f32 0.5, %v341
    %v343 = vsub.f32 1.5, %v342
    %v344 = vmul.f32 %v339, %v343
    %vm345 = vweird.f32 %v322
    %vm346 = vweird.f32 %v339
    %vm347 = vmor %vm345, %vm346
    %v348 = vsel %vm347, %v339, %v344
    %v349 = vrsqrt.pop %v323
    %v350 = vmul.f32 %v349, %v323
    %v351 = vmul.f32 %v350, %v349
    %v352 = vmul.f32 0.5, %v351
    %v353 = vsub.f32 1.5, %v352
    %v354 = vmul.f32 %v349, %v353
    %vm355 = vweird.f32 %v323
    %vm356 = vweird.f32 %v349
    %vm357 = vmor %vm355, %vm356
    %v358 = vsel %vm357, %v349, %v354
    %v359 = vrsqrt.pop %v324
    %v360 = vmul.f32 %v359, %v324
    %v361 = vmul.f32 %v360, %v359
    %v362 = vmul.f32 0.5, %v361
    %v363 = vsub.f32 1.5, %v362
    %v364 = vmul.f32 %v359, %v363
    %vm365 = vweird.f32 %v324
    %vm366 = vweird.f32 %v359
    %vm367 = vmor %vm365, %vm366
    %v368 = vsel %vm367, %v359, %v364
    %v369 = vrsqrt.pop %v325
    %v370 = vmul.f32 %v369, %v325
    %v371 = vmul.f32 %v370, %v369
    %v372 = vmul.f32 0.5, %v371
    %v373 = vsub.f32 1.5, %v372
    %v374 = vmul.f32 %v369, %v373
    %vm375 = vweird.f32 %v325
    %vm376 = vweird.f32 %v369
    %vm377 = vmor %vm375, %vm376
    %v378 = vsel %vm377, %v369, %v374
    %v379 = vrsqrt.pop %v326
    %v380 = vmul.f32 %v379, %v326
    %v381 = vmul.f32 %v380, %v379
    %v382 = vmul.f32 0.5, %v381
    %v383 = vsub.f32 1.5, %v382
    %v384 = vmul.f32 %v379, %v383
    %vm385 = vweird.f32 %v326
    %vm386 = vweird.f32 %v379
    %vm387 = vmor %vm385, %vm386
    %v388 = vsel %vm387, %v379, %v384
    %v389 = vrsqrt.pop %v327
    %v390 = vmul.f32 %v389, %v327
    %v391 = vmul.f32 %v390, %v389
    %v392 = vmul.f32 0.5, %v391
    %v393 = vsub.f32 1.5, %v392
    %v394 = vmul.f32 %v389, %v393
    %vm395 = vweird.f32 %v327
    %vm396 = vweird.f32 %v389
    %vm397 = vmor %vm395, %vm396
    %v398 = vsel %vm397, %v389, %v394
    %v399 = vrsqrt.pop %v328
    %v400 = vmul.f32 %v399, %v328
    %v401 = vmul.f32 %v400, %v399
    %v402 = vmul.f32 0.5, %v401
    %v403 = vsub.f32 1.5, %v402
    %v404 = vmul.f32 %v399, %v403
    %vm405 = vweird.f32 %v328
    %vm406 = vweird.f32 %v399
    %vm407 = vmor %vm405, %vm406
    %v408 = vsel %vm407, %v399, %v404
    %v409 = vmul.f32 %v273, %v338
    %v410 = vmul.f32 %v274, %v348
    %v411 = vmul.f32 %v275, %v358
    %v412 = vmul.f32 %v276, %v368
    %v413 = vmul.f32 %v277, %v378
    %v414 = vmul.f32 %v278, %v388
    %v415 = vmul.f32 %v279, %v398
    %v416 = vmul.f32 %v280, %v408
    %v417 = vperm.slane %v226, 0
    %v418 = vmul.f32 %v409, %v417
    %v419 = vmul.f32 %v410, %v417
    %v420 = vmul.f32 %v411, %v417
    %v421 = vmul.f32 %v412, %v417
    %v422 = vmul.f32 %v413, %v417
    %v423 = vmul.f32 %v414, %v417
    %v424 = vmul.f32 %v415, %v417
    %v425 = vmul.f32 %v416, %v417
    %v426 = vperm.slane %v226, 1
    %v427 = vadd.f32 %v418, %v426
    %v428 = vadd.f32 %v419, %v426
    %v429 = vadd.f32 %v420, %v426
    %v430 = vadd.f32 %v421, %v426
    %v431 = vadd.f32 %v422, %v426
    %v432 = vadd.f32 %v423, %v426
    %v433 = vadd.f32 %v424, %v426
    %v434 = vadd.f32 %v425, %v426
    %v435 = vld [vmem:[%s2] sm:$0xff]
    %v436 = vld [vmem:[%s2 + $0x8] sm:$0xff]
    %v437 = vld [vmem:[%s2 + $0x10] sm:$0xff]
    %v438 = vld [vmem:[%s2 + $0x18] sm:$0xff]
    %v439 = vld [vmem:[%s2 + $0x60] sm:$0xff]
    %v440 = vld [vmem:[%s2 + $0x68] sm:$0xff]
    %v441 = vld [vmem:[%s2 + $0x70] sm:$0xff]
    %v442 = vld [vmem:[%s2 + $0x78] sm:$0xff]
    %v443 = vld [vmem:[%s2 + $0xc0] sm:$0xff]
    %v444 = vld [vmem:[%s2 + $0xc8] sm:$0xff]
    %v445 = vld [vmem:[%s2 + $0xd0] sm:$0xff]
    %v446 = vld [vmem:[%s2 + $0xd8] sm:$0xff]
    %v447 = vld [vmem:[%s2 + $0x120] sm:$0xff]
    %v448 = vld [vmem:[%s2 + $0x128] sm:$0xff]
    %v449 = vld [vmem:[%s2 + $0x130] sm:$0xff]
    %v450 = vld [vmem:[%s2 + $0x138] sm:$0xff]
    %v452 = vsel %vm233, %v427, 0
    %v455 = vsel %vm233, %v428, 0
    %v458 = vsel %vm233, %v429, 0
    %v461 = vsel %vm233, %v430, 0
    %v464 = vsel %vm233, %v431, 0
    %v467 = vsel %vm233, %v432, 0
    %v470 = vsel %vm233, %v433, 0
    %v473 = vsel %vm233, %v434, 0
    %475 = vmatpush.msra.mxu0 0.0
    %476 = vmatpush.msra.mxu0 0.0
    %477 = vmatpush.msra.mxu0 0.0
    %478 = vmatpush.msra.mxu0 0.0
    %479 = vmatpush.msra.mxu0 0.0
    %480 = vmatpush.msra.mxu0 0.0
    %481 = vmatpush.msra.mxu0 0.0
    %482 = vmatpush.msra.mxu0 0.0
    %483 = vmatpush.msra.mxu0 0.0
    %484 = vmatpush.msra.mxu0 0.0
    %485 = vmatpush.msra.mxu0 0.0
    %486 = vmatpush.msra.mxu0 0.0
    %487 = vmatpush.msra.mxu0 %v447
    %488 = vmatpush.msra.mxu0 %v443
    %489 = vmatpush.msra.mxu0 %v439
    %490 = vmatpush.msra.mxu0 %v435
    %491 = vmatmul.f32.gmra.mxu0 %v452
    %v492 = vpop.f32.mrf.mxu0
    %v493 = vadd.f32 0.0, %v492
    %494 = vmatmul.f32.gmra.mxu0 %v455
    %v495 = vpop.f32.mrf.mxu0
    %v496 = vadd.f32 0.0, %v495
    %497 = vmatmul.f32.gmra.mxu0 %v458
    %v498 = vpop.f32.mrf.mxu0
    %v499 = vadd.f32 0.0, %v498
    %500 = vmatmul.f32.gmra.mxu0 %v461
    %v501 = vpop.f32.mrf.mxu0
    %v502 = vadd.f32 0.0, %v501
    %503 = vmatmul.f32.gmra.mxu0 %v464
    %v504 = vpop.f32.mrf.mxu0
    %v505 = vadd.f32 0.0, %v504
    %506 = vmatmul.f32.gmra.mxu0 %v467
    %v507 = vpop.f32.mrf.mxu0
    %v508 = vadd.f32 0.0, %v507
    %509 = vmatmul.f32.gmra.mxu0 %v470
    %v510 = vpop.f32.mrf.mxu0
    %v511 = vadd.f32 0.0, %v510
    %512 = vmatmul.f32.gmra.mxu0 %v473
    %v513 = vpop.f32.mrf.mxu0
    %v514 = vadd.f32 0.0, %v513
    %515 = vdwg.mxu0
    %516 = vmatpush.msra.mxu0 0.0
    %517 = vmatpush.msra.mxu0 0.0
    %518 = vmatpush.msra.mxu0 0.0
    %519 = vmatpush.msra.mxu0 0.0
    %520 = vmatpush.msra.mxu0 0.0
    %521 = vmatpush.msra.mxu0 0.0
    %522 = vmatpush.msra.mxu0 0.0
    %523 = vmatpush.msra.mxu0 0.0
    %524 = vmatpush.msra.mxu0 0.0
    %525 = vmatpush.msra.mxu0 0.0
    %526 = vmatpush.msra.mxu0 0.0
    %527 = vmatpush.msra.mxu0 0.0
    %528 = vmatpush.msra.mxu0 %v448
    %529 = vmatpush.msra.mxu0 %v444
    %530 = vmatpush.msra.mxu0 %v440
    %531 = vmatpush.msra.mxu0 %v436
    %532 = vmatmul.f32.gmra.mxu0 %v452
    %v533 = vpop.f32.mrf.mxu0
    %v534 = vadd.f32 0.0, %v533
    %535 = vmatmul.f32.gmra.mxu0 %v455
    %v536 = vpop.f32.mrf.mxu0
    %v537 = vadd.f32 0.0, %v536
    %538 = vmatmul.f32.gmra.mxu0 %v458
    %v539 = vpop.f32.mrf.mxu0
    %v540 = vadd.f32 0.0, %v539
    %541 = vmatmul.f32.gmra.mxu0 %v461
    %v542 = vpop.f32.mrf.mxu0
    %v543 = vadd.f32 0.0, %v542
    %544 = vmatmul.f32.gmra.mxu0 %v464
    %v545 = vpop.f32.mrf.mxu0
    %v546 = vadd.f32 0.0, %v545
    %547 = vmatmul.f32.gmra.mxu0 %v467
    %v548 = vpop.f32.mrf.mxu0
    %v549 = vadd.f32 0.0, %v548
    %550 = vmatmul.f32.gmra.mxu0 %v470
    %v551 = vpop.f32.mrf.mxu0
    %v552 = vadd.f32 0.0, %v551
    %553 = vmatmul.f32.gmra.mxu0 %v473
    %v554 = vpop.f32.mrf.mxu0
    %v555 = vadd.f32 0.0, %v554
    %556 = vdwg.mxu0
    %557 = vmatpush.msra.mxu0 0.0
    %558 = vmatpush.msra.mxu0 0.0
    %559 = vmatpush.msra.mxu0 0.0
    %560 = vmatpush.msra.mxu0 0.0
    %561 = vmatpush.msra.mxu0 0.0
    %562 = vmatpush.msra.mxu0 0.0
    %563 = vmatpush.msra.mxu0 0.0
    %564 = vmatpush.msra.mxu0 0.0
    %565 = vmatpush.msra.mxu0 0.0
    %566 = vmatpush.msra.mxu0 0.0
    %567 = vmatpush.msra.mxu0 0.0
    %568 = vmatpush.msra.mxu0 0.0
    %569 = vmatpush.msra.mxu0 %v449
    %570 = vmatpush.msra.mxu0 %v445
    %571 = vmatpush.msra.mxu0 %v441
    %572 = vmatpush.msra.mxu0 %v437
    %573 = vmatmul.f32.gmra.mxu0 %v452
    %v574 = vpop.f32.mrf.mxu0
    %v575 = vadd.f32 0.0, %v574
    %576 = vmatmul.f32.gmra.mxu0 %v455
    %v577 = vpop.f32.mrf.mxu0
    %v578 = vadd.f32 0.0, %v577
    %579 = vmatmul.f32.gmra.mxu0 %v458
    %v580 = vpop.f32.mrf.mxu0
    %v581 = vadd.f32 0.0, %v580
    %582 = vmatmul.f32.gmra.mxu0 %v461
    %v583 = vpop.f32.mrf.mxu0
    %v584 = vadd.f32 0.0, %v583
    %585 = vmatmul.f32.gmra.mxu0 %v464
    %v586 = vpop.f32.mrf.mxu0
    %v587 = vadd.f32 0.0, %v586
    %588 = vmatmul.f32.gmra.mxu0 %v467
    %v589 = vpop.f32.mrf.mxu0
    %v590 = vadd.f32 0.0, %v589
    %591 = vmatmul.f32.gmra.mxu0 %v470
    %v592 = vpop.f32.mrf.mxu0
    %v593 = vadd.f32 0.0, %v592
    %594 = vmatmul.f32.gmra.mxu0 %v473
    %v595 = vpop.f32.mrf.mxu0
    %v596 = vadd.f32 0.0, %v595
    %597 = vdwg.mxu0
    %598 = vmatpush.msra.mxu0 0.0
    %599 = vmatpush.msra.mxu0 0.0
    %600 = vmatpush.msra.mxu0 0.0
    %601 = vmatpush.msra.mxu0 0.0
    %602 = vmatpush.msra.mxu0 0.0
    %603 = vmatpush.msra.mxu0 0.0
    %604 = vmatpush.msra.mxu0 0.0
    %605 = vmatpush.msra.mxu0 0.0
    %606 = vmatpush.msra.mxu0 0.0
    %607 = vmatpush.msra.mxu0 0.0
    %608 = vmatpush.msra.mxu0 0.0
    %609 = vmatpush.msra.mxu0 0.0
    %610 = vmatpush.msra.mxu0 %v450
    %611 = vmatpush.msra.mxu0 %v446
    %612 = vmatpush.msra.mxu0 %v442
    %613 = vmatpush.msra.mxu0 %v438
    %614 = vmatmul.f32.gmra.mxu0 %v452
    %v615 = vpop.f32.mrf.mxu0
    %v616 = vadd.f32 0.0, %v615
    %617 = vmatmul.f32.gmra.mxu0 %v455
    %v618 = vpop.f32.mrf.mxu0
    %v619 = vadd.f32 0.0, %v618
    %620 = vmatmul.f32.gmra.mxu0 %v458
    %v621 = vpop.f32.mrf.mxu0
    %v622 = vadd.f32 0.0, %v621
    %623 = vmatmul.f32.gmra.mxu0 %v461
    %v624 = vpop.f32.mrf.mxu0
    %v625 = vadd.f32 0.0, %v624
    %626 = vmatmul.f32.gmra.mxu0 %v464
    %v627 = vpop.f32.mrf.mxu0
    %v628 = vadd.f32 0.0, %v627
    %629 = vmatmul.f32.gmra.mxu0 %v467
    %v630 = vpop.f32.mrf.mxu0
    %v631 = vadd.f32 0.0, %v630
    %632 = vmatmul.f32.gmra.mxu0 %v470
    %v633 = vpop.f32.mrf.mxu0
    %v634 = vadd.f32 0.0, %v633
    %635 = vmatmul.f32.gmra.mxu0 %v473
    %v636 = vpop.f32.mrf.mxu0
    %v637 = vadd.f32 0.0, %v636
    %638 = vdwg.mxu0
    %v639 = vperm.slane %v226, 5
    %v640 = vperm.slane %v227, 5
    %v641 = vadd.f32 %v575, %v639
    %v642 = vadd.f32 %v616, %v640
    %v643 = vadd.f32 %v578, %v639
    %v644 = vadd.f32 %v619, %v640
    %v645 = vadd.f32 %v581, %v639
    %v646 = vadd.f32 %v622, %v640
    %v647 = vadd.f32 %v584, %v639
    %v648 = vadd.f32 %v625, %v640
    %v649 = vadd.f32 %v587, %v639
    %v650 = vadd.f32 %v628, %v640
    %v651 = vadd.f32 %v590, %v639
    %v652 = vadd.f32 %v631, %v640
    %v653 = vadd.f32 %v593, %v639
    %v654 = vadd.f32 %v634, %v640
    %v655 = vadd.f32 %v596, %v639
    %v656 = vadd.f32 %v637, %v640
    %v657 = vxor.u32 %v641, 2147483648
    %v658 = vxor.u32 %v642, 2147483648
    %v659 = vxor.u32 %v643, 2147483648
    %v660 = vxor.u32 %v644, 2147483648
    %v661 = vxor.u32 %v645, 2147483648
    %v662 = vxor.u32 %v646, 2147483648
    %v663 = vxor.u32 %v647, 2147483648
    %v664 = vxor.u32 %v648, 2147483648
    %v665 = vxor.u32 %v649, 2147483648
    %v666 = vxor.u32 %v650, 2147483648
    %v667 = vxor.u32 %v651, 2147483648
    %v668 = vxor.u32 %v652, 2147483648
    %v669 = vxor.u32 %v653, 2147483648
    %v670 = vxor.u32 %v654, 2147483648
    %v671 = vxor.u32 %v655, 2147483648
    %v672 = vxor.u32 %v656, 2147483648
    %v673 = vmul.f32 %v657, 1.442695
    %v674 = vpow.pop %v673
    %v675 = vmul.f32 %v658, 1.442695
    %v676 = vpow.pop %v675
    %v677 = vmul.f32 %v659, 1.442695
    %v678 = vpow.pop %v677
    %v679 = vmul.f32 %v660, 1.442695
    %v680 = vpow.pop %v679
    %v681 = vmul.f32 %v661, 1.442695
    %v682 = vpow.pop %v681
    %v683 = vmul.f32 %v662, 1.442695
    %v684 = vpow.pop %v683
    %v685 = vmul.f32 %v663, 1.442695
    %v686 = vpow.pop %v685
    %v687 = vmul.f32 %v664, 1.442695
    %v688 = vpow.pop %v687
    %v689 = vmul.f32 %v665, 1.442695
    %v690 = vpow.pop %v689
    %v691 = vmul.f32 %v666, 1.442695
    %v692 = vpow.pop %v691
    %v693 = vmul.f32 %v667, 1.442695
    %v694 = vpow.pop %v693
    %v695 = vmul.f32 %v668, 1.442695
    %v696 = vpow.pop %v695
    %v697 = vmul.f32 %v669, 1.442695
    %v698 = vpow.pop %v697
    %v699 = vmul.f32 %v670, 1.442695
    %v700 = vpow.pop %v699
    %v701 = vmul.f32 %v671, 1.442695
    %v702 = vpow.pop %v701
    %v703 = vmul.f32 %v672, 1.442695
    %v704 = vpow.pop %v703
    %v705 = vadd.f32 %v674, 1.0
    %v706 = vadd.f32 %v676, 1.0
    %v707 = vadd.f32 %v678, 1.0
    %v708 = vadd.f32 %v680, 1.0
    %v709 = vadd.f32 %v682, 1.0
    %v710 = vadd.f32 %v684, 1.0
    %v711 = vadd.f32 %v686, 1.0
    %v712 = vadd.f32 %v688, 1.0
    %v713 = vadd.f32 %v690, 1.0
    %v714 = vadd.f32 %v692, 1.0
    %v715 = vadd.f32 %v694, 1.0
    %v716 = vadd.f32 %v696, 1.0
    %v717 = vadd.f32 %v698, 1.0
    %v718 = vadd.f32 %v700, 1.0
    %v719 = vadd.f32 %v702, 1.0
    %v720 = vadd.f32 %v704, 1.0
    %v721 = vrcp.pop %v705
    %v722 = vmul.f32 %v705, %v721
    %v723 = vsub.f32 1.0, %v722
    %v724 = vmul.f32 %v721, %v723
    %v725 = vadd.f32 %v721, %v724
    %vm726 = vweird.f32 %v705
    %vm727 = vweird.f32 %v721
    %vm728 = vmor %vm726, %vm727
    %v729 = vsel %vm728, %v721, %v725
    %v730 = vand.u32 2147483647, %v705
    %vm731 = vcmp.eq.f32.partialorder %v730, 8.507059e+37
    %v732 = vand.u32 %v705, 2147483648
    %v733 = vor.u32 1.1754944e-38, %v732
    %v734 = vsel %vm731, %v733, %v729
    %v735 = vmul.f32 1.0, %v734
    %v736 = vrcp.pop %v706
    %v737 = vmul.f32 %v706, %v736
    %v738 = vsub.f32 1.0, %v737
    %v739 = vmul.f32 %v736, %v738
    %v740 = vadd.f32 %v736, %v739
    %vm741 = vweird.f32 %v706
    %vm742 = vweird.f32 %v736
    %vm743 = vmor %vm741, %vm742
    %v744 = vsel %vm743, %v736, %v740
    %v745 = vand.u32 2147483647, %v706
    %vm746 = vcmp.eq.f32.partialorder %v745, 8.507059e+37
    %v747 = vand.u32 %v706, 2147483648
    %v748 = vor.u32 1.1754944e-38, %v747
    %v749 = vsel %vm746, %v748, %v744
    %v750 = vmul.f32 1.0, %v749
    %v751 = vrcp.pop %v707
    %v752 = vmul.f32 %v707, %v751
    %v753 = vsub.f32 1.0, %v752
    %v754 = vmul.f32 %v751, %v753
    %v755 = vadd.f32 %v751, %v754
    %vm756 = vweird.f32 %v707
    %vm757 = vweird.f32 %v751
    %vm758 = vmor %vm756, %vm757
    %v759 = vsel %vm758, %v751, %v755
    %v760 = vand.u32 2147483647, %v707
    %vm761 = vcmp.eq.f32.partialorder %v760, 8.507059e+37
    %v762 = vand.u32 %v707, 2147483648
    %v763 = vor.u32 1.1754944e-38, %v762
    %v764 = vsel %vm761, %v763, %v759
    %v765 = vmul.f32 1.0, %v764
    %v766 = vrcp.pop %v708
    %v767 = vmul.f32 %v708, %v766
    %v768 = vsub.f32 1.0, %v767
    %v769 = vmul.f32 %v766, %v768
    %v770 = vadd.f32 %v766, %v769
    %vm771 = vweird.f32 %v708
    %vm772 = vweird.f32 %v766
    %vm773 = vmor %vm771, %vm772
    %v774 = vsel %vm773, %v766, %v770
    %v775 = vand.u32 2147483647, %v708
    %vm776 = vcmp.eq.f32.partialorder %v775, 8.507059e+37
    %v777 = vand.u32 %v708, 2147483648
    %v778 = vor.u32 1.1754944e-38, %v777
    %v779 = vsel %vm776, %v778, %v774
    %v780 = vmul.f32 1.0, %v779
    %v781 = vrcp.pop %v709
    %v782 = vmul.f32 %v709, %v781
    %v783 = vsub.f32 1.0, %v782
    %v784 = vmul.f32 %v781, %v783
    %v785 = vadd.f32 %v781, %v784
    %vm786 = vweird.f32 %v709
    %vm787 = vweird.f32 %v781
    %vm788 = vmor %vm786, %vm787
    %v789 = vsel %vm788, %v781, %v785
    %v790 = vand.u32 2147483647, %v709
    %vm791 = vcmp.eq.f32.partialorder %v790, 8.507059e+37
    %v792 = vand.u32 %v709, 2147483648
    %v793 = vor.u32 1.1754944e-38, %v792
    %v794 = vsel %vm791, %v793, %v789
    %v795 = vmul.f32 1.0, %v794
    %v796 = vrcp.pop %v710
    %v797 = vmul.f32 %v710, %v796
    %v798 = vsub.f32 1.0, %v797
    %v799 = vmul.f32 %v796, %v798
    %v800 = vadd.f32 %v796, %v799
    %vm801 = vweird.f32 %v710
    %vm802 = vweird.f32 %v796
    %vm803 = vmor %vm801, %vm802
    %v804 = vsel %vm803, %v796, %v800
    %v805 = vand.u32 2147483647, %v710
    %vm806 = vcmp.eq.f32.partialorder %v805, 8.507059e+37
    %v807 = vand.u32 %v710, 2147483648
    %v808 = vor.u32 1.1754944e-38, %v807
    %v809 = vsel %vm806, %v808, %v804
    %v810 = vmul.f32 1.0, %v809
    %v811 = vrcp.pop %v711
    %v812 = vmul.f32 %v711, %v811
    %v813 = vsub.f32 1.0, %v812
    %v814 = vmul.f32 %v811, %v813
    %v815 = vadd.f32 %v811, %v814
    %vm816 = vweird.f32 %v711
    %vm817 = vweird.f32 %v811
    %vm818 = vmor %vm816, %vm817
    %v819 = vsel %vm818, %v811, %v815
    %v820 = vand.u32 2147483647, %v711
    %vm821 = vcmp.eq.f32.partialorder %v820, 8.507059e+37
    %v822 = vand.u32 %v711, 2147483648
    %v823 = vor.u32 1.1754944e-38, %v822
    %v824 = vsel %vm821, %v823, %v819
    %v825 = vmul.f32 1.0, %v824
    %v826 = vrcp.pop %v712
    %v827 = vmul.f32 %v712, %v826
    %v828 = vsub.f32 1.0, %v827
    %v829 = vmul.f32 %v826, %v828
    %v830 = vadd.f32 %v826, %v829
    %vm831 = vweird.f32 %v712
    %vm832 = vweird.f32 %v826
    %vm833 = vmor %vm831, %vm832
    %v834 = vsel %vm833, %v826, %v830
    %v835 = vand.u32 2147483647, %v712
    %vm836 = vcmp.eq.f32.partialorder %v835, 8.507059e+37
    %v837 = vand.u32 %v712, 2147483648
    %v838 = vor.u32 1.1754944e-38, %v837
    %v839 = vsel %vm836, %v838, %v834
    %v840 = vmul.f32 1.0, %v839
    %v841 = vrcp.pop %v713
    %v842 = vmul.f32 %v713, %v841
    %v843 = vsub.f32 1.0, %v842
    %v844 = vmul.f32 %v841, %v843
    %v845 = vadd.f32 %v841, %v844
    %vm846 = vweird.f32 %v713
    %vm847 = vweird.f32 %v841
    %vm848 = vmor %vm846, %vm847
    %v849 = vsel %vm848, %v841, %v845
    %v850 = vand.u32 2147483647, %v713
    %vm851 = vcmp.eq.f32.partialorder %v850, 8.507059e+37
    %v852 = vand.u32 %v713, 2147483648
    %v853 = vor.u32 1.1754944e-38, %v852
    %v854 = vsel %vm851, %v853, %v849
    %v855 = vmul.f32 1.0, %v854
    %v856 = vrcp.pop %v714
    %v857 = vmul.f32 %v714, %v856
    %v858 = vsub.f32 1.0, %v857
    %v859 = vmul.f32 %v856, %v858
    %v860 = vadd.f32 %v856, %v859
    %vm861 = vweird.f32 %v714
    %vm862 = vweird.f32 %v856
    %vm863 = vmor %vm861, %vm862
    %v864 = vsel %vm863, %v856, %v860
    %v865 = vand.u32 2147483647, %v714
    %vm866 = vcmp.eq.f32.partialorder %v865, 8.507059e+37
    %v867 = vand.u32 %v714, 2147483648
    %v868 = vor.u32 1.1754944e-38, %v867
    %v869 = vsel %vm866, %v868, %v864
    %v870 = vmul.f32 1.0, %v869
    %v871 = vrcp.pop %v715
    %v872 = vmul.f32 %v715, %v871
    %v873 = vsub.f32 1.0, %v872
    %v874 = vmul.f32 %v871, %v873
    %v875 = vadd.f32 %v871, %v874
    %vm876 = vweird.f32 %v715
    %vm877 = vweird.f32 %v871
    %vm878 = vmor %vm876, %vm877
    %v879 = vsel %vm878, %v871, %v875
    %v880 = vand.u32 2147483647, %v715
    %vm881 = vcmp.eq.f32.partialorder %v880, 8.507059e+37
    %v882 = vand.u32 %v715, 2147483648
    %v883 = vor.u32 1.1754944e-38, %v882
    %v884 = vsel %vm881, %v883, %v879
    %v885 = vmul.f32 1.0, %v884
    %v886 = vrcp.pop %v716
    %v887 = vmul.f32 %v716, %v886
    %v888 = vsub.f32 1.0, %v887
    %v889 = vmul.f32 %v886, %v888
    %v890 = vadd.f32 %v886, %v889
    %vm891 = vweird.f32 %v716
    %vm892 = vweird.f32 %v886
    %vm893 = vmor %vm891, %vm892
    %v894 = vsel %vm893, %v886, %v890
    %v895 = vand.u32 2147483647, %v716
    %vm896 = vcmp.eq.f32.partialorder %v895, 8.507059e+37
    %v897 = vand.u32 %v716, 2147483648
    %v898 = vor.u32 1.1754944e-38, %v897
    %v899 = vsel %vm896, %v898, %v894
    %v900 = vmul.f32 1.0, %v899
    %v901 = vrcp.pop %v717
    %v902 = vmul.f32 %v717, %v901
    %v903 = vsub.f32 1.0, %v902
    %v904 = vmul.f32 %v901, %v903
    %v905 = vadd.f32 %v901, %v904
    %vm906 = vweird.f32 %v717
    %vm907 = vweird.f32 %v901
    %vm908 = vmor %vm906, %vm907
    %v909 = vsel %vm908, %v901, %v905
    %v910 = vand.u32 2147483647, %v717
    %vm911 = vcmp.eq.f32.partialorder %v910, 8.507059e+37
    %v912 = vand.u32 %v717, 2147483648
    %v913 = vor.u32 1.1754944e-38, %v912
    %v914 = vsel %vm911, %v913, %v909
    %v915 = vmul.f32 1.0, %v914
    %v916 = vrcp.pop %v718
    %v917 = vmul.f32 %v718, %v916
    %v918 = vsub.f32 1.0, %v917
    %v919 = vmul.f32 %v916, %v918
    %v920 = vadd.f32 %v916, %v919
    %vm921 = vweird.f32 %v718
    %vm922 = vweird.f32 %v916
    %vm923 = vmor %vm921, %vm922
    %v924 = vsel %vm923, %v916, %v920
    %v925 = vand.u32 2147483647, %v718
    %vm926 = vcmp.eq.f32.partialorder %v925, 8.507059e+37
    %v927 = vand.u32 %v718, 2147483648
    %v928 = vor.u32 1.1754944e-38, %v927
    %v929 = vsel %vm926, %v928, %v924
    %v930 = vmul.f32 1.0, %v929
    %v931 = vrcp.pop %v719
    %v932 = vmul.f32 %v719, %v931
    %v933 = vsub.f32 1.0, %v932
    %v934 = vmul.f32 %v931, %v933
    %v935 = vadd.f32 %v931, %v934
    %vm936 = vweird.f32 %v719
    %vm937 = vweird.f32 %v931
    %vm938 = vmor %vm936, %vm937
    %v939 = vsel %vm938, %v931, %v935
    %v940 = vand.u32 2147483647, %v719
    %vm941 = vcmp.eq.f32.partialorder %v940, 8.507059e+37
    %v942 = vand.u32 %v719, 2147483648
    %v943 = vor.u32 1.1754944e-38, %v942
    %v944 = vsel %vm941, %v943, %v939
    %v945 = vmul.f32 1.0, %v944
    %v946 = vrcp.pop %v720
    %v947 = vmul.f32 %v720, %v946
    %v948 = vsub.f32 1.0, %v947
    %v949 = vmul.f32 %v946, %v948
    %v950 = vadd.f32 %v946, %v949
    %vm951 = vweird.f32 %v720
    %vm952 = vweird.f32 %v946
    %vm953 = vmor %vm951, %vm952
    %v954 = vsel %vm953, %v946, %v950
    %v955 = vand.u32 2147483647, %v720
    %vm956 = vcmp.eq.f32.partialorder %v955, 8.507059e+37
    %v957 = vand.u32 %v720, 2147483648
    %v958 = vor.u32 1.1754944e-38, %v957
    %v959 = vsel %vm956, %v958, %v954
    %v960 = vmul.f32 1.0, %v959
    %vm961 = vcmask 523264
    %v963 = vsel %vm961, %v52, 0
    %v966 = vsel %vm961, %v53, 0
    %v969 = vsel %vm961, %v54, 0
    %v972 = vsel %vm961, %v55, 0
    %v975 = vsel %vm961, %v56, 0
    %v978 = vsel %vm961, %v57, 0
    %v981 = vsel %vm961, %v58, 0
    %v984 = vsel %vm961, %v59, 0
    %986 = vmatpush.msra.mxu0 0.0
    %987 = vmatpush.msra.mxu0 0.0
    %988 = vmatpush.msra.mxu0 0.0
    %989 = vmatpush.msra.mxu0 0.0
    %990 = vmatpush.msra.mxu0 0.0
    %991 = vmatpush.msra.mxu0 0.0
    %992 = vmatpush.msra.mxu0 0.0
    %993 = vmatpush.msra.mxu0 0.0
    %994 = vmatpush.msra.mxu0 %v514
    %995 = vmatpush.msra.mxu0 %v511
    %996 = vmatpush.msra.mxu0 %v508
    %997 = vmatpush.msra.mxu0 %v505
    %998 = vmatpush.msra.mxu0 %v502
    %999 = vmatpush.msra.mxu0 %v499
    %1000 = vmatpush.msra.mxu0 %v496
    %1001 = vmatpush.msra.mxu0 %v493
    %1002 = vmatmul.f32.gmra.mxu0 %v963
    %v1003 = vpop.f32.mrf.mxu0
    %v1004 = vadd.f32 0.0, %v1003
    %1005 = vmatmul.f32.gmra.mxu0 %v966
    %v1006 = vpop.f32.mrf.mxu0
    %v1007 = vadd.f32 0.0, %v1006
    %1008 = vmatmul.f32.gmra.mxu0 %v969
    %v1009 = vpop.f32.mrf.mxu0
    %v1010 = vadd.f32 0.0, %v1009
    %1011 = vmatmul.f32.gmra.mxu0 %v972
    %v1012 = vpop.f32.mrf.mxu0
    %v1013 = vadd.f32 0.0, %v1012
    %1014 = vmatmul.f32.gmra.mxu0 %v975
    %v1015 = vpop.f32.mrf.mxu0
    %v1016 = vadd.f32 0.0, %v1015
    %1017 = vmatmul.f32.gmra.mxu0 %v978
    %v1018 = vpop.f32.mrf.mxu0
    %v1019 = vadd.f32 0.0, %v1018
    %1020 = vmatmul.f32.gmra.mxu0 %v981
    %v1021 = vpop.f32.mrf.mxu0
    %v1022 = vadd.f32 0.0, %v1021
    %1023 = vmatmul.f32.gmra.mxu0 %v984
    %v1024 = vpop.f32.mrf.mxu0
    %v1025 = vadd.f32 0.0, %v1024
    %1026 = vdwg.mxu0
    %1027 = vmatpush.msra.mxu0 0.0
    %1028 = vmatpush.msra.mxu0 0.0
    %1029 = vmatpush.msra.mxu0 0.0
    %1030 = vmatpush.msra.mxu0 0.0
    %1031 = vmatpush.msra.mxu0 0.0
    %1032 = vmatpush.msra.mxu0 0.0
    %1033 = vmatpush.msra.mxu0 0.0
    %1034 = vmatpush.msra.mxu0 0.0
    %1035 = vmatpush.msra.mxu0 %v555
    %1036 = vmatpush.msra.mxu0 %v552
    %1037 = vmatpush.msra.mxu0 %v549
    %1038 = vmatpush.msra.mxu0 %v546
    %1039 = vmatpush.msra.mxu0 %v543
    %1040 = vmatpush.msra.mxu0 %v540
    %1041 = vmatpush.msra.mxu0 %v537
    %1042 = vmatpush.msra.mxu0 %v534
    %1043 = vmatmul.f32.gmra.mxu0 %v963
    %v1044 = vpop.f32.mrf.mxu0
    %v1045 = vadd.f32 0.0, %v1044
    %1046 = vmatmul.f32.gmra.mxu0 %v966
    %v1047 = vpop.f32.mrf.mxu0
    %v1048 = vadd.f32 0.0, %v1047
    %1049 = vmatmul.f32.gmra.mxu0 %v969
    %v1050 = vpop.f32.mrf.mxu0
    %v1051 = vadd.f32 0.0, %v1050
    %1052 = vmatmul.f32.gmra.mxu0 %v972
    %v1053 = vpop.f32.mrf.mxu0
    %v1054 = vadd.f32 0.0, %v1053
    %1055 = vmatmul.f32.gmra.mxu0 %v975
    %v1056 = vpop.f32.mrf.mxu0
    %v1057 = vadd.f32 0.0, %v1056
    %1058 = vmatmul.f32.gmra.mxu0 %v978
    %v1059 = vpop.f32.mrf.mxu0
    %v1060 = vadd.f32 0.0, %v1059
    %1061 = vmatmul.f32.gmra.mxu0 %v981
    %v1062 = vpop.f32.mrf.mxu0
    %v1063 = vadd.f32 0.0, %v1062
    %1064 = vmatmul.f32.gmra.mxu0 %v984
    %v1065 = vpop.f32.mrf.mxu0
    %v1066 = vadd.f32 0.0, %v1065
    %1067 = vdwg.mxu0
    %v1068 = vld [vmem:[%s3] sm:$0xff]
    %v1069 = vld [vmem:[%s3 + $0x8] sm:$0xff]
    %v1070 = vld [vmem:[%s3 + $0x10] sm:$0xff]
    %v1071 = vld [vmem:[%s3 + $0x18] sm:$0xff]
    %v1072 = vld [vmem:[%s3 + $0x20] sm:$0xff]
    %v1073 = vld [vmem:[%s3 + $0x28] sm:$0xff]
    %v1074 = vld [vmem:[%s3 + $0x30] sm:$0xff]
    %v1075 = vld [vmem:[%s3 + $0x38] sm:$0xff]
    %v1076 = vld [vmem:[%s3 + $0x40] sm:$0xff]
    %v1077 = vld [vmem:[%s3 + $0x48] sm:$0xff]
    %v1078 = vld [vmem:[%s3 + $0x50] sm:$0xff]
    %v1079 = vld [vmem:[%s3 + $0x58] sm:$0xff]
    %v1080 = vld [vmem:[%s3 + $0x60] sm:$0xff]
    %v1081 = vld [vmem:[%s3 + $0x68] sm:$0xff]
    %v1082 = vld [vmem:[%s3 + $0x70] sm:$0xff]
    %v1083 = vld [vmem:[%s3 + $0x78] sm:$0xff]
    %v1084 = vld [vmem:[%s3 + $0x80] sm:$0xff]
    %v1085 = vld [vmem:[%s3 + $0x88] sm:$0xff]
    %v1086 = vld [vmem:[%s3 + $0x90] sm:$0xff]
    %v1087 = vld [vmem:[%s3 + $0x98] sm:$0xff]
    %v1088 = vld [vmem:[%s3 + $0xa0] sm:$0xff]
    %v1089 = vld [vmem:[%s3 + $0xa8] sm:$0xff]
    %v1090 = vld [vmem:[%s3 + $0xb0] sm:$0xff]
    %v1091 = vld [vmem:[%s3 + $0xb8] sm:$0xff]
    %v1092 = vld [vmem:[%s3 + $0xc0] sm:$0xff]
    %v1093 = vld [vmem:[%s3 + $0xc8] sm:$0xff]
    %v1094 = vld [vmem:[%s3 + $0xd0] sm:$0xff]
    %v1095 = vld [vmem:[%s3 + $0xd8] sm:$0xff]
    %v1096 = vld [vmem:[%s3 + $0xe0] sm:$0xff]
    %v1097 = vld [vmem:[%s3 + $0xe8] sm:$0xff]
    %v1098 = vld [vmem:[%s3 + $0xf0] sm:$0xff]
    %v1099 = vld [vmem:[%s3 + $0xf8] sm:$0xff]
    %v1100 = vmul.f32 %v1004, %v735
    %v1101 = vmul.f32 %v1045, %v750
    %v1102 = vmul.f32 %v1007, %v765
    %v1103 = vmul.f32 %v1048, %v780
    %v1104 = vmul.f32 %v1010, %v795
    %v1105 = vmul.f32 %v1051, %v810
    %v1106 = vmul.f32 %v1013, %v825
    %v1107 = vmul.f32 %v1054, %v840
    %v1108 = vmul.f32 %v1016, %v855
    %v1109 = vmul.f32 %v1057, %v870
    %v1110 = vmul.f32 %v1019, %v885
    %v1111 = vmul.f32 %v1060, %v900
    %v1112 = vmul.f32 %v1022, %v915
    %v1113 = vmul.f32 %v1063, %v930
    %v1114 = vmul.f32 %v1025, %v945
    %v1115 = vmul.f32 %v1066, %v960
    %v1116 = vperm.slane %v226, 2
    %1117 = vmatpush.msra.mxu0 %v1083
    %1118 = vmatpush.msra.mxu0 %v1082
    %1119 = vmatpush.msra.mxu0 %v1081
    %1120 = vmatpush.msra.mxu0 %v1080
    %1121 = vmatpush.msra.mxu0 %v1079
    %1122 = vmatpush.msra.mxu0 %v1078
    %1123 = vmatpush.msra.mxu0 %v1077
    %1124 = vmatpush.msra.mxu0 %v1076
    %1125 = vmatpush.msra.mxu0 %v1075
    %1126 = vmatpush.msra.mxu0 %v1074
    %1127 = vmatpush.msra.mxu0 %v1073
    %1128 = vmatpush.msra.mxu0 %v1072
    %1129 = vmatpush.msra.mxu0 %v1071
    %1130 = vmatpush.msra.mxu0 %v1070
    %1131 = vmatpush.msra.mxu0 %v1069
    %1132 = vmatpush.msra.mxu0 %v1068
    %1133 = vmatmul.f32.gmra.mxu0 %v1100
    %v1134 = vpop.f32.mrf.mxu0
    %v1135 = vadd.f32 %v1116, %v1134
    %1136 = vmatmul.f32.gmra.mxu0 %v1102
    %v1137 = vpop.f32.mrf.mxu0
    %v1138 = vadd.f32 %v1116, %v1137
    %1139 = vmatmul.f32.gmra.mxu0 %v1104
    %v1140 = vpop.f32.mrf.mxu0
    %v1141 = vadd.f32 %v1116, %v1140
    %1142 = vmatmul.f32.gmra.mxu0 %v1106
    %v1143 = vpop.f32.mrf.mxu0
    %v1144 = vadd.f32 %v1116, %v1143
    %1145 = vmatmul.f32.gmra.mxu0 %v1108
    %v1146 = vpop.f32.mrf.mxu0
    %v1147 = vadd.f32 %v1116, %v1146
    %1148 = vmatmul.f32.gmra.mxu0 %v1110
    %v1149 = vpop.f32.mrf.mxu0
    %v1150 = vadd.f32 %v1116, %v1149
    %1151 = vmatmul.f32.gmra.mxu0 %v1112
    %v1152 = vpop.f32.mrf.mxu0
    %v1153 = vadd.f32 %v1116, %v1152
    %1154 = vmatmul.f32.gmra.mxu0 %v1114
    %v1155 = vpop.f32.mrf.mxu0
    %v1156 = vadd.f32 %v1116, %v1155
    %1157 = vdwg.mxu0
    %1158 = vmatpush.msra.mxu0 %v1099
    %1159 = vmatpush.msra.mxu0 %v1098
    %1160 = vmatpush.msra.mxu0 %v1097
    %1161 = vmatpush.msra.mxu0 %v1096
    %1162 = vmatpush.msra.mxu0 %v1095
    %1163 = vmatpush.msra.mxu0 %v1094
    %1164 = vmatpush.msra.mxu0 %v1093
    %1165 = vmatpush.msra.mxu0 %v1092
    %1166 = vmatpush.msra.mxu0 %v1091
    %1167 = vmatpush.msra.mxu0 %v1090
    %1168 = vmatpush.msra.mxu0 %v1089
    %1169 = vmatpush.msra.mxu0 %v1088
    %1170 = vmatpush.msra.mxu0 %v1087
    %1171 = vmatpush.msra.mxu0 %v1086
    %1172 = vmatpush.msra.mxu0 %v1085
    %1173 = vmatpush.msra.mxu0 %v1084
    %1174 = vmatmul.f32.gmra.mxu0 %v1101
    %v1175 = vpop.f32.mrf.mxu0
    %v1176 = vadd.f32 %v1135, %v1175
    %1177 = vmatmul.f32.gmra.mxu0 %v1103
    %v1178 = vpop.f32.mrf.mxu0
    %v1179 = vadd.f32 %v1138, %v1178
    %1180 = vmatmul.f32.gmra.mxu0 %v1105
    %v1181 = vpop.f32.mrf.mxu0
    %v1182 = vadd.f32 %v1141, %v1181
    %1183 = vmatmul.f32.gmra.mxu0 %v1107
    %v1184 = vpop.f32.mrf.mxu0
    %v1185 = vadd.f32 %v1144, %v1184
    %1186 = vmatmul.f32.gmra.mxu0 %v1109
    %v1187 = vpop.f32.mrf.mxu0
    %v1188 = vadd.f32 %v1147, %v1187
    %1189 = vmatmul.f32.gmra.mxu0 %v1111
    %v1190 = vpop.f32.mrf.mxu0
    %v1191 = vadd.f32 %v1150, %v1190
    %1192 = vmatmul.f32.gmra.mxu0 %v1113
    %v1193 = vpop.f32.mrf.mxu0
    %v1194 = vadd.f32 %v1153, %v1193
    %1195 = vmatmul.f32.gmra.mxu0 %v1115
    %v1196 = vpop.f32.mrf.mxu0
    %v1197 = vadd.f32 %v1156, %v1196
    %1198 = vdwg.mxu0
    %v1199 = vadd.f32 %v427, %v1176
    %v1200 = vadd.f32 %v428, %v1179
    %v1201 = vadd.f32 %v429, %v1182
    %v1202 = vadd.f32 %v430, %v1185
    %v1203 = vadd.f32 %v431, %v1188
    %v1204 = vadd.f32 %v432, %v1191
    %v1205 = vadd.f32 %v433, %v1194
    %v1206 = vadd.f32 %v434, %v1197
    %v1207 = vsel %vm233, %v1199, 0.0
    %1208 = vadd.xlane.f32.xlu0 %v1207
    %v1209 = vpop.xlane.xlu0 %1208
    %v1210 = vsel %vm233, %v1200, 0.0
    %1211 = vadd.xlane.f32.xlu0 %v1210
    %v1212 = vpop.xlane.xlu0 %1211
    %v1213 = vsel %vm233, %v1201, 0.0
    %1214 = vadd.xlane.f32.xlu0 %v1213
    %v1215 = vpop.xlane.xlu0 %1214
    %v1216 = vsel %vm233, %v1202, 0.0
    %1217 = vadd.xlane.f32.xlu0 %v1216
    %v1218 = vpop.xlane.xlu0 %1217
    %v1219 = vsel %vm233, %v1203, 0.0
    %1220 = vadd.xlane.f32.xlu0 %v1219
    %v1221 = vpop.xlane.xlu0 %1220
    %v1222 = vsel %vm233, %v1204, 0.0
    %1223 = vadd.xlane.f32.xlu0 %v1222
    %v1224 = vpop.xlane.xlu0 %1223
    %v1225 = vsel %vm233, %v1205, 0.0
    %1226 = vadd.xlane.f32.xlu0 %v1225
    %v1227 = vpop.xlane.xlu0 %1226
    %v1228 = vsel %vm233, %v1206, 0.0
    %1229 = vadd.xlane.f32.xlu0 %v1228
    %v1230 = vpop.xlane.xlu0 %1229
    %v1231 = vmul.f32 %v1209, %v264
    %v1232 = vmul.f32 %v1212, %v264
    %v1233 = vmul.f32 %v1215, %v264
    %v1234 = vmul.f32 %v1218, %v264
    %v1235 = vmul.f32 %v1221, %v264
    %v1236 = vmul.f32 %v1224, %v264
    %v1237 = vmul.f32 %v1227, %v264
    %v1238 = vmul.f32 %v1230, %v264
    %v1239 = vsub.f32 %v1199, %v1231
    %v1240 = vsub.f32 %v1200, %v1232
    %v1241 = vsub.f32 %v1201, %v1233
    %v1242 = vsub.f32 %v1202, %v1234
    %v1243 = vsub.f32 %v1203, %v1235
    %v1244 = vsub.f32 %v1204, %v1236
    %v1245 = vsub.f32 %v1205, %v1237
    %v1246 = vsub.f32 %v1206, %v1238
    %v1247 = vmul.f32 %v1239, %v1239
    %v1248 = vmul.f32 %v1240, %v1240
    %v1249 = vmul.f32 %v1241, %v1241
    %v1250 = vmul.f32 %v1242, %v1242
    %v1251 = vmul.f32 %v1243, %v1243
    %v1252 = vmul.f32 %v1244, %v1244
    %v1253 = vmul.f32 %v1245, %v1245
    %v1254 = vmul.f32 %v1246, %v1246
    %v1255 = vsel %vm233, %v1247, 0.0
    %1256 = vadd.xlane.f32.xlu0 %v1255
    %v1257 = vpop.xlane.xlu0 %1256
    %v1258 = vsel %vm233, %v1248, 0.0
    %1259 = vadd.xlane.f32.xlu0 %v1258
    %v1260 = vpop.xlane.xlu0 %1259
    %v1261 = vsel %vm233, %v1249, 0.0
    %1262 = vadd.xlane.f32.xlu0 %v1261
    %v1263 = vpop.xlane.xlu0 %1262
    %v1264 = vsel %vm233, %v1250, 0.0
    %1265 = vadd.xlane.f32.xlu0 %v1264
    %v1266 = vpop.xlane.xlu0 %1265
    %v1267 = vsel %vm233, %v1251, 0.0
    %1268 = vadd.xlane.f32.xlu0 %v1267
    %v1269 = vpop.xlane.xlu0 %1268
    %v1270 = vsel %vm233, %v1252, 0.0
    %1271 = vadd.xlane.f32.xlu0 %v1270
    %v1272 = vpop.xlane.xlu0 %1271
    %v1273 = vsel %vm233, %v1253, 0.0
    %1274 = vadd.xlane.f32.xlu0 %v1273
    %v1275 = vpop.xlane.xlu0 %1274
    %v1276 = vsel %vm233, %v1254, 0.0
    %1277 = vadd.xlane.f32.xlu0 %v1276
    %v1278 = vpop.xlane.xlu0 %1277
    %v1279 = vmul.f32 %v1257, %v264
    %v1280 = vmul.f32 %v1260, %v264
    %v1281 = vmul.f32 %v1263, %v264
    %v1282 = vmul.f32 %v1266, %v264
    %v1283 = vmul.f32 %v1269, %v264
    %v1284 = vmul.f32 %v1272, %v264
    %v1285 = vmul.f32 %v1275, %v264
    %v1286 = vmul.f32 %v1278, %v264
    %v1287 = vadd.f32 %v1279, 1e-05
    %v1288 = vadd.f32 %v1280, 1e-05
    %v1289 = vadd.f32 %v1281, 1e-05
    %v1290 = vadd.f32 %v1282, 1e-05
    %v1291 = vadd.f32 %v1283, 1e-05
    %v1292 = vadd.f32 %v1284, 1e-05
    %v1293 = vadd.f32 %v1285, 1e-05
    %v1294 = vadd.f32 %v1286, 1e-05
    %v1295 = vrsqrt.pop %v1287
    %v1296 = vmul.f32 %v1295, %v1287
    %v1297 = vmul.f32 %v1296, %v1295
    %v1298 = vmul.f32 0.5, %v1297
    %v1299 = vsub.f32 1.5, %v1298
    %v1300 = vmul.f32 %v1295, %v1299
    %vm1301 = vweird.f32 %v1287
    %vm1302 = vweird.f32 %v1295
    %vm1303 = vmor %vm1301, %vm1302
    %v1304 = vsel %vm1303, %v1295, %v1300
    %v1305 = vrsqrt.pop %v1288
    %v1306 = vmul.f32 %v1305, %v1288
    %v1307 = vmul.f32 %v1306, %v1305
    %v1308 = vmul.f32 0.5, %v1307
    %v1309 = vsub.f32 1.5, %v1308
    %v1310 = vmul.f32 %v1305, %v1309
    %vm1311 = vweird.f32 %v1288
    %vm1312 = vweird.f32 %v1305
    %vm1313 = vmor %vm1311, %vm1312
    %v1314 = vsel %vm1313, %v1305, %v1310
    %v1315 = vrsqrt.pop %v1289
    %v1316 = vmul.f32 %v1315, %v1289
    %v1317 = vmul.f32 %v1316, %v1315
    %v1318 = vmul.f32 0.5, %v1317
    %v1319 = vsub.f32 1.5, %v1318
    %v1320 = vmul.f32 %v1315, %v1319
    %vm1321 = vweird.f32 %v1289
    %vm1322 = vweird.f32 %v1315
    %vm1323 = vmor %vm1321, %vm1322
    %v1324 = vsel %vm1323, %v1315, %v1320
    %v1325 = vrsqrt.pop %v1290
    %v1326 = vmul.f32 %v1325, %v1290
    %v1327 = vmul.f32 %v1326, %v1325
    %v1328 = vmul.f32 0.5, %v1327
    %v1329 = vsub.f32 1.5, %v1328
    %v1330 = vmul.f32 %v1325, %v1329
    %vm1331 = vweird.f32 %v1290
    %vm1332 = vweird.f32 %v1325
    %vm1333 = vmor %vm1331, %vm1332
    %v1334 = vsel %vm1333, %v1325, %v1330
    %v1335 = vrsqrt.pop %v1291
    %v1336 = vmul.f32 %v1335, %v1291
    %v1337 = vmul.f32 %v1336, %v1335
    %v1338 = vmul.f32 0.5, %v1337
    %v1339 = vsub.f32 1.5, %v1338
    %v1340 = vmul.f32 %v1335, %v1339
    %vm1341 = vweird.f32 %v1291
    %vm1342 = vweird.f32 %v1335
    %vm1343 = vmor %vm1341, %vm1342
    %v1344 = vsel %vm1343, %v1335, %v1340
    %v1345 = vrsqrt.pop %v1292
    %v1346 = vmul.f32 %v1345, %v1292
    %v1347 = vmul.f32 %v1346, %v1345
    %v1348 = vmul.f32 0.5, %v1347
    %v1349 = vsub.f32 1.5, %v1348
    %v1350 = vmul.f32 %v1345, %v1349
    %vm1351 = vweird.f32 %v1292
    %vm1352 = vweird.f32 %v1345
    %vm1353 = vmor %vm1351, %vm1352
    %v1354 = vsel %vm1353, %v1345, %v1350
    %v1355 = vrsqrt.pop %v1293
    %v1356 = vmul.f32 %v1355, %v1293
    %v1357 = vmul.f32 %v1356, %v1355
    %v1358 = vmul.f32 0.5, %v1357
    %v1359 = vsub.f32 1.5, %v1358
    %v1360 = vmul.f32 %v1355, %v1359
    %vm1361 = vweird.f32 %v1293
    %vm1362 = vweird.f32 %v1355
    %vm1363 = vmor %vm1361, %vm1362
    %v1364 = vsel %vm1363, %v1355, %v1360
    %v1365 = vrsqrt.pop %v1294
    %v1366 = vmul.f32 %v1365, %v1294
    %v1367 = vmul.f32 %v1366, %v1365
    %v1368 = vmul.f32 0.5, %v1367
    %v1369 = vsub.f32 1.5, %v1368
    %v1370 = vmul.f32 %v1365, %v1369
    %vm1371 = vweird.f32 %v1294
    %vm1372 = vweird.f32 %v1365
    %vm1373 = vmor %vm1371, %vm1372
    %v1374 = vsel %vm1373, %v1365, %v1370
    %v1375 = vmul.f32 %v1239, %v1304
    %v1376 = vmul.f32 %v1240, %v1314
    %v1377 = vmul.f32 %v1241, %v1324
    %v1378 = vmul.f32 %v1242, %v1334
    %v1379 = vmul.f32 %v1243, %v1344
    %v1380 = vmul.f32 %v1244, %v1354
    %v1381 = vmul.f32 %v1245, %v1364
    %v1382 = vmul.f32 %v1246, %v1374
    %v1383 = vperm.slane %v226, 3
    %v1384 = vmul.f32 %v1375, %v1383
    %v1385 = vmul.f32 %v1376, %v1383
    %v1386 = vmul.f32 %v1377, %v1383
    %v1387 = vmul.f32 %v1378, %v1383
    %v1388 = vmul.f32 %v1379, %v1383
    %v1389 = vmul.f32 %v1380, %v1383
    %v1390 = vmul.f32 %v1381, %v1383
    %v1391 = vmul.f32 %v1382, %v1383
    %v1392 = vperm.slane %v226, 4
    %v1393 = vadd.f32 %v1384, %v1392
    %v1394 = vadd.f32 %v1385, %v1392
    %v1395 = vadd.f32 %v1386, %v1392
    %v1396 = vadd.f32 %v1387, %v1392
    %v1397 = vadd.f32 %v1388, %v1392
    %v1398 = vadd.f32 %v1389, %v1392
    %v1399 = vadd.f32 %v1390, %v1392
    %v1400 = vadd.f32 %v1391, %v1392
    %v1401 = vadd.f32 %v203, %v1393
    %v1402 = vadd.f32 %v206, %v1394
    %v1403 = vadd.f32 %v209, %v1395
    %v1404 = vadd.f32 %v212, %v1396
    %v1405 = vadd.f32 %v215, %v1397
    %v1406 = vadd.f32 %v218, %v1398
    %v1407 = vadd.f32 %v221, %v1399
    %v1408 = vadd.f32 %v224, %v1400
    %v1409 = vsel %vm233, %v1401, 0.0
    %1410 = vadd.xlane.f32.xlu0 %v1409
    %v1411 = vpop.xlane.xlu0 %1410
    %v1412 = vsel %vm233, %v1402, 0.0
    %1413 = vadd.xlane.f32.xlu0 %v1412
    %v1414 = vpop.xlane.xlu0 %1413
    %v1415 = vsel %vm233, %v1403, 0.0
    %1416 = vadd.xlane.f32.xlu0 %v1415
    %v1417 = vpop.xlane.xlu0 %1416
    %v1418 = vsel %vm233, %v1404, 0.0
    %1419 = vadd.xlane.f32.xlu0 %v1418
    %v1420 = vpop.xlane.xlu0 %1419
    %v1421 = vsel %vm233, %v1405, 0.0
    %1422 = vadd.xlane.f32.xlu0 %v1421
    %v1423 = vpop.xlane.xlu0 %1422
    %v1424 = vsel %vm233, %v1406, 0.0
    %1425 = vadd.xlane.f32.xlu0 %v1424
    %v1426 = vpop.xlane.xlu0 %1425
    %v1427 = vsel %vm233, %v1407, 0.0
    %1428 = vadd.xlane.f32.xlu0 %v1427
    %v1429 = vpop.xlane.xlu0 %1428
    %v1430 = vsel %vm233, %v1408, 0.0
    %1431 = vadd.xlane.f32.xlu0 %v1430
    %v1432 = vpop.xlane.xlu0 %1431
    %v1433 = vmul.f32 %v1411, %v264
    %v1434 = vmul.f32 %v1414, %v264
    %v1435 = vmul.f32 %v1417, %v264
    %v1436 = vmul.f32 %v1420, %v264
    %v1437 = vmul.f32 %v1423, %v264
    %v1438 = vmul.f32 %v1426, %v264
    %v1439 = vmul.f32 %v1429, %v264
    %v1440 = vmul.f32 %v1432, %v264
    %v1441 = vsub.f32 %v1401, %v1433
    %v1442 = vsub.f32 %v1402, %v1434
    %v1443 = vsub.f32 %v1403, %v1435
    %v1444 = vsub.f32 %v1404, %v1436
    %v1445 = vsub.f32 %v1405, %v1437
    %v1446 = vsub.f32 %v1406, %v1438
    %v1447 = vsub.f32 %v1407, %v1439
    %v1448 = vsub.f32 %v1408, %v1440
    %v1449 = vmul.f32 %v1441, %v1441
    %v1450 = vmul.f32 %v1442, %v1442
    %v1451 = vmul.f32 %v1443, %v1443
    %v1452 = vmul.f32 %v1444, %v1444
    %v1453 = vmul.f32 %v1445, %v1445
    %v1454 = vmul.f32 %v1446, %v1446
    %v1455 = vmul.f32 %v1447, %v1447
    %v1456 = vmul.f32 %v1448, %v1448
    %v1457 = vsel %vm233, %v1449, 0.0
    %1458 = vadd.xlane.f32.xlu0 %v1457
    %v1459 = vpop.xlane.xlu0 %1458
    %v1460 = vsel %vm233, %v1450, 0.0
    %1461 = vadd.xlane.f32.xlu0 %v1460
    %v1462 = vpop.xlane.xlu0 %1461
    %v1463 = vsel %vm233, %v1451, 0.0
    %1464 = vadd.xlane.f32.xlu0 %v1463
    %v1465 = vpop.xlane.xlu0 %1464
    %v1466 = vsel %vm233, %v1452, 0.0
    %1467 = vadd.xlane.f32.xlu0 %v1466
    %v1468 = vpop.xlane.xlu0 %1467
    %v1469 = vsel %vm233, %v1453, 0.0
    %1470 = vadd.xlane.f32.xlu0 %v1469
    %v1471 = vpop.xlane.xlu0 %1470
    %v1472 = vsel %vm233, %v1454, 0.0
    %1473 = vadd.xlane.f32.xlu0 %v1472
    %v1474 = vpop.xlane.xlu0 %1473
    %v1475 = vsel %vm233, %v1455, 0.0
    %1476 = vadd.xlane.f32.xlu0 %v1475
    %v1477 = vpop.xlane.xlu0 %1476
    %v1478 = vsel %vm233, %v1456, 0.0
    %1479 = vadd.xlane.f32.xlu0 %v1478
    %v1480 = vpop.xlane.xlu0 %1479
    %v1481 = vmul.f32 %v1459, %v264
    %v1482 = vmul.f32 %v1462, %v264
    %v1483 = vmul.f32 %v1465, %v264
    %v1484 = vmul.f32 %v1468, %v264
    %v1485 = vmul.f32 %v1471, %v264
    %v1486 = vmul.f32 %v1474, %v264
    %v1487 = vmul.f32 %v1477, %v264
    %v1488 = vmul.f32 %v1480, %v264
    %v1489 = vadd.f32 %v1481, 1e-05
    %v1490 = vadd.f32 %v1482, 1e-05
    %v1491 = vadd.f32 %v1483, 1e-05
    %v1492 = vadd.f32 %v1484, 1e-05
    %v1493 = vadd.f32 %v1485, 1e-05
    %v1494 = vadd.f32 %v1486, 1e-05
    %v1495 = vadd.f32 %v1487, 1e-05
    %v1496 = vadd.f32 %v1488, 1e-05
    %v1497 = vrsqrt.pop %v1489
    %v1498 = vmul.f32 %v1497, %v1489
    %v1499 = vmul.f32 %v1498, %v1497
    %v1500 = vmul.f32 0.5, %v1499
    %v1501 = vsub.f32 1.5, %v1500
    %v1502 = vmul.f32 %v1497, %v1501
    %vm1503 = vweird.f32 %v1489
    %vm1504 = vweird.f32 %v1497
    %vm1505 = vmor %vm1503, %vm1504
    %v1506 = vsel %vm1505, %v1497, %v1502
    %v1507 = vrsqrt.pop %v1490
    %v1508 = vmul.f32 %v1507, %v1490
    %v1509 = vmul.f32 %v1508, %v1507
    %v1510 = vmul.f32 0.5, %v1509
    %v1511 = vsub.f32 1.5, %v1510
    %v1512 = vmul.f32 %v1507, %v1511
    %vm1513 = vweird.f32 %v1490
    %vm1514 = vweird.f32 %v1507
    %vm1515 = vmor %vm1513, %vm1514
    %v1516 = vsel %vm1515, %v1507, %v1512
    %v1517 = vrsqrt.pop %v1491
    %v1518 = vmul.f32 %v1517, %v1491
    %v1519 = vmul.f32 %v1518, %v1517
    %v1520 = vmul.f32 0.5, %v1519
    %v1521 = vsub.f32 1.5, %v1520
    %v1522 = vmul.f32 %v1517, %v1521
    %vm1523 = vweird.f32 %v1491
    %vm1524 = vweird.f32 %v1517
    %vm1525 = vmor %vm1523, %vm1524
    %v1526 = vsel %vm1525, %v1517, %v1522
    %v1527 = vrsqrt.pop %v1492
    %v1528 = vmul.f32 %v1527, %v1492
    %v1529 = vmul.f32 %v1528, %v1527
    %v1530 = vmul.f32 0.5, %v1529
    %v1531 = vsub.f32 1.5, %v1530
    %v1532 = vmul.f32 %v1527, %v1531
    %vm1533 = vweird.f32 %v1492
    %vm1534 = vweird.f32 %v1527
    %vm1535 = vmor %vm1533, %vm1534
    %v1536 = vsel %vm1535, %v1527, %v1532
    %v1537 = vrsqrt.pop %v1493
    %v1538 = vmul.f32 %v1537, %v1493
    %v1539 = vmul.f32 %v1538, %v1537
    %v1540 = vmul.f32 0.5, %v1539
    %v1541 = vsub.f32 1.5, %v1540
    %v1542 = vmul.f32 %v1537, %v1541
    %vm1543 = vweird.f32 %v1493
    %vm1544 = vweird.f32 %v1537
    %vm1545 = vmor %vm1543, %vm1544
    %v1546 = vsel %vm1545, %v1537, %v1542
    %v1547 = vrsqrt.pop %v1494
    %v1548 = vmul.f32 %v1547, %v1494
    %v1549 = vmul.f32 %v1548, %v1547
    %v1550 = vmul.f32 0.5, %v1549
    %v1551 = vsub.f32 1.5, %v1550
    %v1552 = vmul.f32 %v1547, %v1551
    %vm1553 = vweird.f32 %v1494
    %vm1554 = vweird.f32 %v1547
    %vm1555 = vmor %vm1553, %vm1554
    %v1556 = vsel %vm1555, %v1547, %v1552
    %v1557 = vrsqrt.pop %v1495
    %v1558 = vmul.f32 %v1557, %v1495
    %v1559 = vmul.f32 %v1558, %v1557
    %v1560 = vmul.f32 0.5, %v1559
    %v1561 = vsub.f32 1.5, %v1560
    %v1562 = vmul.f32 %v1557, %v1561
    %vm1563 = vweird.f32 %v1495
    %vm1564 = vweird.f32 %v1557
    %vm1565 = vmor %vm1563, %vm1564
    %v1566 = vsel %vm1565, %v1557, %v1562
    %v1567 = vrsqrt.pop %v1496
    %v1568 = vmul.f32 %v1567, %v1496
    %v1569 = vmul.f32 %v1568, %v1567
    %v1570 = vmul.f32 0.5, %v1569
    %v1571 = vsub.f32 1.5, %v1570
    %v1572 = vmul.f32 %v1567, %v1571
    %vm1573 = vweird.f32 %v1496
    %vm1574 = vweird.f32 %v1567
    %vm1575 = vmor %vm1573, %vm1574
    %v1576 = vsel %vm1575, %v1567, %v1572
    %v1577 = vmul.f32 %v1441, %v1506
    %v1578 = vmul.f32 %v1442, %v1516
    %v1579 = vmul.f32 %v1443, %v1526
    %v1580 = vmul.f32 %v1444, %v1536
    %v1581 = vmul.f32 %v1445, %v1546
    %v1582 = vmul.f32 %v1446, %v1556
    %v1583 = vmul.f32 %v1447, %v1566
    %v1584 = vmul.f32 %v1448, %v1576
    %v1585 = vperm.slane %v226, 6
    %v1586 = vmul.f32 %v1577, %v1585
    %v1587 = vmul.f32 %v1578, %v1585
    %v1588 = vmul.f32 %v1579, %v1585
    %v1589 = vmul.f32 %v1580, %v1585
    %v1590 = vmul.f32 %v1581, %v1585
    %v1591 = vmul.f32 %v1582, %v1585
    %v1592 = vmul.f32 %v1583, %v1585
    %v1593 = vmul.f32 %v1584, %v1585
    %v1594 = vperm.slane %v226, 7
    %v1595 = vadd.f32 %v1586, %v1594
    %v1596 = vadd.f32 %v1587, %v1594
    %v1597 = vadd.f32 %v1588, %v1594
    %v1598 = vadd.f32 %v1589, %v1594
    %v1599 = vadd.f32 %v1590, %v1594
    %v1600 = vadd.f32 %v1591, %v1594
    %v1601 = vadd.f32 %v1592, %v1594
    %v1602 = vadd.f32 %v1593, %v1594
    %v1603 = vld [vmem:[%s2 + $0x20] sm:$0xff]
    %v1604 = vld [vmem:[%s2 + $0x28] sm:$0xff]
    %v1605 = vld [vmem:[%s2 + $0x80] sm:$0xff]
    %v1606 = vld [vmem:[%s2 + $0x88] sm:$0xff]
    %v1607 = vld [vmem:[%s2 + $0xe0] sm:$0xff]
    %v1608 = vld [vmem:[%s2 + $0xe8] sm:$0xff]
    %v1609 = vld [vmem:[%s2 + $0x140] sm:$0xff]
    %v1610 = vld [vmem:[%s2 + $0x148] sm:$0xff]
    %v1612 = vsel %vm233, %v1595, 0
    %v1615 = vsel %vm233, %v1596, 0
    %v1618 = vsel %vm233, %v1597, 0
    %v1621 = vsel %vm233, %v1598, 0
    %v1624 = vsel %vm233, %v1599, 0
    %v1627 = vsel %vm233, %v1600, 0
    %v1630 = vsel %vm233, %v1601, 0
    %v1633 = vsel %vm233, %v1602, 0
    %1635 = vmatpush.msra.mxu0 0.0
    %1636 = vmatpush.msra.mxu0 0.0
    %1637 = vmatpush.msra.mxu0 0.0
    %1638 = vmatpush.msra.mxu0 0.0
    %1639 = vmatpush.msra.mxu0 0.0
    %1640 = vmatpush.msra.mxu0 0.0
    %1641 = vmatpush.msra.mxu0 0.0
    %1642 = vmatpush.msra.mxu0 0.0
    %1643 = vmatpush.msra.mxu0 0.0
    %1644 = vmatpush.msra.mxu0 0.0
    %1645 = vmatpush.msra.mxu0 0.0
    %1646 = vmatpush.msra.mxu0 0.0
    %1647 = vmatpush.msra.mxu0 %v1609
    %1648 = vmatpush.msra.mxu0 %v1607
    %1649 = vmatpush.msra.mxu0 %v1605
    %1650 = vmatpush.msra.mxu0 %v1603
    %1651 = vmatmul.f32.gmra.mxu0 %v1612
    %v1652 = vpop.f32.mrf.mxu0
    %v1653 = vadd.f32 0.0, %v1652
    %1654 = vmatmul.f32.gmra.mxu0 %v1615
    %v1655 = vpop.f32.mrf.mxu0
    %v1656 = vadd.f32 0.0, %v1655
    %1657 = vmatmul.f32.gmra.mxu0 %v1618
    %v1658 = vpop.f32.mrf.mxu0
    %v1659 = vadd.f32 0.0, %v1658
    %1660 = vmatmul.f32.gmra.mxu0 %v1621
    %v1661 = vpop.f32.mrf.mxu0
    %v1662 = vadd.f32 0.0, %v1661
    %1663 = vmatmul.f32.gmra.mxu0 %v1624
    %v1664 = vpop.f32.mrf.mxu0
    %v1665 = vadd.f32 0.0, %v1664
    %1666 = vmatmul.f32.gmra.mxu0 %v1627
    %v1667 = vpop.f32.mrf.mxu0
    %v1668 = vadd.f32 0.0, %v1667
    %1669 = vmatmul.f32.gmra.mxu0 %v1630
    %v1670 = vpop.f32.mrf.mxu0
    %v1671 = vadd.f32 0.0, %v1670
    %1672 = vmatmul.f32.gmra.mxu0 %v1633
    %v1673 = vpop.f32.mrf.mxu0
    %v1674 = vadd.f32 0.0, %v1673
    %1675 = vdwg.mxu0
    %1676 = vmatpush.msra.mxu0 0.0
    %1677 = vmatpush.msra.mxu0 0.0
    %1678 = vmatpush.msra.mxu0 0.0
    %1679 = vmatpush.msra.mxu0 0.0
    %1680 = vmatpush.msra.mxu0 0.0
    %1681 = vmatpush.msra.mxu0 0.0
    %1682 = vmatpush.msra.mxu0 0.0
    %1683 = vmatpush.msra.mxu0 0.0
    %1684 = vmatpush.msra.mxu0 0.0
    %1685 = vmatpush.msra.mxu0 0.0
    %1686 = vmatpush.msra.mxu0 0.0
    %1687 = vmatpush.msra.mxu0 0.0
    %1688 = vmatpush.msra.mxu0 %v1610
    %1689 = vmatpush.msra.mxu0 %v1608
    %1690 = vmatpush.msra.mxu0 %v1606
    %1691 = vmatpush.msra.mxu0 %v1604
    %1692 = vmatmul.f32.gmra.mxu0 %v1612
    %v1693 = vpop.f32.mrf.mxu0
    %v1694 = vadd.f32 0.0, %v1693
    %1695 = vmatmul.f32.gmra.mxu0 %v1615
    %v1696 = vpop.f32.mrf.mxu0
    %v1697 = vadd.f32 0.0, %v1696
    %1698 = vmatmul.f32.gmra.mxu0 %v1618
    %v1699 = vpop.f32.mrf.mxu0
    %v1700 = vadd.f32 0.0, %v1699
    %1701 = vmatmul.f32.gmra.mxu0 %v1621
    %v1702 = vpop.f32.mrf.mxu0
    %v1703 = vadd.f32 0.0, %v1702
    %1704 = vmatmul.f32.gmra.mxu0 %v1624
    %v1705 = vpop.f32.mrf.mxu0
    %v1706 = vadd.f32 0.0, %v1705
    %1707 = vmatmul.f32.gmra.mxu0 %v1627
    %v1708 = vpop.f32.mrf.mxu0
    %v1709 = vadd.f32 0.0, %v1708
    %1710 = vmatmul.f32.gmra.mxu0 %v1630
    %v1711 = vpop.f32.mrf.mxu0
    %v1712 = vadd.f32 0.0, %v1711
    %1713 = vmatmul.f32.gmra.mxu0 %v1633
    %v1714 = vpop.f32.mrf.mxu0
    %v1715 = vadd.f32 0.0, %v1714
    %1716 = vdwg.mxu0
    %v1717 = vperm.slane %v228, 3
    %1719 = vrot.lane.b32.xlu0 %v1717, 64
    %v1720 = vpop.permute.xlu0 %1719
    %v1722 = vadd.f32 %v1694, %v1720
    %v1723 = vadd.f32 %v1697, %v1720
    %v1724 = vadd.f32 %v1700, %v1720
    %v1725 = vadd.f32 %v1703, %v1720
    %v1726 = vadd.f32 %v1706, %v1720
    %v1727 = vadd.f32 %v1709, %v1720
    %v1728 = vadd.f32 %v1712, %v1720
    %v1729 = vadd.f32 %v1715, %v1720
    %v1730 = vxor.u32 %v1722, 2147483648
    %v1731 = vxor.u32 %v1723, 2147483648
    %v1732 = vxor.u32 %v1724, 2147483648
    %v1733 = vxor.u32 %v1725, 2147483648
    %v1734 = vxor.u32 %v1726, 2147483648
    %v1735 = vxor.u32 %v1727, 2147483648
    %v1736 = vxor.u32 %v1728, 2147483648
    %v1737 = vxor.u32 %v1729, 2147483648
    %v1738 = vmul.f32 %v1730, 1.442695
    %v1739 = vpow.pop %v1738
    %v1740 = vmul.f32 %v1731, 1.442695
    %v1741 = vpow.pop %v1740
    %v1742 = vmul.f32 %v1732, 1.442695
    %v1743 = vpow.pop %v1742
    %v1744 = vmul.f32 %v1733, 1.442695
    %v1745 = vpow.pop %v1744
    %v1746 = vmul.f32 %v1734, 1.442695
    %v1747 = vpow.pop %v1746
    %v1748 = vmul.f32 %v1735, 1.442695
    %v1749 = vpow.pop %v1748
    %v1750 = vmul.f32 %v1736, 1.442695
    %v1751 = vpow.pop %v1750
    %v1752 = vmul.f32 %v1737, 1.442695
    %v1753 = vpow.pop %v1752
    %v1754 = vadd.f32 %v1739, 1.0
    %v1755 = vadd.f32 %v1741, 1.0
    %v1756 = vadd.f32 %v1743, 1.0
    %v1757 = vadd.f32 %v1745, 1.0
    %v1758 = vadd.f32 %v1747, 1.0
    %v1759 = vadd.f32 %v1749, 1.0
    %v1760 = vadd.f32 %v1751, 1.0
    %v1761 = vadd.f32 %v1753, 1.0
    %v1762 = vrcp.pop %v1754
    %v1763 = vmul.f32 %v1754, %v1762
    %v1764 = vsub.f32 1.0, %v1763
    %v1765 = vmul.f32 %v1762, %v1764
    %v1766 = vadd.f32 %v1762, %v1765
    %vm1767 = vweird.f32 %v1754
    %vm1768 = vweird.f32 %v1762
    %vm1769 = vmor %vm1767, %vm1768
    %v1770 = vsel %vm1769, %v1762, %v1766
    %v1771 = vand.u32 2147483647, %v1754
    %vm1772 = vcmp.eq.f32.partialorder %v1771, 8.507059e+37
    %v1773 = vand.u32 %v1754, 2147483648
    %v1774 = vor.u32 1.1754944e-38, %v1773
    %v1775 = vsel %vm1772, %v1774, %v1770
    %v1776 = vmul.f32 1.0, %v1775
    %v1777 = vrcp.pop %v1755
    %v1778 = vmul.f32 %v1755, %v1777
    %v1779 = vsub.f32 1.0, %v1778
    %v1780 = vmul.f32 %v1777, %v1779
    %v1781 = vadd.f32 %v1777, %v1780
    %vm1782 = vweird.f32 %v1755
    %vm1783 = vweird.f32 %v1777
    %vm1784 = vmor %vm1782, %vm1783
    %v1785 = vsel %vm1784, %v1777, %v1781
    %v1786 = vand.u32 2147483647, %v1755
    %vm1787 = vcmp.eq.f32.partialorder %v1786, 8.507059e+37
    %v1788 = vand.u32 %v1755, 2147483648
    %v1789 = vor.u32 1.1754944e-38, %v1788
    %v1790 = vsel %vm1787, %v1789, %v1785
    %v1791 = vmul.f32 1.0, %v1790
    %v1792 = vrcp.pop %v1756
    %v1793 = vmul.f32 %v1756, %v1792
    %v1794 = vsub.f32 1.0, %v1793
    %v1795 = vmul.f32 %v1792, %v1794
    %v1796 = vadd.f32 %v1792, %v1795
    %vm1797 = vweird.f32 %v1756
    %vm1798 = vweird.f32 %v1792
    %vm1799 = vmor %vm1797, %vm1798
    %v1800 = vsel %vm1799, %v1792, %v1796
    %v1801 = vand.u32 2147483647, %v1756
    %vm1802 = vcmp.eq.f32.partialorder %v1801, 8.507059e+37
    %v1803 = vand.u32 %v1756, 2147483648
    %v1804 = vor.u32 1.1754944e-38, %v1803
    %v1805 = vsel %vm1802, %v1804, %v1800
    %v1806 = vmul.f32 1.0, %v1805
    %v1807 = vrcp.pop %v1757
    %v1808 = vmul.f32 %v1757, %v1807
    %v1809 = vsub.f32 1.0, %v1808
    %v1810 = vmul.f32 %v1807, %v1809
    %v1811 = vadd.f32 %v1807, %v1810
    %vm1812 = vweird.f32 %v1757
    %vm1813 = vweird.f32 %v1807
    %vm1814 = vmor %vm1812, %vm1813
    %v1815 = vsel %vm1814, %v1807, %v1811
    %v1816 = vand.u32 2147483647, %v1757
    %vm1817 = vcmp.eq.f32.partialorder %v1816, 8.507059e+37
    %v1818 = vand.u32 %v1757, 2147483648
    %v1819 = vor.u32 1.1754944e-38, %v1818
    %v1820 = vsel %vm1817, %v1819, %v1815
    %v1821 = vmul.f32 1.0, %v1820
    %v1822 = vrcp.pop %v1758
    %v1823 = vmul.f32 %v1758, %v1822
    %v1824 = vsub.f32 1.0, %v1823
    %v1825 = vmul.f32 %v1822, %v1824
    %v1826 = vadd.f32 %v1822, %v1825
    %vm1827 = vweird.f32 %v1758
    %vm1828 = vweird.f32 %v1822
    %vm1829 = vmor %vm1827, %vm1828
    %v1830 = vsel %vm1829, %v1822, %v1826
    %v1831 = vand.u32 2147483647, %v1758
    %vm1832 = vcmp.eq.f32.partialorder %v1831, 8.507059e+37
    %v1833 = vand.u32 %v1758, 2147483648
    %v1834 = vor.u32 1.1754944e-38, %v1833
    %v1835 = vsel %vm1832, %v1834, %v1830
    %v1836 = vmul.f32 1.0, %v1835
    %v1837 = vrcp.pop %v1759
    %v1838 = vmul.f32 %v1759, %v1837
    %v1839 = vsub.f32 1.0, %v1838
    %v1840 = vmul.f32 %v1837, %v1839
    %v1841 = vadd.f32 %v1837, %v1840
    %vm1842 = vweird.f32 %v1759
    %vm1843 = vweird.f32 %v1837
    %vm1844 = vmor %vm1842, %vm1843
    %v1845 = vsel %vm1844, %v1837, %v1841
    %v1846 = vand.u32 2147483647, %v1759
    %vm1847 = vcmp.eq.f32.partialorder %v1846, 8.507059e+37
    %v1848 = vand.u32 %v1759, 2147483648
    %v1849 = vor.u32 1.1754944e-38, %v1848
    %v1850 = vsel %vm1847, %v1849, %v1845
    %v1851 = vmul.f32 1.0, %v1850
    %v1852 = vrcp.pop %v1760
    %v1853 = vmul.f32 %v1760, %v1852
    %v1854 = vsub.f32 1.0, %v1853
    %v1855 = vmul.f32 %v1852, %v1854
    %v1856 = vadd.f32 %v1852, %v1855
    %vm1857 = vweird.f32 %v1760
    %vm1858 = vweird.f32 %v1852
    %vm1859 = vmor %vm1857, %vm1858
    %v1860 = vsel %vm1859, %v1852, %v1856
    %v1861 = vand.u32 2147483647, %v1760
    %vm1862 = vcmp.eq.f32.partialorder %v1861, 8.507059e+37
    %v1863 = vand.u32 %v1760, 2147483648
    %v1864 = vor.u32 1.1754944e-38, %v1863
    %v1865 = vsel %vm1862, %v1864, %v1860
    %v1866 = vmul.f32 1.0, %v1865
    %v1867 = vrcp.pop %v1761
    %v1868 = vmul.f32 %v1761, %v1867
    %v1869 = vsub.f32 1.0, %v1868
    %v1870 = vmul.f32 %v1867, %v1869
    %v1871 = vadd.f32 %v1867, %v1870
    %vm1872 = vweird.f32 %v1761
    %vm1873 = vweird.f32 %v1867
    %vm1874 = vmor %vm1872, %vm1873
    %v1875 = vsel %vm1874, %v1867, %v1871
    %v1876 = vand.u32 2147483647, %v1761
    %vm1877 = vcmp.eq.f32.partialorder %v1876, 8.507059e+37
    %v1878 = vand.u32 %v1761, 2147483648
    %v1879 = vor.u32 1.1754944e-38, %v1878
    %v1880 = vsel %vm1877, %v1879, %v1875
    %v1881 = vmul.f32 1.0, %v1880
    %1890 = vrot.lane.b32.xlu0 %v1653, 64
    %v1891 = vpop.permute.xlu0 %1890
    %1892 = vrot.lane.b32.xlu0 %v1656, 64
    %v1893 = vpop.permute.xlu0 %1892
    %1894 = vrot.lane.b32.xlu0 %v1659, 64
    %v1895 = vpop.permute.xlu0 %1894
    %1896 = vrot.lane.b32.xlu0 %v1662, 64
    %v1897 = vpop.permute.xlu0 %1896
    %1898 = vrot.lane.b32.xlu0 %v1665, 64
    %v1899 = vpop.permute.xlu0 %1898
    %1900 = vrot.lane.b32.xlu0 %v1668, 64
    %v1901 = vpop.permute.xlu0 %1900
    %1902 = vrot.lane.b32.xlu0 %v1671, 64
    %v1903 = vpop.permute.xlu0 %1902
    %1904 = vrot.lane.b32.xlu0 %v1674, 64
    %v1905 = vpop.permute.xlu0 %1904
    %v1906 = vsel %vm961, %v1653, 0
    %v1908 = vsel %vm961, %v1656, 0
    %v1910 = vsel %vm961, %v1659, 0
    %v1912 = vsel %vm961, %v1662, 0
    %v1914 = vsel %vm961, %v1665, 0
    %v1916 = vsel %vm961, %v1668, 0
    %v1918 = vsel %vm961, %v1671, 0
    %v1920 = vsel %vm961, %v1674, 0
    %v1922 = vsel %vm961, %v1891, 0
    %v1924 = vsel %vm961, %v1893, 0
    %v1926 = vsel %vm961, %v1895, 0
    %v1928 = vsel %vm961, %v1897, 0
    %v1930 = vsel %vm961, %v1899, 0
    %v1932 = vsel %vm961, %v1901, 0
    %v1934 = vsel %vm961, %v1903, 0
    %v1936 = vsel %vm961, %v1905, 0
    %1938 = vmatpush.xpose.msra.mxu0 0.0
    %1939 = vmatpush.xpose.msra.mxu0 0.0
    %1940 = vmatpush.xpose.msra.mxu0 0.0
    %1941 = vmatpush.xpose.msra.mxu0 0.0
    %1942 = vmatpush.xpose.msra.mxu0 0.0
    %1943 = vmatpush.xpose.msra.mxu0 0.0
    %1944 = vmatpush.xpose.msra.mxu0 0.0
    %1945 = vmatpush.xpose.msra.mxu0 0.0
    %1946 = vmatpush.xpose.msra.mxu0 %v1936
    %1947 = vmatpush.xpose.msra.mxu0 %v1934
    %1948 = vmatpush.xpose.msra.mxu0 %v1932
    %1949 = vmatpush.xpose.msra.mxu0 %v1930
    %1950 = vmatpush.xpose.msra.mxu0 %v1928
    %1951 = vmatpush.xpose.msra.mxu0 %v1926
    %1952 = vmatpush.xpose.msra.mxu0 %v1924
    %1953 = vmatpush.xpose.msra.mxu0 %v1922
    %1954 = vmatmul.f32.gmra.mxu0 %v1906
    %v1955 = vpop.f32.mrf.mxu0
    %v1956 = vadd.f32 0.0, %v1955
    %1957 = vmatmul.f32.gmra.mxu0 %v1908
    %v1958 = vpop.f32.mrf.mxu0
    %v1959 = vadd.f32 0.0, %v1958
    %1960 = vmatmul.f32.gmra.mxu0 %v1910
    %v1961 = vpop.f32.mrf.mxu0
    %v1962 = vadd.f32 0.0, %v1961
    %1963 = vmatmul.f32.gmra.mxu0 %v1912
    %v1964 = vpop.f32.mrf.mxu0
    %v1965 = vadd.f32 0.0, %v1964
    %1966 = vmatmul.f32.gmra.mxu0 %v1914
    %v1967 = vpop.f32.mrf.mxu0
    %v1968 = vadd.f32 0.0, %v1967
    %1969 = vmatmul.f32.gmra.mxu0 %v1916
    %v1970 = vpop.f32.mrf.mxu0
    %v1971 = vadd.f32 0.0, %v1970
    %1972 = vmatmul.f32.gmra.mxu0 %v1918
    %v1973 = vpop.f32.mrf.mxu0
    %v1974 = vadd.f32 0.0, %v1973
    %1975 = vmatmul.f32.gmra.mxu0 %v1920
    %v1976 = vpop.f32.mrf.mxu0
    %v1977 = vadd.f32 0.0, %v1976
    %1978 = vdwg.mxu0
    %v1979 = vsel %vm94, %v1956, -1e+30
    %v1980 = vsel %vm95, %v1959, -1e+30
    %v1981 = vsel %vm96, %v1962, -1e+30
    %v1982 = vsel %vm97, %v1965, -1e+30
    %v1983 = vsel %vm98, %v1968, -1e+30
    %v1984 = vsel %vm99, %v1971, -1e+30
    %v1985 = vsel %vm100, %v1974, -1e+30
    %v1986 = vsel %vm101, %v1977, -1e+30
    %v1987 = vsel %vm961, %v1979, -inf
    %1988 = vmax.xlane.f32.xlu0 %v1987
    %v1989 = vpop.xlane.xlu0 %1988
    %v1990 = vsel %vm961, %v1980, -inf
    %1991 = vmax.xlane.f32.xlu0 %v1990
    %v1992 = vpop.xlane.xlu0 %1991
    %v1993 = vsel %vm961, %v1981, -inf
    %1994 = vmax.xlane.f32.xlu0 %v1993
    %v1995 = vpop.xlane.xlu0 %1994
    %v1996 = vsel %vm961, %v1982, -inf
    %1997 = vmax.xlane.f32.xlu0 %v1996
    %v1998 = vpop.xlane.xlu0 %1997
    %v1999 = vsel %vm961, %v1983, -inf
    %2000 = vmax.xlane.f32.xlu0 %v1999
    %v2001 = vpop.xlane.xlu0 %2000
    %v2002 = vsel %vm961, %v1984, -inf
    %2003 = vmax.xlane.f32.xlu0 %v2002
    %v2004 = vpop.xlane.xlu0 %2003
    %v2005 = vsel %vm961, %v1985, -inf
    %2006 = vmax.xlane.f32.xlu0 %v2005
    %v2007 = vpop.xlane.xlu0 %2006
    %v2008 = vsel %vm961, %v1986, -inf
    %2009 = vmax.xlane.f32.xlu0 %v2008
    %v2010 = vpop.xlane.xlu0 %2009
    %v2011 = vsub.f32 %v1979, %v1989
    %v2012 = vsub.f32 %v1980, %v1992
    %v2013 = vsub.f32 %v1981, %v1995
    %v2014 = vsub.f32 %v1982, %v1998
    %v2015 = vsub.f32 %v1983, %v2001
    %v2016 = vsub.f32 %v1984, %v2004
    %v2017 = vsub.f32 %v1985, %v2007
    %v2018 = vsub.f32 %v1986, %v2010
    %v2019 = vmul.f32 %v2011, 1.442695
    %v2020 = vpow.pop %v2019
    %v2021 = vmul.f32 %v2012, 1.442695
    %v2022 = vpow.pop %v2021
    %v2023 = vmul.f32 %v2013, 1.442695
    %v2024 = vpow.pop %v2023
    %v2025 = vmul.f32 %v2014, 1.442695
    %v2026 = vpow.pop %v2025
    %v2027 = vmul.f32 %v2015, 1.442695
    %v2028 = vpow.pop %v2027
    %v2029 = vmul.f32 %v2016, 1.442695
    %v2030 = vpow.pop %v2029
    %v2031 = vmul.f32 %v2017, 1.442695
    %v2032 = vpow.pop %v2031
    %v2033 = vmul.f32 %v2018, 1.442695
    %v2034 = vpow.pop %v2033
    %v2035 = vsel %vm961, %v2020, 0.0
    %2036 = vadd.xlane.f32.xlu0 %v2035
    %v2037 = vpop.xlane.xlu0 %2036
    %v2038 = vsel %vm961, %v2022, 0.0
    %2039 = vadd.xlane.f32.xlu0 %v2038
    %v2040 = vpop.xlane.xlu0 %2039
    %v2041 = vsel %vm961, %v2024, 0.0
    %2042 = vadd.xlane.f32.xlu0 %v2041
    %v2043 = vpop.xlane.xlu0 %2042
    %v2044 = vsel %vm961, %v2026, 0.0
    %2045 = vadd.xlane.f32.xlu0 %v2044
    %v2046 = vpop.xlane.xlu0 %2045
    %v2047 = vsel %vm961, %v2028, 0.0
    %2048 = vadd.xlane.f32.xlu0 %v2047
    %v2049 = vpop.xlane.xlu0 %2048
    %v2050 = vsel %vm961, %v2030, 0.0
    %2051 = vadd.xlane.f32.xlu0 %v2050
    %v2052 = vpop.xlane.xlu0 %2051
    %v2053 = vsel %vm961, %v2032, 0.0
    %2054 = vadd.xlane.f32.xlu0 %v2053
    %v2055 = vpop.xlane.xlu0 %2054
    %v2056 = vsel %vm961, %v2034, 0.0
    %2057 = vadd.xlane.f32.xlu0 %v2056
    %v2058 = vpop.xlane.xlu0 %2057
    %v2059 = vrcp.pop %v2037
    %v2060 = vrcp.pop %v2040
    %v2061 = vrcp.pop %v2043
    %v2062 = vrcp.pop %v2046
    %v2063 = vrcp.pop %v2049
    %v2064 = vrcp.pop %v2052
    %v2065 = vrcp.pop %v2055
    %v2066 = vrcp.pop %v2058
    %v2067 = vmul.f32 %v2020, %v2059
    %v2068 = vmul.f32 %v2022, %v2060
    %v2069 = vmul.f32 %v2024, %v2061
    %v2070 = vmul.f32 %v2026, %v2062
    %v2071 = vmul.f32 %v2028, %v2063
    %v2072 = vmul.f32 %v2030, %v2064
    %v2073 = vmul.f32 %v2032, %v2065
    %v2074 = vmul.f32 %v2034, %v2066
    %v2076 = vsel %vm961, %v2067, 0
    %v2079 = vsel %vm961, %v2068, 0
    %v2082 = vsel %vm961, %v2069, 0
    %v2085 = vsel %vm961, %v2070, 0
    %v2088 = vsel %vm961, %v2071, 0
    %v2091 = vsel %vm961, %v2072, 0
    %v2094 = vsel %vm961, %v2073, 0
    %v2097 = vsel %vm961, %v2074, 0
    %2099 = vmatpush.msra.mxu0 0.0
    %2100 = vmatpush.msra.mxu0 0.0
    %2101 = vmatpush.msra.mxu0 0.0
    %2102 = vmatpush.msra.mxu0 0.0
    %2103 = vmatpush.msra.mxu0 0.0
    %2104 = vmatpush.msra.mxu0 0.0
    %2105 = vmatpush.msra.mxu0 0.0
    %2106 = vmatpush.msra.mxu0 0.0
    %2107 = vmatpush.msra.mxu0 %v1715
    %2108 = vmatpush.msra.mxu0 %v1712
    %2109 = vmatpush.msra.mxu0 %v1709
    %2110 = vmatpush.msra.mxu0 %v1706
    %2111 = vmatpush.msra.mxu0 %v1703
    %2112 = vmatpush.msra.mxu0 %v1700
    %2113 = vmatpush.msra.mxu0 %v1697
    %2114 = vmatpush.msra.mxu0 %v1694
    %2115 = vmatmul.f32.gmra.mxu0 %v2076
    %v2116 = vpop.f32.mrf.mxu0
    %v2117 = vadd.f32 0.0, %v2116
    %2118 = vmatmul.f32.gmra.mxu0 %v2079
    %v2119 = vpop.f32.mrf.mxu0
    %v2120 = vadd.f32 0.0, %v2119
    %2121 = vmatmul.f32.gmra.mxu0 %v2082
    %v2122 = vpop.f32.mrf.mxu0
    %v2123 = vadd.f32 0.0, %v2122
    %2124 = vmatmul.f32.gmra.mxu0 %v2085
    %v2125 = vpop.f32.mrf.mxu0
    %v2126 = vadd.f32 0.0, %v2125
    %2127 = vmatmul.f32.gmra.mxu0 %v2088
    %v2128 = vpop.f32.mrf.mxu0
    %v2129 = vadd.f32 0.0, %v2128
    %2130 = vmatmul.f32.gmra.mxu0 %v2091
    %v2131 = vpop.f32.mrf.mxu0
    %v2132 = vadd.f32 0.0, %v2131
    %2133 = vmatmul.f32.gmra.mxu0 %v2094
    %v2134 = vpop.f32.mrf.mxu0
    %v2135 = vadd.f32 0.0, %v2134
    %2136 = vmatmul.f32.gmra.mxu0 %v2097
    %v2137 = vpop.f32.mrf.mxu0
    %v2138 = vadd.f32 0.0, %v2137
    %2139 = vdwg.mxu0
    %v2140 = vld [vmem:[%s3 + $0x100] sm:$0xff]
    %v2141 = vld [vmem:[%s3 + $0x108] sm:$0xff]
    %v2142 = vld [vmem:[%s3 + $0x110] sm:$0xff]
    %v2143 = vld [vmem:[%s3 + $0x118] sm:$0xff]
    %v2144 = vld [vmem:[%s3 + $0x120] sm:$0xff]
    %v2145 = vld [vmem:[%s3 + $0x128] sm:$0xff]
    %v2146 = vld [vmem:[%s3 + $0x130] sm:$0xff]
    %v2147 = vld [vmem:[%s3 + $0x138] sm:$0xff]
    %2156 = vrot.lane.b32.xlu0 %v1776, 64
    %v2157 = vpop.permute.xlu0 %2156
    %2158 = vrot.lane.b32.xlu0 %v1791, 64
    %v2159 = vpop.permute.xlu0 %2158
    %2160 = vrot.lane.b32.xlu0 %v1806, 64
    %v2161 = vpop.permute.xlu0 %2160
    %2162 = vrot.lane.b32.xlu0 %v1821, 64
    %v2163 = vpop.permute.xlu0 %2162
    %2164 = vrot.lane.b32.xlu0 %v1836, 64
    %v2165 = vpop.permute.xlu0 %2164
    %2166 = vrot.lane.b32.xlu0 %v1851, 64
    %v2167 = vpop.permute.xlu0 %2166
    %2168 = vrot.lane.b32.xlu0 %v1866, 64
    %v2169 = vpop.permute.xlu0 %2168
    %2170 = vrot.lane.b32.xlu0 %v1881, 64
    %v2171 = vpop.permute.xlu0 %2170
    %v2180 = vmul.f32 %v2117, %v2157
    %v2181 = vmul.f32 %v2120, %v2159
    %v2182 = vmul.f32 %v2123, %v2161
    %v2183 = vmul.f32 %v2126, %v2163
    %v2184 = vmul.f32 %v2129, %v2165
    %v2185 = vmul.f32 %v2132, %v2167
    %v2186 = vmul.f32 %v2135, %v2169
    %v2187 = vmul.f32 %v2138, %v2171
    %v2188 = vld [vmem:[%s2 + $0x30] sm:$0xff]
    %v2189 = vld [vmem:[%s2 + $0x38] sm:$0xff]
    %v2190 = vld [vmem:[%s2 + $0x90] sm:$0xff]
    %v2191 = vld [vmem:[%s2 + $0x98] sm:$0xff]
    %v2192 = vld [vmem:[%s2 + $0xf0] sm:$0xff]
    %v2193 = vld [vmem:[%s2 + $0xf8] sm:$0xff]
    %v2194 = vld [vmem:[%s2 + $0x150] sm:$0xff]
    %v2195 = vld [vmem:[%s2 + $0x158] sm:$0xff]
    %2196 = vmatpush.msra.mxu0 0.0
    %2197 = vmatpush.msra.mxu0 0.0
    %2198 = vmatpush.msra.mxu0 0.0
    %2199 = vmatpush.msra.mxu0 0.0
    %2200 = vmatpush.msra.mxu0 0.0
    %2201 = vmatpush.msra.mxu0 0.0
    %2202 = vmatpush.msra.mxu0 0.0
    %2203 = vmatpush.msra.mxu0 0.0
    %2204 = vmatpush.msra.mxu0 0.0
    %2205 = vmatpush.msra.mxu0 0.0
    %2206 = vmatpush.msra.mxu0 0.0
    %2207 = vmatpush.msra.mxu0 0.0
    %2208 = vmatpush.msra.mxu0 %v2194
    %2209 = vmatpush.msra.mxu0 %v2192
    %2210 = vmatpush.msra.mxu0 %v2190
    %2211 = vmatpush.msra.mxu0 %v2188
    %2212 = vmatmul.f32.gmra.mxu0 %v1612
    %v2213 = vpop.f32.mrf.mxu0
    %v2214 = vadd.f32 0.0, %v2213
    %2215 = vmatmul.f32.gmra.mxu0 %v1615
    %v2216 = vpop.f32.mrf.mxu0
    %v2217 = vadd.f32 0.0, %v2216
    %2218 = vmatmul.f32.gmra.mxu0 %v1618
    %v2219 = vpop.f32.mrf.mxu0
    %v2220 = vadd.f32 0.0, %v2219
    %2221 = vmatmul.f32.gmra.mxu0 %v1621
    %v2222 = vpop.f32.mrf.mxu0
    %v2223 = vadd.f32 0.0, %v2222
    %2224 = vmatmul.f32.gmra.mxu0 %v1624
    %v2225 = vpop.f32.mrf.mxu0
    %v2226 = vadd.f32 0.0, %v2225
    %2227 = vmatmul.f32.gmra.mxu0 %v1627
    %v2228 = vpop.f32.mrf.mxu0
    %v2229 = vadd.f32 0.0, %v2228
    %2230 = vmatmul.f32.gmra.mxu0 %v1630
    %v2231 = vpop.f32.mrf.mxu0
    %v2232 = vadd.f32 0.0, %v2231
    %2233 = vmatmul.f32.gmra.mxu0 %v1633
    %v2234 = vpop.f32.mrf.mxu0
    %v2235 = vadd.f32 0.0, %v2234
    %2236 = vdwg.mxu0
    %2237 = vmatpush.msra.mxu0 0.0
    %2238 = vmatpush.msra.mxu0 0.0
    %2239 = vmatpush.msra.mxu0 0.0
    %2240 = vmatpush.msra.mxu0 0.0
    %2241 = vmatpush.msra.mxu0 0.0
    %2242 = vmatpush.msra.mxu0 0.0
    %2243 = vmatpush.msra.mxu0 0.0
    %2244 = vmatpush.msra.mxu0 0.0
    %2245 = vmatpush.msra.mxu0 0.0
    %2246 = vmatpush.msra.mxu0 0.0
    %2247 = vmatpush.msra.mxu0 0.0
    %2248 = vmatpush.msra.mxu0 0.0
    %2249 = vmatpush.msra.mxu0 %v2195
    %2250 = vmatpush.msra.mxu0 %v2193
    %2251 = vmatpush.msra.mxu0 %v2191
    %2252 = vmatpush.msra.mxu0 %v2189
    %2253 = vmatmul.f32.gmra.mxu0 %v1612
    %v2254 = vpop.f32.mrf.mxu0
    %v2255 = vadd.f32 0.0, %v2254
    %2256 = vmatmul.f32.gmra.mxu0 %v1615
    %v2257 = vpop.f32.mrf.mxu0
    %v2258 = vadd.f32 0.0, %v2257
    %2259 = vmatmul.f32.gmra.mxu0 %v1618
    %v2260 = vpop.f32.mrf.mxu0
    %v2261 = vadd.f32 0.0, %v2260
    %2262 = vmatmul.f32.gmra.mxu0 %v1621
    %v2263 = vpop.f32.mrf.mxu0
    %v2264 = vadd.f32 0.0, %v2263
    %2265 = vmatmul.f32.gmra.mxu0 %v1624
    %v2266 = vpop.f32.mrf.mxu0
    %v2267 = vadd.f32 0.0, %v2266
    %2268 = vmatmul.f32.gmra.mxu0 %v1627
    %v2269 = vpop.f32.mrf.mxu0
    %v2270 = vadd.f32 0.0, %v2269
    %2271 = vmatmul.f32.gmra.mxu0 %v1630
    %v2272 = vpop.f32.mrf.mxu0
    %v2273 = vadd.f32 0.0, %v2272
    %2274 = vmatmul.f32.gmra.mxu0 %v1633
    %v2275 = vpop.f32.mrf.mxu0
    %v2276 = vadd.f32 0.0, %v2275
    %2277 = vdwg.mxu0
    %v2278 = vadd.f32 %v2255, %v1717
    %v2279 = vadd.f32 %v2258, %v1717
    %v2280 = vadd.f32 %v2261, %v1717
    %v2281 = vadd.f32 %v2264, %v1717
    %v2282 = vadd.f32 %v2267, %v1717
    %v2283 = vadd.f32 %v2270, %v1717
    %v2284 = vadd.f32 %v2273, %v1717
    %v2285 = vadd.f32 %v2276, %v1717
    %v2286 = vxor.u32 %v2278, 2147483648
    %v2287 = vxor.u32 %v2279, 2147483648
    %v2288 = vxor.u32 %v2280, 2147483648
    %v2289 = vxor.u32 %v2281, 2147483648
    %v2290 = vxor.u32 %v2282, 2147483648
    %v2291 = vxor.u32 %v2283, 2147483648
    %v2292 = vxor.u32 %v2284, 2147483648
    %v2293 = vxor.u32 %v2285, 2147483648
    %v2294 = vmul.f32 %v2286, 1.442695
    %v2295 = vpow.pop %v2294
    %v2296 = vmul.f32 %v2287, 1.442695
    %v2297 = vpow.pop %v2296
    %v2298 = vmul.f32 %v2288, 1.442695
    %v2299 = vpow.pop %v2298
    %v2300 = vmul.f32 %v2289, 1.442695
    %v2301 = vpow.pop %v2300
    %v2302 = vmul.f32 %v2290, 1.442695
    %v2303 = vpow.pop %v2302
    %v2304 = vmul.f32 %v2291, 1.442695
    %v2305 = vpow.pop %v2304
    %v2306 = vmul.f32 %v2292, 1.442695
    %v2307 = vpow.pop %v2306
    %v2308 = vmul.f32 %v2293, 1.442695
    %v2309 = vpow.pop %v2308
    %v2310 = vadd.f32 %v2295, 1.0
    %v2311 = vadd.f32 %v2297, 1.0
    %v2312 = vadd.f32 %v2299, 1.0
    %v2313 = vadd.f32 %v2301, 1.0
    %v2314 = vadd.f32 %v2303, 1.0
    %v2315 = vadd.f32 %v2305, 1.0
    %v2316 = vadd.f32 %v2307, 1.0
    %v2317 = vadd.f32 %v2309, 1.0
    %v2318 = vrcp.pop %v2310
    %v2319 = vmul.f32 %v2310, %v2318
    %v2320 = vsub.f32 1.0, %v2319
    %v2321 = vmul.f32 %v2318, %v2320
    %v2322 = vadd.f32 %v2318, %v2321
    %vm2323 = vweird.f32 %v2310
    %vm2324 = vweird.f32 %v2318
    %vm2325 = vmor %vm2323, %vm2324
    %v2326 = vsel %vm2325, %v2318, %v2322
    %v2327 = vand.u32 2147483647, %v2310
    %vm2328 = vcmp.eq.f32.partialorder %v2327, 8.507059e+37
    %v2329 = vand.u32 %v2310, 2147483648
    %v2330 = vor.u32 1.1754944e-38, %v2329
    %v2331 = vsel %vm2328, %v2330, %v2326
    %v2332 = vmul.f32 1.0, %v2331
    %v2333 = vrcp.pop %v2311
    %v2334 = vmul.f32 %v2311, %v2333
    %v2335 = vsub.f32 1.0, %v2334
    %v2336 = vmul.f32 %v2333, %v2335
    %v2337 = vadd.f32 %v2333, %v2336
    %vm2338 = vweird.f32 %v2311
    %vm2339 = vweird.f32 %v2333
    %vm2340 = vmor %vm2338, %vm2339
    %v2341 = vsel %vm2340, %v2333, %v2337
    %v2342 = vand.u32 2147483647, %v2311
    %vm2343 = vcmp.eq.f32.partialorder %v2342, 8.507059e+37
    %v2344 = vand.u32 %v2311, 2147483648
    %v2345 = vor.u32 1.1754944e-38, %v2344
    %v2346 = vsel %vm2343, %v2345, %v2341
    %v2347 = vmul.f32 1.0, %v2346
    %v2348 = vrcp.pop %v2312
    %v2349 = vmul.f32 %v2312, %v2348
    %v2350 = vsub.f32 1.0, %v2349
    %v2351 = vmul.f32 %v2348, %v2350
    %v2352 = vadd.f32 %v2348, %v2351
    %vm2353 = vweird.f32 %v2312
    %vm2354 = vweird.f32 %v2348
    %vm2355 = vmor %vm2353, %vm2354
    %v2356 = vsel %vm2355, %v2348, %v2352
    %v2357 = vand.u32 2147483647, %v2312
    %vm2358 = vcmp.eq.f32.partialorder %v2357, 8.507059e+37
    %v2359 = vand.u32 %v2312, 2147483648
    %v2360 = vor.u32 1.1754944e-38, %v2359
    %v2361 = vsel %vm2358, %v2360, %v2356
    %v2362 = vmul.f32 1.0, %v2361
    %v2363 = vrcp.pop %v2313
    %v2364 = vmul.f32 %v2313, %v2363
    %v2365 = vsub.f32 1.0, %v2364
    %v2366 = vmul.f32 %v2363, %v2365
    %v2367 = vadd.f32 %v2363, %v2366
    %vm2368 = vweird.f32 %v2313
    %vm2369 = vweird.f32 %v2363
    %vm2370 = vmor %vm2368, %vm2369
    %v2371 = vsel %vm2370, %v2363, %v2367
    %v2372 = vand.u32 2147483647, %v2313
    %vm2373 = vcmp.eq.f32.partialorder %v2372, 8.507059e+37
    %v2374 = vand.u32 %v2313, 2147483648
    %v2375 = vor.u32 1.1754944e-38, %v2374
    %v2376 = vsel %vm2373, %v2375, %v2371
    %v2377 = vmul.f32 1.0, %v2376
    %v2378 = vrcp.pop %v2314
    %v2379 = vmul.f32 %v2314, %v2378
    %v2380 = vsub.f32 1.0, %v2379
    %v2381 = vmul.f32 %v2378, %v2380
    %v2382 = vadd.f32 %v2378, %v2381
    %vm2383 = vweird.f32 %v2314
    %vm2384 = vweird.f32 %v2378
    %vm2385 = vmor %vm2383, %vm2384
    %v2386 = vsel %vm2385, %v2378, %v2382
    %v2387 = vand.u32 2147483647, %v2314
    %vm2388 = vcmp.eq.f32.partialorder %v2387, 8.507059e+37
    %v2389 = vand.u32 %v2314, 2147483648
    %v2390 = vor.u32 1.1754944e-38, %v2389
    %v2391 = vsel %vm2388, %v2390, %v2386
    %v2392 = vmul.f32 1.0, %v2391
    %v2393 = vrcp.pop %v2315
    %v2394 = vmul.f32 %v2315, %v2393
    %v2395 = vsub.f32 1.0, %v2394
    %v2396 = vmul.f32 %v2393, %v2395
    %v2397 = vadd.f32 %v2393, %v2396
    %vm2398 = vweird.f32 %v2315
    %vm2399 = vweird.f32 %v2393
    %vm2400 = vmor %vm2398, %vm2399
    %v2401 = vsel %vm2400, %v2393, %v2397
    %v2402 = vand.u32 2147483647, %v2315
    %vm2403 = vcmp.eq.f32.partialorder %v2402, 8.507059e+37
    %v2404 = vand.u32 %v2315, 2147483648
    %v2405 = vor.u32 1.1754944e-38, %v2404
    %v2406 = vsel %vm2403, %v2405, %v2401
    %v2407 = vmul.f32 1.0, %v2406
    %v2408 = vrcp.pop %v2316
    %v2409 = vmul.f32 %v2316, %v2408
    %v2410 = vsub.f32 1.0, %v2409
    %v2411 = vmul.f32 %v2408, %v2410
    %v2412 = vadd.f32 %v2408, %v2411
    %vm2413 = vweird.f32 %v2316
    %vm2414 = vweird.f32 %v2408
    %vm2415 = vmor %vm2413, %vm2414
    %v2416 = vsel %vm2415, %v2408, %v2412
    %v2417 = vand.u32 2147483647, %v2316
    %vm2418 = vcmp.eq.f32.partialorder %v2417, 8.507059e+37
    %v2419 = vand.u32 %v2316, 2147483648
    %v2420 = vor.u32 1.1754944e-38, %v2419
    %v2421 = vsel %vm2418, %v2420, %v2416
    %v2422 = vmul.f32 1.0, %v2421
    %v2423 = vrcp.pop %v2317
    %v2424 = vmul.f32 %v2317, %v2423
    %v2425 = vsub.f32 1.0, %v2424
    %v2426 = vmul.f32 %v2423, %v2425
    %v2427 = vadd.f32 %v2423, %v2426
    %vm2428 = vweird.f32 %v2317
    %vm2429 = vweird.f32 %v2423
    %vm2430 = vmor %vm2428, %vm2429
    %v2431 = vsel %vm2430, %v2423, %v2427
    %v2432 = vand.u32 2147483647, %v2317
    %vm2433 = vcmp.eq.f32.partialorder %v2432, 8.507059e+37
    %v2434 = vand.u32 %v2317, 2147483648
    %v2435 = vor.u32 1.1754944e-38, %v2434
    %v2436 = vsel %vm2433, %v2435, %v2431
    %v2437 = vmul.f32 1.0, %v2436
    %2446 = vrot.lane.b32.xlu0 %v2214, 64
    %v2447 = vpop.permute.xlu0 %2446
    %2448 = vrot.lane.b32.xlu0 %v2217, 64
    %v2449 = vpop.permute.xlu0 %2448
    %2450 = vrot.lane.b32.xlu0 %v2220, 64
    %v2451 = vpop.permute.xlu0 %2450
    %2452 = vrot.lane.b32.xlu0 %v2223, 64
    %v2453 = vpop.permute.xlu0 %2452
    %2454 = vrot.lane.b32.xlu0 %v2226, 64
    %v2455 = vpop.permute.xlu0 %2454
    %2456 = vrot.lane.b32.xlu0 %v2229, 64
    %v2457 = vpop.permute.xlu0 %2456
    %2458 = vrot.lane.b32.xlu0 %v2232, 64
    %v2459 = vpop.permute.xlu0 %2458
    %2460 = vrot.lane.b32.xlu0 %v2235, 64
    %v2461 = vpop.permute.xlu0 %2460
    %v2462 = vsel %vm961, %v2214, 0
    %v2464 = vsel %vm961, %v2217, 0
    %v2466 = vsel %vm961, %v2220, 0
    %v2468 = vsel %vm961, %v2223, 0
    %v2470 = vsel %vm961, %v2226, 0
    %v2472 = vsel %vm961, %v2229, 0
    %v2474 = vsel %vm961, %v2232, 0
    %v2476 = vsel %vm961, %v2235, 0
    %v2478 = vsel %vm961, %v2447, 0
    %v2480 = vsel %vm961, %v2449, 0
    %v2482 = vsel %vm961, %v2451, 0
    %v2484 = vsel %vm961, %v2453, 0
    %v2486 = vsel %vm961, %v2455, 0
    %v2488 = vsel %vm961, %v2457, 0
    %v2490 = vsel %vm961, %v2459, 0
    %v2492 = vsel %vm961, %v2461, 0
    %2494 = vmatpush.xpose.msra.mxu0 0.0
    %2495 = vmatpush.xpose.msra.mxu0 0.0
    %2496 = vmatpush.xpose.msra.mxu0 0.0
    %2497 = vmatpush.xpose.msra.mxu0 0.0
    %2498 = vmatpush.xpose.msra.mxu0 0.0
    %2499 = vmatpush.xpose.msra.mxu0 0.0
    %2500 = vmatpush.xpose.msra.mxu0 0.0
    %2501 = vmatpush.xpose.msra.mxu0 0.0
    %2502 = vmatpush.xpose.msra.mxu0 %v2492
    %2503 = vmatpush.xpose.msra.mxu0 %v2490
    %2504 = vmatpush.xpose.msra.mxu0 %v2488
    %2505 = vmatpush.xpose.msra.mxu0 %v2486
    %2506 = vmatpush.xpose.msra.mxu0 %v2484
    %2507 = vmatpush.xpose.msra.mxu0 %v2482
    %2508 = vmatpush.xpose.msra.mxu0 %v2480
    %2509 = vmatpush.xpose.msra.mxu0 %v2478
    %2510 = vmatmul.f32.gmra.mxu0 %v2462
    %v2511 = vpop.f32.mrf.mxu0
    %v2512 = vadd.f32 0.0, %v2511
    %2513 = vmatmul.f32.gmra.mxu0 %v2464
    %v2514 = vpop.f32.mrf.mxu0
    %v2515 = vadd.f32 0.0, %v2514
    %2516 = vmatmul.f32.gmra.mxu0 %v2466
    %v2517 = vpop.f32.mrf.mxu0
    %v2518 = vadd.f32 0.0, %v2517
    %2519 = vmatmul.f32.gmra.mxu0 %v2468
    %v2520 = vpop.f32.mrf.mxu0
    %v2521 = vadd.f32 0.0, %v2520
    %2522 = vmatmul.f32.gmra.mxu0 %v2470
    %v2523 = vpop.f32.mrf.mxu0
    %v2524 = vadd.f32 0.0, %v2523
    %2525 = vmatmul.f32.gmra.mxu0 %v2472
    %v2526 = vpop.f32.mrf.mxu0
    %v2527 = vadd.f32 0.0, %v2526
    %2528 = vmatmul.f32.gmra.mxu0 %v2474
    %v2529 = vpop.f32.mrf.mxu0
    %v2530 = vadd.f32 0.0, %v2529
    %2531 = vmatmul.f32.gmra.mxu0 %v2476
    %v2532 = vpop.f32.mrf.mxu0
    %v2533 = vadd.f32 0.0, %v2532
    %2534 = vdwg.mxu0
    %v2535 = vsel %vm94, %v2512, -1e+30
    %v2536 = vsel %vm95, %v2515, -1e+30
    %v2537 = vsel %vm96, %v2518, -1e+30
    %v2538 = vsel %vm97, %v2521, -1e+30
    %v2539 = vsel %vm98, %v2524, -1e+30
    %v2540 = vsel %vm99, %v2527, -1e+30
    %v2541 = vsel %vm100, %v2530, -1e+30
    %v2542 = vsel %vm101, %v2533, -1e+30
    %v2543 = vsel %vm961, %v2535, -inf
    %2544 = vmax.xlane.f32.xlu0 %v2543
    %v2545 = vpop.xlane.xlu0 %2544
    %v2546 = vsel %vm961, %v2536, -inf
    %2547 = vmax.xlane.f32.xlu0 %v2546
    %v2548 = vpop.xlane.xlu0 %2547
    %v2549 = vsel %vm961, %v2537, -inf
    %2550 = vmax.xlane.f32.xlu0 %v2549
    %v2551 = vpop.xlane.xlu0 %2550
    %v2552 = vsel %vm961, %v2538, -inf
    %2553 = vmax.xlane.f32.xlu0 %v2552
    %v2554 = vpop.xlane.xlu0 %2553
    %v2555 = vsel %vm961, %v2539, -inf
    %2556 = vmax.xlane.f32.xlu0 %v2555
    %v2557 = vpop.xlane.xlu0 %2556
    %v2558 = vsel %vm961, %v2540, -inf
    %2559 = vmax.xlane.f32.xlu0 %v2558
    %v2560 = vpop.xlane.xlu0 %2559
    %v2561 = vsel %vm961, %v2541, -inf
    %2562 = vmax.xlane.f32.xlu0 %v2561
    %v2563 = vpop.xlane.xlu0 %2562
    %v2564 = vsel %vm961, %v2542, -inf
    %2565 = vmax.xlane.f32.xlu0 %v2564
    %v2566 = vpop.xlane.xlu0 %2565
    %v2567 = vsub.f32 %v2535, %v2545
    %v2568 = vsub.f32 %v2536, %v2548
    %v2569 = vsub.f32 %v2537, %v2551
    %v2570 = vsub.f32 %v2538, %v2554
    %v2571 = vsub.f32 %v2539, %v2557
    %v2572 = vsub.f32 %v2540, %v2560
    %v2573 = vsub.f32 %v2541, %v2563
    %v2574 = vsub.f32 %v2542, %v2566
    %v2575 = vmul.f32 %v2567, 1.442695
    %v2576 = vpow.pop %v2575
    %v2577 = vmul.f32 %v2568, 1.442695
    %v2578 = vpow.pop %v2577
    %v2579 = vmul.f32 %v2569, 1.442695
    %v2580 = vpow.pop %v2579
    %v2581 = vmul.f32 %v2570, 1.442695
    %v2582 = vpow.pop %v2581
    %v2583 = vmul.f32 %v2571, 1.442695
    %v2584 = vpow.pop %v2583
    %v2585 = vmul.f32 %v2572, 1.442695
    %v2586 = vpow.pop %v2585
    %v2587 = vmul.f32 %v2573, 1.442695
    %v2588 = vpow.pop %v2587
    %v2589 = vmul.f32 %v2574, 1.442695
    %v2590 = vpow.pop %v2589
    %v2591 = vsel %vm961, %v2576, 0.0
    %2592 = vadd.xlane.f32.xlu0 %v2591
    %v2593 = vpop.xlane.xlu0 %2592
    %v2594 = vsel %vm961, %v2578, 0.0
    %2595 = vadd.xlane.f32.xlu0 %v2594
    %v2596 = vpop.xlane.xlu0 %2595
    %v2597 = vsel %vm961, %v2580, 0.0
    %2598 = vadd.xlane.f32.xlu0 %v2597
    %v2599 = vpop.xlane.xlu0 %2598
    %v2600 = vsel %vm961, %v2582, 0.0
    %2601 = vadd.xlane.f32.xlu0 %v2600
    %v2602 = vpop.xlane.xlu0 %2601
    %v2603 = vsel %vm961, %v2584, 0.0
    %2604 = vadd.xlane.f32.xlu0 %v2603
    %v2605 = vpop.xlane.xlu0 %2604
    %v2606 = vsel %vm961, %v2586, 0.0
    %2607 = vadd.xlane.f32.xlu0 %v2606
    %v2608 = vpop.xlane.xlu0 %2607
    %v2609 = vsel %vm961, %v2588, 0.0
    %2610 = vadd.xlane.f32.xlu0 %v2609
    %v2611 = vpop.xlane.xlu0 %2610
    %v2612 = vsel %vm961, %v2590, 0.0
    %2613 = vadd.xlane.f32.xlu0 %v2612
    %v2614 = vpop.xlane.xlu0 %2613
    %v2615 = vrcp.pop %v2593
    %v2616 = vrcp.pop %v2596
    %v2617 = vrcp.pop %v2599
    %v2618 = vrcp.pop %v2602
    %v2619 = vrcp.pop %v2605
    %v2620 = vrcp.pop %v2608
    %v2621 = vrcp.pop %v2611
    %v2622 = vrcp.pop %v2614
    %v2623 = vmul.f32 %v2576, %v2615
    %v2624 = vmul.f32 %v2578, %v2616
    %v2625 = vmul.f32 %v2580, %v2617
    %v2626 = vmul.f32 %v2582, %v2618
    %v2627 = vmul.f32 %v2584, %v2619
    %v2628 = vmul.f32 %v2586, %v2620
    %v2629 = vmul.f32 %v2588, %v2621
    %v2630 = vmul.f32 %v2590, %v2622
    %v2632 = vsel %vm961, %v2623, 0
    %v2635 = vsel %vm961, %v2624, 0
    %v2638 = vsel %vm961, %v2625, 0
    %v2641 = vsel %vm961, %v2626, 0
    %v2644 = vsel %vm961, %v2627, 0
    %v2647 = vsel %vm961, %v2628, 0
    %v2650 = vsel %vm961, %v2629, 0
    %v2653 = vsel %vm961, %v2630, 0
    %2655 = vmatpush.msra.mxu0 0.0
    %2656 = vmatpush.msra.mxu0 0.0
    %2657 = vmatpush.msra.mxu0 0.0
    %2658 = vmatpush.msra.mxu0 0.0
    %2659 = vmatpush.msra.mxu0 0.0
    %2660 = vmatpush.msra.mxu0 0.0
    %2661 = vmatpush.msra.mxu0 0.0
    %2662 = vmatpush.msra.mxu0 0.0
    %2663 = vmatpush.msra.mxu0 %v2276
    %2664 = vmatpush.msra.mxu0 %v2273
    %2665 = vmatpush.msra.mxu0 %v2270
    %2666 = vmatpush.msra.mxu0 %v2267
    %2667 = vmatpush.msra.mxu0 %v2264
    %2668 = vmatpush.msra.mxu0 %v2261
    %2669 = vmatpush.msra.mxu0 %v2258
    %2670 = vmatpush.msra.mxu0 %v2255
    %2671 = vmatmul.f32.gmra.mxu0 %v2632
    %v2672 = vpop.f32.mrf.mxu0
    %v2673 = vadd.f32 0.0, %v2672
    %2674 = vmatmul.f32.gmra.mxu0 %v2635
    %v2675 = vpop.f32.mrf.mxu0
    %v2676 = vadd.f32 0.0, %v2675
    %2677 = vmatmul.f32.gmra.mxu0 %v2638
    %v2678 = vpop.f32.mrf.mxu0
    %v2679 = vadd.f32 0.0, %v2678
    %2680 = vmatmul.f32.gmra.mxu0 %v2641
    %v2681 = vpop.f32.mrf.mxu0
    %v2682 = vadd.f32 0.0, %v2681
    %2683 = vmatmul.f32.gmra.mxu0 %v2644
    %v2684 = vpop.f32.mrf.mxu0
    %v2685 = vadd.f32 0.0, %v2684
    %2686 = vmatmul.f32.gmra.mxu0 %v2647
    %v2687 = vpop.f32.mrf.mxu0
    %v2688 = vadd.f32 0.0, %v2687
    %2689 = vmatmul.f32.gmra.mxu0 %v2650
    %v2690 = vpop.f32.mrf.mxu0
    %v2691 = vadd.f32 0.0, %v2690
    %2692 = vmatmul.f32.gmra.mxu0 %v2653
    %v2693 = vpop.f32.mrf.mxu0
    %v2694 = vadd.f32 0.0, %v2693
    %2695 = vdwg.mxu0
    %v2696 = vld [vmem:[%s3 + $0x140] sm:$0xff]
    %v2697 = vld [vmem:[%s3 + $0x148] sm:$0xff]
    %v2698 = vld [vmem:[%s3 + $0x150] sm:$0xff]
    %v2699 = vld [vmem:[%s3 + $0x158] sm:$0xff]
    %v2700 = vld [vmem:[%s3 + $0x160] sm:$0xff]
    %v2701 = vld [vmem:[%s3 + $0x168] sm:$0xff]
    %v2702 = vld [vmem:[%s3 + $0x170] sm:$0xff]
    %v2703 = vld [vmem:[%s3 + $0x178] sm:$0xff]
    %2712 = vrot.lane.b32.xlu0 %v2332, 64
    %v2713 = vpop.permute.xlu0 %2712
    %2714 = vrot.lane.b32.xlu0 %v2347, 64
    %v2715 = vpop.permute.xlu0 %2714
    %2716 = vrot.lane.b32.xlu0 %v2362, 64
    %v2717 = vpop.permute.xlu0 %2716
    %2718 = vrot.lane.b32.xlu0 %v2377, 64
    %v2719 = vpop.permute.xlu0 %2718
    %2720 = vrot.lane.b32.xlu0 %v2392, 64
    %v2721 = vpop.permute.xlu0 %2720
    %2722 = vrot.lane.b32.xlu0 %v2407, 64
    %v2723 = vpop.permute.xlu0 %2722
    %2724 = vrot.lane.b32.xlu0 %v2422, 64
    %v2725 = vpop.permute.xlu0 %2724
    %2726 = vrot.lane.b32.xlu0 %v2437, 64
    %v2727 = vpop.permute.xlu0 %2726
    %v2736 = vmul.f32 %v2673, %v2713
    %v2737 = vmul.f32 %v2676, %v2715
    %v2738 = vmul.f32 %v2679, %v2717
    %v2739 = vmul.f32 %v2682, %v2719
    %v2740 = vmul.f32 %v2685, %v2721
    %v2741 = vmul.f32 %v2688, %v2723
    %v2742 = vmul.f32 %v2691, %v2725
    %v2743 = vmul.f32 %v2694, %v2727
    %v2745 = vsel %vm961, %v2736, 0
    %v2748 = vsel %vm961, %v2737, 0
    %v2751 = vsel %vm961, %v2738, 0
    %v2754 = vsel %vm961, %v2739, 0
    %v2757 = vsel %vm961, %v2740, 0
    %v2760 = vsel %vm961, %v2741, 0
    %v2763 = vsel %vm961, %v2742, 0
    %v2766 = vsel %vm961, %v2743, 0
    %2768 = vmatpush.msra.mxu0 0.0
    %2769 = vmatpush.msra.mxu0 0.0
    %2770 = vmatpush.msra.mxu0 0.0
    %2771 = vmatpush.msra.mxu0 0.0
    %2772 = vmatpush.msra.mxu0 0.0
    %2773 = vmatpush.msra.mxu0 0.0
    %2774 = vmatpush.msra.mxu0 0.0
    %2775 = vmatpush.msra.mxu0 0.0
    %2776 = vmatpush.msra.mxu0 %v2703
    %2777 = vmatpush.msra.mxu0 %v2702
    %2778 = vmatpush.msra.mxu0 %v2701
    %2779 = vmatpush.msra.mxu0 %v2700
    %2780 = vmatpush.msra.mxu0 %v2699
    %2781 = vmatpush.msra.mxu0 %v2698
    %2782 = vmatpush.msra.mxu0 %v2697
    %2783 = vmatpush.msra.mxu0 %v2696
    %2784 = vmatmul.f32.gmra.mxu0 %v2745
    %v2785 = vpop.f32.mrf.mxu0
    %v2786 = vadd.f32 0.0, %v2785
    %2787 = vmatmul.f32.gmra.mxu0 %v2748
    %v2788 = vpop.f32.mrf.mxu0
    %v2789 = vadd.f32 0.0, %v2788
    %2790 = vmatmul.f32.gmra.mxu0 %v2751
    %v2791 = vpop.f32.mrf.mxu0
    %v2792 = vadd.f32 0.0, %v2791
    %2793 = vmatmul.f32.gmra.mxu0 %v2754
    %v2794 = vpop.f32.mrf.mxu0
    %v2795 = vadd.f32 0.0, %v2794
    %2796 = vmatmul.f32.gmra.mxu0 %v2757
    %v2797 = vpop.f32.mrf.mxu0
    %v2798 = vadd.f32 0.0, %v2797
    %2799 = vmatmul.f32.gmra.mxu0 %v2760
    %v2800 = vpop.f32.mrf.mxu0
    %v2801 = vadd.f32 0.0, %v2800
    %2802 = vmatmul.f32.gmra.mxu0 %v2763
    %v2803 = vpop.f32.mrf.mxu0
    %v2804 = vadd.f32 0.0, %v2803
    %2805 = vmatmul.f32.gmra.mxu0 %v2766
    %v2806 = vpop.f32.mrf.mxu0
    %v2807 = vadd.f32 0.0, %v2806
    %2808 = vdwg.mxu0
    %v2810 = vsel %vm961, %v2180, 0
    %v2813 = vsel %vm961, %v2181, 0
    %v2816 = vsel %vm961, %v2182, 0
    %v2819 = vsel %vm961, %v2183, 0
    %v2822 = vsel %vm961, %v2184, 0
    %v2825 = vsel %vm961, %v2185, 0
    %v2828 = vsel %vm961, %v2186, 0
    %v2831 = vsel %vm961, %v2187, 0
    %2833 = vmatpush.msra.mxu0 0.0
    %2834 = vmatpush.msra.mxu0 0.0
    %2835 = vmatpush.msra.mxu0 0.0
    %2836 = vmatpush.msra.mxu0 0.0
    %2837 = vmatpush.msra.mxu0 0.0
    %2838 = vmatpush.msra.mxu0 0.0
    %2839 = vmatpush.msra.mxu0 0.0
    %2840 = vmatpush.msra.mxu0 0.0
    %2841 = vmatpush.msra.mxu0 %v2147
    %2842 = vmatpush.msra.mxu0 %v2146
    %2843 = vmatpush.msra.mxu0 %v2145
    %2844 = vmatpush.msra.mxu0 %v2144
    %2845 = vmatpush.msra.mxu0 %v2143
    %2846 = vmatpush.msra.mxu0 %v2142
    %2847 = vmatpush.msra.mxu0 %v2141
    %2848 = vmatpush.msra.mxu0 %v2140
    %2849 = vmatmul.f32.gmra.mxu0 %v2810
    %v2850 = vpop.f32.mrf.mxu0
    %v2851 = vadd.f32 %v2786, %v2850
    %2852 = vmatmul.f32.gmra.mxu0 %v2813
    %v2853 = vpop.f32.mrf.mxu0
    %v2854 = vadd.f32 %v2789, %v2853
    %2855 = vmatmul.f32.gmra.mxu0 %v2816
    %v2856 = vpop.f32.mrf.mxu0
    %v2857 = vadd.f32 %v2792, %v2856
    %2858 = vmatmul.f32.gmra.mxu0 %v2819
    %v2859 = vpop.f32.mrf.mxu0
    %v2860 = vadd.f32 %v2795, %v2859
    %2861 = vmatmul.f32.gmra.mxu0 %v2822
    %v2862 = vpop.f32.mrf.mxu0
    %v2863 = vadd.f32 %v2798, %v2862
    %2864 = vmatmul.f32.gmra.mxu0 %v2825
    %v2865 = vpop.f32.mrf.mxu0
    %v2866 = vadd.f32 %v2801, %v2865
    %2867 = vmatmul.f32.gmra.mxu0 %v2828
    %v2868 = vpop.f32.mrf.mxu0
    %v2869 = vadd.f32 %v2804, %v2868
    %2870 = vmatmul.f32.gmra.mxu0 %v2831
    %v2871 = vpop.f32.mrf.mxu0
    %v2872 = vadd.f32 %v2807, %v2871
    %2873 = vdwg.mxu0
    %v2874 = vld [vmem:[%s2 + $0x40] sm:$0xff]
    %v2875 = vld [vmem:[%s2 + $0x48] sm:$0xff]
    %v2876 = vld [vmem:[%s2 + $0xa0] sm:$0xff]
    %v2877 = vld [vmem:[%s2 + $0xa8] sm:$0xff]
    %v2878 = vld [vmem:[%s2 + $0x100] sm:$0xff]
    %v2879 = vld [vmem:[%s2 + $0x108] sm:$0xff]
    %v2880 = vld [vmem:[%s2 + $0x160] sm:$0xff]
    %v2881 = vld [vmem:[%s2 + $0x168] sm:$0xff]
    %2882 = vmatpush.msra.mxu0 0.0
    %2883 = vmatpush.msra.mxu0 0.0
    %2884 = vmatpush.msra.mxu0 0.0
    %2885 = vmatpush.msra.mxu0 0.0
    %2886 = vmatpush.msra.mxu0 0.0
    %2887 = vmatpush.msra.mxu0 0.0
    %2888 = vmatpush.msra.mxu0 0.0
    %2889 = vmatpush.msra.mxu0 0.0
    %2890 = vmatpush.msra.mxu0 0.0
    %2891 = vmatpush.msra.mxu0 0.0
    %2892 = vmatpush.msra.mxu0 0.0
    %2893 = vmatpush.msra.mxu0 0.0
    %2894 = vmatpush.msra.mxu0 %v2880
    %2895 = vmatpush.msra.mxu0 %v2878
    %2896 = vmatpush.msra.mxu0 %v2876
    %2897 = vmatpush.msra.mxu0 %v2874
    %2898 = vmatmul.f32.gmra.mxu0 %v1612
    %v2899 = vpop.f32.mrf.mxu0
    %v2900 = vadd.f32 0.0, %v2899
    %2901 = vmatmul.f32.gmra.mxu0 %v1615
    %v2902 = vpop.f32.mrf.mxu0
    %v2903 = vadd.f32 0.0, %v2902
    %2904 = vmatmul.f32.gmra.mxu0 %v1618
    %v2905 = vpop.f32.mrf.mxu0
    %v2906 = vadd.f32 0.0, %v2905
    %2907 = vmatmul.f32.gmra.mxu0 %v1621
    %v2908 = vpop.f32.mrf.mxu0
    %v2909 = vadd.f32 0.0, %v2908
    %2910 = vmatmul.f32.gmra.mxu0 %v1624
    %v2911 = vpop.f32.mrf.mxu0
    %v2912 = vadd.f32 0.0, %v2911
    %2913 = vmatmul.f32.gmra.mxu0 %v1627
    %v2914 = vpop.f32.mrf.mxu0
    %v2915 = vadd.f32 0.0, %v2914
    %2916 = vmatmul.f32.gmra.mxu0 %v1630
    %v2917 = vpop.f32.mrf.mxu0
    %v2918 = vadd.f32 0.0, %v2917
    %2919 = vmatmul.f32.gmra.mxu0 %v1633
    %v2920 = vpop.f32.mrf.mxu0
    %v2921 = vadd.f32 0.0, %v2920
    %2922 = vdwg.mxu0
    %2923 = vmatpush.msra.mxu0 0.0
    %2924 = vmatpush.msra.mxu0 0.0
    %2925 = vmatpush.msra.mxu0 0.0
    %2926 = vmatpush.msra.mxu0 0.0
    %2927 = vmatpush.msra.mxu0 0.0
    %2928 = vmatpush.msra.mxu0 0.0
    %2929 = vmatpush.msra.mxu0 0.0
    %2930 = vmatpush.msra.mxu0 0.0
    %2931 = vmatpush.msra.mxu0 0.0
    %2932 = vmatpush.msra.mxu0 0.0
    %2933 = vmatpush.msra.mxu0 0.0
    %2934 = vmatpush.msra.mxu0 0.0
    %2935 = vmatpush.msra.mxu0 %v2881
    %2936 = vmatpush.msra.mxu0 %v2879
    %2937 = vmatpush.msra.mxu0 %v2877
    %2938 = vmatpush.msra.mxu0 %v2875
    %2939 = vmatmul.f32.gmra.mxu0 %v1612
    %v2940 = vpop.f32.mrf.mxu0
    %v2941 = vadd.f32 0.0, %v2940
    %2942 = vmatmul.f32.gmra.mxu0 %v1615
    %v2943 = vpop.f32.mrf.mxu0
    %v2944 = vadd.f32 0.0, %v2943
    %2945 = vmatmul.f32.gmra.mxu0 %v1618
    %v2946 = vpop.f32.mrf.mxu0
    %v2947 = vadd.f32 0.0, %v2946
    %2948 = vmatmul.f32.gmra.mxu0 %v1621
    %v2949 = vpop.f32.mrf.mxu0
    %v2950 = vadd.f32 0.0, %v2949
    %2951 = vmatmul.f32.gmra.mxu0 %v1624
    %v2952 = vpop.f32.mrf.mxu0
    %v2953 = vadd.f32 0.0, %v2952
    %2954 = vmatmul.f32.gmra.mxu0 %v1627
    %v2955 = vpop.f32.mrf.mxu0
    %v2956 = vadd.f32 0.0, %v2955
    %2957 = vmatmul.f32.gmra.mxu0 %v1630
    %v2958 = vpop.f32.mrf.mxu0
    %v2959 = vadd.f32 0.0, %v2958
    %2960 = vmatmul.f32.gmra.mxu0 %v1633
    %v2961 = vpop.f32.mrf.mxu0
    %v2962 = vadd.f32 0.0, %v2961
    %2963 = vdwg.mxu0
    %v2964 = vperm.slane %v229, 3
    %2966 = vrot.lane.b32.xlu0 %v2964, 64
    %v2967 = vpop.permute.xlu0 %2966
    %v2969 = vadd.f32 %v2941, %v2967
    %v2970 = vadd.f32 %v2944, %v2967
    %v2971 = vadd.f32 %v2947, %v2967
    %v2972 = vadd.f32 %v2950, %v2967
    %v2973 = vadd.f32 %v2953, %v2967
    %v2974 = vadd.f32 %v2956, %v2967
    %v2975 = vadd.f32 %v2959, %v2967
    %v2976 = vadd.f32 %v2962, %v2967
    %v2977 = vxor.u32 %v2969, 2147483648
    %v2978 = vxor.u32 %v2970, 2147483648
    %v2979 = vxor.u32 %v2971, 2147483648
    %v2980 = vxor.u32 %v2972, 2147483648
    %v2981 = vxor.u32 %v2973, 2147483648
    %v2982 = vxor.u32 %v2974, 2147483648
    %v2983 = vxor.u32 %v2975, 2147483648
    %v2984 = vxor.u32 %v2976, 2147483648
    %v2985 = vmul.f32 %v2977, 1.442695
    %v2986 = vpow.pop %v2985
    %v2987 = vmul.f32 %v2978, 1.442695
    %v2988 = vpow.pop %v2987
    %v2989 = vmul.f32 %v2979, 1.442695
    %v2990 = vpow.pop %v2989
    %v2991 = vmul.f32 %v2980, 1.442695
    %v2992 = vpow.pop %v2991
    %v2993 = vmul.f32 %v2981, 1.442695
    %v2994 = vpow.pop %v2993
    %v2995 = vmul.f32 %v2982, 1.442695
    %v2996 = vpow.pop %v2995
    %v2997 = vmul.f32 %v2983, 1.442695
    %v2998 = vpow.pop %v2997
    %v2999 = vmul.f32 %v2984, 1.442695
    %v3000 = vpow.pop %v2999
    %v3001 = vadd.f32 %v2986, 1.0
    %v3002 = vadd.f32 %v2988, 1.0
    %v3003 = vadd.f32 %v2990, 1.0
    %v3004 = vadd.f32 %v2992, 1.0
    %v3005 = vadd.f32 %v2994, 1.0
    %v3006 = vadd.f32 %v2996, 1.0
    %v3007 = vadd.f32 %v2998, 1.0
    %v3008 = vadd.f32 %v3000, 1.0
    %v3009 = vrcp.pop %v3001
    %v3010 = vmul.f32 %v3001, %v3009
    %v3011 = vsub.f32 1.0, %v3010
    %v3012 = vmul.f32 %v3009, %v3011
    %v3013 = vadd.f32 %v3009, %v3012
    %vm3014 = vweird.f32 %v3001
    %vm3015 = vweird.f32 %v3009
    %vm3016 = vmor %vm3014, %vm3015
    %v3017 = vsel %vm3016, %v3009, %v3013
    %v3018 = vand.u32 2147483647, %v3001
    %vm3019 = vcmp.eq.f32.partialorder %v3018, 8.507059e+37
    %v3020 = vand.u32 %v3001, 2147483648
    %v3021 = vor.u32 1.1754944e-38, %v3020
    %v3022 = vsel %vm3019, %v3021, %v3017
    %v3023 = vmul.f32 1.0, %v3022
    %v3024 = vrcp.pop %v3002
    %v3025 = vmul.f32 %v3002, %v3024
    %v3026 = vsub.f32 1.0, %v3025
    %v3027 = vmul.f32 %v3024, %v3026
    %v3028 = vadd.f32 %v3024, %v3027
    %vm3029 = vweird.f32 %v3002
    %vm3030 = vweird.f32 %v3024
    %vm3031 = vmor %vm3029, %vm3030
    %v3032 = vsel %vm3031, %v3024, %v3028
    %v3033 = vand.u32 2147483647, %v3002
    %vm3034 = vcmp.eq.f32.partialorder %v3033, 8.507059e+37
    %v3035 = vand.u32 %v3002, 2147483648
    %v3036 = vor.u32 1.1754944e-38, %v3035
    %v3037 = vsel %vm3034, %v3036, %v3032
    %v3038 = vmul.f32 1.0, %v3037
    %v3039 = vrcp.pop %v3003
    %v3040 = vmul.f32 %v3003, %v3039
    %v3041 = vsub.f32 1.0, %v3040
    %v3042 = vmul.f32 %v3039, %v3041
    %v3043 = vadd.f32 %v3039, %v3042
    %vm3044 = vweird.f32 %v3003
    %vm3045 = vweird.f32 %v3039
    %vm3046 = vmor %vm3044, %vm3045
    %v3047 = vsel %vm3046, %v3039, %v3043
    %v3048 = vand.u32 2147483647, %v3003
    %vm3049 = vcmp.eq.f32.partialorder %v3048, 8.507059e+37
    %v3050 = vand.u32 %v3003, 2147483648
    %v3051 = vor.u32 1.1754944e-38, %v3050
    %v3052 = vsel %vm3049, %v3051, %v3047
    %v3053 = vmul.f32 1.0, %v3052
    %v3054 = vrcp.pop %v3004
    %v3055 = vmul.f32 %v3004, %v3054
    %v3056 = vsub.f32 1.0, %v3055
    %v3057 = vmul.f32 %v3054, %v3056
    %v3058 = vadd.f32 %v3054, %v3057
    %vm3059 = vweird.f32 %v3004
    %vm3060 = vweird.f32 %v3054
    %vm3061 = vmor %vm3059, %vm3060
    %v3062 = vsel %vm3061, %v3054, %v3058
    %v3063 = vand.u32 2147483647, %v3004
    %vm3064 = vcmp.eq.f32.partialorder %v3063, 8.507059e+37
    %v3065 = vand.u32 %v3004, 2147483648
    %v3066 = vor.u32 1.1754944e-38, %v3065
    %v3067 = vsel %vm3064, %v3066, %v3062
    %v3068 = vmul.f32 1.0, %v3067
    %v3069 = vrcp.pop %v3005
    %v3070 = vmul.f32 %v3005, %v3069
    %v3071 = vsub.f32 1.0, %v3070
    %v3072 = vmul.f32 %v3069, %v3071
    %v3073 = vadd.f32 %v3069, %v3072
    %vm3074 = vweird.f32 %v3005
    %vm3075 = vweird.f32 %v3069
    %vm3076 = vmor %vm3074, %vm3075
    %v3077 = vsel %vm3076, %v3069, %v3073
    %v3078 = vand.u32 2147483647, %v3005
    %vm3079 = vcmp.eq.f32.partialorder %v3078, 8.507059e+37
    %v3080 = vand.u32 %v3005, 2147483648
    %v3081 = vor.u32 1.1754944e-38, %v3080
    %v3082 = vsel %vm3079, %v3081, %v3077
    %v3083 = vmul.f32 1.0, %v3082
    %v3084 = vrcp.pop %v3006
    %v3085 = vmul.f32 %v3006, %v3084
    %v3086 = vsub.f32 1.0, %v3085
    %v3087 = vmul.f32 %v3084, %v3086
    %v3088 = vadd.f32 %v3084, %v3087
    %vm3089 = vweird.f32 %v3006
    %vm3090 = vweird.f32 %v3084
    %vm3091 = vmor %vm3089, %vm3090
    %v3092 = vsel %vm3091, %v3084, %v3088
    %v3093 = vand.u32 2147483647, %v3006
    %vm3094 = vcmp.eq.f32.partialorder %v3093, 8.507059e+37
    %v3095 = vand.u32 %v3006, 2147483648
    %v3096 = vor.u32 1.1754944e-38, %v3095
    %v3097 = vsel %vm3094, %v3096, %v3092
    %v3098 = vmul.f32 1.0, %v3097
    %v3099 = vrcp.pop %v3007
    %v3100 = vmul.f32 %v3007, %v3099
    %v3101 = vsub.f32 1.0, %v3100
    %v3102 = vmul.f32 %v3099, %v3101
    %v3103 = vadd.f32 %v3099, %v3102
    %vm3104 = vweird.f32 %v3007
    %vm3105 = vweird.f32 %v3099
    %vm3106 = vmor %vm3104, %vm3105
    %v3107 = vsel %vm3106, %v3099, %v3103
    %v3108 = vand.u32 2147483647, %v3007
    %vm3109 = vcmp.eq.f32.partialorder %v3108, 8.507059e+37
    %v3110 = vand.u32 %v3007, 2147483648
    %v3111 = vor.u32 1.1754944e-38, %v3110
    %v3112 = vsel %vm3109, %v3111, %v3107
    %v3113 = vmul.f32 1.0, %v3112
    %v3114 = vrcp.pop %v3008
    %v3115 = vmul.f32 %v3008, %v3114
    %v3116 = vsub.f32 1.0, %v3115
    %v3117 = vmul.f32 %v3114, %v3116
    %v3118 = vadd.f32 %v3114, %v3117
    %vm3119 = vweird.f32 %v3008
    %vm3120 = vweird.f32 %v3114
    %vm3121 = vmor %vm3119, %vm3120
    %v3122 = vsel %vm3121, %v3114, %v3118
    %v3123 = vand.u32 2147483647, %v3008
    %vm3124 = vcmp.eq.f32.partialorder %v3123, 8.507059e+37
    %v3125 = vand.u32 %v3008, 2147483648
    %v3126 = vor.u32 1.1754944e-38, %v3125
    %v3127 = vsel %vm3124, %v3126, %v3122
    %v3128 = vmul.f32 1.0, %v3127
    %3137 = vrot.lane.b32.xlu0 %v2900, 64
    %v3138 = vpop.permute.xlu0 %3137
    %3139 = vrot.lane.b32.xlu0 %v2903, 64
    %v3140 = vpop.permute.xlu0 %3139
    %3141 = vrot.lane.b32.xlu0 %v2906, 64
    %v3142 = vpop.permute.xlu0 %3141
    %3143 = vrot.lane.b32.xlu0 %v2909, 64
    %v3144 = vpop.permute.xlu0 %3143
    %3145 = vrot.lane.b32.xlu0 %v2912, 64
    %v3146 = vpop.permute.xlu0 %3145
    %3147 = vrot.lane.b32.xlu0 %v2915, 64
    %v3148 = vpop.permute.xlu0 %3147
    %3149 = vrot.lane.b32.xlu0 %v2918, 64
    %v3150 = vpop.permute.xlu0 %3149
    %3151 = vrot.lane.b32.xlu0 %v2921, 64
    %v3152 = vpop.permute.xlu0 %3151
    %v3153 = vsel %vm961, %v2900, 0
    %v3155 = vsel %vm961, %v2903, 0
    %v3157 = vsel %vm961, %v2906, 0
    %v3159 = vsel %vm961, %v2909, 0
    %v3161 = vsel %vm961, %v2912, 0
    %v3163 = vsel %vm961, %v2915, 0
    %v3165 = vsel %vm961, %v2918, 0
    %v3167 = vsel %vm961, %v2921, 0
    %v3169 = vsel %vm961, %v3138, 0
    %v3171 = vsel %vm961, %v3140, 0
    %v3173 = vsel %vm961, %v3142, 0
    %v3175 = vsel %vm961, %v3144, 0
    %v3177 = vsel %vm961, %v3146, 0
    %v3179 = vsel %vm961, %v3148, 0
    %v3181 = vsel %vm961, %v3150, 0
    %v3183 = vsel %vm961, %v3152, 0
    %3185 = vmatpush.xpose.msra.mxu0 0.0
    %3186 = vmatpush.xpose.msra.mxu0 0.0
    %3187 = vmatpush.xpose.msra.mxu0 0.0
    %3188 = vmatpush.xpose.msra.mxu0 0.0
    %3189 = vmatpush.xpose.msra.mxu0 0.0
    %3190 = vmatpush.xpose.msra.mxu0 0.0
    %3191 = vmatpush.xpose.msra.mxu0 0.0
    %3192 = vmatpush.xpose.msra.mxu0 0.0
    %3193 = vmatpush.xpose.msra.mxu0 %v3183
    %3194 = vmatpush.xpose.msra.mxu0 %v3181
    %3195 = vmatpush.xpose.msra.mxu0 %v3179
    %3196 = vmatpush.xpose.msra.mxu0 %v3177
    %3197 = vmatpush.xpose.msra.mxu0 %v3175
    %3198 = vmatpush.xpose.msra.mxu0 %v3173
    %3199 = vmatpush.xpose.msra.mxu0 %v3171
    %3200 = vmatpush.xpose.msra.mxu0 %v3169
    %3201 = vmatmul.f32.gmra.mxu0 %v3153
    %v3202 = vpop.f32.mrf.mxu0
    %v3203 = vadd.f32 0.0, %v3202
    %3204 = vmatmul.f32.gmra.mxu0 %v3155
    %v3205 = vpop.f32.mrf.mxu0
    %v3206 = vadd.f32 0.0, %v3205
    %3207 = vmatmul.f32.gmra.mxu0 %v3157
    %v3208 = vpop.f32.mrf.mxu0
    %v3209 = vadd.f32 0.0, %v3208
    %3210 = vmatmul.f32.gmra.mxu0 %v3159
    %v3211 = vpop.f32.mrf.mxu0
    %v3212 = vadd.f32 0.0, %v3211
    %3213 = vmatmul.f32.gmra.mxu0 %v3161
    %v3214 = vpop.f32.mrf.mxu0
    %v3215 = vadd.f32 0.0, %v3214
    %3216 = vmatmul.f32.gmra.mxu0 %v3163
    %v3217 = vpop.f32.mrf.mxu0
    %v3218 = vadd.f32 0.0, %v3217
    %3219 = vmatmul.f32.gmra.mxu0 %v3165
    %v3220 = vpop.f32.mrf.mxu0
    %v3221 = vadd.f32 0.0, %v3220
    %3222 = vmatmul.f32.gmra.mxu0 %v3167
    %v3223 = vpop.f32.mrf.mxu0
    %v3224 = vadd.f32 0.0, %v3223
    %3225 = vdwg.mxu0
    %v3226 = vsel %vm94, %v3203, -1e+30
    %v3227 = vsel %vm95, %v3206, -1e+30
    %v3228 = vsel %vm96, %v3209, -1e+30
    %v3229 = vsel %vm97, %v3212, -1e+30
    %v3230 = vsel %vm98, %v3215, -1e+30
    %v3231 = vsel %vm99, %v3218, -1e+30
    %v3232 = vsel %vm100, %v3221, -1e+30
    %v3233 = vsel %vm101, %v3224, -1e+30
    %v3234 = vsel %vm961, %v3226, -inf
    %3235 = vmax.xlane.f32.xlu0 %v3234
    %v3236 = vpop.xlane.xlu0 %3235
    %v3237 = vsel %vm961, %v3227, -inf
    %3238 = vmax.xlane.f32.xlu0 %v3237
    %v3239 = vpop.xlane.xlu0 %3238
    %v3240 = vsel %vm961, %v3228, -inf
    %3241 = vmax.xlane.f32.xlu0 %v3240
    %v3242 = vpop.xlane.xlu0 %3241
    %v3243 = vsel %vm961, %v3229, -inf
    %3244 = vmax.xlane.f32.xlu0 %v3243
    %v3245 = vpop.xlane.xlu0 %3244
    %v3246 = vsel %vm961, %v3230, -inf
    %3247 = vmax.xlane.f32.xlu0 %v3246
    %v3248 = vpop.xlane.xlu0 %3247
    %v3249 = vsel %vm961, %v3231, -inf
    %3250 = vmax.xlane.f32.xlu0 %v3249
    %v3251 = vpop.xlane.xlu0 %3250
    %v3252 = vsel %vm961, %v3232, -inf
    %3253 = vmax.xlane.f32.xlu0 %v3252
    %v3254 = vpop.xlane.xlu0 %3253
    %v3255 = vsel %vm961, %v3233, -inf
    %3256 = vmax.xlane.f32.xlu0 %v3255
    %v3257 = vpop.xlane.xlu0 %3256
    %v3258 = vsub.f32 %v3226, %v3236
    %v3259 = vsub.f32 %v3227, %v3239
    %v3260 = vsub.f32 %v3228, %v3242
    %v3261 = vsub.f32 %v3229, %v3245
    %v3262 = vsub.f32 %v3230, %v3248
    %v3263 = vsub.f32 %v3231, %v3251
    %v3264 = vsub.f32 %v3232, %v3254
    %v3265 = vsub.f32 %v3233, %v3257
    %v3266 = vmul.f32 %v3258, 1.442695
    %v3267 = vpow.pop %v3266
    %v3268 = vmul.f32 %v3259, 1.442695
    %v3269 = vpow.pop %v3268
    %v3270 = vmul.f32 %v3260, 1.442695
    %v3271 = vpow.pop %v3270
    %v3272 = vmul.f32 %v3261, 1.442695
    %v3273 = vpow.pop %v3272
    %v3274 = vmul.f32 %v3262, 1.442695
    %v3275 = vpow.pop %v3274
    %v3276 = vmul.f32 %v3263, 1.442695
    %v3277 = vpow.pop %v3276
    %v3278 = vmul.f32 %v3264, 1.442695
    %v3279 = vpow.pop %v3278
    %v3280 = vmul.f32 %v3265, 1.442695
    %v3281 = vpow.pop %v3280
    %v3282 = vsel %vm961, %v3267, 0.0
    %3283 = vadd.xlane.f32.xlu0 %v3282
    %v3284 = vpop.xlane.xlu0 %3283
    %v3285 = vsel %vm961, %v3269, 0.0
    %3286 = vadd.xlane.f32.xlu0 %v3285
    %v3287 = vpop.xlane.xlu0 %3286
    %v3288 = vsel %vm961, %v3271, 0.0
    %3289 = vadd.xlane.f32.xlu0 %v3288
    %v3290 = vpop.xlane.xlu0 %3289
    %v3291 = vsel %vm961, %v3273, 0.0
    %3292 = vadd.xlane.f32.xlu0 %v3291
    %v3293 = vpop.xlane.xlu0 %3292
    %v3294 = vsel %vm961, %v3275, 0.0
    %3295 = vadd.xlane.f32.xlu0 %v3294
    %v3296 = vpop.xlane.xlu0 %3295
    %v3297 = vsel %vm961, %v3277, 0.0
    %3298 = vadd.xlane.f32.xlu0 %v3297
    %v3299 = vpop.xlane.xlu0 %3298
    %v3300 = vsel %vm961, %v3279, 0.0
    %3301 = vadd.xlane.f32.xlu0 %v3300
    %v3302 = vpop.xlane.xlu0 %3301
    %v3303 = vsel %vm961, %v3281, 0.0
    %3304 = vadd.xlane.f32.xlu0 %v3303
    %v3305 = vpop.xlane.xlu0 %3304
    %v3306 = vrcp.pop %v3284
    %v3307 = vrcp.pop %v3287
    %v3308 = vrcp.pop %v3290
    %v3309 = vrcp.pop %v3293
    %v3310 = vrcp.pop %v3296
    %v3311 = vrcp.pop %v3299
    %v3312 = vrcp.pop %v3302
    %v3313 = vrcp.pop %v3305
    %v3314 = vmul.f32 %v3267, %v3306
    %v3315 = vmul.f32 %v3269, %v3307
    %v3316 = vmul.f32 %v3271, %v3308
    %v3317 = vmul.f32 %v3273, %v3309
    %v3318 = vmul.f32 %v3275, %v3310
    %v3319 = vmul.f32 %v3277, %v3311
    %v3320 = vmul.f32 %v3279, %v3312
    %v3321 = vmul.f32 %v3281, %v3313
    %v3323 = vsel %vm961, %v3314, 0
    %v3326 = vsel %vm961, %v3315, 0
    %v3329 = vsel %vm961, %v3316, 0
    %v3332 = vsel %vm961, %v3317, 0
    %v3335 = vsel %vm961, %v3318, 0
    %v3338 = vsel %vm961, %v3319, 0
    %v3341 = vsel %vm961, %v3320, 0
    %v3344 = vsel %vm961, %v3321, 0
    %3346 = vmatpush.msra.mxu0 0.0
    %3347 = vmatpush.msra.mxu0 0.0
    %3348 = vmatpush.msra.mxu0 0.0
    %3349 = vmatpush.msra.mxu0 0.0
    %3350 = vmatpush.msra.mxu0 0.0
    %3351 = vmatpush.msra.mxu0 0.0
    %3352 = vmatpush.msra.mxu0 0.0
    %3353 = vmatpush.msra.mxu0 0.0
    %3354 = vmatpush.msra.mxu0 %v2962
    %3355 = vmatpush.msra.mxu0 %v2959
    %3356 = vmatpush.msra.mxu0 %v2956
    %3357 = vmatpush.msra.mxu0 %v2953
    %3358 = vmatpush.msra.mxu0 %v2950
    %3359 = vmatpush.msra.mxu0 %v2947
    %3360 = vmatpush.msra.mxu0 %v2944
    %3361 = vmatpush.msra.mxu0 %v2941
    %3362 = vmatmul.f32.gmra.mxu0 %v3323
    %v3363 = vpop.f32.mrf.mxu0
    %v3364 = vadd.f32 0.0, %v3363
    %3365 = vmatmul.f32.gmra.mxu0 %v3326
    %v3366 = vpop.f32.mrf.mxu0
    %v3367 = vadd.f32 0.0, %v3366
    %3368 = vmatmul.f32.gmra.mxu0 %v3329
    %v3369 = vpop.f32.mrf.mxu0
    %v3370 = vadd.f32 0.0, %v3369
    %3371 = vmatmul.f32.gmra.mxu0 %v3332
    %v3372 = vpop.f32.mrf.mxu0
    %v3373 = vadd.f32 0.0, %v3372
    %3374 = vmatmul.f32.gmra.mxu0 %v3335
    %v3375 = vpop.f32.mrf.mxu0
    %v3376 = vadd.f32 0.0, %v3375
    %3377 = vmatmul.f32.gmra.mxu0 %v3338
    %v3378 = vpop.f32.mrf.mxu0
    %v3379 = vadd.f32 0.0, %v3378
    %3380 = vmatmul.f32.gmra.mxu0 %v3341
    %v3381 = vpop.f32.mrf.mxu0
    %v3382 = vadd.f32 0.0, %v3381
    %3383 = vmatmul.f32.gmra.mxu0 %v3344
    %v3384 = vpop.f32.mrf.mxu0
    %v3385 = vadd.f32 0.0, %v3384
    %3386 = vdwg.mxu0
    %v3387 = vld [vmem:[%s3 + $0x180] sm:$0xff]
    %v3388 = vld [vmem:[%s3 + $0x188] sm:$0xff]
    %v3389 = vld [vmem:[%s3 + $0x190] sm:$0xff]
    %v3390 = vld [vmem:[%s3 + $0x198] sm:$0xff]
    %v3391 = vld [vmem:[%s3 + $0x1a0] sm:$0xff]
    %v3392 = vld [vmem:[%s3 + $0x1a8] sm:$0xff]
    %v3393 = vld [vmem:[%s3 + $0x1b0] sm:$0xff]
    %v3394 = vld [vmem:[%s3 + $0x1b8] sm:$0xff]
    %3403 = vrot.lane.b32.xlu0 %v3023, 64
    %v3404 = vpop.permute.xlu0 %3403
    %3405 = vrot.lane.b32.xlu0 %v3038, 64
    %v3406 = vpop.permute.xlu0 %3405
    %3407 = vrot.lane.b32.xlu0 %v3053, 64
    %v3408 = vpop.permute.xlu0 %3407
    %3409 = vrot.lane.b32.xlu0 %v3068, 64
    %v3410 = vpop.permute.xlu0 %3409
    %3411 = vrot.lane.b32.xlu0 %v3083, 64
    %v3412 = vpop.permute.xlu0 %3411
    %3413 = vrot.lane.b32.xlu0 %v3098, 64
    %v3414 = vpop.permute.xlu0 %3413
    %3415 = vrot.lane.b32.xlu0 %v3113, 64
    %v3416 = vpop.permute.xlu0 %3415
    %3417 = vrot.lane.b32.xlu0 %v3128, 64
    %v3418 = vpop.permute.xlu0 %3417
    %v3427 = vmul.f32 %v3364, %v3404
    %v3428 = vmul.f32 %v3367, %v3406
    %v3429 = vmul.f32 %v3370, %v3408
    %v3430 = vmul.f32 %v3373, %v3410
    %v3431 = vmul.f32 %v3376, %v3412
    %v3432 = vmul.f32 %v3379, %v3414
    %v3433 = vmul.f32 %v3382, %v3416
    %v3434 = vmul.f32 %v3385, %v3418
    %v3436 = vsel %vm961, %v3427, 0
    %v3439 = vsel %vm961, %v3428, 0
    %v3442 = vsel %vm961, %v3429, 0
    %v3445 = vsel %vm961, %v3430, 0
    %v3448 = vsel %vm961, %v3431, 0
    %v3451 = vsel %vm961, %v3432, 0
    %v3454 = vsel %vm961, %v3433, 0
    %v3457 = vsel %vm961, %v3434, 0
    %3459 = vmatpush.msra.mxu0 0.0
    %3460 = vmatpush.msra.mxu0 0.0
    %3461 = vmatpush.msra.mxu0 0.0
    %3462 = vmatpush.msra.mxu0 0.0
    %3463 = vmatpush.msra.mxu0 0.0
    %3464 = vmatpush.msra.mxu0 0.0
    %3465 = vmatpush.msra.mxu0 0.0
    %3466 = vmatpush.msra.mxu0 0.0
    %3467 = vmatpush.msra.mxu0 %v3394
    %3468 = vmatpush.msra.mxu0 %v3393
    %3469 = vmatpush.msra.mxu0 %v3392
    %3470 = vmatpush.msra.mxu0 %v3391
    %3471 = vmatpush.msra.mxu0 %v3390
    %3472 = vmatpush.msra.mxu0 %v3389
    %3473 = vmatpush.msra.mxu0 %v3388
    %3474 = vmatpush.msra.mxu0 %v3387
    %3475 = vmatmul.f32.gmra.mxu0 %v3436
    %v3476 = vpop.f32.mrf.mxu0
    %v3477 = vadd.f32 0.0, %v3476
    %3478 = vmatmul.f32.gmra.mxu0 %v3439
    %v3479 = vpop.f32.mrf.mxu0
    %v3480 = vadd.f32 0.0, %v3479
    %3481 = vmatmul.f32.gmra.mxu0 %v3442
    %v3482 = vpop.f32.mrf.mxu0
    %v3483 = vadd.f32 0.0, %v3482
    %3484 = vmatmul.f32.gmra.mxu0 %v3445
    %v3485 = vpop.f32.mrf.mxu0
    %v3486 = vadd.f32 0.0, %v3485
    %3487 = vmatmul.f32.gmra.mxu0 %v3448
    %v3488 = vpop.f32.mrf.mxu0
    %v3489 = vadd.f32 0.0, %v3488
    %3490 = vmatmul.f32.gmra.mxu0 %v3451
    %v3491 = vpop.f32.mrf.mxu0
    %v3492 = vadd.f32 0.0, %v3491
    %3493 = vmatmul.f32.gmra.mxu0 %v3454
    %v3494 = vpop.f32.mrf.mxu0
    %v3495 = vadd.f32 0.0, %v3494
    %3496 = vmatmul.f32.gmra.mxu0 %v3457
    %v3497 = vpop.f32.mrf.mxu0
    %v3498 = vadd.f32 0.0, %v3497
    %3499 = vdwg.mxu0
    %v3500 = vadd.f32 %v2851, %v3477
    %v3501 = vadd.f32 %v2854, %v3480
    %v3502 = vadd.f32 %v2857, %v3483
    %v3503 = vadd.f32 %v2860, %v3486
    %v3504 = vadd.f32 %v2863, %v3489
    %v3505 = vadd.f32 %v2866, %v3492
    %v3506 = vadd.f32 %v2869, %v3495
    %v3507 = vadd.f32 %v2872, %v3498
    %v3508 = vld [vmem:[%s2 + $0x50] sm:$0xff]
    %v3509 = vld [vmem:[%s2 + $0x58] sm:$0xff]
    %v3510 = vld [vmem:[%s2 + $0xb0] sm:$0xff]
    %v3511 = vld [vmem:[%s2 + $0xb8] sm:$0xff]
    %v3512 = vld [vmem:[%s2 + $0x110] sm:$0xff]
    %v3513 = vld [vmem:[%s2 + $0x118] sm:$0xff]
    %v3514 = vld [vmem:[%s2 + $0x170] sm:$0xff]
    %v3515 = vld [vmem:[%s2 + $0x178] sm:$0xff]
    %3516 = vmatpush.msra.mxu0 0.0
    %3517 = vmatpush.msra.mxu0 0.0
    %3518 = vmatpush.msra.mxu0 0.0
    %3519 = vmatpush.msra.mxu0 0.0
    %3520 = vmatpush.msra.mxu0 0.0
    %3521 = vmatpush.msra.mxu0 0.0
    %3522 = vmatpush.msra.mxu0 0.0
    %3523 = vmatpush.msra.mxu0 0.0
    %3524 = vmatpush.msra.mxu0 0.0
    %3525 = vmatpush.msra.mxu0 0.0
    %3526 = vmatpush.msra.mxu0 0.0
    %3527 = vmatpush.msra.mxu0 0.0
    %3528 = vmatpush.msra.mxu0 %v3514
    %3529 = vmatpush.msra.mxu0 %v3512
    %3530 = vmatpush.msra.mxu0 %v3510
    %3531 = vmatpush.msra.mxu0 %v3508
    %3532 = vmatmul.f32.gmra.mxu0 %v1612
    %v3533 = vpop.f32.mrf.mxu0
    %v3534 = vadd.f32 0.0, %v3533
    %3535 = vmatmul.f32.gmra.mxu0 %v1615
    %v3536 = vpop.f32.mrf.mxu0
    %v3537 = vadd.f32 0.0, %v3536
    %3538 = vmatmul.f32.gmra.mxu0 %v1618
    %v3539 = vpop.f32.mrf.mxu0
    %v3540 = vadd.f32 0.0, %v3539
    %3541 = vmatmul.f32.gmra.mxu0 %v1621
    %v3542 = vpop.f32.mrf.mxu0
    %v3543 = vadd.f32 0.0, %v3542
    %3544 = vmatmul.f32.gmra.mxu0 %v1624
    %v3545 = vpop.f32.mrf.mxu0
    %v3546 = vadd.f32 0.0, %v3545
    %3547 = vmatmul.f32.gmra.mxu0 %v1627
    %v3548 = vpop.f32.mrf.mxu0
    %v3549 = vadd.f32 0.0, %v3548
    %3550 = vmatmul.f32.gmra.mxu0 %v1630
    %v3551 = vpop.f32.mrf.mxu0
    %v3552 = vadd.f32 0.0, %v3551
    %3553 = vmatmul.f32.gmra.mxu0 %v1633
    %v3554 = vpop.f32.mrf.mxu0
    %v3555 = vadd.f32 0.0, %v3554
    %3556 = vdwg.mxu0
    %3557 = vmatpush.msra.mxu0 0.0
    %3558 = vmatpush.msra.mxu0 0.0
    %3559 = vmatpush.msra.mxu0 0.0
    %3560 = vmatpush.msra.mxu0 0.0
    %3561 = vmatpush.msra.mxu0 0.0
    %3562 = vmatpush.msra.mxu0 0.0
    %3563 = vmatpush.msra.mxu0 0.0
    %3564 = vmatpush.msra.mxu0 0.0
    %3565 = vmatpush.msra.mxu0 0.0
    %3566 = vmatpush.msra.mxu0 0.0
    %3567 = vmatpush.msra.mxu0 0.0
    %3568 = vmatpush.msra.mxu0 0.0
    %3569 = vmatpush.msra.mxu0 %v3515
    %3570 = vmatpush.msra.mxu0 %v3513
    %3571 = vmatpush.msra.mxu0 %v3511
    %3572 = vmatpush.msra.mxu0 %v3509
    %3573 = vmatmul.f32.gmra.mxu0 %v1612
    %v3574 = vpop.f32.mrf.mxu0
    %v3575 = vadd.f32 0.0, %v3574
    %3576 = vmatmul.f32.gmra.mxu0 %v1615
    %v3577 = vpop.f32.mrf.mxu0
    %v3578 = vadd.f32 0.0, %v3577
    %3579 = vmatmul.f32.gmra.mxu0 %v1618
    %v3580 = vpop.f32.mrf.mxu0
    %v3581 = vadd.f32 0.0, %v3580
    %3582 = vmatmul.f32.gmra.mxu0 %v1621
    %v3583 = vpop.f32.mrf.mxu0
    %v3584 = vadd.f32 0.0, %v3583
    %3585 = vmatmul.f32.gmra.mxu0 %v1624
    %v3586 = vpop.f32.mrf.mxu0
    %v3587 = vadd.f32 0.0, %v3586
    %3588 = vmatmul.f32.gmra.mxu0 %v1627
    %v3589 = vpop.f32.mrf.mxu0
    %v3590 = vadd.f32 0.0, %v3589
    %3591 = vmatmul.f32.gmra.mxu0 %v1630
    %v3592 = vpop.f32.mrf.mxu0
    %v3593 = vadd.f32 0.0, %v3592
    %3594 = vmatmul.f32.gmra.mxu0 %v1633
    %v3595 = vpop.f32.mrf.mxu0
    %v3596 = vadd.f32 0.0, %v3595
    %3597 = vdwg.mxu0
    %v3598 = vadd.f32 %v3575, %v2964
    %v3599 = vadd.f32 %v3578, %v2964
    %v3600 = vadd.f32 %v3581, %v2964
    %v3601 = vadd.f32 %v3584, %v2964
    %v3602 = vadd.f32 %v3587, %v2964
    %v3603 = vadd.f32 %v3590, %v2964
    %v3604 = vadd.f32 %v3593, %v2964
    %v3605 = vadd.f32 %v3596, %v2964
    %v3606 = vxor.u32 %v3598, 2147483648
    %v3607 = vxor.u32 %v3599, 2147483648
    %v3608 = vxor.u32 %v3600, 2147483648
    %v3609 = vxor.u32 %v3601, 2147483648
    %v3610 = vxor.u32 %v3602, 2147483648
    %v3611 = vxor.u32 %v3603, 2147483648
    %v3612 = vxor.u32 %v3604, 2147483648
    %v3613 = vxor.u32 %v3605, 2147483648
    %v3614 = vmul.f32 %v3606, 1.442695
    %v3615 = vpow.pop %v3614
    %v3616 = vmul.f32 %v3607, 1.442695
    %v3617 = vpow.pop %v3616
    %v3618 = vmul.f32 %v3608, 1.442695
    %v3619 = vpow.pop %v3618
    %v3620 = vmul.f32 %v3609, 1.442695
    %v3621 = vpow.pop %v3620
    %v3622 = vmul.f32 %v3610, 1.442695
    %v3623 = vpow.pop %v3622
    %v3624 = vmul.f32 %v3611, 1.442695
    %v3625 = vpow.pop %v3624
    %v3626 = vmul.f32 %v3612, 1.442695
    %v3627 = vpow.pop %v3626
    %v3628 = vmul.f32 %v3613, 1.442695
    %v3629 = vpow.pop %v3628
    %v3630 = vadd.f32 %v3615, 1.0
    %v3631 = vadd.f32 %v3617, 1.0
    %v3632 = vadd.f32 %v3619, 1.0
    %v3633 = vadd.f32 %v3621, 1.0
    %v3634 = vadd.f32 %v3623, 1.0
    %v3635 = vadd.f32 %v3625, 1.0
    %v3636 = vadd.f32 %v3627, 1.0
    %v3637 = vadd.f32 %v3629, 1.0
    %v3638 = vrcp.pop %v3630
    %v3639 = vmul.f32 %v3630, %v3638
    %v3640 = vsub.f32 1.0, %v3639
    %v3641 = vmul.f32 %v3638, %v3640
    %v3642 = vadd.f32 %v3638, %v3641
    %vm3643 = vweird.f32 %v3630
    %vm3644 = vweird.f32 %v3638
    %vm3645 = vmor %vm3643, %vm3644
    %v3646 = vsel %vm3645, %v3638, %v3642
    %v3647 = vand.u32 2147483647, %v3630
    %vm3648 = vcmp.eq.f32.partialorder %v3647, 8.507059e+37
    %v3649 = vand.u32 %v3630, 2147483648
    %v3650 = vor.u32 1.1754944e-38, %v3649
    %v3651 = vsel %vm3648, %v3650, %v3646
    %v3652 = vmul.f32 1.0, %v3651
    %v3653 = vrcp.pop %v3631
    %v3654 = vmul.f32 %v3631, %v3653
    %v3655 = vsub.f32 1.0, %v3654
    %v3656 = vmul.f32 %v3653, %v3655
    %v3657 = vadd.f32 %v3653, %v3656
    %vm3658 = vweird.f32 %v3631
    %vm3659 = vweird.f32 %v3653
    %vm3660 = vmor %vm3658, %vm3659
    %v3661 = vsel %vm3660, %v3653, %v3657
    %v3662 = vand.u32 2147483647, %v3631
    %vm3663 = vcmp.eq.f32.partialorder %v3662, 8.507059e+37
    %v3664 = vand.u32 %v3631, 2147483648
    %v3665 = vor.u32 1.1754944e-38, %v3664
    %v3666 = vsel %vm3663, %v3665, %v3661
    %v3667 = vmul.f32 1.0, %v3666
    %v3668 = vrcp.pop %v3632
    %v3669 = vmul.f32 %v3632, %v3668
    %v3670 = vsub.f32 1.0, %v3669
    %v3671 = vmul.f32 %v3668, %v3670
    %v3672 = vadd.f32 %v3668, %v3671
    %vm3673 = vweird.f32 %v3632
    %vm3674 = vweird.f32 %v3668
    %vm3675 = vmor %vm3673, %vm3674
    %v3676 = vsel %vm3675, %v3668, %v3672
    %v3677 = vand.u32 2147483647, %v3632
    %vm3678 = vcmp.eq.f32.partialorder %v3677, 8.507059e+37
    %v3679 = vand.u32 %v3632, 2147483648
    %v3680 = vor.u32 1.1754944e-38, %v3679
    %v3681 = vsel %vm3678, %v3680, %v3676
    %v3682 = vmul.f32 1.0, %v3681
    %v3683 = vrcp.pop %v3633
    %v3684 = vmul.f32 %v3633, %v3683
    %v3685 = vsub.f32 1.0, %v3684
    %v3686 = vmul.f32 %v3683, %v3685
    %v3687 = vadd.f32 %v3683, %v3686
    %vm3688 = vweird.f32 %v3633
    %vm3689 = vweird.f32 %v3683
    %vm3690 = vmor %vm3688, %vm3689
    %v3691 = vsel %vm3690, %v3683, %v3687
    %v3692 = vand.u32 2147483647, %v3633
    %vm3693 = vcmp.eq.f32.partialorder %v3692, 8.507059e+37
    %v3694 = vand.u32 %v3633, 2147483648
    %v3695 = vor.u32 1.1754944e-38, %v3694
    %v3696 = vsel %vm3693, %v3695, %v3691
    %v3697 = vmul.f32 1.0, %v3696
    %v3698 = vrcp.pop %v3634
    %v3699 = vmul.f32 %v3634, %v3698
    %v3700 = vsub.f32 1.0, %v3699
    %v3701 = vmul.f32 %v3698, %v3700
    %v3702 = vadd.f32 %v3698, %v3701
    %vm3703 = vweird.f32 %v3634
    %vm3704 = vweird.f32 %v3698
    %vm3705 = vmor %vm3703, %vm3704
    %v3706 = vsel %vm3705, %v3698, %v3702
    %v3707 = vand.u32 2147483647, %v3634
    %vm3708 = vcmp.eq.f32.partialorder %v3707, 8.507059e+37
    %v3709 = vand.u32 %v3634, 2147483648
    %v3710 = vor.u32 1.1754944e-38, %v3709
    %v3711 = vsel %vm3708, %v3710, %v3706
    %v3712 = vmul.f32 1.0, %v3711
    %v3713 = vrcp.pop %v3635
    %v3714 = vmul.f32 %v3635, %v3713
    %v3715 = vsub.f32 1.0, %v3714
    %v3716 = vmul.f32 %v3713, %v3715
    %v3717 = vadd.f32 %v3713, %v3716
    %vm3718 = vweird.f32 %v3635
    %vm3719 = vweird.f32 %v3713
    %vm3720 = vmor %vm3718, %vm3719
    %v3721 = vsel %vm3720, %v3713, %v3717
    %v3722 = vand.u32 2147483647, %v3635
    %vm3723 = vcmp.eq.f32.partialorder %v3722, 8.507059e+37
    %v3724 = vand.u32 %v3635, 2147483648
    %v3725 = vor.u32 1.1754944e-38, %v3724
    %v3726 = vsel %vm3723, %v3725, %v3721
    %v3727 = vmul.f32 1.0, %v3726
    %v3728 = vrcp.pop %v3636
    %v3729 = vmul.f32 %v3636, %v3728
    %v3730 = vsub.f32 1.0, %v3729
    %v3731 = vmul.f32 %v3728, %v3730
    %v3732 = vadd.f32 %v3728, %v3731
    %vm3733 = vweird.f32 %v3636
    %vm3734 = vweird.f32 %v3728
    %vm3735 = vmor %vm3733, %vm3734
    %v3736 = vsel %vm3735, %v3728, %v3732
    %v3737 = vand.u32 2147483647, %v3636
    %vm3738 = vcmp.eq.f32.partialorder %v3737, 8.507059e+37
    %v3739 = vand.u32 %v3636, 2147483648
    %v3740 = vor.u32 1.1754944e-38, %v3739
    %v3741 = vsel %vm3738, %v3740, %v3736
    %v3742 = vmul.f32 1.0, %v3741
    %v3743 = vrcp.pop %v3637
    %v3744 = vmul.f32 %v3637, %v3743
    %v3745 = vsub.f32 1.0, %v3744
    %v3746 = vmul.f32 %v3743, %v3745
    %v3747 = vadd.f32 %v3743, %v3746
    %vm3748 = vweird.f32 %v3637
    %vm3749 = vweird.f32 %v3743
    %vm3750 = vmor %vm3748, %vm3749
    %v3751 = vsel %vm3750, %v3743, %v3747
    %v3752 = vand.u32 2147483647, %v3637
    %vm3753 = vcmp.eq.f32.partialorder %v3752, 8.507059e+37
    %v3754 = vand.u32 %v3637, 2147483648
    %v3755 = vor.u32 1.1754944e-38, %v3754
    %v3756 = vsel %vm3753, %v3755, %v3751
    %v3757 = vmul.f32 1.0, %v3756
    %3766 = vrot.lane.b32.xlu0 %v3534, 64
    %v3767 = vpop.permute.xlu0 %3766
    %3768 = vrot.lane.b32.xlu0 %v3537, 64
    %v3769 = vpop.permute.xlu0 %3768
    %3770 = vrot.lane.b32.xlu0 %v3540, 64
    %v3771 = vpop.permute.xlu0 %3770
    %3772 = vrot.lane.b32.xlu0 %v3543, 64
    %v3773 = vpop.permute.xlu0 %3772
    %3774 = vrot.lane.b32.xlu0 %v3546, 64
    %v3775 = vpop.permute.xlu0 %3774
    %3776 = vrot.lane.b32.xlu0 %v3549, 64
    %v3777 = vpop.permute.xlu0 %3776
    %3778 = vrot.lane.b32.xlu0 %v3552, 64
    %v3779 = vpop.permute.xlu0 %3778
    %3780 = vrot.lane.b32.xlu0 %v3555, 64
    %v3781 = vpop.permute.xlu0 %3780
    %v3782 = vsel %vm961, %v3534, 0
    %v3784 = vsel %vm961, %v3537, 0
    %v3786 = vsel %vm961, %v3540, 0
    %v3788 = vsel %vm961, %v3543, 0
    %v3790 = vsel %vm961, %v3546, 0
    %v3792 = vsel %vm961, %v3549, 0
    %v3794 = vsel %vm961, %v3552, 0
    %v3796 = vsel %vm961, %v3555, 0
    %v3798 = vsel %vm961, %v3767, 0
    %v3800 = vsel %vm961, %v3769, 0
    %v3802 = vsel %vm961, %v3771, 0
    %v3804 = vsel %vm961, %v3773, 0
    %v3806 = vsel %vm961, %v3775, 0
    %v3808 = vsel %vm961, %v3777, 0
    %v3810 = vsel %vm961, %v3779, 0
    %v3812 = vsel %vm961, %v3781, 0
    %3814 = vmatpush.xpose.msra.mxu0 0.0
    %3815 = vmatpush.xpose.msra.mxu0 0.0
    %3816 = vmatpush.xpose.msra.mxu0 0.0
    %3817 = vmatpush.xpose.msra.mxu0 0.0
    %3818 = vmatpush.xpose.msra.mxu0 0.0
    %3819 = vmatpush.xpose.msra.mxu0 0.0
    %3820 = vmatpush.xpose.msra.mxu0 0.0
    %3821 = vmatpush.xpose.msra.mxu0 0.0
    %3822 = vmatpush.xpose.msra.mxu0 %v3812
    %3823 = vmatpush.xpose.msra.mxu0 %v3810
    %3824 = vmatpush.xpose.msra.mxu0 %v3808
    %3825 = vmatpush.xpose.msra.mxu0 %v3806
    %3826 = vmatpush.xpose.msra.mxu0 %v3804
    %3827 = vmatpush.xpose.msra.mxu0 %v3802
    %3828 = vmatpush.xpose.msra.mxu0 %v3800
    %3829 = vmatpush.xpose.msra.mxu0 %v3798
    %3830 = vmatmul.f32.gmra.mxu0 %v3782
    %v3831 = vpop.f32.mrf.mxu0
    %v3832 = vadd.f32 0.0, %v3831
    %3833 = vmatmul.f32.gmra.mxu0 %v3784
    %v3834 = vpop.f32.mrf.mxu0
    %v3835 = vadd.f32 0.0, %v3834
    %3836 = vmatmul.f32.gmra.mxu0 %v3786
    %v3837 = vpop.f32.mrf.mxu0
    %v3838 = vadd.f32 0.0, %v3837
    %3839 = vmatmul.f32.gmra.mxu0 %v3788
    %v3840 = vpop.f32.mrf.mxu0
    %v3841 = vadd.f32 0.0, %v3840
    %3842 = vmatmul.f32.gmra.mxu0 %v3790
    %v3843 = vpop.f32.mrf.mxu0
    %v3844 = vadd.f32 0.0, %v3843
    %3845 = vmatmul.f32.gmra.mxu0 %v3792
    %v3846 = vpop.f32.mrf.mxu0
    %v3847 = vadd.f32 0.0, %v3846
    %3848 = vmatmul.f32.gmra.mxu0 %v3794
    %v3849 = vpop.f32.mrf.mxu0
    %v3850 = vadd.f32 0.0, %v3849
    %3851 = vmatmul.f32.gmra.mxu0 %v3796
    %v3852 = vpop.f32.mrf.mxu0
    %v3853 = vadd.f32 0.0, %v3852
    %3854 = vdwg.mxu0
    %v3855 = vsel %vm94, %v3832, -1e+30
    %v3856 = vsel %vm95, %v3835, -1e+30
    %v3857 = vsel %vm96, %v3838, -1e+30
    %v3858 = vsel %vm97, %v3841, -1e+30
    %v3859 = vsel %vm98, %v3844, -1e+30
    %v3860 = vsel %vm99, %v3847, -1e+30
    %v3861 = vsel %vm100, %v3850, -1e+30
    %v3862 = vsel %vm101, %v3853, -1e+30
    %v3863 = vsel %vm961, %v3855, -inf
    %3864 = vmax.xlane.f32.xlu0 %v3863
    %v3865 = vpop.xlane.xlu0 %3864
    %v3866 = vsel %vm961, %v3856, -inf
    %3867 = vmax.xlane.f32.xlu0 %v3866
    %v3868 = vpop.xlane.xlu0 %3867
    %v3869 = vsel %vm961, %v3857, -inf
    %3870 = vmax.xlane.f32.xlu0 %v3869
    %v3871 = vpop.xlane.xlu0 %3870
    %v3872 = vsel %vm961, %v3858, -inf
    %3873 = vmax.xlane.f32.xlu0 %v3872
    %v3874 = vpop.xlane.xlu0 %3873
    %v3875 = vsel %vm961, %v3859, -inf
    %3876 = vmax.xlane.f32.xlu0 %v3875
    %v3877 = vpop.xlane.xlu0 %3876
    %v3878 = vsel %vm961, %v3860, -inf
    %3879 = vmax.xlane.f32.xlu0 %v3878
    %v3880 = vpop.xlane.xlu0 %3879
    %v3881 = vsel %vm961, %v3861, -inf
    %3882 = vmax.xlane.f32.xlu0 %v3881
    %v3883 = vpop.xlane.xlu0 %3882
    %v3884 = vsel %vm961, %v3862, -inf
    %3885 = vmax.xlane.f32.xlu0 %v3884
    %v3886 = vpop.xlane.xlu0 %3885
    %v3887 = vsub.f32 %v3855, %v3865
    %v3888 = vsub.f32 %v3856, %v3868
    %v3889 = vsub.f32 %v3857, %v3871
    %v3890 = vsub.f32 %v3858, %v3874
    %v3891 = vsub.f32 %v3859, %v3877
    %v3892 = vsub.f32 %v3860, %v3880
    %v3893 = vsub.f32 %v3861, %v3883
    %v3894 = vsub.f32 %v3862, %v3886
    %v3895 = vmul.f32 %v3887, 1.442695
    %v3896 = vpow.pop %v3895
    %v3897 = vmul.f32 %v3888, 1.442695
    %v3898 = vpow.pop %v3897
    %v3899 = vmul.f32 %v3889, 1.442695
    %v3900 = vpow.pop %v3899
    %v3901 = vmul.f32 %v3890, 1.442695
    %v3902 = vpow.pop %v3901
    %v3903 = vmul.f32 %v3891, 1.442695
    %v3904 = vpow.pop %v3903
    %v3905 = vmul.f32 %v3892, 1.442695
    %v3906 = vpow.pop %v3905
    %v3907 = vmul.f32 %v3893, 1.442695
    %v3908 = vpow.pop %v3907
    %v3909 = vmul.f32 %v3894, 1.442695
    %v3910 = vpow.pop %v3909
    %v3911 = vsel %vm961, %v3896, 0.0
    %3912 = vadd.xlane.f32.xlu0 %v3911
    %v3913 = vpop.xlane.xlu0 %3912
    %v3914 = vsel %vm961, %v3898, 0.0
    %3915 = vadd.xlane.f32.xlu0 %v3914
    %v3916 = vpop.xlane.xlu0 %3915
    %v3917 = vsel %vm961, %v3900, 0.0
    %3918 = vadd.xlane.f32.xlu0 %v3917
    %v3919 = vpop.xlane.xlu0 %3918
    %v3920 = vsel %vm961, %v3902, 0.0
    %3921 = vadd.xlane.f32.xlu0 %v3920
    %v3922 = vpop.xlane.xlu0 %3921
    %v3923 = vsel %vm961, %v3904, 0.0
    %3924 = vadd.xlane.f32.xlu0 %v3923
    %v3925 = vpop.xlane.xlu0 %3924
    %v3926 = vsel %vm961, %v3906, 0.0
    %3927 = vadd.xlane.f32.xlu0 %v3926
    %v3928 = vpop.xlane.xlu0 %3927
    %v3929 = vsel %vm961, %v3908, 0.0
    %3930 = vadd.xlane.f32.xlu0 %v3929
    %v3931 = vpop.xlane.xlu0 %3930
    %v3932 = vsel %vm961, %v3910, 0.0
    %3933 = vadd.xlane.f32.xlu0 %v3932
    %v3934 = vpop.xlane.xlu0 %3933
    %v3935 = vrcp.pop %v3913
    %v3936 = vrcp.pop %v3916
    %v3937 = vrcp.pop %v3919
    %v3938 = vrcp.pop %v3922
    %v3939 = vrcp.pop %v3925
    %v3940 = vrcp.pop %v3928
    %v3941 = vrcp.pop %v3931
    %v3942 = vrcp.pop %v3934
    %v3943 = vmul.f32 %v3896, %v3935
    %v3944 = vmul.f32 %v3898, %v3936
    %v3945 = vmul.f32 %v3900, %v3937
    %v3946 = vmul.f32 %v3902, %v3938
    %v3947 = vmul.f32 %v3904, %v3939
    %v3948 = vmul.f32 %v3906, %v3940
    %v3949 = vmul.f32 %v3908, %v3941
    %v3950 = vmul.f32 %v3910, %v3942
    %v3952 = vsel %vm961, %v3943, 0
    %v3955 = vsel %vm961, %v3944, 0
    %v3958 = vsel %vm961, %v3945, 0
    %v3961 = vsel %vm961, %v3946, 0
    %v3964 = vsel %vm961, %v3947, 0
    %v3967 = vsel %vm961, %v3948, 0
    %v3970 = vsel %vm961, %v3949, 0
    %v3973 = vsel %vm961, %v3950, 0
    %3975 = vmatpush.msra.mxu0 0.0
    %3976 = vmatpush.msra.mxu0 0.0
    %3977 = vmatpush.msra.mxu0 0.0
    %3978 = vmatpush.msra.mxu0 0.0
    %3979 = vmatpush.msra.mxu0 0.0
    %3980 = vmatpush.msra.mxu0 0.0
    %3981 = vmatpush.msra.mxu0 0.0
    %3982 = vmatpush.msra.mxu0 0.0
    %3983 = vmatpush.msra.mxu0 %v3596
    %3984 = vmatpush.msra.mxu0 %v3593
    %3985 = vmatpush.msra.mxu0 %v3590
    %3986 = vmatpush.msra.mxu0 %v3587
    %3987 = vmatpush.msra.mxu0 %v3584
    %3988 = vmatpush.msra.mxu0 %v3581
    %3989 = vmatpush.msra.mxu0 %v3578
    %3990 = vmatpush.msra.mxu0 %v3575
    %3991 = vmatmul.f32.gmra.mxu0 %v3952
    %v3992 = vpop.f32.mrf.mxu0
    %v3993 = vadd.f32 0.0, %v3992
    %3994 = vmatmul.f32.gmra.mxu0 %v3955
    %v3995 = vpop.f32.mrf.mxu0
    %v3996 = vadd.f32 0.0, %v3995
    %3997 = vmatmul.f32.gmra.mxu0 %v3958
    %v3998 = vpop.f32.mrf.mxu0
    %v3999 = vadd.f32 0.0, %v3998
    %4000 = vmatmul.f32.gmra.mxu0 %v3961
    %v4001 = vpop.f32.mrf.mxu0
    %v4002 = vadd.f32 0.0, %v4001
    %4003 = vmatmul.f32.gmra.mxu0 %v3964
    %v4004 = vpop.f32.mrf.mxu0
    %v4005 = vadd.f32 0.0, %v4004
    %4006 = vmatmul.f32.gmra.mxu0 %v3967
    %v4007 = vpop.f32.mrf.mxu0
    %v4008 = vadd.f32 0.0, %v4007
    %4009 = vmatmul.f32.gmra.mxu0 %v3970
    %v4010 = vpop.f32.mrf.mxu0
    %v4011 = vadd.f32 0.0, %v4010
    %4012 = vmatmul.f32.gmra.mxu0 %v3973
    %v4013 = vpop.f32.mrf.mxu0
    %v4014 = vadd.f32 0.0, %v4013
    %4015 = vdwg.mxu0
    %v4016 = vld [vmem:[%s3 + $0x1c0] sm:$0xff]
    %v4017 = vld [vmem:[%s3 + $0x1c8] sm:$0xff]
    %v4018 = vld [vmem:[%s3 + $0x1d0] sm:$0xff]
    %v4019 = vld [vmem:[%s3 + $0x1d8] sm:$0xff]
    %v4020 = vld [vmem:[%s3 + $0x1e0] sm:$0xff]
    %v4021 = vld [vmem:[%s3 + $0x1e8] sm:$0xff]
    %v4022 = vld [vmem:[%s3 + $0x1f0] sm:$0xff]
    %v4023 = vld [vmem:[%s3 + $0x1f8] sm:$0xff]
    %4032 = vrot.lane.b32.xlu0 %v3652, 64
    %v4033 = vpop.permute.xlu0 %4032
    %4034 = vrot.lane.b32.xlu0 %v3667, 64
    %v4035 = vpop.permute.xlu0 %4034
    %4036 = vrot.lane.b32.xlu0 %v3682, 64
    %v4037 = vpop.permute.xlu0 %4036
    %4038 = vrot.lane.b32.xlu0 %v3697, 64
    %v4039 = vpop.permute.xlu0 %4038
    %4040 = vrot.lane.b32.xlu0 %v3712, 64
    %v4041 = vpop.permute.xlu0 %4040
    %4042 = vrot.lane.b32.xlu0 %v3727, 64
    %v4043 = vpop.permute.xlu0 %4042
    %4044 = vrot.lane.b32.xlu0 %v3742, 64
    %v4045 = vpop.permute.xlu0 %4044
    %4046 = vrot.lane.b32.xlu0 %v3757, 64
    %v4047 = vpop.permute.xlu0 %4046
    %v4056 = vmul.f32 %v3993, %v4033
    %v4057 = vmul.f32 %v3996, %v4035
    %v4058 = vmul.f32 %v3999, %v4037
    %v4059 = vmul.f32 %v4002, %v4039
    %v4060 = vmul.f32 %v4005, %v4041
    %v4061 = vmul.f32 %v4008, %v4043
    %v4062 = vmul.f32 %v4011, %v4045
    %v4063 = vmul.f32 %v4014, %v4047
    %v4065 = vsel %vm961, %v4056, 0
    %v4068 = vsel %vm961, %v4057, 0
    %v4071 = vsel %vm961, %v4058, 0
    %v4074 = vsel %vm961, %v4059, 0
    %v4077 = vsel %vm961, %v4060, 0
    %v4080 = vsel %vm961, %v4061, 0
    %v4083 = vsel %vm961, %v4062, 0
    %v4086 = vsel %vm961, %v4063, 0
    %4088 = vmatpush.msra.mxu0 0.0
    %4089 = vmatpush.msra.mxu0 0.0
    %4090 = vmatpush.msra.mxu0 0.0
    %4091 = vmatpush.msra.mxu0 0.0
    %4092 = vmatpush.msra.mxu0 0.0
    %4093 = vmatpush.msra.mxu0 0.0
    %4094 = vmatpush.msra.mxu0 0.0
    %4095 = vmatpush.msra.mxu0 0.0
    %4096 = vmatpush.msra.mxu0 %v4023
    %4097 = vmatpush.msra.mxu0 %v4022
    %4098 = vmatpush.msra.mxu0 %v4021
    %4099 = vmatpush.msra.mxu0 %v4020
    %4100 = vmatpush.msra.mxu0 %v4019
    %4101 = vmatpush.msra.mxu0 %v4018
    %4102 = vmatpush.msra.mxu0 %v4017
    %4103 = vmatpush.msra.mxu0 %v4016
    %4104 = vmatmul.f32.gmra.mxu0 %v4065
    %v4105 = vpop.f32.mrf.mxu0
    %v4106 = vadd.f32 0.0, %v4105
    %4107 = vmatmul.f32.gmra.mxu0 %v4068
    %v4108 = vpop.f32.mrf.mxu0
    %v4109 = vadd.f32 0.0, %v4108
    %4110 = vmatmul.f32.gmra.mxu0 %v4071
    %v4111 = vpop.f32.mrf.mxu0
    %v4112 = vadd.f32 0.0, %v4111
    %4113 = vmatmul.f32.gmra.mxu0 %v4074
    %v4114 = vpop.f32.mrf.mxu0
    %v4115 = vadd.f32 0.0, %v4114
    %4116 = vmatmul.f32.gmra.mxu0 %v4077
    %v4117 = vpop.f32.mrf.mxu0
    %v4118 = vadd.f32 0.0, %v4117
    %4119 = vmatmul.f32.gmra.mxu0 %v4080
    %v4120 = vpop.f32.mrf.mxu0
    %v4121 = vadd.f32 0.0, %v4120
    %4122 = vmatmul.f32.gmra.mxu0 %v4083
    %v4123 = vpop.f32.mrf.mxu0
    %v4124 = vadd.f32 0.0, %v4123
    %4125 = vmatmul.f32.gmra.mxu0 %v4086
    %v4126 = vpop.f32.mrf.mxu0
    %v4127 = vadd.f32 0.0, %v4126
    %4128 = vdwg.mxu0
    %v4129 = vadd.f32 %v3500, %v4106
    %v4130 = vadd.f32 %v3501, %v4109
    %v4131 = vadd.f32 %v3502, %v4112
    %v4132 = vadd.f32 %v3503, %v4115
    %v4133 = vadd.f32 %v3504, %v4118
    %v4134 = vadd.f32 %v3505, %v4121
    %v4135 = vadd.f32 %v3506, %v4124
    %v4136 = vadd.f32 %v3507, %v4127
    %v4137 = vperm.slane %v228, 0
    %v4138 = vadd.f32 %v4129, %v4137
    %v4139 = vadd.f32 %v4130, %v4137
    %v4140 = vadd.f32 %v4131, %v4137
    %v4141 = vadd.f32 %v4132, %v4137
    %v4142 = vadd.f32 %v4133, %v4137
    %v4143 = vadd.f32 %v4134, %v4137
    %v4144 = vadd.f32 %v4135, %v4137
    %v4145 = vadd.f32 %v4136, %v4137
    %v4146 = vadd.f32 %v1595, %v4138
    %v4147 = vadd.f32 %v1596, %v4139
    %v4148 = vadd.f32 %v1597, %v4140
    %v4149 = vadd.f32 %v1598, %v4141
    %v4150 = vadd.f32 %v1599, %v4142
    %v4151 = vadd.f32 %v1600, %v4143
    %v4152 = vadd.f32 %v1601, %v4144
    %v4153 = vadd.f32 %v1602, %v4145
    %v4154 = vsel %vm233, %v4146, 0.0
    %4155 = vadd.xlane.f32.xlu0 %v4154
    %v4156 = vpop.xlane.xlu0 %4155
    %v4157 = vsel %vm233, %v4147, 0.0
    %4158 = vadd.xlane.f32.xlu0 %v4157
    %v4159 = vpop.xlane.xlu0 %4158
    %v4160 = vsel %vm233, %v4148, 0.0
    %4161 = vadd.xlane.f32.xlu0 %v4160
    %v4162 = vpop.xlane.xlu0 %4161
    %v4163 = vsel %vm233, %v4149, 0.0
    %4164 = vadd.xlane.f32.xlu0 %v4163
    %v4165 = vpop.xlane.xlu0 %4164
    %v4166 = vsel %vm233, %v4150, 0.0
    %4167 = vadd.xlane.f32.xlu0 %v4166
    %v4168 = vpop.xlane.xlu0 %4167
    %v4169 = vsel %vm233, %v4151, 0.0
    %4170 = vadd.xlane.f32.xlu0 %v4169
    %v4171 = vpop.xlane.xlu0 %4170
    %v4172 = vsel %vm233, %v4152, 0.0
    %4173 = vadd.xlane.f32.xlu0 %v4172
    %v4174 = vpop.xlane.xlu0 %4173
    %v4175 = vsel %vm233, %v4153, 0.0
    %4176 = vadd.xlane.f32.xlu0 %v4175
    %v4177 = vpop.xlane.xlu0 %4176
    %v4178 = vmul.f32 %v4156, %v264
    %v4179 = vmul.f32 %v4159, %v264
    %v4180 = vmul.f32 %v4162, %v264
    %v4181 = vmul.f32 %v4165, %v264
    %v4182 = vmul.f32 %v4168, %v264
    %v4183 = vmul.f32 %v4171, %v264
    %v4184 = vmul.f32 %v4174, %v264
    %v4185 = vmul.f32 %v4177, %v264
    %v4186 = vsub.f32 %v4146, %v4178
    %v4187 = vsub.f32 %v4147, %v4179
    %v4188 = vsub.f32 %v4148, %v4180
    %v4189 = vsub.f32 %v4149, %v4181
    %v4190 = vsub.f32 %v4150, %v4182
    %v4191 = vsub.f32 %v4151, %v4183
    %v4192 = vsub.f32 %v4152, %v4184
    %v4193 = vsub.f32 %v4153, %v4185
    %v4194 = vmul.f32 %v4186, %v4186
    %v4195 = vmul.f32 %v4187, %v4187
    %v4196 = vmul.f32 %v4188, %v4188
    %v4197 = vmul.f32 %v4189, %v4189
    %v4198 = vmul.f32 %v4190, %v4190
    %v4199 = vmul.f32 %v4191, %v4191
    %v4200 = vmul.f32 %v4192, %v4192
    %v4201 = vmul.f32 %v4193, %v4193
    %v4202 = vsel %vm233, %v4194, 0.0
    %4203 = vadd.xlane.f32.xlu0 %v4202
    %v4204 = vpop.xlane.xlu0 %4203
    %v4205 = vsel %vm233, %v4195, 0.0
    %4206 = vadd.xlane.f32.xlu0 %v4205
    %v4207 = vpop.xlane.xlu0 %4206
    %v4208 = vsel %vm233, %v4196, 0.0
    %4209 = vadd.xlane.f32.xlu0 %v4208
    %v4210 = vpop.xlane.xlu0 %4209
    %v4211 = vsel %vm233, %v4197, 0.0
    %4212 = vadd.xlane.f32.xlu0 %v4211
    %v4213 = vpop.xlane.xlu0 %4212
    %v4214 = vsel %vm233, %v4198, 0.0
    %4215 = vadd.xlane.f32.xlu0 %v4214
    %v4216 = vpop.xlane.xlu0 %4215
    %v4217 = vsel %vm233, %v4199, 0.0
    %4218 = vadd.xlane.f32.xlu0 %v4217
    %v4219 = vpop.xlane.xlu0 %4218
    %v4220 = vsel %vm233, %v4200, 0.0
    %4221 = vadd.xlane.f32.xlu0 %v4220
    %v4222 = vpop.xlane.xlu0 %4221
    %v4223 = vsel %vm233, %v4201, 0.0
    %4224 = vadd.xlane.f32.xlu0 %v4223
    %v4225 = vpop.xlane.xlu0 %4224
    %v4226 = vmul.f32 %v4204, %v264
    %v4227 = vmul.f32 %v4207, %v264
    %v4228 = vmul.f32 %v4210, %v264
    %v4229 = vmul.f32 %v4213, %v264
    %v4230 = vmul.f32 %v4216, %v264
    %v4231 = vmul.f32 %v4219, %v264
    %v4232 = vmul.f32 %v4222, %v264
    %v4233 = vmul.f32 %v4225, %v264
    %v4234 = vadd.f32 %v4226, 1e-05
    %v4235 = vadd.f32 %v4227, 1e-05
    %v4236 = vadd.f32 %v4228, 1e-05
    %v4237 = vadd.f32 %v4229, 1e-05
    %v4238 = vadd.f32 %v4230, 1e-05
    %v4239 = vadd.f32 %v4231, 1e-05
    %v4240 = vadd.f32 %v4232, 1e-05
    %v4241 = vadd.f32 %v4233, 1e-05
    %v4242 = vrsqrt.pop %v4234
    %v4243 = vmul.f32 %v4242, %v4234
    %v4244 = vmul.f32 %v4243, %v4242
    %v4245 = vmul.f32 0.5, %v4244
    %v4246 = vsub.f32 1.5, %v4245
    %v4247 = vmul.f32 %v4242, %v4246
    %vm4248 = vweird.f32 %v4234
    %vm4249 = vweird.f32 %v4242
    %vm4250 = vmor %vm4248, %vm4249
    %v4251 = vsel %vm4250, %v4242, %v4247
    %v4252 = vrsqrt.pop %v4235
    %v4253 = vmul.f32 %v4252, %v4235
    %v4254 = vmul.f32 %v4253, %v4252
    %v4255 = vmul.f32 0.5, %v4254
    %v4256 = vsub.f32 1.5, %v4255
    %v4257 = vmul.f32 %v4252, %v4256
    %vm4258 = vweird.f32 %v4235
    %vm4259 = vweird.f32 %v4252
    %vm4260 = vmor %vm4258, %vm4259
    %v4261 = vsel %vm4260, %v4252, %v4257
    %v4262 = vrsqrt.pop %v4236
    %v4263 = vmul.f32 %v4262, %v4236
    %v4264 = vmul.f32 %v4263, %v4262
    %v4265 = vmul.f32 0.5, %v4264
    %v4266 = vsub.f32 1.5, %v4265
    %v4267 = vmul.f32 %v4262, %v4266
    %vm4268 = vweird.f32 %v4236
    %vm4269 = vweird.f32 %v4262
    %vm4270 = vmor %vm4268, %vm4269
    %v4271 = vsel %vm4270, %v4262, %v4267
    %v4272 = vrsqrt.pop %v4237
    %v4273 = vmul.f32 %v4272, %v4237
    %v4274 = vmul.f32 %v4273, %v4272
    %v4275 = vmul.f32 0.5, %v4274
    %v4276 = vsub.f32 1.5, %v4275
    %v4277 = vmul.f32 %v4272, %v4276
    %vm4278 = vweird.f32 %v4237
    %vm4279 = vweird.f32 %v4272
    %vm4280 = vmor %vm4278, %vm4279
    %v4281 = vsel %vm4280, %v4272, %v4277
    %v4282 = vrsqrt.pop %v4238
    %v4283 = vmul.f32 %v4282, %v4238
    %v4284 = vmul.f32 %v4283, %v4282
    %v4285 = vmul.f32 0.5, %v4284
    %v4286 = vsub.f32 1.5, %v4285
    %v4287 = vmul.f32 %v4282, %v4286
    %vm4288 = vweird.f32 %v4238
    %vm4289 = vweird.f32 %v4282
    %vm4290 = vmor %vm4288, %vm4289
    %v4291 = vsel %vm4290, %v4282, %v4287
    %v4292 = vrsqrt.pop %v4239
    %v4293 = vmul.f32 %v4292, %v4239
    %v4294 = vmul.f32 %v4293, %v4292
    %v4295 = vmul.f32 0.5, %v4294
    %v4296 = vsub.f32 1.5, %v4295
    %v4297 = vmul.f32 %v4292, %v4296
    %vm4298 = vweird.f32 %v4239
    %vm4299 = vweird.f32 %v4292
    %vm4300 = vmor %vm4298, %vm4299
    %v4301 = vsel %vm4300, %v4292, %v4297
    %v4302 = vrsqrt.pop %v4240
    %v4303 = vmul.f32 %v4302, %v4240
    %v4304 = vmul.f32 %v4303, %v4302
    %v4305 = vmul.f32 0.5, %v4304
    %v4306 = vsub.f32 1.5, %v4305
    %v4307 = vmul.f32 %v4302, %v4306
    %vm4308 = vweird.f32 %v4240
    %vm4309 = vweird.f32 %v4302
    %vm4310 = vmor %vm4308, %vm4309
    %v4311 = vsel %vm4310, %v4302, %v4307
    %v4312 = vrsqrt.pop %v4241
    %v4313 = vmul.f32 %v4312, %v4241
    %v4314 = vmul.f32 %v4313, %v4312
    %v4315 = vmul.f32 0.5, %v4314
    %v4316 = vsub.f32 1.5, %v4315
    %v4317 = vmul.f32 %v4312, %v4316
    %vm4318 = vweird.f32 %v4241
    %vm4319 = vweird.f32 %v4312
    %vm4320 = vmor %vm4318, %vm4319
    %v4321 = vsel %vm4320, %v4312, %v4317
    %v4322 = vmul.f32 %v4186, %v4251
    %v4323 = vmul.f32 %v4187, %v4261
    %v4324 = vmul.f32 %v4188, %v4271
    %v4325 = vmul.f32 %v4189, %v4281
    %v4326 = vmul.f32 %v4190, %v4291
    %v4327 = vmul.f32 %v4191, %v4301
    %v4328 = vmul.f32 %v4192, %v4311
    %v4329 = vmul.f32 %v4193, %v4321
    %v4330 = vperm.slane %v228, 1
    %v4331 = vmul.f32 %v4322, %v4330
    %v4332 = vmul.f32 %v4323, %v4330
    %v4333 = vmul.f32 %v4324, %v4330
    %v4334 = vmul.f32 %v4325, %v4330
    %v4335 = vmul.f32 %v4326, %v4330
    %v4336 = vmul.f32 %v4327, %v4330
    %v4337 = vmul.f32 %v4328, %v4330
    %v4338 = vmul.f32 %v4329, %v4330
    %v4339 = vperm.slane %v228, 2
    %v4340 = vadd.f32 %v4331, %v4339
    %v4341 = vadd.f32 %v4332, %v4339
    %v4342 = vadd.f32 %v4333, %v4339
    %v4343 = vadd.f32 %v4334, %v4339
    %v4344 = vadd.f32 %v4335, %v4339
    %v4345 = vadd.f32 %v4336, %v4339
    %v4346 = vadd.f32 %v4337, %v4339
    %v4347 = vadd.f32 %v4338, %v4339
    %v4348 = vadd.f32 %v1401, %v4340
    %v4349 = vadd.f32 %v1402, %v4341
    %v4350 = vadd.f32 %v1403, %v4342
    %v4351 = vadd.f32 %v1404, %v4343
    %v4352 = vadd.f32 %v1405, %v4344
    %v4353 = vadd.f32 %v1406, %v4345
    %v4354 = vadd.f32 %v1407, %v4346
    %v4355 = vadd.f32 %v1408, %v4347
    %v4356 = vsel %vm233, %v4348, 0.0
    %4357 = vadd.xlane.f32.xlu0 %v4356
    %v4358 = vpop.xlane.xlu0 %4357
    %v4359 = vsel %vm233, %v4349, 0.0
    %4360 = vadd.xlane.f32.xlu0 %v4359
    %v4361 = vpop.xlane.xlu0 %4360
    %v4362 = vsel %vm233, %v4350, 0.0
    %4363 = vadd.xlane.f32.xlu0 %v4362
    %v4364 = vpop.xlane.xlu0 %4363
    %v4365 = vsel %vm233, %v4351, 0.0
    %4366 = vadd.xlane.f32.xlu0 %v4365
    %v4367 = vpop.xlane.xlu0 %4366
    %v4368 = vsel %vm233, %v4352, 0.0
    %4369 = vadd.xlane.f32.xlu0 %v4368
    %v4370 = vpop.xlane.xlu0 %4369
    %v4371 = vsel %vm233, %v4353, 0.0
    %4372 = vadd.xlane.f32.xlu0 %v4371
    %v4373 = vpop.xlane.xlu0 %4372
    %v4374 = vsel %vm233, %v4354, 0.0
    %4375 = vadd.xlane.f32.xlu0 %v4374
    %v4376 = vpop.xlane.xlu0 %4375
    %v4377 = vsel %vm233, %v4355, 0.0
    %4378 = vadd.xlane.f32.xlu0 %v4377
    %v4379 = vpop.xlane.xlu0 %4378
    %v4380 = vmul.f32 %v4358, %v264
    %v4381 = vmul.f32 %v4361, %v264
    %v4382 = vmul.f32 %v4364, %v264
    %v4383 = vmul.f32 %v4367, %v264
    %v4384 = vmul.f32 %v4370, %v264
    %v4385 = vmul.f32 %v4373, %v264
    %v4386 = vmul.f32 %v4376, %v264
    %v4387 = vmul.f32 %v4379, %v264
    %v4388 = vsub.f32 %v4348, %v4380
    %v4389 = vsub.f32 %v4349, %v4381
    %v4390 = vsub.f32 %v4350, %v4382
    %v4391 = vsub.f32 %v4351, %v4383
    %v4392 = vsub.f32 %v4352, %v4384
    %v4393 = vsub.f32 %v4353, %v4385
    %v4394 = vsub.f32 %v4354, %v4386
    %v4395 = vsub.f32 %v4355, %v4387
    %v4396 = vmul.f32 %v4388, %v4388
    %v4397 = vmul.f32 %v4389, %v4389
    %v4398 = vmul.f32 %v4390, %v4390
    %v4399 = vmul.f32 %v4391, %v4391
    %v4400 = vmul.f32 %v4392, %v4392
    %v4401 = vmul.f32 %v4393, %v4393
    %v4402 = vmul.f32 %v4394, %v4394
    %v4403 = vmul.f32 %v4395, %v4395
    %v4404 = vsel %vm233, %v4396, 0.0
    %4405 = vadd.xlane.f32.xlu0 %v4404
    %v4406 = vpop.xlane.xlu0 %4405
    %v4407 = vsel %vm233, %v4397, 0.0
    %4408 = vadd.xlane.f32.xlu0 %v4407
    %v4409 = vpop.xlane.xlu0 %4408
    %v4410 = vsel %vm233, %v4398, 0.0
    %4411 = vadd.xlane.f32.xlu0 %v4410
    %v4412 = vpop.xlane.xlu0 %4411
    %v4413 = vsel %vm233, %v4399, 0.0
    %4414 = vadd.xlane.f32.xlu0 %v4413
    %v4415 = vpop.xlane.xlu0 %4414
    %v4416 = vsel %vm233, %v4400, 0.0
    %4417 = vadd.xlane.f32.xlu0 %v4416
    %v4418 = vpop.xlane.xlu0 %4417
    %v4419 = vsel %vm233, %v4401, 0.0
    %4420 = vadd.xlane.f32.xlu0 %v4419
    %v4421 = vpop.xlane.xlu0 %4420
    %v4422 = vsel %vm233, %v4402, 0.0
    %4423 = vadd.xlane.f32.xlu0 %v4422
    %v4424 = vpop.xlane.xlu0 %4423
    %v4425 = vsel %vm233, %v4403, 0.0
    %4426 = vadd.xlane.f32.xlu0 %v4425
    %v4427 = vpop.xlane.xlu0 %4426
    %v4428 = vmul.f32 %v4406, %v264
    %v4429 = vmul.f32 %v4409, %v264
    %v4430 = vmul.f32 %v4412, %v264
    %v4431 = vmul.f32 %v4415, %v264
    %v4432 = vmul.f32 %v4418, %v264
    %v4433 = vmul.f32 %v4421, %v264
    %v4434 = vmul.f32 %v4424, %v264
    %v4435 = vmul.f32 %v4427, %v264
    %v4436 = vadd.f32 %v4428, 1e-05
    %v4437 = vadd.f32 %v4429, 1e-05
    %v4438 = vadd.f32 %v4430, 1e-05
    %v4439 = vadd.f32 %v4431, 1e-05
    %v4440 = vadd.f32 %v4432, 1e-05
    %v4441 = vadd.f32 %v4433, 1e-05
    %v4442 = vadd.f32 %v4434, 1e-05
    %v4443 = vadd.f32 %v4435, 1e-05
    %v4444 = vrsqrt.pop %v4436
    %v4445 = vmul.f32 %v4444, %v4436
    %v4446 = vmul.f32 %v4445, %v4444
    %v4447 = vmul.f32 0.5, %v4446
    %v4448 = vsub.f32 1.5, %v4447
    %v4449 = vmul.f32 %v4444, %v4448
    %vm4450 = vweird.f32 %v4436
    %vm4451 = vweird.f32 %v4444
    %vm4452 = vmor %vm4450, %vm4451
    %v4453 = vsel %vm4452, %v4444, %v4449
    %v4454 = vrsqrt.pop %v4437
    %v4455 = vmul.f32 %v4454, %v4437
    %v4456 = vmul.f32 %v4455, %v4454
    %v4457 = vmul.f32 0.5, %v4456
    %v4458 = vsub.f32 1.5, %v4457
    %v4459 = vmul.f32 %v4454, %v4458
    %vm4460 = vweird.f32 %v4437
    %vm4461 = vweird.f32 %v4454
    %vm4462 = vmor %vm4460, %vm4461
    %v4463 = vsel %vm4462, %v4454, %v4459
    %v4464 = vrsqrt.pop %v4438
    %v4465 = vmul.f32 %v4464, %v4438
    %v4466 = vmul.f32 %v4465, %v4464
    %v4467 = vmul.f32 0.5, %v4466
    %v4468 = vsub.f32 1.5, %v4467
    %v4469 = vmul.f32 %v4464, %v4468
    %vm4470 = vweird.f32 %v4438
    %vm4471 = vweird.f32 %v4464
    %vm4472 = vmor %vm4470, %vm4471
    %v4473 = vsel %vm4472, %v4464, %v4469
    %v4474 = vrsqrt.pop %v4439
    %v4475 = vmul.f32 %v4474, %v4439
    %v4476 = vmul.f32 %v4475, %v4474
    %v4477 = vmul.f32 0.5, %v4476
    %v4478 = vsub.f32 1.5, %v4477
    %v4479 = vmul.f32 %v4474, %v4478
    %vm4480 = vweird.f32 %v4439
    %vm4481 = vweird.f32 %v4474
    %vm4482 = vmor %vm4480, %vm4481
    %v4483 = vsel %vm4482, %v4474, %v4479
    %v4484 = vrsqrt.pop %v4440
    %v4485 = vmul.f32 %v4484, %v4440
    %v4486 = vmul.f32 %v4485, %v4484
    %v4487 = vmul.f32 0.5, %v4486
    %v4488 = vsub.f32 1.5, %v4487
    %v4489 = vmul.f32 %v4484, %v4488
    %vm4490 = vweird.f32 %v4440
    %vm4491 = vweird.f32 %v4484
    %vm4492 = vmor %vm4490, %vm4491
    %v4493 = vsel %vm4492, %v4484, %v4489
    %v4494 = vrsqrt.pop %v4441
    %v4495 = vmul.f32 %v4494, %v4441
    %v4496 = vmul.f32 %v4495, %v4494
    %v4497 = vmul.f32 0.5, %v4496
    %v4498 = vsub.f32 1.5, %v4497
    %v4499 = vmul.f32 %v4494, %v4498
    %vm4500 = vweird.f32 %v4441
    %vm4501 = vweird.f32 %v4494
    %vm4502 = vmor %vm4500, %vm4501
    %v4503 = vsel %vm4502, %v4494, %v4499
    %v4504 = vrsqrt.pop %v4442
    %v4505 = vmul.f32 %v4504, %v4442
    %v4506 = vmul.f32 %v4505, %v4504
    %v4507 = vmul.f32 0.5, %v4506
    %v4508 = vsub.f32 1.5, %v4507
    %v4509 = vmul.f32 %v4504, %v4508
    %vm4510 = vweird.f32 %v4442
    %vm4511 = vweird.f32 %v4504
    %vm4512 = vmor %vm4510, %vm4511
    %v4513 = vsel %vm4512, %v4504, %v4509
    %v4514 = vrsqrt.pop %v4443
    %v4515 = vmul.f32 %v4514, %v4443
    %v4516 = vmul.f32 %v4515, %v4514
    %v4517 = vmul.f32 0.5, %v4516
    %v4518 = vsub.f32 1.5, %v4517
    %v4519 = vmul.f32 %v4514, %v4518
    %vm4520 = vweird.f32 %v4443
    %vm4521 = vweird.f32 %v4514
    %vm4522 = vmor %vm4520, %vm4521
    %v4523 = vsel %vm4522, %v4514, %v4519
    %v4524 = vmul.f32 %v4388, %v4453
    %v4525 = vmul.f32 %v4389, %v4463
    %v4526 = vmul.f32 %v4390, %v4473
    %v4527 = vmul.f32 %v4391, %v4483
    %v4528 = vmul.f32 %v4392, %v4493
    %v4529 = vmul.f32 %v4393, %v4503
    %v4530 = vmul.f32 %v4394, %v4513
    %v4531 = vmul.f32 %v4395, %v4523
    %v4532 = vperm.slane %v228, 4
    %v4533 = vmul.f32 %v4524, %v4532
    %v4534 = vmul.f32 %v4525, %v4532
    %v4535 = vmul.f32 %v4526, %v4532
    %v4536 = vmul.f32 %v4527, %v4532
    %v4537 = vmul.f32 %v4528, %v4532
    %v4538 = vmul.f32 %v4529, %v4532
    %v4539 = vmul.f32 %v4530, %v4532
    %v4540 = vmul.f32 %v4531, %v4532
    %v4541 = vperm.slane %v228, 5
    %v4542 = vadd.f32 %v4533, %v4541
    %v4543 = vadd.f32 %v4534, %v4541
    %v4544 = vadd.f32 %v4535, %v4541
    %v4545 = vadd.f32 %v4536, %v4541
    %v4546 = vadd.f32 %v4537, %v4541
    %v4547 = vadd.f32 %v4538, %v4541
    %v4548 = vadd.f32 %v4539, %v4541
    %v4549 = vadd.f32 %v4540, %v4541
    %v4550 = vld [vmem:[%s2 + $0x180] sm:$0xff]
    %v4551 = vld [vmem:[%s2 + $0x188] sm:$0xff]
    %v4552 = vld [vmem:[%s2 + $0x190] sm:$0xff]
    %v4553 = vld [vmem:[%s2 + $0x198] sm:$0xff]
    %v4554 = vld [vmem:[%s2 + $0x1e0] sm:$0xff]
    %v4555 = vld [vmem:[%s2 + $0x1e8] sm:$0xff]
    %v4556 = vld [vmem:[%s2 + $0x1f0] sm:$0xff]
    %v4557 = vld [vmem:[%s2 + $0x1f8] sm:$0xff]
    %v4558 = vld [vmem:[%s2 + $0x240] sm:$0xff]
    %v4559 = vld [vmem:[%s2 + $0x248] sm:$0xff]
    %v4560 = vld [vmem:[%s2 + $0x250] sm:$0xff]
    %v4561 = vld [vmem:[%s2 + $0x258] sm:$0xff]
    %v4562 = vld [vmem:[%s2 + $0x2a0] sm:$0xff]
    %v4563 = vld [vmem:[%s2 + $0x2a8] sm:$0xff]
    %v4564 = vld [vmem:[%s2 + $0x2b0] sm:$0xff]
    %v4565 = vld [vmem:[%s2 + $0x2b8] sm:$0xff]
    %v4567 = vsel %vm233, %v4542, 0
    %v4570 = vsel %vm233, %v4543, 0
    %v4573 = vsel %vm233, %v4544, 0
    %v4576 = vsel %vm233, %v4545, 0
    %v4579 = vsel %vm233, %v4546, 0
    %v4582 = vsel %vm233, %v4547, 0
    %v4585 = vsel %vm233, %v4548, 0
    %v4588 = vsel %vm233, %v4549, 0
    %4590 = vmatpush.msra.mxu0 0.0
    %4591 = vmatpush.msra.mxu0 0.0
    %4592 = vmatpush.msra.mxu0 0.0
    %4593 = vmatpush.msra.mxu0 0.0
    %4594 = vmatpush.msra.mxu0 0.0
    %4595 = vmatpush.msra.mxu0 0.0
    %4596 = vmatpush.msra.mxu0 0.0
    %4597 = vmatpush.msra.mxu0 0.0
    %4598 = vmatpush.msra.mxu0 0.0
    %4599 = vmatpush.msra.mxu0 0.0
    %4600 = vmatpush.msra.mxu0 0.0
    %4601 = vmatpush.msra.mxu0 0.0
    %4602 = vmatpush.msra.mxu0 %v4562
    %4603 = vmatpush.msra.mxu0 %v4558
    %4604 = vmatpush.msra.mxu0 %v4554
    %4605 = vmatpush.msra.mxu0 %v4550
    %4606 = vmatmul.f32.gmra.mxu0 %v4567
    %v4607 = vpop.f32.mrf.mxu0
    %v4608 = vadd.f32 0.0, %v4607
    %4609 = vmatmul.f32.gmra.mxu0 %v4570
    %v4610 = vpop.f32.mrf.mxu0
    %v4611 = vadd.f32 0.0, %v4610
    %4612 = vmatmul.f32.gmra.mxu0 %v4573
    %v4613 = vpop.f32.mrf.mxu0
    %v4614 = vadd.f32 0.0, %v4613
    %4615 = vmatmul.f32.gmra.mxu0 %v4576
    %v4616 = vpop.f32.mrf.mxu0
    %v4617 = vadd.f32 0.0, %v4616
    %4618 = vmatmul.f32.gmra.mxu0 %v4579
    %v4619 = vpop.f32.mrf.mxu0
    %v4620 = vadd.f32 0.0, %v4619
    %4621 = vmatmul.f32.gmra.mxu0 %v4582
    %v4622 = vpop.f32.mrf.mxu0
    %v4623 = vadd.f32 0.0, %v4622
    %4624 = vmatmul.f32.gmra.mxu0 %v4585
    %v4625 = vpop.f32.mrf.mxu0
    %v4626 = vadd.f32 0.0, %v4625
    %4627 = vmatmul.f32.gmra.mxu0 %v4588
    %v4628 = vpop.f32.mrf.mxu0
    %v4629 = vadd.f32 0.0, %v4628
    %4630 = vdwg.mxu0
    %4631 = vmatpush.msra.mxu0 0.0
    %4632 = vmatpush.msra.mxu0 0.0
    %4633 = vmatpush.msra.mxu0 0.0
    %4634 = vmatpush.msra.mxu0 0.0
    %4635 = vmatpush.msra.mxu0 0.0
    %4636 = vmatpush.msra.mxu0 0.0
    %4637 = vmatpush.msra.mxu0 0.0
    %4638 = vmatpush.msra.mxu0 0.0
    %4639 = vmatpush.msra.mxu0 0.0
    %4640 = vmatpush.msra.mxu0 0.0
    %4641 = vmatpush.msra.mxu0 0.0
    %4642 = vmatpush.msra.mxu0 0.0
    %4643 = vmatpush.msra.mxu0 %v4563
    %4644 = vmatpush.msra.mxu0 %v4559
    %4645 = vmatpush.msra.mxu0 %v4555
    %4646 = vmatpush.msra.mxu0 %v4551
    %4647 = vmatmul.f32.gmra.mxu0 %v4567
    %v4648 = vpop.f32.mrf.mxu0
    %v4649 = vadd.f32 0.0, %v4648
    %4650 = vmatmul.f32.gmra.mxu0 %v4570
    %v4651 = vpop.f32.mrf.mxu0
    %v4652 = vadd.f32 0.0, %v4651
    %4653 = vmatmul.f32.gmra.mxu0 %v4573
    %v4654 = vpop.f32.mrf.mxu0
    %v4655 = vadd.f32 0.0, %v4654
    %4656 = vmatmul.f32.gmra.mxu0 %v4576
    %v4657 = vpop.f32.mrf.mxu0
    %v4658 = vadd.f32 0.0, %v4657
    %4659 = vmatmul.f32.gmra.mxu0 %v4579
    %v4660 = vpop.f32.mrf.mxu0
    %v4661 = vadd.f32 0.0, %v4660
    %4662 = vmatmul.f32.gmra.mxu0 %v4582
    %v4663 = vpop.f32.mrf.mxu0
    %v4664 = vadd.f32 0.0, %v4663
    %4665 = vmatmul.f32.gmra.mxu0 %v4585
    %v4666 = vpop.f32.mrf.mxu0
    %v4667 = vadd.f32 0.0, %v4666
    %4668 = vmatmul.f32.gmra.mxu0 %v4588
    %v4669 = vpop.f32.mrf.mxu0
    %v4670 = vadd.f32 0.0, %v4669
    %4671 = vdwg.mxu0
    %4672 = vmatpush.msra.mxu0 0.0
    %4673 = vmatpush.msra.mxu0 0.0
    %4674 = vmatpush.msra.mxu0 0.0
    %4675 = vmatpush.msra.mxu0 0.0
    %4676 = vmatpush.msra.mxu0 0.0
    %4677 = vmatpush.msra.mxu0 0.0
    %4678 = vmatpush.msra.mxu0 0.0
    %4679 = vmatpush.msra.mxu0 0.0
    %4680 = vmatpush.msra.mxu0 0.0
    %4681 = vmatpush.msra.mxu0 0.0
    %4682 = vmatpush.msra.mxu0 0.0
    %4683 = vmatpush.msra.mxu0 0.0
    %4684 = vmatpush.msra.mxu0 %v4564
    %4685 = vmatpush.msra.mxu0 %v4560
    %4686 = vmatpush.msra.mxu0 %v4556
    %4687 = vmatpush.msra.mxu0 %v4552
    %4688 = vmatmul.f32.gmra.mxu0 %v4567
    %v4689 = vpop.f32.mrf.mxu0
    %v4690 = vadd.f32 0.0, %v4689
    %4691 = vmatmul.f32.gmra.mxu0 %v4570
    %v4692 = vpop.f32.mrf.mxu0
    %v4693 = vadd.f32 0.0, %v4692
    %4694 = vmatmul.f32.gmra.mxu0 %v4573
    %v4695 = vpop.f32.mrf.mxu0
    %v4696 = vadd.f32 0.0, %v4695
    %4697 = vmatmul.f32.gmra.mxu0 %v4576
    %v4698 = vpop.f32.mrf.mxu0
    %v4699 = vadd.f32 0.0, %v4698
    %4700 = vmatmul.f32.gmra.mxu0 %v4579
    %v4701 = vpop.f32.mrf.mxu0
    %v4702 = vadd.f32 0.0, %v4701
    %4703 = vmatmul.f32.gmra.mxu0 %v4582
    %v4704 = vpop.f32.mrf.mxu0
    %v4705 = vadd.f32 0.0, %v4704
    %4706 = vmatmul.f32.gmra.mxu0 %v4585
    %v4707 = vpop.f32.mrf.mxu0
    %v4708 = vadd.f32 0.0, %v4707
    %4709 = vmatmul.f32.gmra.mxu0 %v4588
    %v4710 = vpop.f32.mrf.mxu0
    %v4711 = vadd.f32 0.0, %v4710
    %4712 = vdwg.mxu0
    %4713 = vmatpush.msra.mxu0 0.0
    %4714 = vmatpush.msra.mxu0 0.0
    %4715 = vmatpush.msra.mxu0 0.0
    %4716 = vmatpush.msra.mxu0 0.0
    %4717 = vmatpush.msra.mxu0 0.0
    %4718 = vmatpush.msra.mxu0 0.0
    %4719 = vmatpush.msra.mxu0 0.0
    %4720 = vmatpush.msra.mxu0 0.0
    %4721 = vmatpush.msra.mxu0 0.0
    %4722 = vmatpush.msra.mxu0 0.0
    %4723 = vmatpush.msra.mxu0 0.0
    %4724 = vmatpush.msra.mxu0 0.0
    %4725 = vmatpush.msra.mxu0 %v4565
    %4726 = vmatpush.msra.mxu0 %v4561
    %4727 = vmatpush.msra.mxu0 %v4557
    %4728 = vmatpush.msra.mxu0 %v4553
    %4729 = vmatmul.f32.gmra.mxu0 %v4567
    %v4730 = vpop.f32.mrf.mxu0
    %v4731 = vadd.f32 0.0, %v4730
    %4732 = vmatmul.f32.gmra.mxu0 %v4570
    %v4733 = vpop.f32.mrf.mxu0
    %v4734 = vadd.f32 0.0, %v4733
    %4735 = vmatmul.f32.gmra.mxu0 %v4573
    %v4736 = vpop.f32.mrf.mxu0
    %v4737 = vadd.f32 0.0, %v4736
    %4738 = vmatmul.f32.gmra.mxu0 %v4576
    %v4739 = vpop.f32.mrf.mxu0
    %v4740 = vadd.f32 0.0, %v4739
    %4741 = vmatmul.f32.gmra.mxu0 %v4579
    %v4742 = vpop.f32.mrf.mxu0
    %v4743 = vadd.f32 0.0, %v4742
    %4744 = vmatmul.f32.gmra.mxu0 %v4582
    %v4745 = vpop.f32.mrf.mxu0
    %v4746 = vadd.f32 0.0, %v4745
    %4747 = vmatmul.f32.gmra.mxu0 %v4585
    %v4748 = vpop.f32.mrf.mxu0
    %v4749 = vadd.f32 0.0, %v4748
    %4750 = vmatmul.f32.gmra.mxu0 %v4588
    %v4751 = vpop.f32.mrf.mxu0
    %v4752 = vadd.f32 0.0, %v4751
    %4753 = vdwg.mxu0
    %v4754 = vperm.slane %v230, 1
    %v4755 = vperm.slane %v231, 1
    %v4756 = vadd.f32 %v4690, %v4754
    %v4757 = vadd.f32 %v4731, %v4755
    %v4758 = vadd.f32 %v4693, %v4754
    %v4759 = vadd.f32 %v4734, %v4755
    %v4760 = vadd.f32 %v4696, %v4754
    %v4761 = vadd.f32 %v4737, %v4755
    %v4762 = vadd.f32 %v4699, %v4754
    %v4763 = vadd.f32 %v4740, %v4755
    %v4764 = vadd.f32 %v4702, %v4754
    %v4765 = vadd.f32 %v4743, %v4755
    %v4766 = vadd.f32 %v4705, %v4754
    %v4767 = vadd.f32 %v4746, %v4755
    %v4768 = vadd.f32 %v4708, %v4754
    %v4769 = vadd.f32 %v4749, %v4755
    %v4770 = vadd.f32 %v4711, %v4754
    %v4771 = vadd.f32 %v4752, %v4755
    %v4772 = vxor.u32 %v4756, 2147483648
    %v4773 = vxor.u32 %v4757, 2147483648
    %v4774 = vxor.u32 %v4758, 2147483648
    %v4775 = vxor.u32 %v4759, 2147483648
    %v4776 = vxor.u32 %v4760, 2147483648
    %v4777 = vxor.u32 %v4761, 2147483648
    %v4778 = vxor.u32 %v4762, 2147483648
    %v4779 = vxor.u32 %v4763, 2147483648
    %v4780 = vxor.u32 %v4764, 2147483648
    %v4781 = vxor.u32 %v4765, 2147483648
    %v4782 = vxor.u32 %v4766, 2147483648
    %v4783 = vxor.u32 %v4767, 2147483648
    %v4784 = vxor.u32 %v4768, 2147483648
    %v4785 = vxor.u32 %v4769, 2147483648
    %v4786 = vxor.u32 %v4770, 2147483648
    %v4787 = vxor.u32 %v4771, 2147483648
    %v4788 = vmul.f32 %v4772, 1.442695
    %v4789 = vpow.pop %v4788
    %v4790 = vmul.f32 %v4773, 1.442695
    %v4791 = vpow.pop %v4790
    %v4792 = vmul.f32 %v4774, 1.442695
    %v4793 = vpow.pop %v4792
    %v4794 = vmul.f32 %v4775, 1.442695
    %v4795 = vpow.pop %v4794
    %v4796 = vmul.f32 %v4776, 1.442695
    %v4797 = vpow.pop %v4796
    %v4798 = vmul.f32 %v4777, 1.442695
    %v4799 = vpow.pop %v4798
    %v4800 = vmul.f32 %v4778, 1.442695
    %v4801 = vpow.pop %v4800
    %v4802 = vmul.f32 %v4779, 1.442695
    %v4803 = vpow.pop %v4802
    %v4804 = vmul.f32 %v4780, 1.442695
    %v4805 = vpow.pop %v4804
    %v4806 = vmul.f32 %v4781, 1.442695
    %v4807 = vpow.pop %v4806
    %v4808 = vmul.f32 %v4782, 1.442695
    %v4809 = vpow.pop %v4808
    %v4810 = vmul.f32 %v4783, 1.442695
    %v4811 = vpow.pop %v4810
    %v4812 = vmul.f32 %v4784, 1.442695
    %v4813 = vpow.pop %v4812
    %v4814 = vmul.f32 %v4785, 1.442695
    %v4815 = vpow.pop %v4814
    %v4816 = vmul.f32 %v4786, 1.442695
    %v4817 = vpow.pop %v4816
    %v4818 = vmul.f32 %v4787, 1.442695
    %v4819 = vpow.pop %v4818
    %v4820 = vadd.f32 %v4789, 1.0
    %v4821 = vadd.f32 %v4791, 1.0
    %v4822 = vadd.f32 %v4793, 1.0
    %v4823 = vadd.f32 %v4795, 1.0
    %v4824 = vadd.f32 %v4797, 1.0
    %v4825 = vadd.f32 %v4799, 1.0
    %v4826 = vadd.f32 %v4801, 1.0
    %v4827 = vadd.f32 %v4803, 1.0
    %v4828 = vadd.f32 %v4805, 1.0
    %v4829 = vadd.f32 %v4807, 1.0
    %v4830 = vadd.f32 %v4809, 1.0
    %v4831 = vadd.f32 %v4811, 1.0
    %v4832 = vadd.f32 %v4813, 1.0
    %v4833 = vadd.f32 %v4815, 1.0
    %v4834 = vadd.f32 %v4817, 1.0
    %v4835 = vadd.f32 %v4819, 1.0
    %v4836 = vrcp.pop %v4820
    %v4837 = vmul.f32 %v4820, %v4836
    %v4838 = vsub.f32 1.0, %v4837
    %v4839 = vmul.f32 %v4836, %v4838
    %v4840 = vadd.f32 %v4836, %v4839
    %vm4841 = vweird.f32 %v4820
    %vm4842 = vweird.f32 %v4836
    %vm4843 = vmor %vm4841, %vm4842
    %v4844 = vsel %vm4843, %v4836, %v4840
    %v4845 = vand.u32 2147483647, %v4820
    %vm4846 = vcmp.eq.f32.partialorder %v4845, 8.507059e+37
    %v4847 = vand.u32 %v4820, 2147483648
    %v4848 = vor.u32 1.1754944e-38, %v4847
    %v4849 = vsel %vm4846, %v4848, %v4844
    %v4850 = vmul.f32 1.0, %v4849
    %v4851 = vrcp.pop %v4821
    %v4852 = vmul.f32 %v4821, %v4851
    %v4853 = vsub.f32 1.0, %v4852
    %v4854 = vmul.f32 %v4851, %v4853
    %v4855 = vadd.f32 %v4851, %v4854
    %vm4856 = vweird.f32 %v4821
    %vm4857 = vweird.f32 %v4851
    %vm4858 = vmor %vm4856, %vm4857
    %v4859 = vsel %vm4858, %v4851, %v4855
    %v4860 = vand.u32 2147483647, %v4821
    %vm4861 = vcmp.eq.f32.partialorder %v4860, 8.507059e+37
    %v4862 = vand.u32 %v4821, 2147483648
    %v4863 = vor.u32 1.1754944e-38, %v4862
    %v4864 = vsel %vm4861, %v4863, %v4859
    %v4865 = vmul.f32 1.0, %v4864
    %v4866 = vrcp.pop %v4822
    %v4867 = vmul.f32 %v4822, %v4866
    %v4868 = vsub.f32 1.0, %v4867
    %v4869 = vmul.f32 %v4866, %v4868
    %v4870 = vadd.f32 %v4866, %v4869
    %vm4871 = vweird.f32 %v4822
    %vm4872 = vweird.f32 %v4866
    %vm4873 = vmor %vm4871, %vm4872
    %v4874 = vsel %vm4873, %v4866, %v4870
    %v4875 = vand.u32 2147483647, %v4822
    %vm4876 = vcmp.eq.f32.partialorder %v4875, 8.507059e+37
    %v4877 = vand.u32 %v4822, 2147483648
    %v4878 = vor.u32 1.1754944e-38, %v4877
    %v4879 = vsel %vm4876, %v4878, %v4874
    %v4880 = vmul.f32 1.0, %v4879
    %v4881 = vrcp.pop %v4823
    %v4882 = vmul.f32 %v4823, %v4881
    %v4883 = vsub.f32 1.0, %v4882
    %v4884 = vmul.f32 %v4881, %v4883
    %v4885 = vadd.f32 %v4881, %v4884
    %vm4886 = vweird.f32 %v4823
    %vm4887 = vweird.f32 %v4881
    %vm4888 = vmor %vm4886, %vm4887
    %v4889 = vsel %vm4888, %v4881, %v4885
    %v4890 = vand.u32 2147483647, %v4823
    %vm4891 = vcmp.eq.f32.partialorder %v4890, 8.507059e+37
    %v4892 = vand.u32 %v4823, 2147483648
    %v4893 = vor.u32 1.1754944e-38, %v4892
    %v4894 = vsel %vm4891, %v4893, %v4889
    %v4895 = vmul.f32 1.0, %v4894
    %v4896 = vrcp.pop %v4824
    %v4897 = vmul.f32 %v4824, %v4896
    %v4898 = vsub.f32 1.0, %v4897
    %v4899 = vmul.f32 %v4896, %v4898
    %v4900 = vadd.f32 %v4896, %v4899
    %vm4901 = vweird.f32 %v4824
    %vm4902 = vweird.f32 %v4896
    %vm4903 = vmor %vm4901, %vm4902
    %v4904 = vsel %vm4903, %v4896, %v4900
    %v4905 = vand.u32 2147483647, %v4824
    %vm4906 = vcmp.eq.f32.partialorder %v4905, 8.507059e+37
    %v4907 = vand.u32 %v4824, 2147483648
    %v4908 = vor.u32 1.1754944e-38, %v4907
    %v4909 = vsel %vm4906, %v4908, %v4904
    %v4910 = vmul.f32 1.0, %v4909
    %v4911 = vrcp.pop %v4825
    %v4912 = vmul.f32 %v4825, %v4911
    %v4913 = vsub.f32 1.0, %v4912
    %v4914 = vmul.f32 %v4911, %v4913
    %v4915 = vadd.f32 %v4911, %v4914
    %vm4916 = vweird.f32 %v4825
    %vm4917 = vweird.f32 %v4911
    %vm4918 = vmor %vm4916, %vm4917
    %v4919 = vsel %vm4918, %v4911, %v4915
    %v4920 = vand.u32 2147483647, %v4825
    %vm4921 = vcmp.eq.f32.partialorder %v4920, 8.507059e+37
    %v4922 = vand.u32 %v4825, 2147483648
    %v4923 = vor.u32 1.1754944e-38, %v4922
    %v4924 = vsel %vm4921, %v4923, %v4919
    %v4925 = vmul.f32 1.0, %v4924
    %v4926 = vrcp.pop %v4826
    %v4927 = vmul.f32 %v4826, %v4926
    %v4928 = vsub.f32 1.0, %v4927
    %v4929 = vmul.f32 %v4926, %v4928
    %v4930 = vadd.f32 %v4926, %v4929
    %vm4931 = vweird.f32 %v4826
    %vm4932 = vweird.f32 %v4926
    %vm4933 = vmor %vm4931, %vm4932
    %v4934 = vsel %vm4933, %v4926, %v4930
    %v4935 = vand.u32 2147483647, %v4826
    %vm4936 = vcmp.eq.f32.partialorder %v4935, 8.507059e+37
    %v4937 = vand.u32 %v4826, 2147483648
    %v4938 = vor.u32 1.1754944e-38, %v4937
    %v4939 = vsel %vm4936, %v4938, %v4934
    %v4940 = vmul.f32 1.0, %v4939
    %v4941 = vrcp.pop %v4827
    %v4942 = vmul.f32 %v4827, %v4941
    %v4943 = vsub.f32 1.0, %v4942
    %v4944 = vmul.f32 %v4941, %v4943
    %v4945 = vadd.f32 %v4941, %v4944
    %vm4946 = vweird.f32 %v4827
    %vm4947 = vweird.f32 %v4941
    %vm4948 = vmor %vm4946, %vm4947
    %v4949 = vsel %vm4948, %v4941, %v4945
    %v4950 = vand.u32 2147483647, %v4827
    %vm4951 = vcmp.eq.f32.partialorder %v4950, 8.507059e+37
    %v4952 = vand.u32 %v4827, 2147483648
    %v4953 = vor.u32 1.1754944e-38, %v4952
    %v4954 = vsel %vm4951, %v4953, %v4949
    %v4955 = vmul.f32 1.0, %v4954
    %v4956 = vrcp.pop %v4828
    %v4957 = vmul.f32 %v4828, %v4956
    %v4958 = vsub.f32 1.0, %v4957
    %v4959 = vmul.f32 %v4956, %v4958
    %v4960 = vadd.f32 %v4956, %v4959
    %vm4961 = vweird.f32 %v4828
    %vm4962 = vweird.f32 %v4956
    %vm4963 = vmor %vm4961, %vm4962
    %v4964 = vsel %vm4963, %v4956, %v4960
    %v4965 = vand.u32 2147483647, %v4828
    %vm4966 = vcmp.eq.f32.partialorder %v4965, 8.507059e+37
    %v4967 = vand.u32 %v4828, 2147483648
    %v4968 = vor.u32 1.1754944e-38, %v4967
    %v4969 = vsel %vm4966, %v4968, %v4964
    %v4970 = vmul.f32 1.0, %v4969
    %v4971 = vrcp.pop %v4829
    %v4972 = vmul.f32 %v4829, %v4971
    %v4973 = vsub.f32 1.0, %v4972
    %v4974 = vmul.f32 %v4971, %v4973
    %v4975 = vadd.f32 %v4971, %v4974
    %vm4976 = vweird.f32 %v4829
    %vm4977 = vweird.f32 %v4971
    %vm4978 = vmor %vm4976, %vm4977
    %v4979 = vsel %vm4978, %v4971, %v4975
    %v4980 = vand.u32 2147483647, %v4829
    %vm4981 = vcmp.eq.f32.partialorder %v4980, 8.507059e+37
    %v4982 = vand.u32 %v4829, 2147483648
    %v4983 = vor.u32 1.1754944e-38, %v4982
    %v4984 = vsel %vm4981, %v4983, %v4979
    %v4985 = vmul.f32 1.0, %v4984
    %v4986 = vrcp.pop %v4830
    %v4987 = vmul.f32 %v4830, %v4986
    %v4988 = vsub.f32 1.0, %v4987
    %v4989 = vmul.f32 %v4986, %v4988
    %v4990 = vadd.f32 %v4986, %v4989
    %vm4991 = vweird.f32 %v4830
    %vm4992 = vweird.f32 %v4986
    %vm4993 = vmor %vm4991, %vm4992
    %v4994 = vsel %vm4993, %v4986, %v4990
    %v4995 = vand.u32 2147483647, %v4830
    %vm4996 = vcmp.eq.f32.partialorder %v4995, 8.507059e+37
    %v4997 = vand.u32 %v4830, 2147483648
    %v4998 = vor.u32 1.1754944e-38, %v4997
    %v4999 = vsel %vm4996, %v4998, %v4994
    %v5000 = vmul.f32 1.0, %v4999
    %v5001 = vrcp.pop %v4831
    %v5002 = vmul.f32 %v4831, %v5001
    %v5003 = vsub.f32 1.0, %v5002
    %v5004 = vmul.f32 %v5001, %v5003
    %v5005 = vadd.f32 %v5001, %v5004
    %vm5006 = vweird.f32 %v4831
    %vm5007 = vweird.f32 %v5001
    %vm5008 = vmor %vm5006, %vm5007
    %v5009 = vsel %vm5008, %v5001, %v5005
    %v5010 = vand.u32 2147483647, %v4831
    %vm5011 = vcmp.eq.f32.partialorder %v5010, 8.507059e+37
    %v5012 = vand.u32 %v4831, 2147483648
    %v5013 = vor.u32 1.1754944e-38, %v5012
    %v5014 = vsel %vm5011, %v5013, %v5009
    %v5015 = vmul.f32 1.0, %v5014
    %v5016 = vrcp.pop %v4832
    %v5017 = vmul.f32 %v4832, %v5016
    %v5018 = vsub.f32 1.0, %v5017
    %v5019 = vmul.f32 %v5016, %v5018
    %v5020 = vadd.f32 %v5016, %v5019
    %vm5021 = vweird.f32 %v4832
    %vm5022 = vweird.f32 %v5016
    %vm5023 = vmor %vm5021, %vm5022
    %v5024 = vsel %vm5023, %v5016, %v5020
    %v5025 = vand.u32 2147483647, %v4832
    %vm5026 = vcmp.eq.f32.partialorder %v5025, 8.507059e+37
    %v5027 = vand.u32 %v4832, 2147483648
    %v5028 = vor.u32 1.1754944e-38, %v5027
    %v5029 = vsel %vm5026, %v5028, %v5024
    %v5030 = vmul.f32 1.0, %v5029
    %v5031 = vrcp.pop %v4833
    %v5032 = vmul.f32 %v4833, %v5031
    %v5033 = vsub.f32 1.0, %v5032
    %v5034 = vmul.f32 %v5031, %v5033
    %v5035 = vadd.f32 %v5031, %v5034
    %vm5036 = vweird.f32 %v4833
    %vm5037 = vweird.f32 %v5031
    %vm5038 = vmor %vm5036, %vm5037
    %v5039 = vsel %vm5038, %v5031, %v5035
    %v5040 = vand.u32 2147483647, %v4833
    %vm5041 = vcmp.eq.f32.partialorder %v5040, 8.507059e+37
    %v5042 = vand.u32 %v4833, 2147483648
    %v5043 = vor.u32 1.1754944e-38, %v5042
    %v5044 = vsel %vm5041, %v5043, %v5039
    %v5045 = vmul.f32 1.0, %v5044
    %v5046 = vrcp.pop %v4834
    %v5047 = vmul.f32 %v4834, %v5046
    %v5048 = vsub.f32 1.0, %v5047
    %v5049 = vmul.f32 %v5046, %v5048
    %v5050 = vadd.f32 %v5046, %v5049
    %vm5051 = vweird.f32 %v4834
    %vm5052 = vweird.f32 %v5046
    %vm5053 = vmor %vm5051, %vm5052
    %v5054 = vsel %vm5053, %v5046, %v5050
    %v5055 = vand.u32 2147483647, %v4834
    %vm5056 = vcmp.eq.f32.partialorder %v5055, 8.507059e+37
    %v5057 = vand.u32 %v4834, 2147483648
    %v5058 = vor.u32 1.1754944e-38, %v5057
    %v5059 = vsel %vm5056, %v5058, %v5054
    %v5060 = vmul.f32 1.0, %v5059
    %v5061 = vrcp.pop %v4835
    %v5062 = vmul.f32 %v4835, %v5061
    %v5063 = vsub.f32 1.0, %v5062
    %v5064 = vmul.f32 %v5061, %v5063
    %v5065 = vadd.f32 %v5061, %v5064
    %vm5066 = vweird.f32 %v4835
    %vm5067 = vweird.f32 %v5061
    %vm5068 = vmor %vm5066, %vm5067
    %v5069 = vsel %vm5068, %v5061, %v5065
    %v5070 = vand.u32 2147483647, %v4835
    %vm5071 = vcmp.eq.f32.partialorder %v5070, 8.507059e+37
    %v5072 = vand.u32 %v4835, 2147483648
    %v5073 = vor.u32 1.1754944e-38, %v5072
    %v5074 = vsel %vm5071, %v5073, %v5069
    %v5075 = vmul.f32 1.0, %v5074
    %5076 = vmatpush.msra.mxu0 0.0
    %5077 = vmatpush.msra.mxu0 0.0
    %5078 = vmatpush.msra.mxu0 0.0
    %5079 = vmatpush.msra.mxu0 0.0
    %5080 = vmatpush.msra.mxu0 0.0
    %5081 = vmatpush.msra.mxu0 0.0
    %5082 = vmatpush.msra.mxu0 0.0
    %5083 = vmatpush.msra.mxu0 0.0
    %5084 = vmatpush.msra.mxu0 %v4629
    %5085 = vmatpush.msra.mxu0 %v4626
    %5086 = vmatpush.msra.mxu0 %v4623
    %5087 = vmatpush.msra.mxu0 %v4620
    %5088 = vmatpush.msra.mxu0 %v4617
    %5089 = vmatpush.msra.mxu0 %v4614
    %5090 = vmatpush.msra.mxu0 %v4611
    %5091 = vmatpush.msra.mxu0 %v4608
    %5092 = vmatmul.f32.gmra.mxu0 %v963
    %v5093 = vpop.f32.mrf.mxu0
    %v5094 = vadd.f32 0.0, %v5093
    %5095 = vmatmul.f32.gmra.mxu0 %v966
    %v5096 = vpop.f32.mrf.mxu0
    %v5097 = vadd.f32 0.0, %v5096
    %5098 = vmatmul.f32.gmra.mxu0 %v969
    %v5099 = vpop.f32.mrf.mxu0
    %v5100 = vadd.f32 0.0, %v5099
    %5101 = vmatmul.f32.gmra.mxu0 %v972
    %v5102 = vpop.f32.mrf.mxu0
    %v5103 = vadd.f32 0.0, %v5102
    %5104 = vmatmul.f32.gmra.mxu0 %v975
    %v5105 = vpop.f32.mrf.mxu0
    %v5106 = vadd.f32 0.0, %v5105
    %5107 = vmatmul.f32.gmra.mxu0 %v978
    %v5108 = vpop.f32.mrf.mxu0
    %v5109 = vadd.f32 0.0, %v5108
    %5110 = vmatmul.f32.gmra.mxu0 %v981
    %v5111 = vpop.f32.mrf.mxu0
    %v5112 = vadd.f32 0.0, %v5111
    %5113 = vmatmul.f32.gmra.mxu0 %v984
    %v5114 = vpop.f32.mrf.mxu0
    %v5115 = vadd.f32 0.0, %v5114
    %5116 = vdwg.mxu0
    %5117 = vmatpush.msra.mxu0 0.0
    %5118 = vmatpush.msra.mxu0 0.0
    %5119 = vmatpush.msra.mxu0 0.0
    %5120 = vmatpush.msra.mxu0 0.0
    %5121 = vmatpush.msra.mxu0 0.0
    %5122 = vmatpush.msra.mxu0 0.0
    %5123 = vmatpush.msra.mxu0 0.0
    %5124 = vmatpush.msra.mxu0 0.0
    %5125 = vmatpush.msra.mxu0 %v4670
    %5126 = vmatpush.msra.mxu0 %v4667
    %5127 = vmatpush.msra.mxu0 %v4664
    %5128 = vmatpush.msra.mxu0 %v4661
    %5129 = vmatpush.msra.mxu0 %v4658
    %5130 = vmatpush.msra.mxu0 %v4655
    %5131 = vmatpush.msra.mxu0 %v4652
    %5132 = vmatpush.msra.mxu0 %v4649
    %5133 = vmatmul.f32.gmra.mxu0 %v963
    %v5134 = vpop.f32.mrf.mxu0
    %v5135 = vadd.f32 0.0, %v5134
    %5136 = vmatmul.f32.gmra.mxu0 %v966
    %v5137 = vpop.f32.mrf.mxu0
    %v5138 = vadd.f32 0.0, %v5137
    %5139 = vmatmul.f32.gmra.mxu0 %v969
    %v5140 = vpop.f32.mrf.mxu0
    %v5141 = vadd.f32 0.0, %v5140
    %5142 = vmatmul.f32.gmra.mxu0 %v972
    %v5143 = vpop.f32.mrf.mxu0
    %v5144 = vadd.f32 0.0, %v5143
    %5145 = vmatmul.f32.gmra.mxu0 %v975
    %v5146 = vpop.f32.mrf.mxu0
    %v5147 = vadd.f32 0.0, %v5146
    %5148 = vmatmul.f32.gmra.mxu0 %v978
    %v5149 = vpop.f32.mrf.mxu0
    %v5150 = vadd.f32 0.0, %v5149
    %5151 = vmatmul.f32.gmra.mxu0 %v981
    %v5152 = vpop.f32.mrf.mxu0
    %v5153 = vadd.f32 0.0, %v5152
    %5154 = vmatmul.f32.gmra.mxu0 %v984
    %v5155 = vpop.f32.mrf.mxu0
    %v5156 = vadd.f32 0.0, %v5155
    %5157 = vdwg.mxu0
    %v5158 = vld [vmem:[%s3 + $0x200] sm:$0xff]
    %v5159 = vld [vmem:[%s3 + $0x208] sm:$0xff]
    %v5160 = vld [vmem:[%s3 + $0x210] sm:$0xff]
    %v5161 = vld [vmem:[%s3 + $0x218] sm:$0xff]
    %v5162 = vld [vmem:[%s3 + $0x220] sm:$0xff]
    %v5163 = vld [vmem:[%s3 + $0x228] sm:$0xff]
    %v5164 = vld [vmem:[%s3 + $0x230] sm:$0xff]
    %v5165 = vld [vmem:[%s3 + $0x238] sm:$0xff]
    %v5166 = vld [vmem:[%s3 + $0x240] sm:$0xff]
    %v5167 = vld [vmem:[%s3 + $0x248] sm:$0xff]
    %v5168 = vld [vmem:[%s3 + $0x250] sm:$0xff]
    %v5169 = vld [vmem:[%s3 + $0x258] sm:$0xff]
    %v5170 = vld [vmem:[%s3 + $0x260] sm:$0xff]
    %v5171 = vld [vmem:[%s3 + $0x268] sm:$0xff]
    %v5172 = vld [vmem:[%s3 + $0x270] sm:$0xff]
    %v5173 = vld [vmem:[%s3 + $0x278] sm:$0xff]
    %v5174 = vld [vmem:[%s3 + $0x280] sm:$0xff]
    %v5175 = vld [vmem:[%s3 + $0x288] sm:$0xff]
    %v5176 = vld [vmem:[%s3 + $0x290] sm:$0xff]
    %v5177 = vld [vmem:[%s3 + $0x298] sm:$0xff]
    %v5178 = vld [vmem:[%s3 + $0x2a0] sm:$0xff]
    %v5179 = vld [vmem:[%s3 + $0x2a8] sm:$0xff]
    %v5180 = vld [vmem:[%s3 + $0x2b0] sm:$0xff]
    %v5181 = vld [vmem:[%s3 + $0x2b8] sm:$0xff]
    %v5182 = vld [vmem:[%s3 + $0x2c0] sm:$0xff]
    %v5183 = vld [vmem:[%s3 + $0x2c8] sm:$0xff]
    %v5184 = vld [vmem:[%s3 + $0x2d0] sm:$0xff]
    %v5185 = vld [vmem:[%s3 + $0x2d8] sm:$0xff]
    %v5186 = vld [vmem:[%s3 + $0x2e0] sm:$0xff]
    %v5187 = vld [vmem:[%s3 + $0x2e8] sm:$0xff]
    %v5188 = vld [vmem:[%s3 + $0x2f0] sm:$0xff]
    %v5189 = vld [vmem:[%s3 + $0x2f8] sm:$0xff]
    %v5190 = vmul.f32 %v5094, %v4850
    %v5191 = vmul.f32 %v5135, %v4865
    %v5192 = vmul.f32 %v5097, %v4880
    %v5193 = vmul.f32 %v5138, %v4895
    %v5194 = vmul.f32 %v5100, %v4910
    %v5195 = vmul.f32 %v5141, %v4925
    %v5196 = vmul.f32 %v5103, %v4940
    %v5197 = vmul.f32 %v5144, %v4955
    %v5198 = vmul.f32 %v5106, %v4970
    %v5199 = vmul.f32 %v5147, %v4985
    %v5200 = vmul.f32 %v5109, %v5000
    %v5201 = vmul.f32 %v5150, %v5015
    %v5202 = vmul.f32 %v5112, %v5030
    %v5203 = vmul.f32 %v5153, %v5045
    %v5204 = vmul.f32 %v5115, %v5060
    %v5205 = vmul.f32 %v5156, %v5075
    %v5206 = vperm.slane %v228, 6
    %5207 = vmatpush.msra.mxu0 %v5173
    %5208 = vmatpush.msra.mxu0 %v5172
    %5209 = vmatpush.msra.mxu0 %v5171
    %5210 = vmatpush.msra.mxu0 %v5170
    %5211 = vmatpush.msra.mxu0 %v5169
    %5212 = vmatpush.msra.mxu0 %v5168
    %5213 = vmatpush.msra.mxu0 %v5167
    %5214 = vmatpush.msra.mxu0 %v5166
    %5215 = vmatpush.msra.mxu0 %v5165
    %5216 = vmatpush.msra.mxu0 %v5164
    %5217 = vmatpush.msra.mxu0 %v5163
    %5218 = vmatpush.msra.mxu0 %v5162
    %5219 = vmatpush.msra.mxu0 %v5161
    %5220 = vmatpush.msra.mxu0 %v5160
    %5221 = vmatpush.msra.mxu0 %v5159
    %5222 = vmatpush.msra.mxu0 %v5158
    %5223 = vmatmul.f32.gmra.mxu0 %v5190
    %v5224 = vpop.f32.mrf.mxu0
    %v5225 = vadd.f32 %v5206, %v5224
    %5226 = vmatmul.f32.gmra.mxu0 %v5192
    %v5227 = vpop.f32.mrf.mxu0
    %v5228 = vadd.f32 %v5206, %v5227
    %5229 = vmatmul.f32.gmra.mxu0 %v5194
    %v5230 = vpop.f32.mrf.mxu0
    %v5231 = vadd.f32 %v5206, %v5230
    %5232 = vmatmul.f32.gmra.mxu0 %v5196
    %v5233 = vpop.f32.mrf.mxu0
    %v5234 = vadd.f32 %v5206, %v5233
    %5235 = vmatmul.f32.gmra.mxu0 %v5198
    %v5236 = vpop.f32.mrf.mxu0
    %v5237 = vadd.f32 %v5206, %v5236
    %5238 = vmatmul.f32.gmra.mxu0 %v5200
    %v5239 = vpop.f32.mrf.mxu0
    %v5240 = vadd.f32 %v5206, %v5239
    %5241 = vmatmul.f32.gmra.mxu0 %v5202
    %v5242 = vpop.f32.mrf.mxu0
    %v5243 = vadd.f32 %v5206, %v5242
    %5244 = vmatmul.f32.gmra.mxu0 %v5204
    %v5245 = vpop.f32.mrf.mxu0
    %v5246 = vadd.f32 %v5206, %v5245
    %5247 = vdwg.mxu0
    %5248 = vmatpush.msra.mxu0 %v5189
    %5249 = vmatpush.msra.mxu0 %v5188
    %5250 = vmatpush.msra.mxu0 %v5187
    %5251 = vmatpush.msra.mxu0 %v5186
    %5252 = vmatpush.msra.mxu0 %v5185
    %5253 = vmatpush.msra.mxu0 %v5184
    %5254 = vmatpush.msra.mxu0 %v5183
    %5255 = vmatpush.msra.mxu0 %v5182
    %5256 = vmatpush.msra.mxu0 %v5181
    %5257 = vmatpush.msra.mxu0 %v5180
    %5258 = vmatpush.msra.mxu0 %v5179
    %5259 = vmatpush.msra.mxu0 %v5178
    %5260 = vmatpush.msra.mxu0 %v5177
    %5261 = vmatpush.msra.mxu0 %v5176
    %5262 = vmatpush.msra.mxu0 %v5175
    %5263 = vmatpush.msra.mxu0 %v5174
    %5264 = vmatmul.f32.gmra.mxu0 %v5191
    %v5265 = vpop.f32.mrf.mxu0
    %v5266 = vadd.f32 %v5225, %v5265
    %5267 = vmatmul.f32.gmra.mxu0 %v5193
    %v5268 = vpop.f32.mrf.mxu0
    %v5269 = vadd.f32 %v5228, %v5268
    %5270 = vmatmul.f32.gmra.mxu0 %v5195
    %v5271 = vpop.f32.mrf.mxu0
    %v5272 = vadd.f32 %v5231, %v5271
    %5273 = vmatmul.f32.gmra.mxu0 %v5197
    %v5274 = vpop.f32.mrf.mxu0
    %v5275 = vadd.f32 %v5234, %v5274
    %5276 = vmatmul.f32.gmra.mxu0 %v5199
    %v5277 = vpop.f32.mrf.mxu0
    %v5278 = vadd.f32 %v5237, %v5277
    %5279 = vmatmul.f32.gmra.mxu0 %v5201
    %v5280 = vpop.f32.mrf.mxu0
    %v5281 = vadd.f32 %v5240, %v5280
    %5282 = vmatmul.f32.gmra.mxu0 %v5203
    %v5283 = vpop.f32.mrf.mxu0
    %v5284 = vadd.f32 %v5243, %v5283
    %5285 = vmatmul.f32.gmra.mxu0 %v5205
    %v5286 = vpop.f32.mrf.mxu0
    %v5287 = vadd.f32 %v5246, %v5286
    %5288 = vdwg.mxu0
    %v5289 = vadd.f32 %v4542, %v5266
    %v5290 = vadd.f32 %v4543, %v5269
    %v5291 = vadd.f32 %v4544, %v5272
    %v5292 = vadd.f32 %v4545, %v5275
    %v5293 = vadd.f32 %v4546, %v5278
    %v5294 = vadd.f32 %v4547, %v5281
    %v5295 = vadd.f32 %v4548, %v5284
    %v5296 = vadd.f32 %v4549, %v5287
    %v5297 = vsel %vm233, %v5289, 0.0
    %5298 = vadd.xlane.f32.xlu0 %v5297
    %v5299 = vpop.xlane.xlu0 %5298
    %v5300 = vsel %vm233, %v5290, 0.0
    %5301 = vadd.xlane.f32.xlu0 %v5300
    %v5302 = vpop.xlane.xlu0 %5301
    %v5303 = vsel %vm233, %v5291, 0.0
    %5304 = vadd.xlane.f32.xlu0 %v5303
    %v5305 = vpop.xlane.xlu0 %5304
    %v5306 = vsel %vm233, %v5292, 0.0
    %5307 = vadd.xlane.f32.xlu0 %v5306
    %v5308 = vpop.xlane.xlu0 %5307
    %v5309 = vsel %vm233, %v5293, 0.0
    %5310 = vadd.xlane.f32.xlu0 %v5309
    %v5311 = vpop.xlane.xlu0 %5310
    %v5312 = vsel %vm233, %v5294, 0.0
    %5313 = vadd.xlane.f32.xlu0 %v5312
    %v5314 = vpop.xlane.xlu0 %5313
    %v5315 = vsel %vm233, %v5295, 0.0
    %5316 = vadd.xlane.f32.xlu0 %v5315
    %v5317 = vpop.xlane.xlu0 %5316
    %v5318 = vsel %vm233, %v5296, 0.0
    %5319 = vadd.xlane.f32.xlu0 %v5318
    %v5320 = vpop.xlane.xlu0 %5319
    %v5321 = vmul.f32 %v5299, %v264
    %v5322 = vmul.f32 %v5302, %v264
    %v5323 = vmul.f32 %v5305, %v264
    %v5324 = vmul.f32 %v5308, %v264
    %v5325 = vmul.f32 %v5311, %v264
    %v5326 = vmul.f32 %v5314, %v264
    %v5327 = vmul.f32 %v5317, %v264
    %v5328 = vmul.f32 %v5320, %v264
    %v5329 = vsub.f32 %v5289, %v5321
    %v5330 = vsub.f32 %v5290, %v5322
    %v5331 = vsub.f32 %v5291, %v5323
    %v5332 = vsub.f32 %v5292, %v5324
    %v5333 = vsub.f32 %v5293, %v5325
    %v5334 = vsub.f32 %v5294, %v5326
    %v5335 = vsub.f32 %v5295, %v5327
    %v5336 = vsub.f32 %v5296, %v5328
    %v5337 = vmul.f32 %v5329, %v5329
    %v5338 = vmul.f32 %v5330, %v5330
    %v5339 = vmul.f32 %v5331, %v5331
    %v5340 = vmul.f32 %v5332, %v5332
    %v5341 = vmul.f32 %v5333, %v5333
    %v5342 = vmul.f32 %v5334, %v5334
    %v5343 = vmul.f32 %v5335, %v5335
    %v5344 = vmul.f32 %v5336, %v5336
    %v5345 = vsel %vm233, %v5337, 0.0
    %5346 = vadd.xlane.f32.xlu0 %v5345
    %v5347 = vpop.xlane.xlu0 %5346
    %v5348 = vsel %vm233, %v5338, 0.0
    %5349 = vadd.xlane.f32.xlu0 %v5348
    %v5350 = vpop.xlane.xlu0 %5349
    %v5351 = vsel %vm233, %v5339, 0.0
    %5352 = vadd.xlane.f32.xlu0 %v5351
    %v5353 = vpop.xlane.xlu0 %5352
    %v5354 = vsel %vm233, %v5340, 0.0
    %5355 = vadd.xlane.f32.xlu0 %v5354
    %v5356 = vpop.xlane.xlu0 %5355
    %v5357 = vsel %vm233, %v5341, 0.0
    %5358 = vadd.xlane.f32.xlu0 %v5357
    %v5359 = vpop.xlane.xlu0 %5358
    %v5360 = vsel %vm233, %v5342, 0.0
    %5361 = vadd.xlane.f32.xlu0 %v5360
    %v5362 = vpop.xlane.xlu0 %5361
    %v5363 = vsel %vm233, %v5343, 0.0
    %5364 = vadd.xlane.f32.xlu0 %v5363
    %v5365 = vpop.xlane.xlu0 %5364
    %v5366 = vsel %vm233, %v5344, 0.0
    %5367 = vadd.xlane.f32.xlu0 %v5366
    %v5368 = vpop.xlane.xlu0 %5367
    %v5369 = vmul.f32 %v5347, %v264
    %v5370 = vmul.f32 %v5350, %v264
    %v5371 = vmul.f32 %v5353, %v264
    %v5372 = vmul.f32 %v5356, %v264
    %v5373 = vmul.f32 %v5359, %v264
    %v5374 = vmul.f32 %v5362, %v264
    %v5375 = vmul.f32 %v5365, %v264
    %v5376 = vmul.f32 %v5368, %v264
    %v5377 = vadd.f32 %v5369, 1e-05
    %v5378 = vadd.f32 %v5370, 1e-05
    %v5379 = vadd.f32 %v5371, 1e-05
    %v5380 = vadd.f32 %v5372, 1e-05
    %v5381 = vadd.f32 %v5373, 1e-05
    %v5382 = vadd.f32 %v5374, 1e-05
    %v5383 = vadd.f32 %v5375, 1e-05
    %v5384 = vadd.f32 %v5376, 1e-05
    %v5385 = vrsqrt.pop %v5377
    %v5386 = vmul.f32 %v5385, %v5377
    %v5387 = vmul.f32 %v5386, %v5385
    %v5388 = vmul.f32 0.5, %v5387
    %v5389 = vsub.f32 1.5, %v5388
    %v5390 = vmul.f32 %v5385, %v5389
    %vm5391 = vweird.f32 %v5377
    %vm5392 = vweird.f32 %v5385
    %vm5393 = vmor %vm5391, %vm5392
    %v5394 = vsel %vm5393, %v5385, %v5390
    %v5395 = vrsqrt.pop %v5378
    %v5396 = vmul.f32 %v5395, %v5378
    %v5397 = vmul.f32 %v5396, %v5395
    %v5398 = vmul.f32 0.5, %v5397
    %v5399 = vsub.f32 1.5, %v5398
    %v5400 = vmul.f32 %v5395, %v5399
    %vm5401 = vweird.f32 %v5378
    %vm5402 = vweird.f32 %v5395
    %vm5403 = vmor %vm5401, %vm5402
    %v5404 = vsel %vm5403, %v5395, %v5400
    %v5405 = vrsqrt.pop %v5379
    %v5406 = vmul.f32 %v5405, %v5379
    %v5407 = vmul.f32 %v5406, %v5405
    %v5408 = vmul.f32 0.5, %v5407
    %v5409 = vsub.f32 1.5, %v5408
    %v5410 = vmul.f32 %v5405, %v5409
    %vm5411 = vweird.f32 %v5379
    %vm5412 = vweird.f32 %v5405
    %vm5413 = vmor %vm5411, %vm5412
    %v5414 = vsel %vm5413, %v5405, %v5410
    %v5415 = vrsqrt.pop %v5380
    %v5416 = vmul.f32 %v5415, %v5380
    %v5417 = vmul.f32 %v5416, %v5415
    %v5418 = vmul.f32 0.5, %v5417
    %v5419 = vsub.f32 1.5, %v5418
    %v5420 = vmul.f32 %v5415, %v5419
    %vm5421 = vweird.f32 %v5380
    %vm5422 = vweird.f32 %v5415
    %vm5423 = vmor %vm5421, %vm5422
    %v5424 = vsel %vm5423, %v5415, %v5420
    %v5425 = vrsqrt.pop %v5381
    %v5426 = vmul.f32 %v5425, %v5381
    %v5427 = vmul.f32 %v5426, %v5425
    %v5428 = vmul.f32 0.5, %v5427
    %v5429 = vsub.f32 1.5, %v5428
    %v5430 = vmul.f32 %v5425, %v5429
    %vm5431 = vweird.f32 %v5381
    %vm5432 = vweird.f32 %v5425
    %vm5433 = vmor %vm5431, %vm5432
    %v5434 = vsel %vm5433, %v5425, %v5430
    %v5435 = vrsqrt.pop %v5382
    %v5436 = vmul.f32 %v5435, %v5382
    %v5437 = vmul.f32 %v5436, %v5435
    %v5438 = vmul.f32 0.5, %v5437
    %v5439 = vsub.f32 1.5, %v5438
    %v5440 = vmul.f32 %v5435, %v5439
    %vm5441 = vweird.f32 %v5382
    %vm5442 = vweird.f32 %v5435
    %vm5443 = vmor %vm5441, %vm5442
    %v5444 = vsel %vm5443, %v5435, %v5440
    %v5445 = vrsqrt.pop %v5383
    %v5446 = vmul.f32 %v5445, %v5383
    %v5447 = vmul.f32 %v5446, %v5445
    %v5448 = vmul.f32 0.5, %v5447
    %v5449 = vsub.f32 1.5, %v5448
    %v5450 = vmul.f32 %v5445, %v5449
    %vm5451 = vweird.f32 %v5383
    %vm5452 = vweird.f32 %v5445
    %vm5453 = vmor %vm5451, %vm5452
    %v5454 = vsel %vm5453, %v5445, %v5450
    %v5455 = vrsqrt.pop %v5384
    %v5456 = vmul.f32 %v5455, %v5384
    %v5457 = vmul.f32 %v5456, %v5455
    %v5458 = vmul.f32 0.5, %v5457
    %v5459 = vsub.f32 1.5, %v5458
    %v5460 = vmul.f32 %v5455, %v5459
    %vm5461 = vweird.f32 %v5384
    %vm5462 = vweird.f32 %v5455
    %vm5463 = vmor %vm5461, %vm5462
    %v5464 = vsel %vm5463, %v5455, %v5460
    %v5465 = vmul.f32 %v5329, %v5394
    %v5466 = vmul.f32 %v5330, %v5404
    %v5467 = vmul.f32 %v5331, %v5414
    %v5468 = vmul.f32 %v5332, %v5424
    %v5469 = vmul.f32 %v5333, %v5434
    %v5470 = vmul.f32 %v5334, %v5444
    %v5471 = vmul.f32 %v5335, %v5454
    %v5472 = vmul.f32 %v5336, %v5464
    %v5473 = vperm.slane %v228, 7
    %v5474 = vmul.f32 %v5465, %v5473
    %v5475 = vmul.f32 %v5466, %v5473
    %v5476 = vmul.f32 %v5467, %v5473
    %v5477 = vmul.f32 %v5468, %v5473
    %v5478 = vmul.f32 %v5469, %v5473
    %v5479 = vmul.f32 %v5470, %v5473
    %v5480 = vmul.f32 %v5471, %v5473
    %v5481 = vmul.f32 %v5472, %v5473
    %v5482 = vperm.slane %v230, 0
    %v5483 = vadd.f32 %v5474, %v5482
    %v5484 = vadd.f32 %v5475, %v5482
    %v5485 = vadd.f32 %v5476, %v5482
    %v5486 = vadd.f32 %v5477, %v5482
    %v5487 = vadd.f32 %v5478, %v5482
    %v5488 = vadd.f32 %v5479, %v5482
    %v5489 = vadd.f32 %v5480, %v5482
    %v5490 = vadd.f32 %v5481, %v5482
    %v5491 = vadd.f32 %v4348, %v5483
    %v5492 = vadd.f32 %v4349, %v5484
    %v5493 = vadd.f32 %v4350, %v5485
    %v5494 = vadd.f32 %v4351, %v5486
    %v5495 = vadd.f32 %v4352, %v5487
    %v5496 = vadd.f32 %v4353, %v5488
    %v5497 = vadd.f32 %v4354, %v5489
    %v5498 = vadd.f32 %v4355, %v5490
    %v5499 = vsel %vm233, %v5491, 0.0
    %5500 = vadd.xlane.f32.xlu0 %v5499
    %v5501 = vpop.xlane.xlu0 %5500
    %v5502 = vsel %vm233, %v5492, 0.0
    %5503 = vadd.xlane.f32.xlu0 %v5502
    %v5504 = vpop.xlane.xlu0 %5503
    %v5505 = vsel %vm233, %v5493, 0.0
    %5506 = vadd.xlane.f32.xlu0 %v5505
    %v5507 = vpop.xlane.xlu0 %5506
    %v5508 = vsel %vm233, %v5494, 0.0
    %5509 = vadd.xlane.f32.xlu0 %v5508
    %v5510 = vpop.xlane.xlu0 %5509
    %v5511 = vsel %vm233, %v5495, 0.0
    %5512 = vadd.xlane.f32.xlu0 %v5511
    %v5513 = vpop.xlane.xlu0 %5512
    %v5514 = vsel %vm233, %v5496, 0.0
    %5515 = vadd.xlane.f32.xlu0 %v5514
    %v5516 = vpop.xlane.xlu0 %5515
    %v5517 = vsel %vm233, %v5497, 0.0
    %5518 = vadd.xlane.f32.xlu0 %v5517
    %v5519 = vpop.xlane.xlu0 %5518
    %v5520 = vsel %vm233, %v5498, 0.0
    %5521 = vadd.xlane.f32.xlu0 %v5520
    %v5522 = vpop.xlane.xlu0 %5521
    %v5523 = vmul.f32 %v5501, %v264
    %v5524 = vmul.f32 %v5504, %v264
    %v5525 = vmul.f32 %v5507, %v264
    %v5526 = vmul.f32 %v5510, %v264
    %v5527 = vmul.f32 %v5513, %v264
    %v5528 = vmul.f32 %v5516, %v264
    %v5529 = vmul.f32 %v5519, %v264
    %v5530 = vmul.f32 %v5522, %v264
    %v5531 = vsub.f32 %v5491, %v5523
    %v5532 = vsub.f32 %v5492, %v5524
    %v5533 = vsub.f32 %v5493, %v5525
    %v5534 = vsub.f32 %v5494, %v5526
    %v5535 = vsub.f32 %v5495, %v5527
    %v5536 = vsub.f32 %v5496, %v5528
    %v5537 = vsub.f32 %v5497, %v5529
    %v5538 = vsub.f32 %v5498, %v5530
    %v5539 = vmul.f32 %v5531, %v5531
    %v5540 = vmul.f32 %v5532, %v5532
    %v5541 = vmul.f32 %v5533, %v5533
    %v5542 = vmul.f32 %v5534, %v5534
    %v5543 = vmul.f32 %v5535, %v5535
    %v5544 = vmul.f32 %v5536, %v5536
    %v5545 = vmul.f32 %v5537, %v5537
    %v5546 = vmul.f32 %v5538, %v5538
    %v5547 = vsel %vm233, %v5539, 0.0
    %5548 = vadd.xlane.f32.xlu0 %v5547
    %v5549 = vpop.xlane.xlu0 %5548
    %v5550 = vsel %vm233, %v5540, 0.0
    %5551 = vadd.xlane.f32.xlu0 %v5550
    %v5552 = vpop.xlane.xlu0 %5551
    %v5553 = vsel %vm233, %v5541, 0.0
    %5554 = vadd.xlane.f32.xlu0 %v5553
    %v5555 = vpop.xlane.xlu0 %5554
    %v5556 = vsel %vm233, %v5542, 0.0
    %5557 = vadd.xlane.f32.xlu0 %v5556
    %v5558 = vpop.xlane.xlu0 %5557
    %v5559 = vsel %vm233, %v5543, 0.0
    %5560 = vadd.xlane.f32.xlu0 %v5559
    %v5561 = vpop.xlane.xlu0 %5560
    %v5562 = vsel %vm233, %v5544, 0.0
    %5563 = vadd.xlane.f32.xlu0 %v5562
    %v5564 = vpop.xlane.xlu0 %5563
    %v5565 = vsel %vm233, %v5545, 0.0
    %5566 = vadd.xlane.f32.xlu0 %v5565
    %v5567 = vpop.xlane.xlu0 %5566
    %v5568 = vsel %vm233, %v5546, 0.0
    %5569 = vadd.xlane.f32.xlu0 %v5568
    %v5570 = vpop.xlane.xlu0 %5569
    %v5571 = vmul.f32 %v5549, %v264
    %v5572 = vmul.f32 %v5552, %v264
    %v5573 = vmul.f32 %v5555, %v264
    %v5574 = vmul.f32 %v5558, %v264
    %v5575 = vmul.f32 %v5561, %v264
    %v5576 = vmul.f32 %v5564, %v264
    %v5577 = vmul.f32 %v5567, %v264
    %v5578 = vmul.f32 %v5570, %v264
    %v5579 = vadd.f32 %v5571, 1e-05
    %v5580 = vadd.f32 %v5572, 1e-05
    %v5581 = vadd.f32 %v5573, 1e-05
    %v5582 = vadd.f32 %v5574, 1e-05
    %v5583 = vadd.f32 %v5575, 1e-05
    %v5584 = vadd.f32 %v5576, 1e-05
    %v5585 = vadd.f32 %v5577, 1e-05
    %v5586 = vadd.f32 %v5578, 1e-05
    %v5587 = vrsqrt.pop %v5579
    %v5588 = vmul.f32 %v5587, %v5579
    %v5589 = vmul.f32 %v5588, %v5587
    %v5590 = vmul.f32 0.5, %v5589
    %v5591 = vsub.f32 1.5, %v5590
    %v5592 = vmul.f32 %v5587, %v5591
    %vm5593 = vweird.f32 %v5579
    %vm5594 = vweird.f32 %v5587
    %vm5595 = vmor %vm5593, %vm5594
    %v5596 = vsel %vm5595, %v5587, %v5592
    %v5597 = vrsqrt.pop %v5580
    %v5598 = vmul.f32 %v5597, %v5580
    %v5599 = vmul.f32 %v5598, %v5597
    %v5600 = vmul.f32 0.5, %v5599
    %v5601 = vsub.f32 1.5, %v5600
    %v5602 = vmul.f32 %v5597, %v5601
    %vm5603 = vweird.f32 %v5580
    %vm5604 = vweird.f32 %v5597
    %vm5605 = vmor %vm5603, %vm5604
    %v5606 = vsel %vm5605, %v5597, %v5602
    %v5607 = vrsqrt.pop %v5581
    %v5608 = vmul.f32 %v5607, %v5581
    %v5609 = vmul.f32 %v5608, %v5607
    %v5610 = vmul.f32 0.5, %v5609
    %v5611 = vsub.f32 1.5, %v5610
    %v5612 = vmul.f32 %v5607, %v5611
    %vm5613 = vweird.f32 %v5581
    %vm5614 = vweird.f32 %v5607
    %vm5615 = vmor %vm5613, %vm5614
    %v5616 = vsel %vm5615, %v5607, %v5612
    %v5617 = vrsqrt.pop %v5582
    %v5618 = vmul.f32 %v5617, %v5582
    %v5619 = vmul.f32 %v5618, %v5617
    %v5620 = vmul.f32 0.5, %v5619
    %v5621 = vsub.f32 1.5, %v5620
    %v5622 = vmul.f32 %v5617, %v5621
    %vm5623 = vweird.f32 %v5582
    %vm5624 = vweird.f32 %v5617
    %vm5625 = vmor %vm5623, %vm5624
    %v5626 = vsel %vm5625, %v5617, %v5622
    %v5627 = vrsqrt.pop %v5583
    %v5628 = vmul.f32 %v5627, %v5583
    %v5629 = vmul.f32 %v5628, %v5627
    %v5630 = vmul.f32 0.5, %v5629
    %v5631 = vsub.f32 1.5, %v5630
    %v5632 = vmul.f32 %v5627, %v5631
    %vm5633 = vweird.f32 %v5583
    %vm5634 = vweird.f32 %v5627
    %vm5635 = vmor %vm5633, %vm5634
    %v5636 = vsel %vm5635, %v5627, %v5632
    %v5637 = vrsqrt.pop %v5584
    %v5638 = vmul.f32 %v5637, %v5584
    %v5639 = vmul.f32 %v5638, %v5637
    %v5640 = vmul.f32 0.5, %v5639
    %v5641 = vsub.f32 1.5, %v5640
    %v5642 = vmul.f32 %v5637, %v5641
    %vm5643 = vweird.f32 %v5584
    %vm5644 = vweird.f32 %v5637
    %vm5645 = vmor %vm5643, %vm5644
    %v5646 = vsel %vm5645, %v5637, %v5642
    %v5647 = vrsqrt.pop %v5585
    %v5648 = vmul.f32 %v5647, %v5585
    %v5649 = vmul.f32 %v5648, %v5647
    %v5650 = vmul.f32 0.5, %v5649
    %v5651 = vsub.f32 1.5, %v5650
    %v5652 = vmul.f32 %v5647, %v5651
    %vm5653 = vweird.f32 %v5585
    %vm5654 = vweird.f32 %v5647
    %vm5655 = vmor %vm5653, %vm5654
    %v5656 = vsel %vm5655, %v5647, %v5652
    %v5657 = vrsqrt.pop %v5586
    %v5658 = vmul.f32 %v5657, %v5586
    %v5659 = vmul.f32 %v5658, %v5657
    %v5660 = vmul.f32 0.5, %v5659
    %v5661 = vsub.f32 1.5, %v5660
    %v5662 = vmul.f32 %v5657, %v5661
    %vm5663 = vweird.f32 %v5586
    %vm5664 = vweird.f32 %v5657
    %vm5665 = vmor %vm5663, %vm5664
    %v5666 = vsel %vm5665, %v5657, %v5662
    %v5667 = vmul.f32 %v5531, %v5596
    %v5668 = vmul.f32 %v5532, %v5606
    %v5669 = vmul.f32 %v5533, %v5616
    %v5670 = vmul.f32 %v5534, %v5626
    %v5671 = vmul.f32 %v5535, %v5636
    %v5672 = vmul.f32 %v5536, %v5646
    %v5673 = vmul.f32 %v5537, %v5656
    %v5674 = vmul.f32 %v5538, %v5666
    %v5675 = vperm.slane %v230, 2
    %v5676 = vmul.f32 %v5667, %v5675
    %v5677 = vmul.f32 %v5668, %v5675
    %v5678 = vmul.f32 %v5669, %v5675
    %v5679 = vmul.f32 %v5670, %v5675
    %v5680 = vmul.f32 %v5671, %v5675
    %v5681 = vmul.f32 %v5672, %v5675
    %v5682 = vmul.f32 %v5673, %v5675
    %v5683 = vmul.f32 %v5674, %v5675
    %v5684 = vperm.slane %v230, 3
    %v5685 = vadd.f32 %v5676, %v5684
    %v5686 = vadd.f32 %v5677, %v5684
    %v5687 = vadd.f32 %v5678, %v5684
    %v5688 = vadd.f32 %v5679, %v5684
    %v5689 = vadd.f32 %v5680, %v5684
    %v5690 = vadd.f32 %v5681, %v5684
    %v5691 = vadd.f32 %v5682, %v5684
    %v5692 = vadd.f32 %v5683, %v5684
    %v5693 = vld [vmem:[%s2 + $0x1a0] sm:$0xff]
    %v5694 = vld [vmem:[%s2 + $0x1a8] sm:$0xff]
    %v5695 = vld [vmem:[%s2 + $0x200] sm:$0xff]
    %v5696 = vld [vmem:[%s2 + $0x208] sm:$0xff]
    %v5697 = vld [vmem:[%s2 + $0x260] sm:$0xff]
    %v5698 = vld [vmem:[%s2 + $0x268] sm:$0xff]
    %v5699 = vld [vmem:[%s2 + $0x2c0] sm:$0xff]
    %v5700 = vld [vmem:[%s2 + $0x2c8] sm:$0xff]
    %v5702 = vsel %vm233, %v5685, 0
    %v5705 = vsel %vm233, %v5686, 0
    %v5708 = vsel %vm233, %v5687, 0
    %v5711 = vsel %vm233, %v5688, 0
    %v5714 = vsel %vm233, %v5689, 0
    %v5717 = vsel %vm233, %v5690, 0
    %v5720 = vsel %vm233, %v5691, 0
    %v5723 = vsel %vm233, %v5692, 0
    %5725 = vmatpush.msra.mxu0 0.0
    %5726 = vmatpush.msra.mxu0 0.0
    %5727 = vmatpush.msra.mxu0 0.0
    %5728 = vmatpush.msra.mxu0 0.0
    %5729 = vmatpush.msra.mxu0 0.0
    %5730 = vmatpush.msra.mxu0 0.0
    %5731 = vmatpush.msra.mxu0 0.0
    %5732 = vmatpush.msra.mxu0 0.0
    %5733 = vmatpush.msra.mxu0 0.0
    %5734 = vmatpush.msra.mxu0 0.0
    %5735 = vmatpush.msra.mxu0 0.0
    %5736 = vmatpush.msra.mxu0 0.0
    %5737 = vmatpush.msra.mxu0 %v5699
    %5738 = vmatpush.msra.mxu0 %v5697
    %5739 = vmatpush.msra.mxu0 %v5695
    %5740 = vmatpush.msra.mxu0 %v5693
    %5741 = vmatmul.f32.gmra.mxu0 %v5702
    %v5742 = vpop.f32.mrf.mxu0
    %v5743 = vadd.f32 0.0, %v5742
    %5744 = vmatmul.f32.gmra.mxu0 %v5705
    %v5745 = vpop.f32.mrf.mxu0
    %v5746 = vadd.f32 0.0, %v5745
    %5747 = vmatmul.f32.gmra.mxu0 %v5708
    %v5748 = vpop.f32.mrf.mxu0
    %v5749 = vadd.f32 0.0, %v5748
    %5750 = vmatmul.f32.gmra.mxu0 %v5711
    %v5751 = vpop.f32.mrf.mxu0
    %v5752 = vadd.f32 0.0, %v5751
    %5753 = vmatmul.f32.gmra.mxu0 %v5714
    %v5754 = vpop.f32.mrf.mxu0
    %v5755 = vadd.f32 0.0, %v5754
    %5756 = vmatmul.f32.gmra.mxu0 %v5717
    %v5757 = vpop.f32.mrf.mxu0
    %v5758 = vadd.f32 0.0, %v5757
    %5759 = vmatmul.f32.gmra.mxu0 %v5720
    %v5760 = vpop.f32.mrf.mxu0
    %v5761 = vadd.f32 0.0, %v5760
    %5762 = vmatmul.f32.gmra.mxu0 %v5723
    %v5763 = vpop.f32.mrf.mxu0
    %v5764 = vadd.f32 0.0, %v5763
    %5765 = vdwg.mxu0
    %5766 = vmatpush.msra.mxu0 0.0
    %5767 = vmatpush.msra.mxu0 0.0
    %5768 = vmatpush.msra.mxu0 0.0
    %5769 = vmatpush.msra.mxu0 0.0
    %5770 = vmatpush.msra.mxu0 0.0
    %5771 = vmatpush.msra.mxu0 0.0
    %5772 = vmatpush.msra.mxu0 0.0
    %5773 = vmatpush.msra.mxu0 0.0
    %5774 = vmatpush.msra.mxu0 0.0
    %5775 = vmatpush.msra.mxu0 0.0
    %5776 = vmatpush.msra.mxu0 0.0
    %5777 = vmatpush.msra.mxu0 0.0
    %5778 = vmatpush.msra.mxu0 %v5700
    %5779 = vmatpush.msra.mxu0 %v5698
    %5780 = vmatpush.msra.mxu0 %v5696
    %5781 = vmatpush.msra.mxu0 %v5694
    %5782 = vmatmul.f32.gmra.mxu0 %v5702
    %v5783 = vpop.f32.mrf.mxu0
    %v5784 = vadd.f32 0.0, %v5783
    %5785 = vmatmul.f32.gmra.mxu0 %v5705
    %v5786 = vpop.f32.mrf.mxu0
    %v5787 = vadd.f32 0.0, %v5786
    %5788 = vmatmul.f32.gmra.mxu0 %v5708
    %v5789 = vpop.f32.mrf.mxu0
    %v5790 = vadd.f32 0.0, %v5789
    %5791 = vmatmul.f32.gmra.mxu0 %v5711
    %v5792 = vpop.f32.mrf.mxu0
    %v5793 = vadd.f32 0.0, %v5792
    %5794 = vmatmul.f32.gmra.mxu0 %v5714
    %v5795 = vpop.f32.mrf.mxu0
    %v5796 = vadd.f32 0.0, %v5795
    %5797 = vmatmul.f32.gmra.mxu0 %v5717
    %v5798 = vpop.f32.mrf.mxu0
    %v5799 = vadd.f32 0.0, %v5798
    %5800 = vmatmul.f32.gmra.mxu0 %v5720
    %v5801 = vpop.f32.mrf.mxu0
    %v5802 = vadd.f32 0.0, %v5801
    %5803 = vmatmul.f32.gmra.mxu0 %v5723
    %v5804 = vpop.f32.mrf.mxu0
    %v5805 = vadd.f32 0.0, %v5804
    %5806 = vdwg.mxu0
    %v5807 = vperm.slane %v230, 7
    %5809 = vrot.lane.b32.xlu0 %v5807, 64
    %v5810 = vpop.permute.xlu0 %5809
    %v5812 = vadd.f32 %v5784, %v5810
    %v5813 = vadd.f32 %v5787, %v5810
    %v5814 = vadd.f32 %v5790, %v5810
    %v5815 = vadd.f32 %v5793, %v5810
    %v5816 = vadd.f32 %v5796, %v5810
    %v5817 = vadd.f32 %v5799, %v5810
    %v5818 = vadd.f32 %v5802, %v5810
    %v5819 = vadd.f32 %v5805, %v5810
    %v5820 = vxor.u32 %v5812, 2147483648
    %v5821 = vxor.u32 %v5813, 2147483648
    %v5822 = vxor.u32 %v5814, 2147483648
    %v5823 = vxor.u32 %v5815, 2147483648
    %v5824 = vxor.u32 %v5816, 2147483648
    %v5825 = vxor.u32 %v5817, 2147483648
    %v5826 = vxor.u32 %v5818, 2147483648
    %v5827 = vxor.u32 %v5819, 2147483648
    %v5828 = vmul.f32 %v5820, 1.442695
    %v5829 = vpow.pop %v5828
    %v5830 = vmul.f32 %v5821, 1.442695
    %v5831 = vpow.pop %v5830
    %v5832 = vmul.f32 %v5822, 1.442695
    %v5833 = vpow.pop %v5832
    %v5834 = vmul.f32 %v5823, 1.442695
    %v5835 = vpow.pop %v5834
    %v5836 = vmul.f32 %v5824, 1.442695
    %v5837 = vpow.pop %v5836
    %v5838 = vmul.f32 %v5825, 1.442695
    %v5839 = vpow.pop %v5838
    %v5840 = vmul.f32 %v5826, 1.442695
    %v5841 = vpow.pop %v5840
    %v5842 = vmul.f32 %v5827, 1.442695
    %v5843 = vpow.pop %v5842
    %v5844 = vadd.f32 %v5829, 1.0
    %v5845 = vadd.f32 %v5831, 1.0
    %v5846 = vadd.f32 %v5833, 1.0
    %v5847 = vadd.f32 %v5835, 1.0
    %v5848 = vadd.f32 %v5837, 1.0
    %v5849 = vadd.f32 %v5839, 1.0
    %v5850 = vadd.f32 %v5841, 1.0
    %v5851 = vadd.f32 %v5843, 1.0
    %v5852 = vrcp.pop %v5844
    %v5853 = vmul.f32 %v5844, %v5852
    %v5854 = vsub.f32 1.0, %v5853
    %v5855 = vmul.f32 %v5852, %v5854
    %v5856 = vadd.f32 %v5852, %v5855
    %vm5857 = vweird.f32 %v5844
    %vm5858 = vweird.f32 %v5852
    %vm5859 = vmor %vm5857, %vm5858
    %v5860 = vsel %vm5859, %v5852, %v5856
    %v5861 = vand.u32 2147483647, %v5844
    %vm5862 = vcmp.eq.f32.partialorder %v5861, 8.507059e+37
    %v5863 = vand.u32 %v5844, 2147483648
    %v5864 = vor.u32 1.1754944e-38, %v5863
    %v5865 = vsel %vm5862, %v5864, %v5860
    %v5866 = vmul.f32 1.0, %v5865
    %v5867 = vrcp.pop %v5845
    %v5868 = vmul.f32 %v5845, %v5867
    %v5869 = vsub.f32 1.0, %v5868
    %v5870 = vmul.f32 %v5867, %v5869
    %v5871 = vadd.f32 %v5867, %v5870
    %vm5872 = vweird.f32 %v5845
    %vm5873 = vweird.f32 %v5867
    %vm5874 = vmor %vm5872, %vm5873
    %v5875 = vsel %vm5874, %v5867, %v5871
    %v5876 = vand.u32 2147483647, %v5845
    %vm5877 = vcmp.eq.f32.partialorder %v5876, 8.507059e+37
    %v5878 = vand.u32 %v5845, 2147483648
    %v5879 = vor.u32 1.1754944e-38, %v5878
    %v5880 = vsel %vm5877, %v5879, %v5875
    %v5881 = vmul.f32 1.0, %v5880
    %v5882 = vrcp.pop %v5846
    %v5883 = vmul.f32 %v5846, %v5882
    %v5884 = vsub.f32 1.0, %v5883
    %v5885 = vmul.f32 %v5882, %v5884
    %v5886 = vadd.f32 %v5882, %v5885
    %vm5887 = vweird.f32 %v5846
    %vm5888 = vweird.f32 %v5882
    %vm5889 = vmor %vm5887, %vm5888
    %v5890 = vsel %vm5889, %v5882, %v5886
    %v5891 = vand.u32 2147483647, %v5846
    %vm5892 = vcmp.eq.f32.partialorder %v5891, 8.507059e+37
    %v5893 = vand.u32 %v5846, 2147483648
    %v5894 = vor.u32 1.1754944e-38, %v5893
    %v5895 = vsel %vm5892, %v5894, %v5890
    %v5896 = vmul.f32 1.0, %v5895
    %v5897 = vrcp.pop %v5847
    %v5898 = vmul.f32 %v5847, %v5897
    %v5899 = vsub.f32 1.0, %v5898
    %v5900 = vmul.f32 %v5897, %v5899
    %v5901 = vadd.f32 %v5897, %v5900
    %vm5902 = vweird.f32 %v5847
    %vm5903 = vweird.f32 %v5897
    %vm5904 = vmor %vm5902, %vm5903
    %v5905 = vsel %vm5904, %v5897, %v5901
    %v5906 = vand.u32 2147483647, %v5847
    %vm5907 = vcmp.eq.f32.partialorder %v5906, 8.507059e+37
    %v5908 = vand.u32 %v5847, 2147483648
    %v5909 = vor.u32 1.1754944e-38, %v5908
    %v5910 = vsel %vm5907, %v5909, %v5905
    %v5911 = vmul.f32 1.0, %v5910
    %v5912 = vrcp.pop %v5848
    %v5913 = vmul.f32 %v5848, %v5912
    %v5914 = vsub.f32 1.0, %v5913
    %v5915 = vmul.f32 %v5912, %v5914
    %v5916 = vadd.f32 %v5912, %v5915
    %vm5917 = vweird.f32 %v5848
    %vm5918 = vweird.f32 %v5912
    %vm5919 = vmor %vm5917, %vm5918
    %v5920 = vsel %vm5919, %v5912, %v5916
    %v5921 = vand.u32 2147483647, %v5848
    %vm5922 = vcmp.eq.f32.partialorder %v5921, 8.507059e+37
    %v5923 = vand.u32 %v5848, 2147483648
    %v5924 = vor.u32 1.1754944e-38, %v5923
    %v5925 = vsel %vm5922, %v5924, %v5920
    %v5926 = vmul.f32 1.0, %v5925
    %v5927 = vrcp.pop %v5849
    %v5928 = vmul.f32 %v5849, %v5927
    %v5929 = vsub.f32 1.0, %v5928
    %v5930 = vmul.f32 %v5927, %v5929
    %v5931 = vadd.f32 %v5927, %v5930
    %vm5932 = vweird.f32 %v5849
    %vm5933 = vweird.f32 %v5927
    %vm5934 = vmor %vm5932, %vm5933
    %v5935 = vsel %vm5934, %v5927, %v5931
    %v5936 = vand.u32 2147483647, %v5849
    %vm5937 = vcmp.eq.f32.partialorder %v5936, 8.507059e+37
    %v5938 = vand.u32 %v5849, 2147483648
    %v5939 = vor.u32 1.1754944e-38, %v5938
    %v5940 = vsel %vm5937, %v5939, %v5935
    %v5941 = vmul.f32 1.0, %v5940
    %v5942 = vrcp.pop %v5850
    %v5943 = vmul.f32 %v5850, %v5942
    %v5944 = vsub.f32 1.0, %v5943
    %v5945 = vmul.f32 %v5942, %v5944
    %v5946 = vadd.f32 %v5942, %v5945
    %vm5947 = vweird.f32 %v5850
    %vm5948 = vweird.f32 %v5942
    %vm5949 = vmor %vm5947, %vm5948
    %v5950 = vsel %vm5949, %v5942, %v5946
    %v5951 = vand.u32 2147483647, %v5850
    %vm5952 = vcmp.eq.f32.partialorder %v5951, 8.507059e+37
    %v5953 = vand.u32 %v5850, 2147483648
    %v5954 = vor.u32 1.1754944e-38, %v5953
    %v5955 = vsel %vm5952, %v5954, %v5950
    %v5956 = vmul.f32 1.0, %v5955
    %v5957 = vrcp.pop %v5851
    %v5958 = vmul.f32 %v5851, %v5957
    %v5959 = vsub.f32 1.0, %v5958
    %v5960 = vmul.f32 %v5957, %v5959
    %v5961 = vadd.f32 %v5957, %v5960
    %vm5962 = vweird.f32 %v5851
    %vm5963 = vweird.f32 %v5957
    %vm5964 = vmor %vm5962, %vm5963
    %v5965 = vsel %vm5964, %v5957, %v5961
    %v5966 = vand.u32 2147483647, %v5851
    %vm5967 = vcmp.eq.f32.partialorder %v5966, 8.507059e+37
    %v5968 = vand.u32 %v5851, 2147483648
    %v5969 = vor.u32 1.1754944e-38, %v5968
    %v5970 = vsel %vm5967, %v5969, %v5965
    %v5971 = vmul.f32 1.0, %v5970
    %5980 = vrot.lane.b32.xlu0 %v5743, 64
    %v5981 = vpop.permute.xlu0 %5980
    %5982 = vrot.lane.b32.xlu0 %v5746, 64
    %v5983 = vpop.permute.xlu0 %5982
    %5984 = vrot.lane.b32.xlu0 %v5749, 64
    %v5985 = vpop.permute.xlu0 %5984
    %5986 = vrot.lane.b32.xlu0 %v5752, 64
    %v5987 = vpop.permute.xlu0 %5986
    %5988 = vrot.lane.b32.xlu0 %v5755, 64
    %v5989 = vpop.permute.xlu0 %5988
    %5990 = vrot.lane.b32.xlu0 %v5758, 64
    %v5991 = vpop.permute.xlu0 %5990
    %5992 = vrot.lane.b32.xlu0 %v5761, 64
    %v5993 = vpop.permute.xlu0 %5992
    %5994 = vrot.lane.b32.xlu0 %v5764, 64
    %v5995 = vpop.permute.xlu0 %5994
    %v5996 = vsel %vm961, %v5743, 0
    %v5998 = vsel %vm961, %v5746, 0
    %v6000 = vsel %vm961, %v5749, 0
    %v6002 = vsel %vm961, %v5752, 0
    %v6004 = vsel %vm961, %v5755, 0
    %v6006 = vsel %vm961, %v5758, 0
    %v6008 = vsel %vm961, %v5761, 0
    %v6010 = vsel %vm961, %v5764, 0
    %v6012 = vsel %vm961, %v5981, 0
    %v6014 = vsel %vm961, %v5983, 0
    %v6016 = vsel %vm961, %v5985, 0
    %v6018 = vsel %vm961, %v5987, 0
    %v6020 = vsel %vm961, %v5989, 0
    %v6022 = vsel %vm961, %v5991, 0
    %v6024 = vsel %vm961, %v5993, 0
    %v6026 = vsel %vm961, %v5995, 0
    %6028 = vmatpush.xpose.msra.mxu0 0.0
    %6029 = vmatpush.xpose.msra.mxu0 0.0
    %6030 = vmatpush.xpose.msra.mxu0 0.0
    %6031 = vmatpush.xpose.msra.mxu0 0.0
    %6032 = vmatpush.xpose.msra.mxu0 0.0
    %6033 = vmatpush.xpose.msra.mxu0 0.0
    %6034 = vmatpush.xpose.msra.mxu0 0.0
    %6035 = vmatpush.xpose.msra.mxu0 0.0
    %6036 = vmatpush.xpose.msra.mxu0 %v6026
    %6037 = vmatpush.xpose.msra.mxu0 %v6024
    %6038 = vmatpush.xpose.msra.mxu0 %v6022
    %6039 = vmatpush.xpose.msra.mxu0 %v6020
    %6040 = vmatpush.xpose.msra.mxu0 %v6018
    %6041 = vmatpush.xpose.msra.mxu0 %v6016
    %6042 = vmatpush.xpose.msra.mxu0 %v6014
    %6043 = vmatpush.xpose.msra.mxu0 %v6012
    %6044 = vmatmul.f32.gmra.mxu0 %v5996
    %v6045 = vpop.f32.mrf.mxu0
    %v6046 = vadd.f32 0.0, %v6045
    %6047 = vmatmul.f32.gmra.mxu0 %v5998
    %v6048 = vpop.f32.mrf.mxu0
    %v6049 = vadd.f32 0.0, %v6048
    %6050 = vmatmul.f32.gmra.mxu0 %v6000
    %v6051 = vpop.f32.mrf.mxu0
    %v6052 = vadd.f32 0.0, %v6051
    %6053 = vmatmul.f32.gmra.mxu0 %v6002
    %v6054 = vpop.f32.mrf.mxu0
    %v6055 = vadd.f32 0.0, %v6054
    %6056 = vmatmul.f32.gmra.mxu0 %v6004
    %v6057 = vpop.f32.mrf.mxu0
    %v6058 = vadd.f32 0.0, %v6057
    %6059 = vmatmul.f32.gmra.mxu0 %v6006
    %v6060 = vpop.f32.mrf.mxu0
    %v6061 = vadd.f32 0.0, %v6060
    %6062 = vmatmul.f32.gmra.mxu0 %v6008
    %v6063 = vpop.f32.mrf.mxu0
    %v6064 = vadd.f32 0.0, %v6063
    %6065 = vmatmul.f32.gmra.mxu0 %v6010
    %v6066 = vpop.f32.mrf.mxu0
    %v6067 = vadd.f32 0.0, %v6066
    %6068 = vdwg.mxu0
    %v6069 = vsel %vm94, %v6046, -1e+30
    %v6070 = vsel %vm95, %v6049, -1e+30
    %v6071 = vsel %vm96, %v6052, -1e+30
    %v6072 = vsel %vm97, %v6055, -1e+30
    %v6073 = vsel %vm98, %v6058, -1e+30
    %v6074 = vsel %vm99, %v6061, -1e+30
    %v6075 = vsel %vm100, %v6064, -1e+30
    %v6076 = vsel %vm101, %v6067, -1e+30
    %v6077 = vsel %vm961, %v6069, -inf
    %6078 = vmax.xlane.f32.xlu0 %v6077
    %v6079 = vpop.xlane.xlu0 %6078
    %v6080 = vsel %vm961, %v6070, -inf
    %6081 = vmax.xlane.f32.xlu0 %v6080
    %v6082 = vpop.xlane.xlu0 %6081
    %v6083 = vsel %vm961, %v6071, -inf
    %6084 = vmax.xlane.f32.xlu0 %v6083
    %v6085 = vpop.xlane.xlu0 %6084
    %v6086 = vsel %vm961, %v6072, -inf
    %6087 = vmax.xlane.f32.xlu0 %v6086
    %v6088 = vpop.xlane.xlu0 %6087
    %v6089 = vsel %vm961, %v6073, -inf
    %6090 = vmax.xlane.f32.xlu0 %v6089
    %v6091 = vpop.xlane.xlu0 %6090
    %v6092 = vsel %vm961, %v6074, -inf
    %6093 = vmax.xlane.f32.xlu0 %v6092
    %v6094 = vpop.xlane.xlu0 %6093
    %v6095 = vsel %vm961, %v6075, -inf
    %6096 = vmax.xlane.f32.xlu0 %v6095
    %v6097 = vpop.xlane.xlu0 %6096
    %v6098 = vsel %vm961, %v6076, -inf
    %6099 = vmax.xlane.f32.xlu0 %v6098
    %v6100 = vpop.xlane.xlu0 %6099
    %v6101 = vsub.f32 %v6069, %v6079
    %v6102 = vsub.f32 %v6070, %v6082
    %v6103 = vsub.f32 %v6071, %v6085
    %v6104 = vsub.f32 %v6072, %v6088
    %v6105 = vsub.f32 %v6073, %v6091
    %v6106 = vsub.f32 %v6074, %v6094
    %v6107 = vsub.f32 %v6075, %v6097
    %v6108 = vsub.f32 %v6076, %v6100
    %v6109 = vmul.f32 %v6101, 1.442695
    %v6110 = vpow.pop %v6109
    %v6111 = vmul.f32 %v6102, 1.442695
    %v6112 = vpow.pop %v6111
    %v6113 = vmul.f32 %v6103, 1.442695
    %v6114 = vpow.pop %v6113
    %v6115 = vmul.f32 %v6104, 1.442695
    %v6116 = vpow.pop %v6115
    %v6117 = vmul.f32 %v6105, 1.442695
    %v6118 = vpow.pop %v6117
    %v6119 = vmul.f32 %v6106, 1.442695
    %v6120 = vpow.pop %v6119
    %v6121 = vmul.f32 %v6107, 1.442695
    %v6122 = vpow.pop %v6121
    %v6123 = vmul.f32 %v6108, 1.442695
    %v6124 = vpow.pop %v6123
    %v6125 = vsel %vm961, %v6110, 0.0
    %6126 = vadd.xlane.f32.xlu0 %v6125
    %v6127 = vpop.xlane.xlu0 %6126
    %v6128 = vsel %vm961, %v6112, 0.0
    %6129 = vadd.xlane.f32.xlu0 %v6128
    %v6130 = vpop.xlane.xlu0 %6129
    %v6131 = vsel %vm961, %v6114, 0.0
    %6132 = vadd.xlane.f32.xlu0 %v6131
    %v6133 = vpop.xlane.xlu0 %6132
    %v6134 = vsel %vm961, %v6116, 0.0
    %6135 = vadd.xlane.f32.xlu0 %v6134
    %v6136 = vpop.xlane.xlu0 %6135
    %v6137 = vsel %vm961, %v6118, 0.0
    %6138 = vadd.xlane.f32.xlu0 %v6137
    %v6139 = vpop.xlane.xlu0 %6138
    %v6140 = vsel %vm961, %v6120, 0.0
    %6141 = vadd.xlane.f32.xlu0 %v6140
    %v6142 = vpop.xlane.xlu0 %6141
    %v6143 = vsel %vm961, %v6122, 0.0
    %6144 = vadd.xlane.f32.xlu0 %v6143
    %v6145 = vpop.xlane.xlu0 %6144
    %v6146 = vsel %vm961, %v6124, 0.0
    %6147 = vadd.xlane.f32.xlu0 %v6146
    %v6148 = vpop.xlane.xlu0 %6147
    %v6149 = vrcp.pop %v6127
    %v6150 = vrcp.pop %v6130
    %v6151 = vrcp.pop %v6133
    %v6152 = vrcp.pop %v6136
    %v6153 = vrcp.pop %v6139
    %v6154 = vrcp.pop %v6142
    %v6155 = vrcp.pop %v6145
    %v6156 = vrcp.pop %v6148
    %v6157 = vmul.f32 %v6110, %v6149
    %v6158 = vmul.f32 %v6112, %v6150
    %v6159 = vmul.f32 %v6114, %v6151
    %v6160 = vmul.f32 %v6116, %v6152
    %v6161 = vmul.f32 %v6118, %v6153
    %v6162 = vmul.f32 %v6120, %v6154
    %v6163 = vmul.f32 %v6122, %v6155
    %v6164 = vmul.f32 %v6124, %v6156
    %v6166 = vsel %vm961, %v6157, 0
    %v6169 = vsel %vm961, %v6158, 0
    %v6172 = vsel %vm961, %v6159, 0
    %v6175 = vsel %vm961, %v6160, 0
    %v6178 = vsel %vm961, %v6161, 0
    %v6181 = vsel %vm961, %v6162, 0
    %v6184 = vsel %vm961, %v6163, 0
    %v6187 = vsel %vm961, %v6164, 0
    %6189 = vmatpush.msra.mxu0 0.0
    %6190 = vmatpush.msra.mxu0 0.0
    %6191 = vmatpush.msra.mxu0 0.0
    %6192 = vmatpush.msra.mxu0 0.0
    %6193 = vmatpush.msra.mxu0 0.0
    %6194 = vmatpush.msra.mxu0 0.0
    %6195 = vmatpush.msra.mxu0 0.0
    %6196 = vmatpush.msra.mxu0 0.0
    %6197 = vmatpush.msra.mxu0 %v5805
    %6198 = vmatpush.msra.mxu0 %v5802
    %6199 = vmatpush.msra.mxu0 %v5799
    %6200 = vmatpush.msra.mxu0 %v5796
    %6201 = vmatpush.msra.mxu0 %v5793
    %6202 = vmatpush.msra.mxu0 %v5790
    %6203 = vmatpush.msra.mxu0 %v5787
    %6204 = vmatpush.msra.mxu0 %v5784
    %6205 = vmatmul.f32.gmra.mxu0 %v6166
    %v6206 = vpop.f32.mrf.mxu0
    %v6207 = vadd.f32 0.0, %v6206
    %6208 = vmatmul.f32.gmra.mxu0 %v6169
    %v6209 = vpop.f32.mrf.mxu0
    %v6210 = vadd.f32 0.0, %v6209
    %6211 = vmatmul.f32.gmra.mxu0 %v6172
    %v6212 = vpop.f32.mrf.mxu0
    %v6213 = vadd.f32 0.0, %v6212
    %6214 = vmatmul.f32.gmra.mxu0 %v6175
    %v6215 = vpop.f32.mrf.mxu0
    %v6216 = vadd.f32 0.0, %v6215
    %6217 = vmatmul.f32.gmra.mxu0 %v6178
    %v6218 = vpop.f32.mrf.mxu0
    %v6219 = vadd.f32 0.0, %v6218
    %6220 = vmatmul.f32.gmra.mxu0 %v6181
    %v6221 = vpop.f32.mrf.mxu0
    %v6222 = vadd.f32 0.0, %v6221
    %6223 = vmatmul.f32.gmra.mxu0 %v6184
    %v6224 = vpop.f32.mrf.mxu0
    %v6225 = vadd.f32 0.0, %v6224
    %6226 = vmatmul.f32.gmra.mxu0 %v6187
    %v6227 = vpop.f32.mrf.mxu0
    %v6228 = vadd.f32 0.0, %v6227
    %6229 = vdwg.mxu0
    %v6230 = vld [vmem:[%s3 + $0x300] sm:$0xff]
    %v6231 = vld [vmem:[%s3 + $0x308] sm:$0xff]
    %v6232 = vld [vmem:[%s3 + $0x310] sm:$0xff]
    %v6233 = vld [vmem:[%s3 + $0x318] sm:$0xff]
    %v6234 = vld [vmem:[%s3 + $0x320] sm:$0xff]
    %v6235 = vld [vmem:[%s3 + $0x328] sm:$0xff]
    %v6236 = vld [vmem:[%s3 + $0x330] sm:$0xff]
    %v6237 = vld [vmem:[%s3 + $0x338] sm:$0xff]
    %6246 = vrot.lane.b32.xlu0 %v5866, 64
    %v6247 = vpop.permute.xlu0 %6246
    %6248 = vrot.lane.b32.xlu0 %v5881, 64
    %v6249 = vpop.permute.xlu0 %6248
    %6250 = vrot.lane.b32.xlu0 %v5896, 64
    %v6251 = vpop.permute.xlu0 %6250
    %6252 = vrot.lane.b32.xlu0 %v5911, 64
    %v6253 = vpop.permute.xlu0 %6252
    %6254 = vrot.lane.b32.xlu0 %v5926, 64
    %v6255 = vpop.permute.xlu0 %6254
    %6256 = vrot.lane.b32.xlu0 %v5941, 64
    %v6257 = vpop.permute.xlu0 %6256
    %6258 = vrot.lane.b32.xlu0 %v5956, 64
    %v6259 = vpop.permute.xlu0 %6258
    %6260 = vrot.lane.b32.xlu0 %v5971, 64
    %v6261 = vpop.permute.xlu0 %6260
    %v6270 = vmul.f32 %v6207, %v6247
    %v6271 = vmul.f32 %v6210, %v6249
    %v6272 = vmul.f32 %v6213, %v6251
    %v6273 = vmul.f32 %v6216, %v6253
    %v6274 = vmul.f32 %v6219, %v6255
    %v6275 = vmul.f32 %v6222, %v6257
    %v6276 = vmul.f32 %v6225, %v6259
    %v6277 = vmul.f32 %v6228, %v6261
    %v6278 = vld [vmem:[%s2 + $0x1b0] sm:$0xff]
    %v6279 = vld [vmem:[%s2 + $0x1b8] sm:$0xff]
    %v6280 = vld [vmem:[%s2 + $0x210] sm:$0xff]
    %v6281 = vld [vmem:[%s2 + $0x218] sm:$0xff]
    %v6282 = vld [vmem:[%s2 + $0x270] sm:$0xff]
    %v6283 = vld [vmem:[%s2 + $0x278] sm:$0xff]
    %v6284 = vld [vmem:[%s2 + $0x2d0] sm:$0xff]
    %v6285 = vld [vmem:[%s2 + $0x2d8] sm:$0xff]
    %6286 = vmatpush.msra.mxu0 0.0
    %6287 = vmatpush.msra.mxu0 0.0
    %6288 = vmatpush.msra.mxu0 0.0
    %6289 = vmatpush.msra.mxu0 0.0
    %6290 = vmatpush.msra.mxu0 0.0
    %6291 = vmatpush.msra.mxu0 0.0
    %6292 = vmatpush.msra.mxu0 0.0
    %6293 = vmatpush.msra.mxu0 0.0
    %6294 = vmatpush.msra.mxu0 0.0
    %6295 = vmatpush.msra.mxu0 0.0
    %6296 = vmatpush.msra.mxu0 0.0
    %6297 = vmatpush.msra.mxu0 0.0
    %6298 = vmatpush.msra.mxu0 %v6284
    %6299 = vmatpush.msra.mxu0 %v6282
    %6300 = vmatpush.msra.mxu0 %v6280
    %6301 = vmatpush.msra.mxu0 %v6278
    %6302 = vmatmul.f32.gmra.mxu0 %v5702
    %v6303 = vpop.f32.mrf.mxu0
    %v6304 = vadd.f32 0.0, %v6303
    %6305 = vmatmul.f32.gmra.mxu0 %v5705
    %v6306 = vpop.f32.mrf.mxu0
    %v6307 = vadd.f32 0.0, %v6306
    %6308 = vmatmul.f32.gmra.mxu0 %v5708
    %v6309 = vpop.f32.mrf.mxu0
    %v6310 = vadd.f32 0.0, %v6309
    %6311 = vmatmul.f32.gmra.mxu0 %v5711
    %v6312 = vpop.f32.mrf.mxu0
    %v6313 = vadd.f32 0.0, %v6312
    %6314 = vmatmul.f32.gmra.mxu0 %v5714
    %v6315 = vpop.f32.mrf.mxu0
    %v6316 = vadd.f32 0.0, %v6315
    %6317 = vmatmul.f32.gmra.mxu0 %v5717
    %v6318 = vpop.f32.mrf.mxu0
    %v6319 = vadd.f32 0.0, %v6318
    %6320 = vmatmul.f32.gmra.mxu0 %v5720
    %v6321 = vpop.f32.mrf.mxu0
    %v6322 = vadd.f32 0.0, %v6321
    %6323 = vmatmul.f32.gmra.mxu0 %v5723
    %v6324 = vpop.f32.mrf.mxu0
    %v6325 = vadd.f32 0.0, %v6324
    %6326 = vdwg.mxu0
    %6327 = vmatpush.msra.mxu0 0.0
    %6328 = vmatpush.msra.mxu0 0.0
    %6329 = vmatpush.msra.mxu0 0.0
    %6330 = vmatpush.msra.mxu0 0.0
    %6331 = vmatpush.msra.mxu0 0.0
    %6332 = vmatpush.msra.mxu0 0.0
    %6333 = vmatpush.msra.mxu0 0.0
    %6334 = vmatpush.msra.mxu0 0.0
    %6335 = vmatpush.msra.mxu0 0.0
    %6336 = vmatpush.msra.mxu0 0.0
    %6337 = vmatpush.msra.mxu0 0.0
    %6338 = vmatpush.msra.mxu0 0.0
    %6339 = vmatpush.msra.mxu0 %v6285
    %6340 = vmatpush.msra.mxu0 %v6283
    %6341 = vmatpush.msra.mxu0 %v6281
    %6342 = vmatpush.msra.mxu0 %v6279
    %6343 = vmatmul.f32.gmra.mxu0 %v5702
    %v6344 = vpop.f32.mrf.mxu0
    %v6345 = vadd.f32 0.0, %v6344
    %6346 = vmatmul.f32.gmra.mxu0 %v5705
    %v6347 = vpop.f32.mrf.mxu0
    %v6348 = vadd.f32 0.0, %v6347
    %6349 = vmatmul.f32.gmra.mxu0 %v5708
    %v6350 = vpop.f32.mrf.mxu0
    %v6351 = vadd.f32 0.0, %v6350
    %6352 = vmatmul.f32.gmra.mxu0 %v5711
    %v6353 = vpop.f32.mrf.mxu0
    %v6354 = vadd.f32 0.0, %v6353
    %6355 = vmatmul.f32.gmra.mxu0 %v5714
    %v6356 = vpop.f32.mrf.mxu0
    %v6357 = vadd.f32 0.0, %v6356
    %6358 = vmatmul.f32.gmra.mxu0 %v5717
    %v6359 = vpop.f32.mrf.mxu0
    %v6360 = vadd.f32 0.0, %v6359
    %6361 = vmatmul.f32.gmra.mxu0 %v5720
    %v6362 = vpop.f32.mrf.mxu0
    %v6363 = vadd.f32 0.0, %v6362
    %6364 = vmatmul.f32.gmra.mxu0 %v5723
    %v6365 = vpop.f32.mrf.mxu0
    %v6366 = vadd.f32 0.0, %v6365
    %6367 = vdwg.mxu0
    %v6368 = vadd.f32 %v6345, %v5807
    %v6369 = vadd.f32 %v6348, %v5807
    %v6370 = vadd.f32 %v6351, %v5807
    %v6371 = vadd.f32 %v6354, %v5807
    %v6372 = vadd.f32 %v6357, %v5807
    %v6373 = vadd.f32 %v6360, %v5807
    %v6374 = vadd.f32 %v6363, %v5807
    %v6375 = vadd.f32 %v6366, %v5807
    %v6376 = vxor.u32 %v6368, 2147483648
    %v6377 = vxor.u32 %v6369, 2147483648
    %v6378 = vxor.u32 %v6370, 2147483648
    %v6379 = vxor.u32 %v6371, 2147483648
    %v6380 = vxor.u32 %v6372, 2147483648
    %v6381 = vxor.u32 %v6373, 2147483648
    %v6382 = vxor.u32 %v6374, 2147483648
    %v6383 = vxor.u32 %v6375, 2147483648
    %v6384 = vmul.f32 %v6376, 1.442695
    %v6385 = vpow.pop %v6384
    %v6386 = vmul.f32 %v6377, 1.442695
    %v6387 = vpow.pop %v6386
    %v6388 = vmul.f32 %v6378, 1.442695
    %v6389 = vpow.pop %v6388
    %v6390 = vmul.f32 %v6379, 1.442695
    %v6391 = vpow.pop %v6390
    %v6392 = vmul.f32 %v6380, 1.442695
    %v6393 = vpow.pop %v6392
    %v6394 = vmul.f32 %v6381, 1.442695
    %v6395 = vpow.pop %v6394
    %v6396 = vmul.f32 %v6382, 1.442695
    %v6397 = vpow.pop %v6396
    %v6398 = vmul.f32 %v6383, 1.442695
    %v6399 = vpow.pop %v6398
    %v6400 = vadd.f32 %v6385, 1.0
    %v6401 = vadd.f32 %v6387, 1.0
    %v6402 = vadd.f32 %v6389, 1.0
    %v6403 = vadd.f32 %v6391, 1.0
    %v6404 = vadd.f32 %v6393, 1.0
    %v6405 = vadd.f32 %v6395, 1.0
    %v6406 = vadd.f32 %v6397, 1.0
    %v6407 = vadd.f32 %v6399, 1.0
    %v6408 = vrcp.pop %v6400
    %v6409 = vmul.f32 %v6400, %v6408
    %v6410 = vsub.f32 1.0, %v6409
    %v6411 = vmul.f32 %v6408, %v6410
    %v6412 = vadd.f32 %v6408, %v6411
    %vm6413 = vweird.f32 %v6400
    %vm6414 = vweird.f32 %v6408
    %vm6415 = vmor %vm6413, %vm6414
    %v6416 = vsel %vm6415, %v6408, %v6412
    %v6417 = vand.u32 2147483647, %v6400
    %vm6418 = vcmp.eq.f32.partialorder %v6417, 8.507059e+37
    %v6419 = vand.u32 %v6400, 2147483648
    %v6420 = vor.u32 1.1754944e-38, %v6419
    %v6421 = vsel %vm6418, %v6420, %v6416
    %v6422 = vmul.f32 1.0, %v6421
    %v6423 = vrcp.pop %v6401
    %v6424 = vmul.f32 %v6401, %v6423
    %v6425 = vsub.f32 1.0, %v6424
    %v6426 = vmul.f32 %v6423, %v6425
    %v6427 = vadd.f32 %v6423, %v6426
    %vm6428 = vweird.f32 %v6401
    %vm6429 = vweird.f32 %v6423
    %vm6430 = vmor %vm6428, %vm6429
    %v6431 = vsel %vm6430, %v6423, %v6427
    %v6432 = vand.u32 2147483647, %v6401
    %vm6433 = vcmp.eq.f32.partialorder %v6432, 8.507059e+37
    %v6434 = vand.u32 %v6401, 2147483648
    %v6435 = vor.u32 1.1754944e-38, %v6434
    %v6436 = vsel %vm6433, %v6435, %v6431
    %v6437 = vmul.f32 1.0, %v6436
    %v6438 = vrcp.pop %v6402
    %v6439 = vmul.f32 %v6402, %v6438
    %v6440 = vsub.f32 1.0, %v6439
    %v6441 = vmul.f32 %v6438, %v6440
    %v6442 = vadd.f32 %v6438, %v6441
    %vm6443 = vweird.f32 %v6402
    %vm6444 = vweird.f32 %v6438
    %vm6445 = vmor %vm6443, %vm6444
    %v6446 = vsel %vm6445, %v6438, %v6442
    %v6447 = vand.u32 2147483647, %v6402
    %vm6448 = vcmp.eq.f32.partialorder %v6447, 8.507059e+37
    %v6449 = vand.u32 %v6402, 2147483648
    %v6450 = vor.u32 1.1754944e-38, %v6449
    %v6451 = vsel %vm6448, %v6450, %v6446
    %v6452 = vmul.f32 1.0, %v6451
    %v6453 = vrcp.pop %v6403
    %v6454 = vmul.f32 %v6403, %v6453
    %v6455 = vsub.f32 1.0, %v6454
    %v6456 = vmul.f32 %v6453, %v6455
    %v6457 = vadd.f32 %v6453, %v6456
    %vm6458 = vweird.f32 %v6403
    %vm6459 = vweird.f32 %v6453
    %vm6460 = vmor %vm6458, %vm6459
    %v6461 = vsel %vm6460, %v6453, %v6457
    %v6462 = vand.u32 2147483647, %v6403
    %vm6463 = vcmp.eq.f32.partialorder %v6462, 8.507059e+37
    %v6464 = vand.u32 %v6403, 2147483648
    %v6465 = vor.u32 1.1754944e-38, %v6464
    %v6466 = vsel %vm6463, %v6465, %v6461
    %v6467 = vmul.f32 1.0, %v6466
    %v6468 = vrcp.pop %v6404
    %v6469 = vmul.f32 %v6404, %v6468
    %v6470 = vsub.f32 1.0, %v6469
    %v6471 = vmul.f32 %v6468, %v6470
    %v6472 = vadd.f32 %v6468, %v6471
    %vm6473 = vweird.f32 %v6404
    %vm6474 = vweird.f32 %v6468
    %vm6475 = vmor %vm6473, %vm6474
    %v6476 = vsel %vm6475, %v6468, %v6472
    %v6477 = vand.u32 2147483647, %v6404
    %vm6478 = vcmp.eq.f32.partialorder %v6477, 8.507059e+37
    %v6479 = vand.u32 %v6404, 2147483648
    %v6480 = vor.u32 1.1754944e-38, %v6479
    %v6481 = vsel %vm6478, %v6480, %v6476
    %v6482 = vmul.f32 1.0, %v6481
    %v6483 = vrcp.pop %v6405
    %v6484 = vmul.f32 %v6405, %v6483
    %v6485 = vsub.f32 1.0, %v6484
    %v6486 = vmul.f32 %v6483, %v6485
    %v6487 = vadd.f32 %v6483, %v6486
    %vm6488 = vweird.f32 %v6405
    %vm6489 = vweird.f32 %v6483
    %vm6490 = vmor %vm6488, %vm6489
    %v6491 = vsel %vm6490, %v6483, %v6487
    %v6492 = vand.u32 2147483647, %v6405
    %vm6493 = vcmp.eq.f32.partialorder %v6492, 8.507059e+37
    %v6494 = vand.u32 %v6405, 2147483648
    %v6495 = vor.u32 1.1754944e-38, %v6494
    %v6496 = vsel %vm6493, %v6495, %v6491
    %v6497 = vmul.f32 1.0, %v6496
    %v6498 = vrcp.pop %v6406
    %v6499 = vmul.f32 %v6406, %v6498
    %v6500 = vsub.f32 1.0, %v6499
    %v6501 = vmul.f32 %v6498, %v6500
    %v6502 = vadd.f32 %v6498, %v6501
    %vm6503 = vweird.f32 %v6406
    %vm6504 = vweird.f32 %v6498
    %vm6505 = vmor %vm6503, %vm6504
    %v6506 = vsel %vm6505, %v6498, %v6502
    %v6507 = vand.u32 2147483647, %v6406
    %vm6508 = vcmp.eq.f32.partialorder %v6507, 8.507059e+37
    %v6509 = vand.u32 %v6406, 2147483648
    %v6510 = vor.u32 1.1754944e-38, %v6509
    %v6511 = vsel %vm6508, %v6510, %v6506
    %v6512 = vmul.f32 1.0, %v6511
    %v6513 = vrcp.pop %v6407
    %v6514 = vmul.f32 %v6407, %v6513
    %v6515 = vsub.f32 1.0, %v6514
    %v6516 = vmul.f32 %v6513, %v6515
    %v6517 = vadd.f32 %v6513, %v6516
    %vm6518 = vweird.f32 %v6407
    %vm6519 = vweird.f32 %v6513
    %vm6520 = vmor %vm6518, %vm6519
    %v6521 = vsel %vm6520, %v6513, %v6517
    %v6522 = vand.u32 2147483647, %v6407
    %vm6523 = vcmp.eq.f32.partialorder %v6522, 8.507059e+37
    %v6524 = vand.u32 %v6407, 2147483648
    %v6525 = vor.u32 1.1754944e-38, %v6524
    %v6526 = vsel %vm6523, %v6525, %v6521
    %v6527 = vmul.f32 1.0, %v6526
    %6536 = vrot.lane.b32.xlu0 %v6304, 64
    %v6537 = vpop.permute.xlu0 %6536
    %6538 = vrot.lane.b32.xlu0 %v6307, 64
    %v6539 = vpop.permute.xlu0 %6538
    %6540 = vrot.lane.b32.xlu0 %v6310, 64
    %v6541 = vpop.permute.xlu0 %6540
    %6542 = vrot.lane.b32.xlu0 %v6313, 64
    %v6543 = vpop.permute.xlu0 %6542
    %6544 = vrot.lane.b32.xlu0 %v6316, 64
    %v6545 = vpop.permute.xlu0 %6544
    %6546 = vrot.lane.b32.xlu0 %v6319, 64
    %v6547 = vpop.permute.xlu0 %6546
    %6548 = vrot.lane.b32.xlu0 %v6322, 64
    %v6549 = vpop.permute.xlu0 %6548
    %6550 = vrot.lane.b32.xlu0 %v6325, 64
    %v6551 = vpop.permute.xlu0 %6550
    %v6552 = vsel %vm961, %v6304, 0
    %v6554 = vsel %vm961, %v6307, 0
    %v6556 = vsel %vm961, %v6310, 0
    %v6558 = vsel %vm961, %v6313, 0
    %v6560 = vsel %vm961, %v6316, 0
    %v6562 = vsel %vm961, %v6319, 0
    %v6564 = vsel %vm961, %v6322, 0
    %v6566 = vsel %vm961, %v6325, 0
    %v6568 = vsel %vm961, %v6537, 0
    %v6570 = vsel %vm961, %v6539, 0
    %v6572 = vsel %vm961, %v6541, 0
    %v6574 = vsel %vm961, %v6543, 0
    %v6576 = vsel %vm961, %v6545, 0
    %v6578 = vsel %vm961, %v6547, 0
    %v6580 = vsel %vm961, %v6549, 0
    %v6582 = vsel %vm961, %v6551, 0
    %6584 = vmatpush.xpose.msra.mxu0 0.0
    %6585 = vmatpush.xpose.msra.mxu0 0.0
    %6586 = vmatpush.xpose.msra.mxu0 0.0
    %6587 = vmatpush.xpose.msra.mxu0 0.0
    %6588 = vmatpush.xpose.msra.mxu0 0.0
    %6589 = vmatpush.xpose.msra.mxu0 0.0
    %6590 = vmatpush.xpose.msra.mxu0 0.0
    %6591 = vmatpush.xpose.msra.mxu0 0.0
    %6592 = vmatpush.xpose.msra.mxu0 %v6582
    %6593 = vmatpush.xpose.msra.mxu0 %v6580
    %6594 = vmatpush.xpose.msra.mxu0 %v6578
    %6595 = vmatpush.xpose.msra.mxu0 %v6576
    %6596 = vmatpush.xpose.msra.mxu0 %v6574
    %6597 = vmatpush.xpose.msra.mxu0 %v6572
    %6598 = vmatpush.xpose.msra.mxu0 %v6570
    %6599 = vmatpush.xpose.msra.mxu0 %v6568
    %6600 = vmatmul.f32.gmra.mxu0 %v6552
    %v6601 = vpop.f32.mrf.mxu0
    %v6602 = vadd.f32 0.0, %v6601
    %6603 = vmatmul.f32.gmra.mxu0 %v6554
    %v6604 = vpop.f32.mrf.mxu0
    %v6605 = vadd.f32 0.0, %v6604
    %6606 = vmatmul.f32.gmra.mxu0 %v6556
    %v6607 = vpop.f32.mrf.mxu0
    %v6608 = vadd.f32 0.0, %v6607
    %6609 = vmatmul.f32.gmra.mxu0 %v6558
    %v6610 = vpop.f32.mrf.mxu0
    %v6611 = vadd.f32 0.0, %v6610
    %6612 = vmatmul.f32.gmra.mxu0 %v6560
    %v6613 = vpop.f32.mrf.mxu0
    %v6614 = vadd.f32 0.0, %v6613
    %6615 = vmatmul.f32.gmra.mxu0 %v6562
    %v6616 = vpop.f32.mrf.mxu0
    %v6617 = vadd.f32 0.0, %v6616
    %6618 = vmatmul.f32.gmra.mxu0 %v6564
    %v6619 = vpop.f32.mrf.mxu0
    %v6620 = vadd.f32 0.0, %v6619
    %6621 = vmatmul.f32.gmra.mxu0 %v6566
    %v6622 = vpop.f32.mrf.mxu0
    %v6623 = vadd.f32 0.0, %v6622
    %6624 = vdwg.mxu0
    %v6625 = vsel %vm94, %v6602, -1e+30
    %v6626 = vsel %vm95, %v6605, -1e+30
    %v6627 = vsel %vm96, %v6608, -1e+30
    %v6628 = vsel %vm97, %v6611, -1e+30
    %v6629 = vsel %vm98, %v6614, -1e+30
    %v6630 = vsel %vm99, %v6617, -1e+30
    %v6631 = vsel %vm100, %v6620, -1e+30
    %v6632 = vsel %vm101, %v6623, -1e+30
    %v6633 = vsel %vm961, %v6625, -inf
    %6634 = vmax.xlane.f32.xlu0 %v6633
    %v6635 = vpop.xlane.xlu0 %6634
    %v6636 = vsel %vm961, %v6626, -inf
    %6637 = vmax.xlane.f32.xlu0 %v6636
    %v6638 = vpop.xlane.xlu0 %6637
    %v6639 = vsel %vm961, %v6627, -inf
    %6640 = vmax.xlane.f32.xlu0 %v6639
    %v6641 = vpop.xlane.xlu0 %6640
    %v6642 = vsel %vm961, %v6628, -inf
    %6643 = vmax.xlane.f32.xlu0 %v6642
    %v6644 = vpop.xlane.xlu0 %6643
    %v6645 = vsel %vm961, %v6629, -inf
    %6646 = vmax.xlane.f32.xlu0 %v6645
    %v6647 = vpop.xlane.xlu0 %6646
    %v6648 = vsel %vm961, %v6630, -inf
    %6649 = vmax.xlane.f32.xlu0 %v6648
    %v6650 = vpop.xlane.xlu0 %6649
    %v6651 = vsel %vm961, %v6631, -inf
    %6652 = vmax.xlane.f32.xlu0 %v6651
    %v6653 = vpop.xlane.xlu0 %6652
    %v6654 = vsel %vm961, %v6632, -inf
    %6655 = vmax.xlane.f32.xlu0 %v6654
    %v6656 = vpop.xlane.xlu0 %6655
    %v6657 = vsub.f32 %v6625, %v6635
    %v6658 = vsub.f32 %v6626, %v6638
    %v6659 = vsub.f32 %v6627, %v6641
    %v6660 = vsub.f32 %v6628, %v6644
    %v6661 = vsub.f32 %v6629, %v6647
    %v6662 = vsub.f32 %v6630, %v6650
    %v6663 = vsub.f32 %v6631, %v6653
    %v6664 = vsub.f32 %v6632, %v6656
    %v6665 = vmul.f32 %v6657, 1.442695
    %v6666 = vpow.pop %v6665
    %v6667 = vmul.f32 %v6658, 1.442695
    %v6668 = vpow.pop %v6667
    %v6669 = vmul.f32 %v6659, 1.442695
    %v6670 = vpow.pop %v6669
    %v6671 = vmul.f32 %v6660, 1.442695
    %v6672 = vpow.pop %v6671
    %v6673 = vmul.f32 %v6661, 1.442695
    %v6674 = vpow.pop %v6673
    %v6675 = vmul.f32 %v6662, 1.442695
    %v6676 = vpow.pop %v6675
    %v6677 = vmul.f32 %v6663, 1.442695
    %v6678 = vpow.pop %v6677
    %v6679 = vmul.f32 %v6664, 1.442695
    %v6680 = vpow.pop %v6679
    %v6681 = vsel %vm961, %v6666, 0.0
    %6682 = vadd.xlane.f32.xlu0 %v6681
    %v6683 = vpop.xlane.xlu0 %6682
    %v6684 = vsel %vm961, %v6668, 0.0
    %6685 = vadd.xlane.f32.xlu0 %v6684
    %v6686 = vpop.xlane.xlu0 %6685
    %v6687 = vsel %vm961, %v6670, 0.0
    %6688 = vadd.xlane.f32.xlu0 %v6687
    %v6689 = vpop.xlane.xlu0 %6688
    %v6690 = vsel %vm961, %v6672, 0.0
    %6691 = vadd.xlane.f32.xlu0 %v6690
    %v6692 = vpop.xlane.xlu0 %6691
    %v6693 = vsel %vm961, %v6674, 0.0
    %6694 = vadd.xlane.f32.xlu0 %v6693
    %v6695 = vpop.xlane.xlu0 %6694
    %v6696 = vsel %vm961, %v6676, 0.0
    %6697 = vadd.xlane.f32.xlu0 %v6696
    %v6698 = vpop.xlane.xlu0 %6697
    %v6699 = vsel %vm961, %v6678, 0.0
    %6700 = vadd.xlane.f32.xlu0 %v6699
    %v6701 = vpop.xlane.xlu0 %6700
    %v6702 = vsel %vm961, %v6680, 0.0
    %6703 = vadd.xlane.f32.xlu0 %v6702
    %v6704 = vpop.xlane.xlu0 %6703
    %v6705 = vrcp.pop %v6683
    %v6706 = vrcp.pop %v6686
    %v6707 = vrcp.pop %v6689
    %v6708 = vrcp.pop %v6692
    %v6709 = vrcp.pop %v6695
    %v6710 = vrcp.pop %v6698
    %v6711 = vrcp.pop %v6701
    %v6712 = vrcp.pop %v6704
    %v6713 = vmul.f32 %v6666, %v6705
    %v6714 = vmul.f32 %v6668, %v6706
    %v6715 = vmul.f32 %v6670, %v6707
    %v6716 = vmul.f32 %v6672, %v6708
    %v6717 = vmul.f32 %v6674, %v6709
    %v6718 = vmul.f32 %v6676, %v6710
    %v6719 = vmul.f32 %v6678, %v6711
    %v6720 = vmul.f32 %v6680, %v6712
    %v6722 = vsel %vm961, %v6713, 0
    %v6725 = vsel %vm961, %v6714, 0
    %v6728 = vsel %vm961, %v6715, 0
    %v6731 = vsel %vm961, %v6716, 0
    %v6734 = vsel %vm961, %v6717, 0
    %v6737 = vsel %vm961, %v6718, 0
    %v6740 = vsel %vm961, %v6719, 0
    %v6743 = vsel %vm961, %v6720, 0
    %6745 = vmatpush.msra.mxu0 0.0
    %6746 = vmatpush.msra.mxu0 0.0
    %6747 = vmatpush.msra.mxu0 0.0
    %6748 = vmatpush.msra.mxu0 0.0
    %6749 = vmatpush.msra.mxu0 0.0
    %6750 = vmatpush.msra.mxu0 0.0
    %6751 = vmatpush.msra.mxu0 0.0
    %6752 = vmatpush.msra.mxu0 0.0
    %6753 = vmatpush.msra.mxu0 %v6366
    %6754 = vmatpush.msra.mxu0 %v6363
    %6755 = vmatpush.msra.mxu0 %v6360
    %6756 = vmatpush.msra.mxu0 %v6357
    %6757 = vmatpush.msra.mxu0 %v6354
    %6758 = vmatpush.msra.mxu0 %v6351
    %6759 = vmatpush.msra.mxu0 %v6348
    %6760 = vmatpush.msra.mxu0 %v6345
    %6761 = vmatmul.f32.gmra.mxu0 %v6722
    %v6762 = vpop.f32.mrf.mxu0
    %v6763 = vadd.f32 0.0, %v6762
    %6764 = vmatmul.f32.gmra.mxu0 %v6725
    %v6765 = vpop.f32.mrf.mxu0
    %v6766 = vadd.f32 0.0, %v6765
    %6767 = vmatmul.f32.gmra.mxu0 %v6728
    %v6768 = vpop.f32.mrf.mxu0
    %v6769 = vadd.f32 0.0, %v6768
    %6770 = vmatmul.f32.gmra.mxu0 %v6731
    %v6771 = vpop.f32.mrf.mxu0
    %v6772 = vadd.f32 0.0, %v6771
    %6773 = vmatmul.f32.gmra.mxu0 %v6734
    %v6774 = vpop.f32.mrf.mxu0
    %v6775 = vadd.f32 0.0, %v6774
    %6776 = vmatmul.f32.gmra.mxu0 %v6737
    %v6777 = vpop.f32.mrf.mxu0
    %v6778 = vadd.f32 0.0, %v6777
    %6779 = vmatmul.f32.gmra.mxu0 %v6740
    %v6780 = vpop.f32.mrf.mxu0
    %v6781 = vadd.f32 0.0, %v6780
    %6782 = vmatmul.f32.gmra.mxu0 %v6743
    %v6783 = vpop.f32.mrf.mxu0
    %v6784 = vadd.f32 0.0, %v6783
    %6785 = vdwg.mxu0
    %v6786 = vld [vmem:[%s3 + $0x340] sm:$0xff]
    %v6787 = vld [vmem:[%s3 + $0x348] sm:$0xff]
    %v6788 = vld [vmem:[%s3 + $0x350] sm:$0xff]
    %v6789 = vld [vmem:[%s3 + $0x358] sm:$0xff]
    %v6790 = vld [vmem:[%s3 + $0x360] sm:$0xff]
    %v6791 = vld [vmem:[%s3 + $0x368] sm:$0xff]
    %v6792 = vld [vmem:[%s3 + $0x370] sm:$0xff]
    %v6793 = vld [vmem:[%s3 + $0x378] sm:$0xff]
    %6802 = vrot.lane.b32.xlu0 %v6422, 64
    %v6803 = vpop.permute.xlu0 %6802
    %6804 = vrot.lane.b32.xlu0 %v6437, 64
    %v6805 = vpop.permute.xlu0 %6804
    %6806 = vrot.lane.b32.xlu0 %v6452, 64
    %v6807 = vpop.permute.xlu0 %6806
    %6808 = vrot.lane.b32.xlu0 %v6467, 64
    %v6809 = vpop.permute.xlu0 %6808
    %6810 = vrot.lane.b32.xlu0 %v6482, 64
    %v6811 = vpop.permute.xlu0 %6810
    %6812 = vrot.lane.b32.xlu0 %v6497, 64
    %v6813 = vpop.permute.xlu0 %6812
    %6814 = vrot.lane.b32.xlu0 %v6512, 64
    %v6815 = vpop.permute.xlu0 %6814
    %6816 = vrot.lane.b32.xlu0 %v6527, 64
    %v6817 = vpop.permute.xlu0 %6816
    %v6826 = vmul.f32 %v6763, %v6803
    %v6827 = vmul.f32 %v6766, %v6805
    %v6828 = vmul.f32 %v6769, %v6807
    %v6829 = vmul.f32 %v6772, %v6809
    %v6830 = vmul.f32 %v6775, %v6811
    %v6831 = vmul.f32 %v6778, %v6813
    %v6832 = vmul.f32 %v6781, %v6815
    %v6833 = vmul.f32 %v6784, %v6817
    %v6835 = vsel %vm961, %v6826, 0
    %v6838 = vsel %vm961, %v6827, 0
    %v6841 = vsel %vm961, %v6828, 0
    %v6844 = vsel %vm961, %v6829, 0
    %v6847 = vsel %vm961, %v6830, 0
    %v6850 = vsel %vm961, %v6831, 0
    %v6853 = vsel %vm961, %v6832, 0
    %v6856 = vsel %vm961, %v6833, 0
    %6858 = vmatpush.msra.mxu0 0.0
    %6859 = vmatpush.msra.mxu0 0.0
    %6860 = vmatpush.msra.mxu0 0.0
    %6861 = vmatpush.msra.mxu0 0.0
    %6862 = vmatpush.msra.mxu0 0.0
    %6863 = vmatpush.msra.mxu0 0.0
    %6864 = vmatpush.msra.mxu0 0.0
    %6865 = vmatpush.msra.mxu0 0.0
    %6866 = vmatpush.msra.mxu0 %v6793
    %6867 = vmatpush.msra.mxu0 %v6792
    %6868 = vmatpush.msra.mxu0 %v6791
    %6869 = vmatpush.msra.mxu0 %v6790
    %6870 = vmatpush.msra.mxu0 %v6789
    %6871 = vmatpush.msra.mxu0 %v6788
    %6872 = vmatpush.msra.mxu0 %v6787
    %6873 = vmatpush.msra.mxu0 %v6786
    %6874 = vmatmul.f32.gmra.mxu0 %v6835
    %v6875 = vpop.f32.mrf.mxu0
    %v6876 = vadd.f32 0.0, %v6875
    %6877 = vmatmul.f32.gmra.mxu0 %v6838
    %v6878 = vpop.f32.mrf.mxu0
    %6879 = vmatmul.f32.gmra.mxu0 %v6841
    %v6880 = vpop.f32.mrf.mxu0
    %6881 = vmatmul.f32.gmra.mxu0 %v6844
    %v6882 = vpop.f32.mrf.mxu0
    %6883 = vmatmul.f32.gmra.mxu0 %v6847
    %v6884 = vpop.f32.mrf.mxu0
    %v6885 = vadd.f32 0.0, %v6884
    %6886 = vmatmul.f32.gmra.mxu0 %v6850
    %v6887 = vpop.f32.mrf.mxu0
    %6888 = vmatmul.f32.gmra.mxu0 %v6853
    %v6889 = vpop.f32.mrf.mxu0
    %6890 = vmatmul.f32.gmra.mxu0 %v6856
    %v6891 = vpop.f32.mrf.mxu0
    %6892 = vdwg.mxu0
    %v6894 = vsel %vm961, %v6270, 0
    %v6897 = vsel %vm961, %v6271, 0
    %v6900 = vsel %vm961, %v6272, 0
    %v6903 = vsel %vm961, %v6273, 0
    %v6906 = vsel %vm961, %v6274, 0
    %v6909 = vsel %vm961, %v6275, 0
    %v6912 = vsel %vm961, %v6276, 0
    %v6915 = vsel %vm961, %v6277, 0
    %6917 = vmatpush.msra.mxu0 0.0
    %6918 = vmatpush.msra.mxu0 0.0
    %6919 = vmatpush.msra.mxu0 0.0
    %6920 = vmatpush.msra.mxu0 0.0
    %6921 = vmatpush.msra.mxu0 0.0
    %6922 = vmatpush.msra.mxu0 0.0
    %6923 = vmatpush.msra.mxu0 0.0
    %6924 = vmatpush.msra.mxu0 0.0
    %6925 = vmatpush.msra.mxu0 %v6237
    %6926 = vmatpush.msra.mxu0 %v6236
    %6927 = vmatpush.msra.mxu0 %v6235
    %6928 = vmatpush.msra.mxu0 %v6234
    %6929 = vmatpush.msra.mxu0 %v6233
    %6930 = vmatpush.msra.mxu0 %v6232
    %6931 = vmatpush.msra.mxu0 %v6231
    %6932 = vmatpush.msra.mxu0 %v6230
    %6933 = vmatmul.f32.gmra.mxu0 %v6894
    %v6934 = vpop.f32.mrf.mxu0
    %v6935 = vadd.f32 %v6876, %v6934
    %6936 = vmatmul.f32.gmra.mxu0 %v6897
    %v6937 = vpop.f32.mrf.mxu0
    %6938 = vmatmul.f32.gmra.mxu0 %v6900
    %v6939 = vpop.f32.mrf.mxu0
    %6940 = vmatmul.f32.gmra.mxu0 %v6903
    %v6941 = vpop.f32.mrf.mxu0
    %6942 = vmatmul.f32.gmra.mxu0 %v6906
    %v6943 = vpop.f32.mrf.mxu0
    %v6944 = vadd.f32 %v6885, %v6943
    %6945 = vmatmul.f32.gmra.mxu0 %v6909
    %v6946 = vpop.f32.mrf.mxu0
    %6947 = vmatmul.f32.gmra.mxu0 %v6912
    %v6948 = vpop.f32.mrf.mxu0
    %6949 = vmatmul.f32.gmra.mxu0 %v6915
    %v6950 = vpop.f32.mrf.mxu0
    %6951 = vdwg.mxu0
    %v6952 = vld [vmem:[%s2 + $0x1c0] sm:$0xff]
    %v6953 = vld [vmem:[%s2 + $0x1c8] sm:$0xff]
    %v6954 = vld [vmem:[%s2 + $0x220] sm:$0xff]
    %v6955 = vld [vmem:[%s2 + $0x228] sm:$0xff]
    %v6956 = vld [vmem:[%s2 + $0x280] sm:$0xff]
    %v6957 = vld [vmem:[%s2 + $0x288] sm:$0xff]
    %v6958 = vld [vmem:[%s2 + $0x2e0] sm:$0xff]
    %v6959 = vld [vmem:[%s2 + $0x2e8] sm:$0xff]
    %6960 = vmatpush.msra.mxu0 0.0
    %6961 = vmatpush.msra.mxu0 0.0
    %6962 = vmatpush.msra.mxu0 0.0
    %6963 = vmatpush.msra.mxu0 0.0
    %6964 = vmatpush.msra.mxu0 0.0
    %6965 = vmatpush.msra.mxu0 0.0
    %6966 = vmatpush.msra.mxu0 0.0
    %6967 = vmatpush.msra.mxu0 0.0
    %6968 = vmatpush.msra.mxu0 0.0
    %6969 = vmatpush.msra.mxu0 0.0
    %6970 = vmatpush.msra.mxu0 0.0
    %6971 = vmatpush.msra.mxu0 0.0
    %6972 = vmatpush.msra.mxu0 %v6958
    %6973 = vmatpush.msra.mxu0 %v6956
    %6974 = vmatpush.msra.mxu0 %v6954
    %6975 = vmatpush.msra.mxu0 %v6952
    %6976 = vmatmul.f32.gmra.mxu0 %v5702
    %v6977 = vpop.f32.mrf.mxu0
    %v6978 = vadd.f32 0.0, %v6977
    %6979 = vmatmul.f32.gmra.mxu0 %v5705
    %v6980 = vpop.f32.mrf.mxu0
    %v6981 = vadd.f32 0.0, %v6980
    %6982 = vmatmul.f32.gmra.mxu0 %v5708
    %v6983 = vpop.f32.mrf.mxu0
    %v6984 = vadd.f32 0.0, %v6983
    %6985 = vmatmul.f32.gmra.mxu0 %v5711
    %v6986 = vpop.f32.mrf.mxu0
    %v6987 = vadd.f32 0.0, %v6986
    %6988 = vmatmul.f32.gmra.mxu0 %v5714
    %v6989 = vpop.f32.mrf.mxu0
    %v6990 = vadd.f32 0.0, %v6989
    %6991 = vmatmul.f32.gmra.mxu0 %v5717
    %v6992 = vpop.f32.mrf.mxu0
    %v6993 = vadd.f32 0.0, %v6992
    %6994 = vmatmul.f32.gmra.mxu0 %v5720
    %v6995 = vpop.f32.mrf.mxu0
    %v6996 = vadd.f32 0.0, %v6995
    %6997 = vmatmul.f32.gmra.mxu0 %v5723
    %v6998 = vpop.f32.mrf.mxu0
    %v6999 = vadd.f32 0.0, %v6998
    %7000 = vdwg.mxu0
    %7001 = vmatpush.msra.mxu0 0.0
    %7002 = vmatpush.msra.mxu0 0.0
    %7003 = vmatpush.msra.mxu0 0.0
    %7004 = vmatpush.msra.mxu0 0.0
    %7005 = vmatpush.msra.mxu0 0.0
    %7006 = vmatpush.msra.mxu0 0.0
    %7007 = vmatpush.msra.mxu0 0.0
    %7008 = vmatpush.msra.mxu0 0.0
    %7009 = vmatpush.msra.mxu0 0.0
    %7010 = vmatpush.msra.mxu0 0.0
    %7011 = vmatpush.msra.mxu0 0.0
    %7012 = vmatpush.msra.mxu0 0.0
    %7013 = vmatpush.msra.mxu0 %v6959
    %7014 = vmatpush.msra.mxu0 %v6957
    %7015 = vmatpush.msra.mxu0 %v6955
    %7016 = vmatpush.msra.mxu0 %v6953
    %7017 = vmatmul.f32.gmra.mxu0 %v5702
    %v7018 = vpop.f32.mrf.mxu0
    %v7019 = vadd.f32 0.0, %v7018
    %7020 = vmatmul.f32.gmra.mxu0 %v5705
    %v7021 = vpop.f32.mrf.mxu0
    %v7022 = vadd.f32 0.0, %v7021
    %7023 = vmatmul.f32.gmra.mxu0 %v5708
    %v7024 = vpop.f32.mrf.mxu0
    %v7025 = vadd.f32 0.0, %v7024
    %7026 = vmatmul.f32.gmra.mxu0 %v5711
    %v7027 = vpop.f32.mrf.mxu0
    %v7028 = vadd.f32 0.0, %v7027
    %7029 = vmatmul.f32.gmra.mxu0 %v5714
    %v7030 = vpop.f32.mrf.mxu0
    %v7031 = vadd.f32 0.0, %v7030
    %7032 = vmatmul.f32.gmra.mxu0 %v5717
    %v7033 = vpop.f32.mrf.mxu0
    %v7034 = vadd.f32 0.0, %v7033
    %7035 = vmatmul.f32.gmra.mxu0 %v5720
    %v7036 = vpop.f32.mrf.mxu0
    %v7037 = vadd.f32 0.0, %v7036
    %7038 = vmatmul.f32.gmra.mxu0 %v5723
    %v7039 = vpop.f32.mrf.mxu0
    %v7040 = vadd.f32 0.0, %v7039
    %7041 = vdwg.mxu0
    %v7042 = vperm.slane %v231, 7
    %7044 = vrot.lane.b32.xlu0 %v7042, 64
    %v7045 = vpop.permute.xlu0 %7044
    %v7047 = vadd.f32 %v7019, %v7045
    %v7048 = vadd.f32 %v7022, %v7045
    %v7049 = vadd.f32 %v7025, %v7045
    %v7050 = vadd.f32 %v7028, %v7045
    %v7051 = vadd.f32 %v7031, %v7045
    %v7052 = vadd.f32 %v7034, %v7045
    %v7053 = vadd.f32 %v7037, %v7045
    %v7054 = vadd.f32 %v7040, %v7045
    %v7055 = vxor.u32 %v7047, 2147483648
    %v7056 = vxor.u32 %v7048, 2147483648
    %v7057 = vxor.u32 %v7049, 2147483648
    %v7058 = vxor.u32 %v7050, 2147483648
    %v7059 = vxor.u32 %v7051, 2147483648
    %v7060 = vxor.u32 %v7052, 2147483648
    %v7061 = vxor.u32 %v7053, 2147483648
    %v7062 = vxor.u32 %v7054, 2147483648
    %v7063 = vmul.f32 %v7055, 1.442695
    %v7064 = vpow.pop %v7063
    %v7065 = vmul.f32 %v7056, 1.442695
    %v7066 = vpow.pop %v7065
    %v7067 = vmul.f32 %v7057, 1.442695
    %v7068 = vpow.pop %v7067
    %v7069 = vmul.f32 %v7058, 1.442695
    %v7070 = vpow.pop %v7069
    %v7071 = vmul.f32 %v7059, 1.442695
    %v7072 = vpow.pop %v7071
    %v7073 = vmul.f32 %v7060, 1.442695
    %v7074 = vpow.pop %v7073
    %v7075 = vmul.f32 %v7061, 1.442695
    %v7076 = vpow.pop %v7075
    %v7077 = vmul.f32 %v7062, 1.442695
    %v7078 = vpow.pop %v7077
    %v7079 = vadd.f32 %v7064, 1.0
    %v7080 = vadd.f32 %v7066, 1.0
    %v7081 = vadd.f32 %v7068, 1.0
    %v7082 = vadd.f32 %v7070, 1.0
    %v7083 = vadd.f32 %v7072, 1.0
    %v7084 = vadd.f32 %v7074, 1.0
    %v7085 = vadd.f32 %v7076, 1.0
    %v7086 = vadd.f32 %v7078, 1.0
    %v7087 = vrcp.pop %v7079
    %v7088 = vmul.f32 %v7079, %v7087
    %v7089 = vsub.f32 1.0, %v7088
    %v7090 = vmul.f32 %v7087, %v7089
    %v7091 = vadd.f32 %v7087, %v7090
    %vm7092 = vweird.f32 %v7079
    %vm7093 = vweird.f32 %v7087
    %vm7094 = vmor %vm7092, %vm7093
    %v7095 = vsel %vm7094, %v7087, %v7091
    %v7096 = vand.u32 2147483647, %v7079
    %vm7097 = vcmp.eq.f32.partialorder %v7096, 8.507059e+37
    %v7098 = vand.u32 %v7079, 2147483648
    %v7099 = vor.u32 1.1754944e-38, %v7098
    %v7100 = vsel %vm7097, %v7099, %v7095
    %v7101 = vmul.f32 1.0, %v7100
    %v7102 = vrcp.pop %v7080
    %v7103 = vmul.f32 %v7080, %v7102
    %v7104 = vsub.f32 1.0, %v7103
    %v7105 = vmul.f32 %v7102, %v7104
    %v7106 = vadd.f32 %v7102, %v7105
    %vm7107 = vweird.f32 %v7080
    %vm7108 = vweird.f32 %v7102
    %vm7109 = vmor %vm7107, %vm7108
    %v7110 = vsel %vm7109, %v7102, %v7106
    %v7111 = vand.u32 2147483647, %v7080
    %vm7112 = vcmp.eq.f32.partialorder %v7111, 8.507059e+37
    %v7113 = vand.u32 %v7080, 2147483648
    %v7114 = vor.u32 1.1754944e-38, %v7113
    %v7115 = vsel %vm7112, %v7114, %v7110
    %v7116 = vmul.f32 1.0, %v7115
    %v7117 = vrcp.pop %v7081
    %v7118 = vmul.f32 %v7081, %v7117
    %v7119 = vsub.f32 1.0, %v7118
    %v7120 = vmul.f32 %v7117, %v7119
    %v7121 = vadd.f32 %v7117, %v7120
    %vm7122 = vweird.f32 %v7081
    %vm7123 = vweird.f32 %v7117
    %vm7124 = vmor %vm7122, %vm7123
    %v7125 = vsel %vm7124, %v7117, %v7121
    %v7126 = vand.u32 2147483647, %v7081
    %vm7127 = vcmp.eq.f32.partialorder %v7126, 8.507059e+37
    %v7128 = vand.u32 %v7081, 2147483648
    %v7129 = vor.u32 1.1754944e-38, %v7128
    %v7130 = vsel %vm7127, %v7129, %v7125
    %v7131 = vmul.f32 1.0, %v7130
    %v7132 = vrcp.pop %v7082
    %v7133 = vmul.f32 %v7082, %v7132
    %v7134 = vsub.f32 1.0, %v7133
    %v7135 = vmul.f32 %v7132, %v7134
    %v7136 = vadd.f32 %v7132, %v7135
    %vm7137 = vweird.f32 %v7082
    %vm7138 = vweird.f32 %v7132
    %vm7139 = vmor %vm7137, %vm7138
    %v7140 = vsel %vm7139, %v7132, %v7136
    %v7141 = vand.u32 2147483647, %v7082
    %vm7142 = vcmp.eq.f32.partialorder %v7141, 8.507059e+37
    %v7143 = vand.u32 %v7082, 2147483648
    %v7144 = vor.u32 1.1754944e-38, %v7143
    %v7145 = vsel %vm7142, %v7144, %v7140
    %v7146 = vmul.f32 1.0, %v7145
    %v7147 = vrcp.pop %v7083
    %v7148 = vmul.f32 %v7083, %v7147
    %v7149 = vsub.f32 1.0, %v7148
    %v7150 = vmul.f32 %v7147, %v7149
    %v7151 = vadd.f32 %v7147, %v7150
    %vm7152 = vweird.f32 %v7083
    %vm7153 = vweird.f32 %v7147
    %vm7154 = vmor %vm7152, %vm7153
    %v7155 = vsel %vm7154, %v7147, %v7151
    %v7156 = vand.u32 2147483647, %v7083
    %vm7157 = vcmp.eq.f32.partialorder %v7156, 8.507059e+37
    %v7158 = vand.u32 %v7083, 2147483648
    %v7159 = vor.u32 1.1754944e-38, %v7158
    %v7160 = vsel %vm7157, %v7159, %v7155
    %v7161 = vmul.f32 1.0, %v7160
    %v7162 = vrcp.pop %v7084
    %v7163 = vmul.f32 %v7084, %v7162
    %v7164 = vsub.f32 1.0, %v7163
    %v7165 = vmul.f32 %v7162, %v7164
    %v7166 = vadd.f32 %v7162, %v7165
    %vm7167 = vweird.f32 %v7084
    %vm7168 = vweird.f32 %v7162
    %vm7169 = vmor %vm7167, %vm7168
    %v7170 = vsel %vm7169, %v7162, %v7166
    %v7171 = vand.u32 2147483647, %v7084
    %vm7172 = vcmp.eq.f32.partialorder %v7171, 8.507059e+37
    %v7173 = vand.u32 %v7084, 2147483648
    %v7174 = vor.u32 1.1754944e-38, %v7173
    %v7175 = vsel %vm7172, %v7174, %v7170
    %v7176 = vmul.f32 1.0, %v7175
    %v7177 = vrcp.pop %v7085
    %v7178 = vmul.f32 %v7085, %v7177
    %v7179 = vsub.f32 1.0, %v7178
    %v7180 = vmul.f32 %v7177, %v7179
    %v7181 = vadd.f32 %v7177, %v7180
    %vm7182 = vweird.f32 %v7085
    %vm7183 = vweird.f32 %v7177
    %vm7184 = vmor %vm7182, %vm7183
    %v7185 = vsel %vm7184, %v7177, %v7181
    %v7186 = vand.u32 2147483647, %v7085
    %vm7187 = vcmp.eq.f32.partialorder %v7186, 8.507059e+37
    %v7188 = vand.u32 %v7085, 2147483648
    %v7189 = vor.u32 1.1754944e-38, %v7188
    %v7190 = vsel %vm7187, %v7189, %v7185
    %v7191 = vmul.f32 1.0, %v7190
    %v7192 = vrcp.pop %v7086
    %v7193 = vmul.f32 %v7086, %v7192
    %v7194 = vsub.f32 1.0, %v7193
    %v7195 = vmul.f32 %v7192, %v7194
    %v7196 = vadd.f32 %v7192, %v7195
    %vm7197 = vweird.f32 %v7086
    %vm7198 = vweird.f32 %v7192
    %vm7199 = vmor %vm7197, %vm7198
    %v7200 = vsel %vm7199, %v7192, %v7196
    %v7201 = vand.u32 2147483647, %v7086
    %vm7202 = vcmp.eq.f32.partialorder %v7201, 8.507059e+37
    %v7203 = vand.u32 %v7086, 2147483648
    %v7204 = vor.u32 1.1754944e-38, %v7203
    %v7205 = vsel %vm7202, %v7204, %v7200
    %v7206 = vmul.f32 1.0, %v7205
    %7215 = vrot.lane.b32.xlu0 %v6978, 64
    %v7216 = vpop.permute.xlu0 %7215
    %7217 = vrot.lane.b32.xlu0 %v6981, 64
    %v7218 = vpop.permute.xlu0 %7217
    %7219 = vrot.lane.b32.xlu0 %v6984, 64
    %v7220 = vpop.permute.xlu0 %7219
    %7221 = vrot.lane.b32.xlu0 %v6987, 64
    %v7222 = vpop.permute.xlu0 %7221
    %7223 = vrot.lane.b32.xlu0 %v6990, 64
    %v7224 = vpop.permute.xlu0 %7223
    %7225 = vrot.lane.b32.xlu0 %v6993, 64
    %v7226 = vpop.permute.xlu0 %7225
    %7227 = vrot.lane.b32.xlu0 %v6996, 64
    %v7228 = vpop.permute.xlu0 %7227
    %7229 = vrot.lane.b32.xlu0 %v6999, 64
    %v7230 = vpop.permute.xlu0 %7229
    %v7231 = vsel %vm961, %v6978, 0
    %v7233 = vsel %vm961, %v6981, 0
    %v7235 = vsel %vm961, %v6984, 0
    %v7237 = vsel %vm961, %v6987, 0
    %v7239 = vsel %vm961, %v6990, 0
    %v7241 = vsel %vm961, %v6993, 0
    %v7243 = vsel %vm961, %v6996, 0
    %v7245 = vsel %vm961, %v6999, 0
    %v7247 = vsel %vm961, %v7216, 0
    %v7249 = vsel %vm961, %v7218, 0
    %v7251 = vsel %vm961, %v7220, 0
    %v7253 = vsel %vm961, %v7222, 0
    %v7255 = vsel %vm961, %v7224, 0
    %v7257 = vsel %vm961, %v7226, 0
    %v7259 = vsel %vm961, %v7228, 0
    %v7261 = vsel %vm961, %v7230, 0
    %7263 = vmatpush.xpose.msra.mxu0 0.0
    %7264 = vmatpush.xpose.msra.mxu0 0.0
    %7265 = vmatpush.xpose.msra.mxu0 0.0
    %7266 = vmatpush.xpose.msra.mxu0 0.0
    %7267 = vmatpush.xpose.msra.mxu0 0.0
    %7268 = vmatpush.xpose.msra.mxu0 0.0
    %7269 = vmatpush.xpose.msra.mxu0 0.0
    %7270 = vmatpush.xpose.msra.mxu0 0.0
    %7271 = vmatpush.xpose.msra.mxu0 %v7261
    %7272 = vmatpush.xpose.msra.mxu0 %v7259
    %7273 = vmatpush.xpose.msra.mxu0 %v7257
    %7274 = vmatpush.xpose.msra.mxu0 %v7255
    %7275 = vmatpush.xpose.msra.mxu0 %v7253
    %7276 = vmatpush.xpose.msra.mxu0 %v7251
    %7277 = vmatpush.xpose.msra.mxu0 %v7249
    %7278 = vmatpush.xpose.msra.mxu0 %v7247
    %7279 = vmatmul.f32.gmra.mxu0 %v7231
    %v7280 = vpop.f32.mrf.mxu0
    %v7281 = vadd.f32 0.0, %v7280
    %7282 = vmatmul.f32.gmra.mxu0 %v7233
    %v7283 = vpop.f32.mrf.mxu0
    %v7284 = vadd.f32 0.0, %v7283
    %7285 = vmatmul.f32.gmra.mxu0 %v7235
    %v7286 = vpop.f32.mrf.mxu0
    %v7287 = vadd.f32 0.0, %v7286
    %7288 = vmatmul.f32.gmra.mxu0 %v7237
    %v7289 = vpop.f32.mrf.mxu0
    %v7290 = vadd.f32 0.0, %v7289
    %7291 = vmatmul.f32.gmra.mxu0 %v7239
    %v7292 = vpop.f32.mrf.mxu0
    %v7293 = vadd.f32 0.0, %v7292
    %7294 = vmatmul.f32.gmra.mxu0 %v7241
    %v7295 = vpop.f32.mrf.mxu0
    %v7296 = vadd.f32 0.0, %v7295
    %7297 = vmatmul.f32.gmra.mxu0 %v7243
    %v7298 = vpop.f32.mrf.mxu0
    %v7299 = vadd.f32 0.0, %v7298
    %7300 = vmatmul.f32.gmra.mxu0 %v7245
    %v7301 = vpop.f32.mrf.mxu0
    %v7302 = vadd.f32 0.0, %v7301
    %7303 = vdwg.mxu0
    %v7304 = vsel %vm94, %v7281, -1e+30
    %v7305 = vsel %vm95, %v7284, -1e+30
    %v7306 = vsel %vm96, %v7287, -1e+30
    %v7307 = vsel %vm97, %v7290, -1e+30
    %v7308 = vsel %vm98, %v7293, -1e+30
    %v7309 = vsel %vm99, %v7296, -1e+30
    %v7310 = vsel %vm100, %v7299, -1e+30
    %v7311 = vsel %vm101, %v7302, -1e+30
    %v7312 = vsel %vm961, %v7304, -inf
    %7313 = vmax.xlane.f32.xlu0 %v7312
    %v7314 = vpop.xlane.xlu0 %7313
    %v7315 = vsel %vm961, %v7305, -inf
    %7316 = vmax.xlane.f32.xlu0 %v7315
    %v7317 = vpop.xlane.xlu0 %7316
    %v7318 = vsel %vm961, %v7306, -inf
    %7319 = vmax.xlane.f32.xlu0 %v7318
    %v7320 = vpop.xlane.xlu0 %7319
    %v7321 = vsel %vm961, %v7307, -inf
    %7322 = vmax.xlane.f32.xlu0 %v7321
    %v7323 = vpop.xlane.xlu0 %7322
    %v7324 = vsel %vm961, %v7308, -inf
    %7325 = vmax.xlane.f32.xlu0 %v7324
    %v7326 = vpop.xlane.xlu0 %7325
    %v7327 = vsel %vm961, %v7309, -inf
    %7328 = vmax.xlane.f32.xlu0 %v7327
    %v7329 = vpop.xlane.xlu0 %7328
    %v7330 = vsel %vm961, %v7310, -inf
    %7331 = vmax.xlane.f32.xlu0 %v7330
    %v7332 = vpop.xlane.xlu0 %7331
    %v7333 = vsel %vm961, %v7311, -inf
    %7334 = vmax.xlane.f32.xlu0 %v7333
    %v7335 = vpop.xlane.xlu0 %7334
    %v7336 = vsub.f32 %v7304, %v7314
    %v7337 = vsub.f32 %v7305, %v7317
    %v7338 = vsub.f32 %v7306, %v7320
    %v7339 = vsub.f32 %v7307, %v7323
    %v7340 = vsub.f32 %v7308, %v7326
    %v7341 = vsub.f32 %v7309, %v7329
    %v7342 = vsub.f32 %v7310, %v7332
    %v7343 = vsub.f32 %v7311, %v7335
    %v7344 = vmul.f32 %v7336, 1.442695
    %v7345 = vpow.pop %v7344
    %v7346 = vmul.f32 %v7337, 1.442695
    %v7347 = vpow.pop %v7346
    %v7348 = vmul.f32 %v7338, 1.442695
    %v7349 = vpow.pop %v7348
    %v7350 = vmul.f32 %v7339, 1.442695
    %v7351 = vpow.pop %v7350
    %v7352 = vmul.f32 %v7340, 1.442695
    %v7353 = vpow.pop %v7352
    %v7354 = vmul.f32 %v7341, 1.442695
    %v7355 = vpow.pop %v7354
    %v7356 = vmul.f32 %v7342, 1.442695
    %v7357 = vpow.pop %v7356
    %v7358 = vmul.f32 %v7343, 1.442695
    %v7359 = vpow.pop %v7358
    %v7360 = vsel %vm961, %v7345, 0.0
    %7361 = vadd.xlane.f32.xlu0 %v7360
    %v7362 = vpop.xlane.xlu0 %7361
    %v7363 = vsel %vm961, %v7347, 0.0
    %7364 = vadd.xlane.f32.xlu0 %v7363
    %v7365 = vpop.xlane.xlu0 %7364
    %v7366 = vsel %vm961, %v7349, 0.0
    %7367 = vadd.xlane.f32.xlu0 %v7366
    %v7368 = vpop.xlane.xlu0 %7367
    %v7369 = vsel %vm961, %v7351, 0.0
    %7370 = vadd.xlane.f32.xlu0 %v7369
    %v7371 = vpop.xlane.xlu0 %7370
    %v7372 = vsel %vm961, %v7353, 0.0
    %7373 = vadd.xlane.f32.xlu0 %v7372
    %v7374 = vpop.xlane.xlu0 %7373
    %v7375 = vsel %vm961, %v7355, 0.0
    %7376 = vadd.xlane.f32.xlu0 %v7375
    %v7377 = vpop.xlane.xlu0 %7376
    %v7378 = vsel %vm961, %v7357, 0.0
    %7379 = vadd.xlane.f32.xlu0 %v7378
    %v7380 = vpop.xlane.xlu0 %7379
    %v7381 = vsel %vm961, %v7359, 0.0
    %7382 = vadd.xlane.f32.xlu0 %v7381
    %v7383 = vpop.xlane.xlu0 %7382
    %v7384 = vrcp.pop %v7362
    %v7385 = vrcp.pop %v7365
    %v7386 = vrcp.pop %v7368
    %v7387 = vrcp.pop %v7371
    %v7388 = vrcp.pop %v7374
    %v7389 = vrcp.pop %v7377
    %v7390 = vrcp.pop %v7380
    %v7391 = vrcp.pop %v7383
    %v7392 = vmul.f32 %v7345, %v7384
    %v7393 = vmul.f32 %v7347, %v7385
    %v7394 = vmul.f32 %v7349, %v7386
    %v7395 = vmul.f32 %v7351, %v7387
    %v7396 = vmul.f32 %v7353, %v7388
    %v7397 = vmul.f32 %v7355, %v7389
    %v7398 = vmul.f32 %v7357, %v7390
    %v7399 = vmul.f32 %v7359, %v7391
    %v7401 = vsel %vm961, %v7392, 0
    %v7404 = vsel %vm961, %v7393, 0
    %v7407 = vsel %vm961, %v7394, 0
    %v7410 = vsel %vm961, %v7395, 0
    %v7413 = vsel %vm961, %v7396, 0
    %v7416 = vsel %vm961, %v7397, 0
    %v7419 = vsel %vm961, %v7398, 0
    %v7422 = vsel %vm961, %v7399, 0
    %7424 = vmatpush.msra.mxu0 0.0
    %7425 = vmatpush.msra.mxu0 0.0
    %7426 = vmatpush.msra.mxu0 0.0
    %7427 = vmatpush.msra.mxu0 0.0
    %7428 = vmatpush.msra.mxu0 0.0
    %7429 = vmatpush.msra.mxu0 0.0
    %7430 = vmatpush.msra.mxu0 0.0
    %7431 = vmatpush.msra.mxu0 0.0
    %7432 = vmatpush.msra.mxu0 %v7040
    %7433 = vmatpush.msra.mxu0 %v7037
    %7434 = vmatpush.msra.mxu0 %v7034
    %7435 = vmatpush.msra.mxu0 %v7031
    %7436 = vmatpush.msra.mxu0 %v7028
    %7437 = vmatpush.msra.mxu0 %v7025
    %7438 = vmatpush.msra.mxu0 %v7022
    %7439 = vmatpush.msra.mxu0 %v7019
    %7440 = vmatmul.f32.gmra.mxu0 %v7401
    %v7441 = vpop.f32.mrf.mxu0
    %v7442 = vadd.f32 0.0, %v7441
    %7443 = vmatmul.f32.gmra.mxu0 %v7404
    %v7444 = vpop.f32.mrf.mxu0
    %v7445 = vadd.f32 0.0, %v7444
    %7446 = vmatmul.f32.gmra.mxu0 %v7407
    %v7447 = vpop.f32.mrf.mxu0
    %v7448 = vadd.f32 0.0, %v7447
    %7449 = vmatmul.f32.gmra.mxu0 %v7410
    %v7450 = vpop.f32.mrf.mxu0
    %v7451 = vadd.f32 0.0, %v7450
    %7452 = vmatmul.f32.gmra.mxu0 %v7413
    %v7453 = vpop.f32.mrf.mxu0
    %v7454 = vadd.f32 0.0, %v7453
    %7455 = vmatmul.f32.gmra.mxu0 %v7416
    %v7456 = vpop.f32.mrf.mxu0
    %v7457 = vadd.f32 0.0, %v7456
    %7458 = vmatmul.f32.gmra.mxu0 %v7419
    %v7459 = vpop.f32.mrf.mxu0
    %v7460 = vadd.f32 0.0, %v7459
    %7461 = vmatmul.f32.gmra.mxu0 %v7422
    %v7462 = vpop.f32.mrf.mxu0
    %v7463 = vadd.f32 0.0, %v7462
    %7464 = vdwg.mxu0
    %v7465 = vld [vmem:[%s3 + $0x380] sm:$0xff]
    %v7466 = vld [vmem:[%s3 + $0x388] sm:$0xff]
    %v7467 = vld [vmem:[%s3 + $0x390] sm:$0xff]
    %v7468 = vld [vmem:[%s3 + $0x398] sm:$0xff]
    %v7469 = vld [vmem:[%s3 + $0x3a0] sm:$0xff]
    %v7470 = vld [vmem:[%s3 + $0x3a8] sm:$0xff]
    %v7471 = vld [vmem:[%s3 + $0x3b0] sm:$0xff]
    %v7472 = vld [vmem:[%s3 + $0x3b8] sm:$0xff]
    %7481 = vrot.lane.b32.xlu0 %v7101, 64
    %v7482 = vpop.permute.xlu0 %7481
    %7483 = vrot.lane.b32.xlu0 %v7116, 64
    %v7484 = vpop.permute.xlu0 %7483
    %7485 = vrot.lane.b32.xlu0 %v7131, 64
    %v7486 = vpop.permute.xlu0 %7485
    %7487 = vrot.lane.b32.xlu0 %v7146, 64
    %v7488 = vpop.permute.xlu0 %7487
    %7489 = vrot.lane.b32.xlu0 %v7161, 64
    %v7490 = vpop.permute.xlu0 %7489
    %7491 = vrot.lane.b32.xlu0 %v7176, 64
    %v7492 = vpop.permute.xlu0 %7491
    %7493 = vrot.lane.b32.xlu0 %v7191, 64
    %v7494 = vpop.permute.xlu0 %7493
    %7495 = vrot.lane.b32.xlu0 %v7206, 64
    %v7496 = vpop.permute.xlu0 %7495
    %v7505 = vmul.f32 %v7442, %v7482
    %v7506 = vmul.f32 %v7445, %v7484
    %v7507 = vmul.f32 %v7448, %v7486
    %v7508 = vmul.f32 %v7451, %v7488
    %v7509 = vmul.f32 %v7454, %v7490
    %v7510 = vmul.f32 %v7457, %v7492
    %v7511 = vmul.f32 %v7460, %v7494
    %v7512 = vmul.f32 %v7463, %v7496
    %v7514 = vsel %vm961, %v7505, 0
    %v7517 = vsel %vm961, %v7506, 0
    %v7520 = vsel %vm961, %v7507, 0
    %v7523 = vsel %vm961, %v7508, 0
    %v7526 = vsel %vm961, %v7509, 0
    %v7529 = vsel %vm961, %v7510, 0
    %v7532 = vsel %vm961, %v7511, 0
    %v7535 = vsel %vm961, %v7512, 0
    %7537 = vmatpush.msra.mxu0 0.0
    %7538 = vmatpush.msra.mxu0 0.0
    %7539 = vmatpush.msra.mxu0 0.0
    %7540 = vmatpush.msra.mxu0 0.0
    %7541 = vmatpush.msra.mxu0 0.0
    %7542 = vmatpush.msra.mxu0 0.0
    %7543 = vmatpush.msra.mxu0 0.0
    %7544 = vmatpush.msra.mxu0 0.0
    %7545 = vmatpush.msra.mxu0 %v7472
    %7546 = vmatpush.msra.mxu0 %v7471
    %7547 = vmatpush.msra.mxu0 %v7470
    %7548 = vmatpush.msra.mxu0 %v7469
    %7549 = vmatpush.msra.mxu0 %v7468
    %7550 = vmatpush.msra.mxu0 %v7467
    %7551 = vmatpush.msra.mxu0 %v7466
    %7552 = vmatpush.msra.mxu0 %v7465
    %7553 = vmatmul.f32.gmra.mxu0 %v7514
    %v7554 = vpop.f32.mrf.mxu0
    %v7555 = vadd.f32 0.0, %v7554
    %7556 = vmatmul.f32.gmra.mxu0 %v7517
    %v7557 = vpop.f32.mrf.mxu0
    %7558 = vmatmul.f32.gmra.mxu0 %v7520
    %v7559 = vpop.f32.mrf.mxu0
    %7560 = vmatmul.f32.gmra.mxu0 %v7523
    %v7561 = vpop.f32.mrf.mxu0
    %7562 = vmatmul.f32.gmra.mxu0 %v7526
    %v7563 = vpop.f32.mrf.mxu0
    %v7564 = vadd.f32 0.0, %v7563
    %7565 = vmatmul.f32.gmra.mxu0 %v7529
    %v7566 = vpop.f32.mrf.mxu0
    %7567 = vmatmul.f32.gmra.mxu0 %v7532
    %v7568 = vpop.f32.mrf.mxu0
    %7569 = vmatmul.f32.gmra.mxu0 %v7535
    %v7570 = vpop.f32.mrf.mxu0
    %7571 = vdwg.mxu0
    %v7572 = vadd.f32 %v6935, %v7555
    %v7573 = vadd.f32 %v6944, %v7564
    %v7574 = vld [vmem:[%s2 + $0x1d0] sm:$0xff]
    %v7575 = vld [vmem:[%s2 + $0x1d8] sm:$0xff]
    %v7576 = vld [vmem:[%s2 + $0x230] sm:$0xff]
    %v7577 = vld [vmem:[%s2 + $0x238] sm:$0xff]
    %v7578 = vld [vmem:[%s2 + $0x290] sm:$0xff]
    %v7579 = vld [vmem:[%s2 + $0x298] sm:$0xff]
    %v7580 = vld [vmem:[%s2 + $0x2f0] sm:$0xff]
    %v7581 = vld [vmem:[%s2 + $0x2f8] sm:$0xff]
    %7582 = vmatpush.msra.mxu0 0.0
    %7583 = vmatpush.msra.mxu0 0.0
    %7584 = vmatpush.msra.mxu0 0.0
    %7585 = vmatpush.msra.mxu0 0.0
    %7586 = vmatpush.msra.mxu0 0.0
    %7587 = vmatpush.msra.mxu0 0.0
    %7588 = vmatpush.msra.mxu0 0.0
    %7589 = vmatpush.msra.mxu0 0.0
    %7590 = vmatpush.msra.mxu0 0.0
    %7591 = vmatpush.msra.mxu0 0.0
    %7592 = vmatpush.msra.mxu0 0.0
    %7593 = vmatpush.msra.mxu0 0.0
    %7594 = vmatpush.msra.mxu0 %v7580
    %7595 = vmatpush.msra.mxu0 %v7578
    %7596 = vmatpush.msra.mxu0 %v7576
    %7597 = vmatpush.msra.mxu0 %v7574
    %7598 = vmatmul.f32.gmra.mxu0 %v5702
    %v7599 = vpop.f32.mrf.mxu0
    %v7600 = vadd.f32 0.0, %v7599
    %7601 = vmatmul.f32.gmra.mxu0 %v5705
    %v7602 = vpop.f32.mrf.mxu0
    %v7603 = vadd.f32 0.0, %v7602
    %7604 = vmatmul.f32.gmra.mxu0 %v5708
    %v7605 = vpop.f32.mrf.mxu0
    %v7606 = vadd.f32 0.0, %v7605
    %7607 = vmatmul.f32.gmra.mxu0 %v5711
    %v7608 = vpop.f32.mrf.mxu0
    %v7609 = vadd.f32 0.0, %v7608
    %7610 = vmatmul.f32.gmra.mxu0 %v5714
    %v7611 = vpop.f32.mrf.mxu0
    %v7612 = vadd.f32 0.0, %v7611
    %7613 = vmatmul.f32.gmra.mxu0 %v5717
    %v7614 = vpop.f32.mrf.mxu0
    %v7615 = vadd.f32 0.0, %v7614
    %7616 = vmatmul.f32.gmra.mxu0 %v5720
    %v7617 = vpop.f32.mrf.mxu0
    %v7618 = vadd.f32 0.0, %v7617
    %7619 = vmatmul.f32.gmra.mxu0 %v5723
    %v7620 = vpop.f32.mrf.mxu0
    %v7621 = vadd.f32 0.0, %v7620
    %7622 = vdwg.mxu0
    %7623 = vmatpush.msra.mxu0 0.0
    %7624 = vmatpush.msra.mxu0 0.0
    %7625 = vmatpush.msra.mxu0 0.0
    %7626 = vmatpush.msra.mxu0 0.0
    %7627 = vmatpush.msra.mxu0 0.0
    %7628 = vmatpush.msra.mxu0 0.0
    %7629 = vmatpush.msra.mxu0 0.0
    %7630 = vmatpush.msra.mxu0 0.0
    %7631 = vmatpush.msra.mxu0 0.0
    %7632 = vmatpush.msra.mxu0 0.0
    %7633 = vmatpush.msra.mxu0 0.0
    %7634 = vmatpush.msra.mxu0 0.0
    %7635 = vmatpush.msra.mxu0 %v7581
    %7636 = vmatpush.msra.mxu0 %v7579
    %7637 = vmatpush.msra.mxu0 %v7577
    %7638 = vmatpush.msra.mxu0 %v7575
    %7639 = vmatmul.f32.gmra.mxu0 %v5702
    %v7640 = vpop.f32.mrf.mxu0
    %v7641 = vadd.f32 0.0, %v7640
    %7642 = vmatmul.f32.gmra.mxu0 %v5705
    %v7643 = vpop.f32.mrf.mxu0
    %v7644 = vadd.f32 0.0, %v7643
    %7645 = vmatmul.f32.gmra.mxu0 %v5708
    %v7646 = vpop.f32.mrf.mxu0
    %v7647 = vadd.f32 0.0, %v7646
    %7648 = vmatmul.f32.gmra.mxu0 %v5711
    %v7649 = vpop.f32.mrf.mxu0
    %v7650 = vadd.f32 0.0, %v7649
    %7651 = vmatmul.f32.gmra.mxu0 %v5714
    %v7652 = vpop.f32.mrf.mxu0
    %v7653 = vadd.f32 0.0, %v7652
    %7654 = vmatmul.f32.gmra.mxu0 %v5717
    %v7655 = vpop.f32.mrf.mxu0
    %v7656 = vadd.f32 0.0, %v7655
    %7657 = vmatmul.f32.gmra.mxu0 %v5720
    %v7658 = vpop.f32.mrf.mxu0
    %v7659 = vadd.f32 0.0, %v7658
    %7660 = vmatmul.f32.gmra.mxu0 %v5723
    %v7661 = vpop.f32.mrf.mxu0
    %v7662 = vadd.f32 0.0, %v7661
    %7663 = vdwg.mxu0
    %v7664 = vadd.f32 %v7641, %v7042
    %v7665 = vadd.f32 %v7644, %v7042
    %v7666 = vadd.f32 %v7647, %v7042
    %v7667 = vadd.f32 %v7650, %v7042
    %v7668 = vadd.f32 %v7653, %v7042
    %v7669 = vadd.f32 %v7656, %v7042
    %v7670 = vadd.f32 %v7659, %v7042
    %v7671 = vadd.f32 %v7662, %v7042
    %v7672 = vxor.u32 %v7664, 2147483648
    %v7673 = vxor.u32 %v7665, 2147483648
    %v7674 = vxor.u32 %v7666, 2147483648
    %v7675 = vxor.u32 %v7667, 2147483648
    %v7676 = vxor.u32 %v7668, 2147483648
    %v7677 = vxor.u32 %v7669, 2147483648
    %v7678 = vxor.u32 %v7670, 2147483648
    %v7679 = vxor.u32 %v7671, 2147483648
    %v7680 = vmul.f32 %v7672, 1.442695
    %v7681 = vpow.pop %v7680
    %v7682 = vmul.f32 %v7673, 1.442695
    %v7683 = vpow.pop %v7682
    %v7684 = vmul.f32 %v7674, 1.442695
    %v7685 = vpow.pop %v7684
    %v7686 = vmul.f32 %v7675, 1.442695
    %v7687 = vpow.pop %v7686
    %v7688 = vmul.f32 %v7676, 1.442695
    %v7689 = vpow.pop %v7688
    %v7690 = vmul.f32 %v7677, 1.442695
    %v7691 = vpow.pop %v7690
    %v7692 = vmul.f32 %v7678, 1.442695
    %v7693 = vpow.pop %v7692
    %v7694 = vmul.f32 %v7679, 1.442695
    %v7695 = vpow.pop %v7694
    %v7696 = vadd.f32 %v7681, 1.0
    %v7697 = vadd.f32 %v7683, 1.0
    %v7698 = vadd.f32 %v7685, 1.0
    %v7699 = vadd.f32 %v7687, 1.0
    %v7700 = vadd.f32 %v7689, 1.0
    %v7701 = vadd.f32 %v7691, 1.0
    %v7702 = vadd.f32 %v7693, 1.0
    %v7703 = vadd.f32 %v7695, 1.0
    %v7704 = vrcp.pop %v7696
    %v7705 = vmul.f32 %v7696, %v7704
    %v7706 = vsub.f32 1.0, %v7705
    %v7707 = vmul.f32 %v7704, %v7706
    %v7708 = vadd.f32 %v7704, %v7707
    %vm7709 = vweird.f32 %v7696
    %vm7710 = vweird.f32 %v7704
    %vm7711 = vmor %vm7709, %vm7710
    %v7712 = vsel %vm7711, %v7704, %v7708
    %v7713 = vand.u32 2147483647, %v7696
    %vm7714 = vcmp.eq.f32.partialorder %v7713, 8.507059e+37
    %v7715 = vand.u32 %v7696, 2147483648
    %v7716 = vor.u32 1.1754944e-38, %v7715
    %v7717 = vsel %vm7714, %v7716, %v7712
    %v7718 = vmul.f32 1.0, %v7717
    %v7719 = vrcp.pop %v7697
    %v7720 = vmul.f32 %v7697, %v7719
    %v7721 = vsub.f32 1.0, %v7720
    %v7722 = vmul.f32 %v7719, %v7721
    %v7723 = vadd.f32 %v7719, %v7722
    %vm7724 = vweird.f32 %v7697
    %vm7725 = vweird.f32 %v7719
    %vm7726 = vmor %vm7724, %vm7725
    %v7727 = vsel %vm7726, %v7719, %v7723
    %v7728 = vand.u32 2147483647, %v7697
    %vm7729 = vcmp.eq.f32.partialorder %v7728, 8.507059e+37
    %v7730 = vand.u32 %v7697, 2147483648
    %v7731 = vor.u32 1.1754944e-38, %v7730
    %v7732 = vsel %vm7729, %v7731, %v7727
    %v7733 = vmul.f32 1.0, %v7732
    %v7734 = vrcp.pop %v7698
    %v7735 = vmul.f32 %v7698, %v7734
    %v7736 = vsub.f32 1.0, %v7735
    %v7737 = vmul.f32 %v7734, %v7736
    %v7738 = vadd.f32 %v7734, %v7737
    %vm7739 = vweird.f32 %v7698
    %vm7740 = vweird.f32 %v7734
    %vm7741 = vmor %vm7739, %vm7740
    %v7742 = vsel %vm7741, %v7734, %v7738
    %v7743 = vand.u32 2147483647, %v7698
    %vm7744 = vcmp.eq.f32.partialorder %v7743, 8.507059e+37
    %v7745 = vand.u32 %v7698, 2147483648
    %v7746 = vor.u32 1.1754944e-38, %v7745
    %v7747 = vsel %vm7744, %v7746, %v7742
    %v7748 = vmul.f32 1.0, %v7747
    %v7749 = vrcp.pop %v7699
    %v7750 = vmul.f32 %v7699, %v7749
    %v7751 = vsub.f32 1.0, %v7750
    %v7752 = vmul.f32 %v7749, %v7751
    %v7753 = vadd.f32 %v7749, %v7752
    %vm7754 = vweird.f32 %v7699
    %vm7755 = vweird.f32 %v7749
    %vm7756 = vmor %vm7754, %vm7755
    %v7757 = vsel %vm7756, %v7749, %v7753
    %v7758 = vand.u32 2147483647, %v7699
    %vm7759 = vcmp.eq.f32.partialorder %v7758, 8.507059e+37
    %v7760 = vand.u32 %v7699, 2147483648
    %v7761 = vor.u32 1.1754944e-38, %v7760
    %v7762 = vsel %vm7759, %v7761, %v7757
    %v7763 = vmul.f32 1.0, %v7762
    %v7764 = vrcp.pop %v7700
    %v7765 = vmul.f32 %v7700, %v7764
    %v7766 = vsub.f32 1.0, %v7765
    %v7767 = vmul.f32 %v7764, %v7766
    %v7768 = vadd.f32 %v7764, %v7767
    %vm7769 = vweird.f32 %v7700
    %vm7770 = vweird.f32 %v7764
    %vm7771 = vmor %vm7769, %vm7770
    %v7772 = vsel %vm7771, %v7764, %v7768
    %v7773 = vand.u32 2147483647, %v7700
    %vm7774 = vcmp.eq.f32.partialorder %v7773, 8.507059e+37
    %v7775 = vand.u32 %v7700, 2147483648
    %v7776 = vor.u32 1.1754944e-38, %v7775
    %v7777 = vsel %vm7774, %v7776, %v7772
    %v7778 = vmul.f32 1.0, %v7777
    %v7779 = vrcp.pop %v7701
    %v7780 = vmul.f32 %v7701, %v7779
    %v7781 = vsub.f32 1.0, %v7780
    %v7782 = vmul.f32 %v7779, %v7781
    %v7783 = vadd.f32 %v7779, %v7782
    %vm7784 = vweird.f32 %v7701
    %vm7785 = vweird.f32 %v7779
    %vm7786 = vmor %vm7784, %vm7785
    %v7787 = vsel %vm7786, %v7779, %v7783
    %v7788 = vand.u32 2147483647, %v7701
    %vm7789 = vcmp.eq.f32.partialorder %v7788, 8.507059e+37
    %v7790 = vand.u32 %v7701, 2147483648
    %v7791 = vor.u32 1.1754944e-38, %v7790
    %v7792 = vsel %vm7789, %v7791, %v7787
    %v7793 = vmul.f32 1.0, %v7792
    %v7794 = vrcp.pop %v7702
    %v7795 = vmul.f32 %v7702, %v7794
    %v7796 = vsub.f32 1.0, %v7795
    %v7797 = vmul.f32 %v7794, %v7796
    %v7798 = vadd.f32 %v7794, %v7797
    %vm7799 = vweird.f32 %v7702
    %vm7800 = vweird.f32 %v7794
    %vm7801 = vmor %vm7799, %vm7800
    %v7802 = vsel %vm7801, %v7794, %v7798
    %v7803 = vand.u32 2147483647, %v7702
    %vm7804 = vcmp.eq.f32.partialorder %v7803, 8.507059e+37
    %v7805 = vand.u32 %v7702, 2147483648
    %v7806 = vor.u32 1.1754944e-38, %v7805
    %v7807 = vsel %vm7804, %v7806, %v7802
    %v7808 = vmul.f32 1.0, %v7807
    %v7809 = vrcp.pop %v7703
    %v7810 = vmul.f32 %v7703, %v7809
    %v7811 = vsub.f32 1.0, %v7810
    %v7812 = vmul.f32 %v7809, %v7811
    %v7813 = vadd.f32 %v7809, %v7812
    %vm7814 = vweird.f32 %v7703
    %vm7815 = vweird.f32 %v7809
    %vm7816 = vmor %vm7814, %vm7815
    %v7817 = vsel %vm7816, %v7809, %v7813
    %v7818 = vand.u32 2147483647, %v7703
    %vm7819 = vcmp.eq.f32.partialorder %v7818, 8.507059e+37
    %v7820 = vand.u32 %v7703, 2147483648
    %v7821 = vor.u32 1.1754944e-38, %v7820
    %v7822 = vsel %vm7819, %v7821, %v7817
    %v7823 = vmul.f32 1.0, %v7822
    %7832 = vrot.lane.b32.xlu0 %v7600, 64
    %v7833 = vpop.permute.xlu0 %7832
    %7834 = vrot.lane.b32.xlu0 %v7603, 64
    %v7835 = vpop.permute.xlu0 %7834
    %7836 = vrot.lane.b32.xlu0 %v7606, 64
    %v7837 = vpop.permute.xlu0 %7836
    %7838 = vrot.lane.b32.xlu0 %v7609, 64
    %v7839 = vpop.permute.xlu0 %7838
    %7840 = vrot.lane.b32.xlu0 %v7612, 64
    %v7841 = vpop.permute.xlu0 %7840
    %7842 = vrot.lane.b32.xlu0 %v7615, 64
    %v7843 = vpop.permute.xlu0 %7842
    %7844 = vrot.lane.b32.xlu0 %v7618, 64
    %v7845 = vpop.permute.xlu0 %7844
    %7846 = vrot.lane.b32.xlu0 %v7621, 64
    %v7847 = vpop.permute.xlu0 %7846
    %v7848 = vsel %vm961, %v7600, 0
    %v7850 = vsel %vm961, %v7603, 0
    %v7852 = vsel %vm961, %v7606, 0
    %v7854 = vsel %vm961, %v7609, 0
    %v7856 = vsel %vm961, %v7612, 0
    %v7858 = vsel %vm961, %v7615, 0
    %v7860 = vsel %vm961, %v7618, 0
    %v7862 = vsel %vm961, %v7621, 0
    %v7864 = vsel %vm961, %v7833, 0
    %v7866 = vsel %vm961, %v7835, 0
    %v7868 = vsel %vm961, %v7837, 0
    %v7870 = vsel %vm961, %v7839, 0
    %v7872 = vsel %vm961, %v7841, 0
    %v7874 = vsel %vm961, %v7843, 0
    %v7876 = vsel %vm961, %v7845, 0
    %v7878 = vsel %vm961, %v7847, 0
    %7880 = vmatpush.xpose.msra.mxu0 0.0
    %7881 = vmatpush.xpose.msra.mxu0 0.0
    %7882 = vmatpush.xpose.msra.mxu0 0.0
    %7883 = vmatpush.xpose.msra.mxu0 0.0
    %7884 = vmatpush.xpose.msra.mxu0 0.0
    %7885 = vmatpush.xpose.msra.mxu0 0.0
    %7886 = vmatpush.xpose.msra.mxu0 0.0
    %7887 = vmatpush.xpose.msra.mxu0 0.0
    %7888 = vmatpush.xpose.msra.mxu0 %v7878
    %7889 = vmatpush.xpose.msra.mxu0 %v7876
    %7890 = vmatpush.xpose.msra.mxu0 %v7874
    %7891 = vmatpush.xpose.msra.mxu0 %v7872
    %7892 = vmatpush.xpose.msra.mxu0 %v7870
    %7893 = vmatpush.xpose.msra.mxu0 %v7868
    %7894 = vmatpush.xpose.msra.mxu0 %v7866
    %7895 = vmatpush.xpose.msra.mxu0 %v7864
    %7896 = vmatmul.f32.gmra.mxu0 %v7848
    %v7897 = vpop.f32.mrf.mxu0
    %v7898 = vadd.f32 0.0, %v7897
    %7899 = vmatmul.f32.gmra.mxu0 %v7850
    %v7900 = vpop.f32.mrf.mxu0
    %v7901 = vadd.f32 0.0, %v7900
    %7902 = vmatmul.f32.gmra.mxu0 %v7852
    %v7903 = vpop.f32.mrf.mxu0
    %v7904 = vadd.f32 0.0, %v7903
    %7905 = vmatmul.f32.gmra.mxu0 %v7854
    %v7906 = vpop.f32.mrf.mxu0
    %v7907 = vadd.f32 0.0, %v7906
    %7908 = vmatmul.f32.gmra.mxu0 %v7856
    %v7909 = vpop.f32.mrf.mxu0
    %v7910 = vadd.f32 0.0, %v7909
    %7911 = vmatmul.f32.gmra.mxu0 %v7858
    %v7912 = vpop.f32.mrf.mxu0
    %v7913 = vadd.f32 0.0, %v7912
    %7914 = vmatmul.f32.gmra.mxu0 %v7860
    %v7915 = vpop.f32.mrf.mxu0
    %v7916 = vadd.f32 0.0, %v7915
    %7917 = vmatmul.f32.gmra.mxu0 %v7862
    %v7918 = vpop.f32.mrf.mxu0
    %v7919 = vadd.f32 0.0, %v7918
    %7920 = vdwg.mxu0
    %v7921 = vsel %vm94, %v7898, -1e+30
    %v7922 = vsel %vm95, %v7901, -1e+30
    %v7923 = vsel %vm96, %v7904, -1e+30
    %v7924 = vsel %vm97, %v7907, -1e+30
    %v7925 = vsel %vm98, %v7910, -1e+30
    %v7926 = vsel %vm99, %v7913, -1e+30
    %v7927 = vsel %vm100, %v7916, -1e+30
    %v7928 = vsel %vm101, %v7919, -1e+30
    %v7929 = vsel %vm961, %v7921, -inf
    %7930 = vmax.xlane.f32.xlu0 %v7929
    %v7931 = vpop.xlane.xlu0 %7930
    %v7932 = vsel %vm961, %v7922, -inf
    %7933 = vmax.xlane.f32.xlu0 %v7932
    %v7934 = vpop.xlane.xlu0 %7933
    %v7935 = vsel %vm961, %v7923, -inf
    %7936 = vmax.xlane.f32.xlu0 %v7935
    %v7937 = vpop.xlane.xlu0 %7936
    %v7938 = vsel %vm961, %v7924, -inf
    %7939 = vmax.xlane.f32.xlu0 %v7938
    %v7940 = vpop.xlane.xlu0 %7939
    %v7941 = vsel %vm961, %v7925, -inf
    %7942 = vmax.xlane.f32.xlu0 %v7941
    %v7943 = vpop.xlane.xlu0 %7942
    %v7944 = vsel %vm961, %v7926, -inf
    %7945 = vmax.xlane.f32.xlu0 %v7944
    %v7946 = vpop.xlane.xlu0 %7945
    %v7947 = vsel %vm961, %v7927, -inf
    %7948 = vmax.xlane.f32.xlu0 %v7947
    %v7949 = vpop.xlane.xlu0 %7948
    %v7950 = vsel %vm961, %v7928, -inf
    %7951 = vmax.xlane.f32.xlu0 %v7950
    %v7952 = vpop.xlane.xlu0 %7951
    %v7953 = vsub.f32 %v7921, %v7931
    %v7954 = vsub.f32 %v7922, %v7934
    %v7955 = vsub.f32 %v7923, %v7937
    %v7956 = vsub.f32 %v7924, %v7940
    %v7957 = vsub.f32 %v7925, %v7943
    %v7958 = vsub.f32 %v7926, %v7946
    %v7959 = vsub.f32 %v7927, %v7949
    %v7960 = vsub.f32 %v7928, %v7952
    %v7961 = vmul.f32 %v7953, 1.442695
    %v7962 = vpow.pop %v7961
    %v7963 = vmul.f32 %v7954, 1.442695
    %v7964 = vpow.pop %v7963
    %v7965 = vmul.f32 %v7955, 1.442695
    %v7966 = vpow.pop %v7965
    %v7967 = vmul.f32 %v7956, 1.442695
    %v7968 = vpow.pop %v7967
    %v7969 = vmul.f32 %v7957, 1.442695
    %v7970 = vpow.pop %v7969
    %v7971 = vmul.f32 %v7958, 1.442695
    %v7972 = vpow.pop %v7971
    %v7973 = vmul.f32 %v7959, 1.442695
    %v7974 = vpow.pop %v7973
    %v7975 = vmul.f32 %v7960, 1.442695
    %v7976 = vpow.pop %v7975
    %v7977 = vsel %vm961, %v7962, 0.0
    %7978 = vadd.xlane.f32.xlu0 %v7977
    %v7979 = vpop.xlane.xlu0 %7978
    %v7980 = vsel %vm961, %v7964, 0.0
    %7981 = vadd.xlane.f32.xlu0 %v7980
    %v7982 = vpop.xlane.xlu0 %7981
    %v7983 = vsel %vm961, %v7966, 0.0
    %7984 = vadd.xlane.f32.xlu0 %v7983
    %v7985 = vpop.xlane.xlu0 %7984
    %v7986 = vsel %vm961, %v7968, 0.0
    %7987 = vadd.xlane.f32.xlu0 %v7986
    %v7988 = vpop.xlane.xlu0 %7987
    %v7989 = vsel %vm961, %v7970, 0.0
    %7990 = vadd.xlane.f32.xlu0 %v7989
    %v7991 = vpop.xlane.xlu0 %7990
    %v7992 = vsel %vm961, %v7972, 0.0
    %7993 = vadd.xlane.f32.xlu0 %v7992
    %v7994 = vpop.xlane.xlu0 %7993
    %v7995 = vsel %vm961, %v7974, 0.0
    %7996 = vadd.xlane.f32.xlu0 %v7995
    %v7997 = vpop.xlane.xlu0 %7996
    %v7998 = vsel %vm961, %v7976, 0.0
    %7999 = vadd.xlane.f32.xlu0 %v7998
    %v8000 = vpop.xlane.xlu0 %7999
    %v8001 = vrcp.pop %v7979
    %v8002 = vrcp.pop %v7982
    %v8003 = vrcp.pop %v7985
    %v8004 = vrcp.pop %v7988
    %v8005 = vrcp.pop %v7991
    %v8006 = vrcp.pop %v7994
    %v8007 = vrcp.pop %v7997
    %v8008 = vrcp.pop %v8000
    %v8009 = vmul.f32 %v7962, %v8001
    %v8010 = vmul.f32 %v7964, %v8002
    %v8011 = vmul.f32 %v7966, %v8003
    %v8012 = vmul.f32 %v7968, %v8004
    %v8013 = vmul.f32 %v7970, %v8005
    %v8014 = vmul.f32 %v7972, %v8006
    %v8015 = vmul.f32 %v7974, %v8007
    %v8016 = vmul.f32 %v7976, %v8008
    %v8018 = vsel %vm961, %v8009, 0
    %v8021 = vsel %vm961, %v8010, 0
    %v8024 = vsel %vm961, %v8011, 0
    %v8027 = vsel %vm961, %v8012, 0
    %v8030 = vsel %vm961, %v8013, 0
    %v8033 = vsel %vm961, %v8014, 0
    %v8036 = vsel %vm961, %v8015, 0
    %v8039 = vsel %vm961, %v8016, 0
    %8041 = vmatpush.msra.mxu0 0.0
    %8042 = vmatpush.msra.mxu0 0.0
    %8043 = vmatpush.msra.mxu0 0.0
    %8044 = vmatpush.msra.mxu0 0.0
    %8045 = vmatpush.msra.mxu0 0.0
    %8046 = vmatpush.msra.mxu0 0.0
    %8047 = vmatpush.msra.mxu0 0.0
    %8048 = vmatpush.msra.mxu0 0.0
    %8049 = vmatpush.msra.mxu0 %v7662
    %8050 = vmatpush.msra.mxu0 %v7659
    %8051 = vmatpush.msra.mxu0 %v7656
    %8052 = vmatpush.msra.mxu0 %v7653
    %8053 = vmatpush.msra.mxu0 %v7650
    %8054 = vmatpush.msra.mxu0 %v7647
    %8055 = vmatpush.msra.mxu0 %v7644
    %8056 = vmatpush.msra.mxu0 %v7641
    %8057 = vmatmul.f32.gmra.mxu0 %v8018
    %v8058 = vpop.f32.mrf.mxu0
    %v8059 = vadd.f32 0.0, %v8058
    %8060 = vmatmul.f32.gmra.mxu0 %v8021
    %v8061 = vpop.f32.mrf.mxu0
    %v8062 = vadd.f32 0.0, %v8061
    %8063 = vmatmul.f32.gmra.mxu0 %v8024
    %v8064 = vpop.f32.mrf.mxu0
    %v8065 = vadd.f32 0.0, %v8064
    %8066 = vmatmul.f32.gmra.mxu0 %v8027
    %v8067 = vpop.f32.mrf.mxu0
    %v8068 = vadd.f32 0.0, %v8067
    %8069 = vmatmul.f32.gmra.mxu0 %v8030
    %v8070 = vpop.f32.mrf.mxu0
    %v8071 = vadd.f32 0.0, %v8070
    %8072 = vmatmul.f32.gmra.mxu0 %v8033
    %v8073 = vpop.f32.mrf.mxu0
    %v8074 = vadd.f32 0.0, %v8073
    %8075 = vmatmul.f32.gmra.mxu0 %v8036
    %v8076 = vpop.f32.mrf.mxu0
    %v8077 = vadd.f32 0.0, %v8076
    %8078 = vmatmul.f32.gmra.mxu0 %v8039
    %v8079 = vpop.f32.mrf.mxu0
    %v8080 = vadd.f32 0.0, %v8079
    %8081 = vdwg.mxu0
    %v8082 = vld [vmem:[%s3 + $0x3c0] sm:$0xff]
    %v8083 = vld [vmem:[%s3 + $0x3c8] sm:$0xff]
    %v8084 = vld [vmem:[%s3 + $0x3d0] sm:$0xff]
    %v8085 = vld [vmem:[%s3 + $0x3d8] sm:$0xff]
    %v8086 = vld [vmem:[%s3 + $0x3e0] sm:$0xff]
    %v8087 = vld [vmem:[%s3 + $0x3e8] sm:$0xff]
    %v8088 = vld [vmem:[%s3 + $0x3f0] sm:$0xff]
    %v8089 = vld [vmem:[%s3 + $0x3f8] sm:$0xff]
    %8098 = vrot.lane.b32.xlu0 %v7718, 64
    %v8099 = vpop.permute.xlu0 %8098
    %8100 = vrot.lane.b32.xlu0 %v7733, 64
    %v8101 = vpop.permute.xlu0 %8100
    %8102 = vrot.lane.b32.xlu0 %v7748, 64
    %v8103 = vpop.permute.xlu0 %8102
    %8104 = vrot.lane.b32.xlu0 %v7763, 64
    %v8105 = vpop.permute.xlu0 %8104
    %8106 = vrot.lane.b32.xlu0 %v7778, 64
    %v8107 = vpop.permute.xlu0 %8106
    %8108 = vrot.lane.b32.xlu0 %v7793, 64
    %v8109 = vpop.permute.xlu0 %8108
    %8110 = vrot.lane.b32.xlu0 %v7808, 64
    %v8111 = vpop.permute.xlu0 %8110
    %8112 = vrot.lane.b32.xlu0 %v7823, 64
    %v8113 = vpop.permute.xlu0 %8112
    %v8122 = vmul.f32 %v8059, %v8099
    %v8123 = vmul.f32 %v8062, %v8101
    %v8124 = vmul.f32 %v8065, %v8103
    %v8125 = vmul.f32 %v8068, %v8105
    %v8126 = vmul.f32 %v8071, %v8107
    %v8127 = vmul.f32 %v8074, %v8109
    %v8128 = vmul.f32 %v8077, %v8111
    %v8129 = vmul.f32 %v8080, %v8113
    %v8131 = vsel %vm961, %v8122, 0
    %v8134 = vsel %vm961, %v8123, 0
    %v8137 = vsel %vm961, %v8124, 0
    %v8140 = vsel %vm961, %v8125, 0
    %v8143 = vsel %vm961, %v8126, 0
    %v8146 = vsel %vm961, %v8127, 0
    %v8149 = vsel %vm961, %v8128, 0
    %v8152 = vsel %vm961, %v8129, 0
    %8154 = vmatpush.msra.mxu0 0.0
    %8155 = vmatpush.msra.mxu0 0.0
    %8156 = vmatpush.msra.mxu0 0.0
    %8157 = vmatpush.msra.mxu0 0.0
    %8158 = vmatpush.msra.mxu0 0.0
    %8159 = vmatpush.msra.mxu0 0.0
    %8160 = vmatpush.msra.mxu0 0.0
    %8161 = vmatpush.msra.mxu0 0.0
    %8162 = vmatpush.msra.mxu0 %v8089
    %8163 = vmatpush.msra.mxu0 %v8088
    %8164 = vmatpush.msra.mxu0 %v8087
    %8165 = vmatpush.msra.mxu0 %v8086
    %8166 = vmatpush.msra.mxu0 %v8085
    %8167 = vmatpush.msra.mxu0 %v8084
    %8168 = vmatpush.msra.mxu0 %v8083
    %8169 = vmatpush.msra.mxu0 %v8082
    %8170 = vmatmul.f32.gmra.mxu0 %v8131
    %v8171 = vpop.f32.mrf.mxu0
    %v8172 = vadd.f32 0.0, %v8171
    %8173 = vmatmul.f32.gmra.mxu0 %v8134
    %v8174 = vpop.f32.mrf.mxu0
    %8175 = vmatmul.f32.gmra.mxu0 %v8137
    %v8176 = vpop.f32.mrf.mxu0
    %8177 = vmatmul.f32.gmra.mxu0 %v8140
    %v8178 = vpop.f32.mrf.mxu0
    %8179 = vmatmul.f32.gmra.mxu0 %v8143
    %v8180 = vpop.f32.mrf.mxu0
    %v8181 = vadd.f32 0.0, %v8180
    %8182 = vmatmul.f32.gmra.mxu0 %v8146
    %v8183 = vpop.f32.mrf.mxu0
    %8184 = vmatmul.f32.gmra.mxu0 %v8149
    %v8185 = vpop.f32.mrf.mxu0
    %8186 = vmatmul.f32.gmra.mxu0 %v8152
    %v8187 = vpop.f32.mrf.mxu0
    %8188 = vdwg.mxu0
    %v8189 = vadd.f32 %v7572, %v8172
    %v8190 = vadd.f32 %v7573, %v8181
    %v8191 = vperm.slane %v230, 4
    %v8192 = vadd.f32 %v8189, %v8191
    %v8193 = vadd.f32 %v8190, %v8191
    %v8194 = vadd.f32 %v5685, %v8192
    %v8195 = vadd.f32 %v5689, %v8193
    %v8196 = vsel %vm233, %v8194, 0.0
    %8197 = vadd.xlane.f32.xlu0 %v8196
    %v8198 = vpop.xlane.xlu0 %8197
    %v8199 = vsel %vm233, %v8195, 0.0
    %8200 = vadd.xlane.f32.xlu0 %v8199
    %v8201 = vpop.xlane.xlu0 %8200
    %v8202 = vmul.f32 %v8198, %v264
    %v8203 = vmul.f32 %v8201, %v264
    %v8204 = vsub.f32 %v8194, %v8202
    %v8205 = vsub.f32 %v8195, %v8203
    %v8206 = vmul.f32 %v8204, %v8204
    %v8207 = vmul.f32 %v8205, %v8205
    %v8208 = vsel %vm233, %v8206, 0.0
    %8209 = vadd.xlane.f32.xlu0 %v8208
    %v8210 = vpop.xlane.xlu0 %8209
    %v8211 = vsel %vm233, %v8207, 0.0
    %8212 = vadd.xlane.f32.xlu0 %v8211
    %v8213 = vpop.xlane.xlu0 %8212
    %v8214 = vmul.f32 %v8210, %v264
    %v8215 = vmul.f32 %v8213, %v264
    %v8216 = vadd.f32 %v8214, 1e-05
    %v8217 = vadd.f32 %v8215, 1e-05
    %v8218 = vrsqrt.pop %v8216
    %v8219 = vmul.f32 %v8218, %v8216
    %v8220 = vmul.f32 %v8219, %v8218
    %v8221 = vmul.f32 0.5, %v8220
    %v8222 = vsub.f32 1.5, %v8221
    %v8223 = vmul.f32 %v8218, %v8222
    %vm8224 = vweird.f32 %v8216
    %vm8225 = vweird.f32 %v8218
    %vm8226 = vmor %vm8224, %vm8225
    %v8227 = vsel %vm8226, %v8218, %v8223
    %v8228 = vrsqrt.pop %v8217
    %v8229 = vmul.f32 %v8228, %v8217
    %v8230 = vmul.f32 %v8229, %v8228
    %v8231 = vmul.f32 0.5, %v8230
    %v8232 = vsub.f32 1.5, %v8231
    %v8233 = vmul.f32 %v8228, %v8232
    %vm8234 = vweird.f32 %v8217
    %vm8235 = vweird.f32 %v8228
    %vm8236 = vmor %vm8234, %vm8235
    %v8237 = vsel %vm8236, %v8228, %v8233
    %v8238 = vmul.f32 %v8204, %v8227
    %v8239 = vmul.f32 %v8205, %v8237
    %v8240 = vperm.slane %v230, 5
    %v8241 = vmul.f32 %v8238, %v8240
    %v8242 = vmul.f32 %v8239, %v8240
    %v8243 = vperm.slane %v230, 6
    %v8244 = vadd.f32 %v8241, %v8243
    %v8245 = vadd.f32 %v8242, %v8243
    %v8246 = vadd.f32 %v5491, %v8244
    %v8247 = vadd.f32 %v5495, %v8245
    %v8248 = vld [vmem:[%s5] sm:$0xff]
    %v8249 = vld [vmem:[%s5 + $0x8] sm:$0xff]
    %v8250 = vld [vmem:[%s5 + $0x10] sm:$0xff]
    %v8251 = vld [vmem:[%s5 + $0x18] sm:$0xff]
    %v8252 = vperm.slane %v232, 0
    %v8254 = vsel %vm233, %v8246, 0
    %v8257 = vsel %vm233, %v8247, 0
    %8259 = vmatpush.msra.mxu0 0.0
    %8260 = vmatpush.msra.mxu0 0.0
    %8261 = vmatpush.msra.mxu0 0.0
    %8262 = vmatpush.msra.mxu0 0.0
    %8263 = vmatpush.msra.mxu0 0.0
    %8264 = vmatpush.msra.mxu0 0.0
    %8265 = vmatpush.msra.mxu0 0.0
    %8266 = vmatpush.msra.mxu0 0.0
    %8267 = vmatpush.msra.mxu0 0.0
    %8268 = vmatpush.msra.mxu0 0.0
    %8269 = vmatpush.msra.mxu0 0.0
    %8270 = vmatpush.msra.mxu0 0.0
    %8271 = vmatpush.msra.mxu0 %v8251
    %8272 = vmatpush.msra.mxu0 %v8250
    %8273 = vmatpush.msra.mxu0 %v8249
    %8274 = vmatpush.msra.mxu0 %v8248
    %8275 = vmatmul.f32.gmra.mxu0 %v8254
    %v8276 = vpop.f32.mrf.mxu0
    %v8277 = vadd.f32 %v8252, %v8276
    %8278 = vmatmul.f32.gmra.mxu0 %v8257
    %v8279 = vpop.f32.mrf.mxu0
    %v8280 = vadd.f32 %v8252, %v8279
    %8281 = vdwg.mxu0
    %8282 = vst [vmem:[#allocation2] sm:$0xff] %v8277
    %8283 = vst [vmem:[#allocation2 + $0x8] sm:$0xff] %v8280
    // Predicated region
    $region26: #{tpu_custom_call.1} parent=1 // pred_check
      _
    $region27: #{tpu_custom_call.1} parent=1 // pred_check_branch
      %8285 = sbr.rel (0) target = $region29
    $region28: #{tpu_custom_call.1} parent=1 // pred_region
      %8287 = vsyncadd [#allocation3], 0
      %s8288 = sshll.u32 [#allocation2], 4
      %s8289 = int_to_ptr.vmem [resolvable:$true] %s8288
      %s8290 = sshll.u32 %s6, 4
      %s8291 = int_to_ptr.hbm [resolvable:$true] %s8290
      %8296 = dma.vmem_to_hbm [thread:$0]  %s8289, 256, %s8291, [#allocation3], 128, 128, 8
    $region29: #{tpu_custom_call.1} parent=1 // pred_fallthru
      _
    // Predicated region
    $region30: #{tpu_custom_call.1} parent=1 // pred_check
      _
    $region31: #{tpu_custom_call.1} parent=1 // pred_check_branch
      %8298 = sbr.rel (0) target = $region33
    $region32: #{tpu_custom_call.1} parent=1 // pred_region
      %8300 = dma.done [#allocation3], 256
    $region33: #{tpu_custom_call.1} parent=1 // pred_fallthru
      _
    %8301 = vsyncpa [#allocation3], 1

</llo_original>
